<compile_context>
chip_gen: v6e
topology: v6e:2x2x1
jax: 0.10.0
libtpu: 0.0.40
codegen_flags: <defaults>
</compile_context>

<pallas_src>
import functools

import jax
import jax.numpy as jnp
from jax.experimental import pallas as pl
from jax.experimental.pallas import tpu as pltpu

# ---- model dimensions (from ItemEmb.__init__) ----
NUM_RATE = 6
NUM_GENRE = 25
NUM_DIRECTOR = 2186
NUM_ACTOR = 8030
EMB_DIM = 64
N_CNT = EMB_DIM + 1                      # fused table width: 64 emb cols + count col

_HIGH = jax.lax.Precision.HIGHEST


def item_emb_kernel(rate_ref, genre_ref, dir_ref, act_ref,
                    w_rate_ref, w_genre_ref, w_dir_ref, w_act_ref, out_ref):
    f32 = jnp.float32
    tile_b = out_ref.shape[0]

    def normalized_branch(x_ref, w_ref):
        # int8 0/1 multi-hot -> bf16 (exact) on the VPU, then a pure bf16 x bf16
        # MXU matmul with f32 accumulation.
        x = x_ref[...].astype(jnp.bfloat16)
        y = jnp.dot(x, w_ref[...], preferred_element_type=f32)
        emb = y[:, :EMB_DIM]                      # pre-fused embedding contribution
        cnt = y[:, EMB_DIM:EMB_DIM + 1]           # per-row active count (exact)
        cnt = jnp.where(cnt == 0.0, 1.0, cnt)     # guard empty / padded rows
        return emb * pl.reciprocal(cnt)           # exact reciprocal (not approx)

    # rate branch: build the one-hot in-kernel; the fused rate table already
    # carries the final-Linear bias (one-hot rows sum to exactly 1).
    lane_ids = jax.lax.broadcasted_iota(jnp.int32, (tile_b, NUM_RATE), 1)
    rate_oh = (lane_ids == rate_ref[...]).astype(f32)
    acc = jnp.dot(rate_oh, w_rate_ref[...], preferred_element_type=f32)

    acc = acc + normalized_branch(genre_ref, w_genre_ref)
    acc = acc + normalized_branch(dir_ref, w_dir_ref)
    acc = acc + normalized_branch(act_ref, w_act_ref)
    out_ref[...] = acc


def _round_up(x, m):
    return ((x + m - 1) // m) * m


def _pick_tile_b(batch):
    """Generation-aware batch tile and VMEM limit."""
    try:
        kind = jax.devices()[0].device_kind.lower()
    except Exception:
        kind = ""
    granule = 32                          # int8 rows pack 32 per sublane group
    b_up = max(granule, _round_up(batch, granule))
    if ("v5" in kind) or ("v6" in kind):
        # 128 MiB VMEM, single TensorCore: big tiles amortize grid overhead.
        tile = min(512, b_up)
        vmem = 64 * 1024 * 1024
    else:
        # v7x (and unknown chips): 64 MiB VMEM / TC, 2 TCs.  Cap the tile so
        # the grid has >= 2 steps whenever possible so ("parallel",) shards the
        # batch across both cores.
        half = max(granule, _round_up(pl.cdiv(batch, 2), granule))
        tile = min(256, half, b_up)
        vmem = 32 * 1024 * 1024
    return tile, vmem


def prepare_fused_params(p):
    """Pre-fuse the final Linear into each branch (done once per model).

    Big tables are stored in bf16 (the count column of ones stays exact); the
    tiny rate table keeps f32 and absorbs the final-Linear bias.
    """
    w_lin = p["w_lin"]                                  # [4*EMB_DIM, EMB_DIM]
    w0 = w_lin[0 * EMB_DIM:1 * EMB_DIM]
    w1 = w_lin[1 * EMB_DIM:2 * EMB_DIM]
    w2 = w_lin[2 * EMB_DIM:3 * EMB_DIM]
    w3 = w_lin[3 * EMB_DIM:4 * EMB_DIM]

    def fuse_counted(w, w_slice, k):
        fused = jnp.dot(w, w_slice, precision=_HIGH)    # [k, EMB_DIM]
        ones = jnp.ones((k, 1), jnp.float32)            # row-count column
        return jnp.concatenate([fused, ones], axis=1).astype(jnp.bfloat16)

    # one-hot row sums to exactly 1 -> folding the bias here is exact.
    w_rate = jnp.dot(p["w_rate"], w0, precision=_HIGH) + p["b_lin"]   # [6, 64] f32

    return dict(
        w_rate=w_rate,
        w_genre=fuse_counted(p["w_genre"], w1, NUM_GENRE),      # [25, 65]   bf16
        w_dir=fuse_counted(p["w_dir"], w2, NUM_DIRECTOR),       # [2186, 65] bf16
        w_act=fuse_counted(p["w_act"], w3, NUM_ACTOR),          # [8030, 65] bf16
    )


def item_emb_forward(rate_idx, genre_mh, director_mh, actors_mh, fused):
    """rate_idx: int [B]; *_mh: 0/1 multi-hot [B, num_*] (ideally already int8)."""
    B = rate_idx.shape[0]
    tile_b, vmem_bytes = _pick_tile_b(B)
    b_pad = pl.cdiv(B, tile_b) * tile_b

    rate2d = rate_idx.reshape(B, 1).astype(jnp.int32)
    to_i8 = lambda x: x if x.dtype == jnp.int8 else x.astype(jnp.int8)
    genre = to_i8(genre_mh)
    direc = to_i8(director_mh)
    actor = to_i8(actors_mh)

    if b_pad != B:
        pad = lambda x: jnp.pad(x, ((0, b_pad - B), (0, 0)))
        rate2d, genre, direc, actor = map(pad, (rate2d, genre, direc, actor))

    flops = 2 * b_pad * (NUM_RATE * EMB_DIM
                         + (NUM_GENRE + NUM_DIRECTOR + NUM_ACTOR) * N_CNT)
    bytes_accessed = (b_pad * (4 + NUM_GENRE + NUM_DIRECTOR + NUM_ACTOR)
                      + (NUM_GENRE + NUM_DIRECTOR + NUM_ACTOR) * N_CNT * 2
                      + NUM_RATE * EMB_DIM * 4
                      + b_pad * EMB_DIM * 4)

    def batch_spec(width):
        return pl.BlockSpec((tile_b, width), lambda i: (i, 0))

    def const_spec(rows, cols):
        return pl.BlockSpec((rows, cols), lambda i: (0, 0))

    out = pl.pallas_call(
        item_emb_kernel,
        out_shape=jax.ShapeDtypeStruct((b_pad, EMB_DIM), jnp.float32),
        grid_spec=pltpu.PrefetchScalarGridSpec(
            num_scalar_prefetch=0,
            grid=(b_pad // tile_b,),
            in_specs=[
                batch_spec(1),                       # rate index (int32)
                batch_spec(NUM_GENRE),               # int8 multi-hots
                batch_spec(NUM_DIRECTOR),
                batch_spec(NUM_ACTOR),
                const_spec(NUM_RATE, EMB_DIM),       # fused rate table (+bias), f32
                const_spec(NUM_GENRE, N_CNT),        # fused tables (+count col), bf16
                const_spec(NUM_DIRECTOR, N_CNT),
                const_spec(NUM_ACTOR, N_CNT),
            ],
            out_specs=pl.BlockSpec((tile_b, EMB_DIM), lambda i: (i, 0)),
        ),
        compiler_params=pltpu.CompilerParams(
            dimension_semantics=("parallel",),       # shard batch across TCs on v7x
            vmem_limit_bytes=vmem_bytes,
        ),
        cost_estimate=pl.CostEstimate(flops=flops, transcendentals=0,
                                      bytes_accessed=bytes_accessed),
    )(rate2d, genre, direc, actor,
      fused["w_rate"], fused["w_genre"], fused["w_dir"], fused["w_act"])
    return out[:B]


def init_params(key):
    ks = jax.random.split(key, 6)
    # nn.Embedding default init: N(0, 1)
    w_rate = jax.random.normal(ks[0], (NUM_RATE, EMB_DIM), jnp.float32)

    def lin_init(k, fan_in, fan_out):
        # PyTorch Linear default: U(-1/sqrt(fan_in), 1/sqrt(fan_in)); stored [in, out]
        bound = 1.0 / jnp.sqrt(jnp.float32(fan_in))
        return jax.random.uniform(k, (fan_in, fan_out), jnp.float32, -bound, bound)

    w_genre = lin_init(ks[1], NUM_GENRE, EMB_DIM)
    w_dir = lin_init(ks[2], NUM_DIRECTOR, EMB_DIM)
    w_act = lin_init(ks[3], NUM_ACTOR, EMB_DIM)
    w_lin = lin_init(ks[4], EMB_DIM * 4, EMB_DIM)
    b_bound = 1.0 / jnp.sqrt(jnp.float32(EMB_DIM * 4))
    b_lin = jax.random.uniform(ks[5], (1, EMB_DIM), jnp.float32, -b_bound, b_bound)
    return dict(w_rate=w_rate, w_genre=w_genre, w_dir=w_dir, w_act=w_act,
                w_lin=w_lin, b_lin=b_lin)


def reference_forward(rate_idx, genre_mh, director_mh, actors_mh, p):
    """Un-fused f32 reference matching the original PyTorch module."""
    dot = functools.partial(jnp.dot, precision=_HIGH)
    rate_emb = p["w_rate"][rate_idx]
    g = genre_mh.astype(jnp.float32)
    d = director_mh.astype(jnp.float32)
    a = actors_mh.astype(jnp.float32)
    genre_emb = dot(g, p["w_genre"]) / jnp.sum(g, axis=1, keepdims=True)
    dir_emb = dot(d, p["w_dir"]) / jnp.sum(d, axis=1, keepdims=True)
    act_emb = dot(a, p["w_act"]) / jnp.sum(a, axis=1, keepdims=True)
    cat = jnp.concatenate([rate_emb, genre_emb, dir_emb, act_emb], axis=1)
    return dot(cat, p["w_lin"]) + p["b_lin"]


if __name__ == "__main__":
    B = 8
    key = jax.random.PRNGKey(0)
    k_param, k_rate, k_g, k_d, k_a = jax.random.split(key, 5)

    params = init_params(k_param)
    fused = prepare_fused_params(params)

    rate_idx = jax.random.randint(k_rate, (B,), 0, NUM_RATE, dtype=jnp.int32)

    def multi_hot(k, n, p_on):
        mh = jax.random.uniform(k, (B, n)) < p_on
        # guarantee at least one active entry per row (original module divides
        # by the row sum with no guard)
        mh = mh.at[:, 0].set(True)
        return mh.astype(jnp.int8)        # producer emits int8 directly (0/1 exact)

    genre_mh = multi_hot(k_g, NUM_GENRE, 0.2)
    director_mh = multi_hot(k_d, NUM_DIRECTOR, 0.002)
    actors_mh = multi_hot(k_a, NUM_ACTOR, 0.001)

    out = item_emb_forward(rate_idx, genre_mh, director_mh, actors_mh, fused)
    out = jax.block_until_ready(out)

    ref = reference_forward(rate_idx, genre_mh, director_mh, actors_mh, params)
    assert out.shape == (B, EMB_DIM)
    # bf16 fused tables introduce ~1e-3-level relative error vs the f32
    # reference, so the tolerance is relaxed accordingly (review note).
    assert jnp.allclose(out, ref, atol=2e-3, rtol=2e-3), \
        float(jnp.max(jnp.abs(out - ref)))

    print("KERNEL_OK")
</pallas_src>

<mosaic_0001>
module attributes {stable_mosaic.version = 11 : i64} {
  func.func @item_emb_kernel(%arg0: i32, %arg1: memref<32x1xi32, #tpu.memory_space<vmem>>, %arg2: memref<32x25xi8, #tpu.memory_space<vmem>>, %arg3: memref<32x2186xi8, #tpu.memory_space<vmem>>, %arg4: memref<32x8030xi8, #tpu.memory_space<vmem>>, %arg5: memref<6x64xf32, #tpu.memory_space<vmem>>, %arg6: memref<25x65xbf16, #tpu.memory_space<vmem>>, %arg7: memref<2186x65xbf16, #tpu.memory_space<vmem>>, %arg8: memref<8030x65xbf16, #tpu.memory_space<vmem>>, %arg9: memref<32x64xf32, #tpu.memory_space<vmem>>) attributes {dimension_semantics = [#tpu.dimension_semantics<parallel>], iteration_bounds = array<i64: 1>, scalar_prefetch = 0 : i64, scratch_operands = 0 : i64, tpu.core_type = #tpu.core_type<tc>, window_params = [{transform_indices = @transform_0, window_bounds = array<i64: 32, 1>}, {transform_indices = @transform_1, window_bounds = array<i64: 32, 25>}, {transform_indices = @transform_2, window_bounds = array<i64: 32, 2186>}, {transform_indices = @transform_3, window_bounds = array<i64: 32, 8030>}, {pipeline_mode = #tpu.pipeline_mode<synchronous>, transform_indices = @transform_4, window_bounds = array<i64: 6, 64>}, {pipeline_mode = #tpu.pipeline_mode<synchronous>, transform_indices = @transform_5, window_bounds = array<i64: 25, 65>}, {pipeline_mode = #tpu.pipeline_mode<synchronous>, transform_indices = @transform_6, window_bounds = array<i64: 2186, 65>}, {pipeline_mode = #tpu.pipeline_mode<synchronous>, transform_indices = @transform_7, window_bounds = array<i64: 8030, 65>}, {transform_indices = @transform_8, window_bounds = array<i64: 32, 64>}]} {
    %0 = tpu.iota {dimensions = array<i32: 1>} : vector<32x6xi32>
    %c0 = arith.constant 0 : index
    %c0_0 = arith.constant 0 : index
    %1 = vector.load %arg1[%c0, %c0_0] : memref<32x1xi32, #tpu.memory_space<vmem>>, vector<32x1xi32>
    %2 = vector.broadcast %1 : vector<32x1xi32> to vector<32x6xi32>
    %3 = arith.cmpi eq, %0, %2 : vector<32x6xi32>
    %4 = arith.extui %3 : vector<32x6xi1> to vector<32x6xi32>
    %5 = arith.sitofp %4 : vector<32x6xi32> to vector<32x6xf32>
    %c0_1 = arith.constant 0 : index
    %c0_2 = arith.constant 0 : index
    %6 = vector.load %arg5[%c0_1, %c0_2] : memref<6x64xf32, #tpu.memory_space<vmem>>, vector<6x64xf32>
    %cst = arith.constant dense<0.000000e+00> : vector<32x64xf32>
    %7 = tpu.matmul %5, %6, %cst {dimension_numbers = #tpu.dot_dimension_numbers<[1], [0], [0], [1], [0, 0, 1, 1], [], []>} : vector<32x6xf32>, vector<6x64xf32>, vector<32x64xf32> -> vector<32x64xf32>
    %c0_3 = arith.constant 0 : index
    %c0_4 = arith.constant 0 : index
    %8 = vector.load %arg2[%c0_3, %c0_4] : memref<32x25xi8, #tpu.memory_space<vmem>>, vector<32x25xi8>
    %9 = arith.sitofp %8 : vector<32x25xi8> to vector<32x25xbf16>
    %c0_5 = arith.constant 0 : index
    %c0_6 = arith.constant 0 : index
    %10 = vector.load %arg6[%c0_5, %c0_6] : memref<25x65xbf16, #tpu.memory_space<vmem>>, vector<25x65xbf16>
    %cst_7 = arith.constant dense<0.000000e+00> : vector<32x65xf32>
    %11 = tpu.matmul %9, %10, %cst_7 {dimension_numbers = #tpu.dot_dimension_numbers<[1], [0], [0], [1], [0, 0, 1, 1], [], []>} : vector<32x25xbf16>, vector<25x65xbf16>, vector<32x65xf32> -> vector<32x65xf32>
    %12 = vector.extract_strided_slice %11 {offsets = [0, 0], sizes = [32, 64], strides = [1, 1]} : vector<32x65xf32> to vector<32x64xf32>
    %13 = vector.extract_strided_slice %11 {offsets = [0, 64], sizes = [32, 1], strides = [1, 1]} : vector<32x65xf32> to vector<32x1xf32>
    %cst_8 = arith.constant 0.000000e+00 : f32
    %14 = vector.broadcast %cst_8 : f32 to vector<32x1xf32>
    %15 = arith.cmpf oeq, %13, %14 : vector<32x1xf32>
    %cst_9 = arith.constant 1.000000e+00 : f32
    %16 = vector.broadcast %cst_9 : f32 to vector<32x1xf32>
    %17 = arith.select %15, %16, %13 : vector<32x1xi1>, vector<32x1xf32>
    %18 = tpu.reciprocal %17 : vector<32x1xf32> -> vector<32x1xf32>
    %19 = vector.broadcast %18 : vector<32x1xf32> to vector<32x64xf32>
    %20 = arith.mulf %12, %19 : vector<32x64xf32>
    %21 = arith.addf %7, %20 : vector<32x64xf32>
    %c0_10 = arith.constant 0 : index
    %c0_11 = arith.constant 0 : index
    %22 = vector.load %arg3[%c0_10, %c0_11] : memref<32x2186xi8, #tpu.memory_space<vmem>>, vector<32x2186xi8>
    %23 = arith.sitofp %22 : vector<32x2186xi8> to vector<32x2186xbf16>
    %c0_12 = arith.constant 0 : index
    %c0_13 = arith.constant 0 : index
    %24 = vector.load %arg7[%c0_12, %c0_13] : memref<2186x65xbf16, #tpu.memory_space<vmem>>, vector<2186x65xbf16>
    %cst_14 = arith.constant dense<0.000000e+00> : vector<32x65xf32>
    %25 = tpu.matmul %23, %24, %cst_14 {dimension_numbers = #tpu.dot_dimension_numbers<[1], [0], [0], [1], [0, 0, 1, 1], [], []>} : vector<32x2186xbf16>, vector<2186x65xbf16>, vector<32x65xf32> -> vector<32x65xf32>
    %26 = vector.extract_strided_slice %25 {offsets = [0, 0], sizes = [32, 64], strides = [1, 1]} : vector<32x65xf32> to vector<32x64xf32>
    %27 = vector.extract_strided_slice %25 {offsets = [0, 64], sizes = [32, 1], strides = [1, 1]} : vector<32x65xf32> to vector<32x1xf32>
    %cst_15 = arith.constant 0.000000e+00 : f32
    %28 = vector.broadcast %cst_15 : f32 to vector<32x1xf32>
    %29 = arith.cmpf oeq, %27, %28 : vector<32x1xf32>
    %cst_16 = arith.constant 1.000000e+00 : f32
    %30 = vector.broadcast %cst_16 : f32 to vector<32x1xf32>
    %31 = arith.select %29, %30, %27 : vector<32x1xi1>, vector<32x1xf32>
    %32 = tpu.reciprocal %31 : vector<32x1xf32> -> vector<32x1xf32>
    %33 = vector.broadcast %32 : vector<32x1xf32> to vector<32x64xf32>
    %34 = arith.mulf %26, %33 : vector<32x64xf32>
    %35 = arith.addf %21, %34 : vector<32x64xf32>
    %c0_17 = arith.constant 0 : index
    %c0_18 = arith.constant 0 : index
    %36 = vector.load %arg4[%c0_17, %c0_18] : memref<32x8030xi8, #tpu.memory_space<vmem>>, vector<32x8030xi8>
    %37 = arith.sitofp %36 : vector<32x8030xi8> to vector<32x8030xbf16>
    %c0_19 = arith.constant 0 : index
    %c0_20 = arith.constant 0 : index
    %38 = vector.load %arg8[%c0_19, %c0_20] : memref<8030x65xbf16, #tpu.memory_space<vmem>>, vector<8030x65xbf16>
    %cst_21 = arith.constant dense<0.000000e+00> : vector<32x65xf32>
    %39 = tpu.matmul %37, %38, %cst_21 {dimension_numbers = #tpu.dot_dimension_numbers<[1], [0], [0], [1], [0, 0, 1, 1], [], []>} : vector<32x8030xbf16>, vector<8030x65xbf16>, vector<32x65xf32> -> vector<32x65xf32>
    %40 = vector.extract_strided_slice %39 {offsets = [0, 0], sizes = [32, 64], strides = [1, 1]} : vector<32x65xf32> to vector<32x64xf32>
    %41 = vector.extract_strided_slice %39 {offsets = [0, 64], sizes = [32, 1], strides = [1, 1]} : vector<32x65xf32> to vector<32x1xf32>
    %cst_22 = arith.constant 0.000000e+00 : f32
    %42 = vector.broadcast %cst_22 : f32 to vector<32x1xf32>
    %43 = arith.cmpf oeq, %41, %42 : vector<32x1xf32>
    %cst_23 = arith.constant 1.000000e+00 : f32
    %44 = vector.broadcast %cst_23 : f32 to vector<32x1xf32>
    %45 = arith.select %43, %44, %41 : vector<32x1xi1>, vector<32x1xf32>
    %46 = tpu.reciprocal %45 : vector<32x1xf32> -> vector<32x1xf32>
    %47 = vector.broadcast %46 : vector<32x1xf32> to vector<32x64xf32>
    %48 = arith.mulf %40, %47 : vector<32x64xf32>
    %49 = arith.addf %35, %48 : vector<32x64xf32>
    %c0_24 = arith.constant 0 : index
    %c0_25 = arith.constant 0 : index
    %50 = vector.load %arg9[%c0_24, %c0_25] : memref<32x64xf32, #tpu.memory_space<vmem>>, vector<32x64xf32>
    tpu.vector_store %arg9[%c0_24, %c0_25], %49 {strides = array<i32>} : memref<32x64xf32, #tpu.memory_space<vmem>>, vector<32x64xf32>,
    return
  }
  func.func @transform_0(%arg0: i32) -> (i32, i32) {
    %c0_i32 = arith.constant 0 : i32
    %c0_i32_0 = arith.constant 0 : i32
    return %arg0, %c0_i32 : i32, i32
  }
  func.func @transform_1(%arg0: i32) -> (i32, i32) {
    %c0_i32 = arith.constant 0 : i32
    %c0_i32_0 = arith.constant 0 : i32
    return %arg0, %c0_i32 : i32, i32
  }
  func.func @transform_2(%arg0: i32) -> (i32, i32) {
    %c0_i32 = arith.constant 0 : i32
    %c0_i32_0 = arith.constant 0 : i32
    return %arg0, %c0_i32 : i32, i32
  }
  func.func @transform_3(%arg0: i32) -> (i32, i32) {
    %c0_i32 = arith.constant 0 : i32
    %c0_i32_0 = arith.constant 0 : i32
    return %arg0, %c0_i32 : i32, i32
  }
  func.func @transform_4(%arg0: i32) -> (i32, i32) {
    %c0_i32 = arith.constant 0 : i32
    %c0_i32_0 = arith.constant 0 : i32
    %c0_i32_1 = arith.constant 0 : i32
    return %c0_i32, %c0_i32_0 : i32, i32
  }
  func.func @transform_5(%arg0: i32) -> (i32, i32) {
    %c0_i32 = arith.constant 0 : i32
    %c0_i32_0 = arith.constant 0 : i32
    %c0_i32_1 = arith.constant 0 : i32
    return %c0_i32, %c0_i32_0 : i32, i32
  }
  func.func @transform_6(%arg0: i32) -> (i32, i32) {
    %c0_i32 = arith.constant 0 : i32
    %c0_i32_0 = arith.constant 0 : i32
    %c0_i32_1 = arith.constant 0 : i32
    return %c0_i32, %c0_i32_0 : i32, i32
  }
  func.func @transform_7(%arg0: i32) -> (i32, i32) {
    %c0_i32 = arith.constant 0 : i32
    %c0_i32_0 = arith.constant 0 : i32
    %c0_i32_1 = arith.constant 0 : i32
    return %c0_i32, %c0_i32_0 : i32, i32
  }
  func.func @transform_8(%arg0: i32) -> (i32, i32) {
    %c0_i32 = arith.constant 0 : i32
    %c0_i32_0 = arith.constant 0 : i32
    return %arg0, %c0_i32 : i32, i32
  }
}

</mosaic_0001>

<llo_original>
// kernel: tpu_custom_call.1
$region0: #{tpu_custom_call.1}
  #allocation0 [shape = 'u32[]', space=smem, size = 0x4, offset = 0x4, fixed_abs, tag = 'smem constant byte address 0x4 - core index']
  #allocation1 [shape = 'u32[144,128]{1,0:T(1,128)}', space=vmem, size = 0x12000, scoped, tag = 'internal scratch']
  %s0 = inlined_call_operand.vmem [shape: s32[32,1], index: 0, kind: input, shape index: {}]
  %s1 = inlined_call_operand.vmem [shape: s8[32,25], index: 1, kind: input, shape index: {}]
  %s2 = inlined_call_operand.vmem [shape: s8[32,2186], index: 2, kind: input, shape index: {}]
  %s3 = inlined_call_operand.vmem [shape: s8[32,8030], index: 3, kind: input, shape index: {}]
  %s4 = inlined_call_operand.vmem [shape: f32[6,64], index: 4, kind: input, shape index: {}]
  %s5 = inlined_call_operand.vmem [shape: bf16[25,65], index: 5, kind: input, shape index: {}]
  %s6 = inlined_call_operand.vmem [shape: bf16[2186,65], index: 6, kind: input, shape index: {}]
  %s7 = inlined_call_operand.vmem [shape: bf16[8030,65], index: 7, kind: input, shape index: {}]
  %s8 = inlined_call_operand.hbm [shape: f32[32,64], index: 8, kind: output, shape index: {}]
  %s9 = sld [smem:[#allocation0]]
  $region42: #{tpu_custom_call.1} parent=0
    _
  %s11 = ssub.s32 1, %s9
  %s12 = scalar_select 0, %s11, %s9
  $region1: #{tpu_custom_call.1} parent=0
    #allocation2 [shape = 'u8[16384]{0}', space=vmem, size = 0x4000, scoped, tag = 'output window, operand 0, single buffered']
    #allocation3 [shape = 's32[1]{0}', space=sflag, size = 0x4, scoped, tag = 'scoped memory for tpu_custom_call.1']
    %13 = vsyncpa [#allocation3], 0
    // Predicated region
    $region2: #{tpu_custom_call.1} parent=1 // pred_check
      _
    $region3: #{tpu_custom_call.1} parent=1 // pred_check_branch
      %15 = sbr.rel (0) target = $region5
    $region4: #{tpu_custom_call.1} parent=1 // pred_region
      _
    $region5: #{tpu_custom_call.1} parent=1 // pred_fallthru
      _
    // Predicated region
    $region6: #{tpu_custom_call.1} parent=1 // pred_check
      _
    $region7: #{tpu_custom_call.1} parent=1 // pred_check_branch
      %17 = sbr.rel (0) target = $region9
    $region8: #{tpu_custom_call.1} parent=1 // pred_region
      _
    $region9: #{tpu_custom_call.1} parent=1 // pred_fallthru
      _
    // Predicated region
    $region10: #{tpu_custom_call.1} parent=1 // pred_check
      _
    $region11: #{tpu_custom_call.1} parent=1 // pred_check_branch
      %19 = sbr.rel (0) target = $region13
    $region12: #{tpu_custom_call.1} parent=1 // pred_region
      _
    $region13: #{tpu_custom_call.1} parent=1 // pred_fallthru
      _
    // Predicated region
    $region14: #{tpu_custom_call.1} parent=1 // pred_check
      _
    $region15: #{tpu_custom_call.1} parent=1 // pred_check_branch
      %21 = sbr.rel (0) target = $region17
    $region16: #{tpu_custom_call.1} parent=1 // pred_region
      _
    $region17: #{tpu_custom_call.1} parent=1 // pred_fallthru
      _
    // Predicated region
    $region18: #{tpu_custom_call.1} parent=1 // pred_check
      _
    $region19: #{tpu_custom_call.1} parent=1 // pred_check_branch
      %23 = sbr.rel (0) target = $region21
    $region20: #{tpu_custom_call.1} parent=1 // pred_region
      _
    $region21: #{tpu_custom_call.1} parent=1 // pred_fallthru
      _
    // Predicated region
    $region22: #{tpu_custom_call.1} parent=1 // pred_check
      _
    $region23: #{tpu_custom_call.1} parent=1 // pred_check_branch
      %25 = sbr.rel (0) target = $region25
    $region24: #{tpu_custom_call.1} parent=1 // pred_region
      _
    $region25: #{tpu_custom_call.1} parent=1 // pred_fallthru
      _
    // Predicated region
    $region26: #{tpu_custom_call.1} parent=1 // pred_check
      _
    $region27: #{tpu_custom_call.1} parent=1 // pred_check_branch
      %27 = sbr.rel (0) target = $region29
    $region28: #{tpu_custom_call.1} parent=1 // pred_region
      _
    $region29: #{tpu_custom_call.1} parent=1 // pred_fallthru
      _
    // Predicated region
    $region30: #{tpu_custom_call.1} parent=1 // pred_check
      _
    $region31: #{tpu_custom_call.1} parent=1 // pred_check_branch
      %29 = sbr.rel (0) target = $region33
    $region32: #{tpu_custom_call.1} parent=1 // pred_region
      _
    $region33: #{tpu_custom_call.1} parent=1 // pred_fallthru
      _
    %v31 = vlaneseq
    %v32 = vand.u32 %v31, 127
    %v33 = vld [vmem:[%s0] sm:$0xff]
    %v34 = vld [vmem:[%s0 + $0x8] sm:$0xff]
    %v35 = vld [vmem:[%s0 + $0x10] sm:$0xff]
    %v36 = vld [vmem:[%s0 + $0x18] sm:$0xff]
    %37 = vset.pattern.permute.xlu0 0
    %38 = vperm.xlu0 %37, %v33
    %v39 = vpop.permute.xlu0 %38
    %40 = vset.pattern.permute.xlu0 0
    %41 = vperm.xlu0 %40, %v34
    %v42 = vpop.permute.xlu0 %41
    %43 = vset.pattern.permute.xlu0 0
    %44 = vperm.xlu0 %43, %v35
    %v45 = vpop.permute.xlu0 %44
    %46 = vset.pattern.permute.xlu0 0
    %47 = vperm.xlu0 %46, %v36
    %v48 = vpop.permute.xlu0 %47
    %vm49 = vcmp.eq.s32.totalorder %v32, %v39
    %vm50 = vcmp.eq.s32.totalorder %v32, %v42
    %vm51 = vcmp.eq.s32.totalorder %v32, %v45
    %vm52 = vcmp.eq.s32.totalorder %v32, %v48
    %v53 = vsel %vm49, 1, 0
    %v54 = vsel %vm50, 1, 0
    %v55 = vsel %vm51, 1, 0
    %v56 = vsel %vm52, 1, 0
    %v57 = vcvt.s32.f32 %v53
    %v58 = vcvt.s32.f32 %v54
    %v59 = vcvt.s32.f32 %v55
    %v60 = vcvt.s32.f32 %v56
    %v61 = vld [vmem:[%s4] sm:$0x3f]
    %v62 = vld [vmem:[%s1] sm:$0xff]
    %v63 = vunpack.c.l.s8.bf16 %v62
    %v64 = vunpack.c.h.s8.bf16 %v62
    %v65 = vld [vmem:[%s5] sm:$0xf]
    %v66 = vld [vmem:[%s5 + $0x4] sm:$0xf]
    %v67 = vld [vmem:[%s5 + $0x8] sm:$0xf]
    %v68 = vld [vmem:[%s5 + $0xc] sm:$0x1]
    %v73 = vunpack.c.l.b16 %v65
    %v74 = vunpack.c.l.b16 %v66
    %v75 = vunpack.c.l.b16 %v67
    %v76 = vunpack.c.l.b16 %v68
    %v77 = vpack.c.b16 %v74, %v73
    %v78 = vpack.c.b16 %v76, %v75
    %vm80 = vcmask 203776
    %v82 = vsel %vm80, %v63, 0
    %v85 = vsel %vm80, %v64, 0
    %vm87 = vcmask 1043456
    %vm88 = vcmask 1044480
    %v89 = vsel %vm87, 4294967295, 65535
    %v90 = vsel %vm88, %v89, 0
    %v92 = vand.u32 %v78, %v90
    %94 = vmatprep.subr.bf16.mxu0 0
    %95 = vmatpush1.bf16.msra.mxu0 0
    %96 = vmatprep.subr.bf16.mxu0 0
    %97 = vmatpush1.bf16.msra.mxu0 0
    %98 = vmatprep.subr.bf16.mxu0 0
    %99 = vmatpush1.bf16.msra.mxu0 0
    %100 = vmatprep.subr.bf16.mxu0 0
    %101 = vmatpush1.bf16.msra.mxu0 0
    %102 = vmatprep.subr.bf16.mxu0 0
    %103 = vmatpush1.bf16.msra.mxu0 0
    %104 = vmatprep.subr.bf16.mxu0 0
    %105 = vmatpush1.bf16.msra.mxu0 0
    %106 = vmatprep.subr.bf16.mxu0 0
    %107 = vmatpush1.bf16.msra.mxu0 %v92
    %108 = vmatprep.subr.bf16.mxu0 0
    %109 = vmatpush1.bf16.msra.mxu0 %v77
    %110 = vmatprep.subr.bf16.mxu0 0
    %111 = vmatpush2.bf16.msra.mxu0 0
    %112 = vmatprep.subr.bf16.mxu0 0
    %113 = vmatpush2.bf16.msra.mxu0 0
    %114 = vmatprep.subr.bf16.mxu0 0
    %115 = vmatpush2.bf16.msra.mxu0 0
    %116 = vmatprep.subr.bf16.mxu0 0
    %117 = vmatpush2.bf16.msra.mxu0 0
    %118 = vmatprep.subr.bf16.mxu0 0
    %119 = vmatpush2.bf16.msra.mxu0 0
    %120 = vmatprep.subr.bf16.mxu0 0
    %121 = vmatpush2.bf16.msra.mxu0 0
    %122 = vmatprep.subr.bf16.mxu0 0
    %123 = vmatpush2.bf16.msra.mxu0 0
    %124 = vmatprep.subr.bf16.mxu0 0
    %125 = vmatpush2.bf16.msra.mxu0 0
    %126 = vmatprep.mubr.bf16.mxu0 0
    %127 = vmatmul.mubr.bf16.gmra.mxu0 %v82
    %v128 = vpop.f32.mrf.mxu0
    %v129 = vadd.f32 0.0, %v128
    %v130 = vpop.f32.mrf.mxu0
    %v131 = vpop.f32.mrf.mxu0
    %v132 = vadd.f32 0.0, %v131
    %v133 = vpop.f32.mrf.mxu0
    %134 = vmatprep.mubr.bf16.mxu0 0
    %135 = vmatmul.mubr.bf16.gmra.mxu0 %v85
    %v136 = vpop.f32.mrf.mxu0
    %v137 = vadd.f32 0.0, %v136
    %v138 = vpop.f32.mrf.mxu0
    %v139 = vpop.f32.mrf.mxu0
    %v140 = vadd.f32 0.0, %v139
    %v141 = vpop.f32.mrf.mxu0
    %142 = vdwg.mxu0
    %vm143 = vcmp.eq.f32.partialorder %v129, 0.0
    %vm144 = vcmp.eq.f32.partialorder %v132, 0.0
    %vm145 = vcmp.eq.f32.partialorder %v137, 0.0
    %vm146 = vcmp.eq.f32.partialorder %v140, 0.0
    %v147 = vsel %vm143, 1.0, %v129
    %v148 = vsel %vm144, 1.0, %v132
    %v149 = vsel %vm145, 1.0, %v137
    %v150 = vsel %vm146, 1.0, %v140
    %v151 = vrcp.pop %v147
    %v152 = vrcp.pop %v148
    %v153 = vrcp.pop %v149
    %v154 = vrcp.pop %v150
    %156 = vset.pattern.permute.xlu0 64
    %157 = vperm.xlu0 %156, %v151
    %v158 = vpop.permute.xlu0 %157
    %161 = vset.pattern.permute.xlu0 64
    %162 = vperm.xlu0 %161, %v152
    %v163 = vpop.permute.xlu0 %162
    %166 = vset.pattern.permute.xlu0 64
    %167 = vperm.xlu0 %166, %v153
    %v168 = vpop.permute.xlu0 %167
    %171 = vset.pattern.permute.xlu0 64
    %172 = vperm.xlu0 %171, %v154
    %v173 = vpop.permute.xlu0 %172
    %v175 = vmul.f32 %v129, %v158
    %v176 = vmul.f32 %v132, %v163
    %v177 = vmul.f32 %v137, %v168
    %v178 = vmul.f32 %v140, %v173
    %vm179 = vcmask 48128
    %v181 = vsel %vm179, %v57, 0
    %v184 = vsel %vm179, %v58, 0
    %v187 = vsel %vm179, %v59, 0
    %v190 = vsel %vm179, %v60, 0
    %vm192 = vcmask 1045504
    %v194 = vsel %vm192, %v61, 0
    %196 = vmatprep.subr.mxu0 0.0
    %197 = vmatpush1.msra.mxu0 0.0
    %198 = vmatprep.subr.mxu0 0.0
    %199 = vmatpush1.msra.mxu0 0.0
    %200 = vmatprep.subr.mxu0 0.0
    %201 = vmatpush1.msra.mxu0 0.0
    %202 = vmatprep.subr.mxu0 0.0
    %203 = vmatpush1.msra.mxu0 0.0
    %204 = vmatprep.subr.mxu0 0.0
    %205 = vmatpush1.msra.mxu0 0.0
    %206 = vmatprep.subr.mxu0 0.0
    %207 = vmatpush1.msra.mxu0 0.0
    %208 = vmatprep.subr.mxu0 0.0
    %209 = vmatpush1.msra.mxu0 0.0
    %210 = vmatprep.subr.mxu0 0.0
    %211 = vmatpush1.msra.mxu0 0.0
    %212 = vmatprep.subr.mxu0 0.0
    %213 = vmatpush1.msra.mxu0 0.0
    %214 = vmatprep.subr.mxu0 0.0
    %215 = vmatpush1.msra.mxu0 0.0
    %216 = vmatprep.subr.mxu0 0.0
    %217 = vmatpush1.msra.mxu0 0.0
    %218 = vmatprep.subr.mxu0 0.0
    %219 = vmatpush1.msra.mxu0 0.0
    %220 = vmatprep.subr.mxu0 0.0
    %221 = vmatpush1.msra.mxu0 0.0
    %222 = vmatprep.subr.mxu0 0.0
    %223 = vmatpush1.msra.mxu0 0.0
    %224 = vmatprep.subr.mxu0 0.0
    %225 = vmatpush1.msra.mxu0 0.0
    %226 = vmatprep.subr.mxu0 0.0
    %227 = vmatpush1.msra.mxu0 %v194
    %228 = vmatprep.subr.mxu0 0.0
    %229 = vmatpush2.msra.mxu0 0.0
    %230 = vmatprep.subr.mxu0 0.0
    %231 = vmatpush2.msra.mxu0 0.0
    %232 = vmatprep.subr.mxu0 0.0
    %233 = vmatpush2.msra.mxu0 0.0
    %234 = vmatprep.subr.mxu0 0.0
    %235 = vmatpush2.msra.mxu0 0.0
    %236 = vmatprep.subr.mxu0 0.0
    %237 = vmatpush2.msra.mxu0 0.0
    %238 = vmatprep.subr.mxu0 0.0
    %239 = vmatpush2.msra.mxu0 0.0
    %240 = vmatprep.subr.mxu0 0.0
    %241 = vmatpush2.msra.mxu0 0.0
    %242 = vmatprep.subr.mxu0 0.0
    %243 = vmatpush2.msra.mxu0 0.0
    %244 = vmatprep.subr.mxu0 0.0
    %245 = vmatpush2.msra.mxu0 0.0
    %246 = vmatprep.subr.mxu0 0.0
    %247 = vmatpush2.msra.mxu0 0.0
    %248 = vmatprep.subr.mxu0 0.0
    %249 = vmatpush2.msra.mxu0 0.0
    %250 = vmatprep.subr.mxu0 0.0
    %251 = vmatpush2.msra.mxu0 0.0
    %252 = vmatprep.subr.mxu0 0.0
    %253 = vmatpush2.msra.mxu0 0.0
    %254 = vmatprep.subr.mxu0 0.0
    %255 = vmatpush2.msra.mxu0 0.0
    %256 = vmatprep.subr.mxu0 0.0
    %257 = vmatpush2.msra.mxu0 0.0
    %258 = vmatprep.subr.mxu0 0.0
    %259 = vmatpush2.msra.mxu0 0.0
    %260 = vmatprep.mubr.f32.mxu0 0.0
    %261 = vmatmul.mubr.f32.gmra.mxu0 %v181
    %v262 = vpop.f32.mrf.mxu0
    %v263 = vadd.f32 %v175, %v262
    %v264 = vpop.f32.mrf.mxu0
    %265 = vmatprep.mubr.f32.mxu0 0.0
    %266 = vmatmul.mubr.f32.gmra.mxu0 %v184
    %v267 = vpop.f32.mrf.mxu0
    %v268 = vadd.f32 %v176, %v267
    %v269 = vpop.f32.mrf.mxu0
    %270 = vmatprep.mubr.f32.mxu0 0.0
    %271 = vmatmul.mubr.f32.gmra.mxu0 %v187
    %v272 = vpop.f32.mrf.mxu0
    %v273 = vadd.f32 %v177, %v272
    %v274 = vpop.f32.mrf.mxu0
    %275 = vmatprep.mubr.f32.mxu0 0.0
    %276 = vmatmul.mubr.f32.gmra.mxu0 %v190
    %v277 = vpop.f32.mrf.mxu0
    %v278 = vadd.f32 %v178, %v277
    %v279 = vpop.f32.mrf.mxu0
    %280 = vdwg.mxu0
    %v281 = vld [vmem:[%s2] sm:$0xff]
    %v282 = vld [vmem:[%s2 + $0x8] sm:$0xff]
    %v283 = vld [vmem:[%s2 + $0x10] sm:$0xff]
    %v284 = vld [vmem:[%s2 + $0x18] sm:$0xff]
    %v285 = vld [vmem:[%s2 + $0x20] sm:$0xff]
    %v286 = vld [vmem:[%s2 + $0x28] sm:$0xff]
    %v287 = vld [vmem:[%s2 + $0x30] sm:$0xff]
    %v288 = vld [vmem:[%s2 + $0x38] sm:$0xff]
    %v289 = vld [vmem:[%s2 + $0x40] sm:$0xff]
    %v290 = vld [vmem:[%s2 + $0x48] sm:$0xff]
    %v291 = vld [vmem:[%s2 + $0x50] sm:$0xff]
    %v292 = vld [vmem:[%s2 + $0x58] sm:$0xff]
    %v293 = vld [vmem:[%s2 + $0x60] sm:$0xff]
    %v294 = vld [vmem:[%s2 + $0x68] sm:$0xff]
    %v295 = vld [vmem:[%s2 + $0x70] sm:$0xff]
    %v296 = vld [vmem:[%s2 + $0x78] sm:$0xff]
    %v297 = vld [vmem:[%s2 + $0x80] sm:$0xff]
    %v298 = vld [vmem:[%s2 + $0x88] sm:$0xff]
    %v299 = vunpack.c.l.s8.bf16 %v281
    %v300 = vunpack.c.l.s8.bf16 %v282
    %v301 = vunpack.c.l.s8.bf16 %v283
    %v302 = vunpack.c.l.s8.bf16 %v284
    %v303 = vunpack.c.l.s8.bf16 %v285
    %v304 = vunpack.c.l.s8.bf16 %v286
    %v305 = vunpack.c.l.s8.bf16 %v287
    %v306 = vunpack.c.l.s8.bf16 %v288
    %v307 = vunpack.c.l.s8.bf16 %v289
    %v308 = vunpack.c.l.s8.bf16 %v290
    %v309 = vunpack.c.l.s8.bf16 %v291
    %v310 = vunpack.c.l.s8.bf16 %v292
    %v311 = vunpack.c.l.s8.bf16 %v293
    %v312 = vunpack.c.l.s8.bf16 %v294
    %v313 = vunpack.c.l.s8.bf16 %v295
    %v314 = vunpack.c.l.s8.bf16 %v296
    %v315 = vunpack.c.l.s8.bf16 %v297
    %v316 = vunpack.c.l.s8.bf16 %v298
    %v317 = vunpack.c.h.s8.bf16 %v281
    %v318 = vunpack.c.h.s8.bf16 %v282
    %v319 = vunpack.c.h.s8.bf16 %v283
    %v320 = vunpack.c.h.s8.bf16 %v284
    %v321 = vunpack.c.h.s8.bf16 %v285
    %v322 = vunpack.c.h.s8.bf16 %v286
    %v323 = vunpack.c.h.s8.bf16 %v287
    %v324 = vunpack.c.h.s8.bf16 %v288
    %v325 = vunpack.c.h.s8.bf16 %v289
    %v326 = vunpack.c.h.s8.bf16 %v290
    %v327 = vunpack.c.h.s8.bf16 %v291
    %v328 = vunpack.c.h.s8.bf16 %v292
    %v329 = vunpack.c.h.s8.bf16 %v293
    %v330 = vunpack.c.h.s8.bf16 %v294
    %v331 = vunpack.c.h.s8.bf16 %v295
    %v332 = vunpack.c.h.s8.bf16 %v296
    %v333 = vunpack.c.h.s8.bf16 %v297
    %v334 = vunpack.c.h.s8.bf16 %v298
    %v335 = vld [vmem:[%s6] sm:$0xf]
    %v336 = vld [vmem:[%s6 + $0x4] sm:$0xf]
    %v337 = vld [vmem:[%s6 + $0x8] sm:$0xf]
    %v338 = vld [vmem:[%s6 + $0xc] sm:$0xf]
    %v339 = vld [vmem:[%s6 + $0x10] sm:$0xf]
    %v340 = vld [vmem:[%s6 + $0x14] sm:$0xf]
    %v341 = vld [vmem:[%s6 + $0x18] sm:$0xf]
    %v342 = vld [vmem:[%s6 + $0x1c] sm:$0xf]
    %v343 = vld [vmem:[%s6 + $0x20] sm:$0xf]
    %v344 = vld [vmem:[%s6 + $0x24] sm:$0xf]
    %v345 = vld [vmem:[%s6 + $0x28] sm:$0xf]
    %v346 = vld [vmem:[%s6 + $0x2c] sm:$0xf]
    %v347 = vld [vmem:[%s6 + $0x30] sm:$0xf]
    %v348 = vld [vmem:[%s6 + $0x34] sm:$0xf]
    %v349 = vld [vmem:[%s6 + $0x38] sm:$0xf]
    %v350 = vld [vmem:[%s6 + $0x3c] sm:$0xf]
    %v351 = vld [vmem:[%s6 + $0x40] sm:$0xf]
    %v352 = vld [vmem:[%s6 + $0x44] sm:$0xf]
    %v353 = vld [vmem:[%s6 + $0x48] sm:$0xf]
    %v354 = vld [vmem:[%s6 + $0x4c] sm:$0xf]
    %v355 = vld [vmem:[%s6 + $0x50] sm:$0xf]
    %v356 = vld [vmem:[%s6 + $0x54] sm:$0xf]
    %v357 = vld [vmem:[%s6 + $0x58] sm:$0xf]
    %v358 = vld [vmem:[%s6 + $0x5c] sm:$0xf]
    %v359 = vld [vmem:[%s6 + $0x60] sm:$0xf]
    %v360 = vld [vmem:[%s6 + $0x64] sm:$0xf]
    %v361 = vld [vmem:[%s6 + $0x68] sm:$0xf]
    %v362 = vld [vmem:[%s6 + $0x6c] sm:$0xf]
    %v363 = vld [vmem:[%s6 + $0x70] sm:$0xf]
    %v364 = vld [vmem:[%s6 + $0x74] sm:$0xf]
    %v365 = vld [vmem:[%s6 + $0x78] sm:$0xf]
    %v366 = vld [vmem:[%s6 + $0x7c] sm:$0xf]
    %v367 = vld [vmem:[%s6 + $0x80] sm:$0xf]
    %v368 = vld [vmem:[%s6 + $0x84] sm:$0xf]
    %v369 = vld [vmem:[%s6 + $0x88] sm:$0xf]
    %v370 = vld [vmem:[%s6 + $0x8c] sm:$0xf]
    %v371 = vld [vmem:[%s6 + $0x90] sm:$0xf]
    %v372 = vld [vmem:[%s6 + $0x94] sm:$0xf]
    %v373 = vld [vmem:[%s6 + $0x98] sm:$0xf]
    %v374 = vld [vmem:[%s6 + $0x9c] sm:$0xf]
    %v375 = vld [vmem:[%s6 + $0xa0] sm:$0xf]
    %v376 = vld [vmem:[%s6 + $0xa4] sm:$0xf]
    %v377 = vld [vmem:[%s6 + $0xa8] sm:$0xf]
    %v378 = vld [vmem:[%s6 + $0xac] sm:$0xf]
    %v379 = vld [vmem:[%s6 + $0xb0] sm:$0xf]
    %v380 = vld [vmem:[%s6 + $0xb4] sm:$0xf]
    %v381 = vld [vmem:[%s6 + $0xb8] sm:$0xf]
    %v382 = vld [vmem:[%s6 + $0xbc] sm:$0xf]
    %v383 = vld [vmem:[%s6 + $0xc0] sm:$0xf]
    %v384 = vld [vmem:[%s6 + $0xc4] sm:$0xf]
    %v385 = vld [vmem:[%s6 + $0xc8] sm:$0xf]
    %v386 = vld [vmem:[%s6 + $0xcc] sm:$0xf]
    %v387 = vld [vmem:[%s6 + $0xd0] sm:$0xf]
    %v388 = vld [vmem:[%s6 + $0xd4] sm:$0xf]
    %v389 = vld [vmem:[%s6 + $0xd8] sm:$0xf]
    %v390 = vld [vmem:[%s6 + $0xdc] sm:$0xf]
    %v391 = vld [vmem:[%s6 + $0xe0] sm:$0xf]
    %v392 = vld [vmem:[%s6 + $0xe4] sm:$0xf]
    %v393 = vld [vmem:[%s6 + $0xe8] sm:$0xf]
    %v394 = vld [vmem:[%s6 + $0xec] sm:$0xf]
    %v395 = vld [vmem:[%s6 + $0xf0] sm:$0xf]
    %v396 = vld [vmem:[%s6 + $0xf4] sm:$0xf]
    %v397 = vld [vmem:[%s6 + $0xf8] sm:$0xf]
    %v398 = vld [vmem:[%s6 + $0xfc] sm:$0xf]
    %v399 = vld [vmem:[%s6 + $0x100] sm:$0xf]
    %v400 = vld [vmem:[%s6 + $0x104] sm:$0xf]
    %v401 = vld [vmem:[%s6 + $0x108] sm:$0xf]
    %v402 = vld [vmem:[%s6 + $0x10c] sm:$0xf]
    %v403 = vld [vmem:[%s6 + $0x110] sm:$0xf]
    %v404 = vld [vmem:[%s6 + $0x114] sm:$0xf]
    %v405 = vld [vmem:[%s6 + $0x118] sm:$0xf]
    %v406 = vld [vmem:[%s6 + $0x11c] sm:$0xf]
    %v407 = vld [vmem:[%s6 + $0x120] sm:$0xf]
    %v408 = vld [vmem:[%s6 + $0x124] sm:$0xf]
    %v409 = vld [vmem:[%s6 + $0x128] sm:$0xf]
    %v410 = vld [vmem:[%s6 + $0x12c] sm:$0xf]
    %v411 = vld [vmem:[%s6 + $0x130] sm:$0xf]
    %v412 = vld [vmem:[%s6 + $0x134] sm:$0xf]
    %v413 = vld [vmem:[%s6 + $0x138] sm:$0xf]
    %v414 = vld [vmem:[%s6 + $0x13c] sm:$0xf]
    %v415 = vld [vmem:[%s6 + $0x140] sm:$0xf]
    %v416 = vld [vmem:[%s6 + $0x144] sm:$0xf]
    %v417 = vld [vmem:[%s6 + $0x148] sm:$0xf]
    %v418 = vld [vmem:[%s6 + $0x14c] sm:$0xf]
    %v419 = vld [vmem:[%s6 + $0x150] sm:$0xf]
    %v420 = vld [vmem:[%s6 + $0x154] sm:$0xf]
    %v421 = vld [vmem:[%s6 + $0x158] sm:$0xf]
    %v422 = vld [vmem:[%s6 + $0x15c] sm:$0xf]
    %v423 = vld [vmem:[%s6 + $0x160] sm:$0xf]
    %v424 = vld [vmem:[%s6 + $0x164] sm:$0xf]
    %v425 = vld [vmem:[%s6 + $0x168] sm:$0xf]
    %v426 = vld [vmem:[%s6 + $0x16c] sm:$0xf]
    %v427 = vld [vmem:[%s6 + $0x170] sm:$0xf]
    %v428 = vld [vmem:[%s6 + $0x174] sm:$0xf]
    %v429 = vld [vmem:[%s6 + $0x178] sm:$0xf]
    %v430 = vld [vmem:[%s6 + $0x17c] sm:$0xf]
    %v431 = vld [vmem:[%s6 + $0x180] sm:$0xf]
    %v432 = vld [vmem:[%s6 + $0x184] sm:$0xf]
    %v433 = vld [vmem:[%s6 + $0x188] sm:$0xf]
    %v434 = vld [vmem:[%s6 + $0x18c] sm:$0xf]
    %v435 = vld [vmem:[%s6 + $0x190] sm:$0xf]
    %v436 = vld [vmem:[%s6 + $0x194] sm:$0xf]
    %v437 = vld [vmem:[%s6 + $0x198] sm:$0xf]
    %v438 = vld [vmem:[%s6 + $0x19c] sm:$0xf]
    %v439 = vld [vmem:[%s6 + $0x1a0] sm:$0xf]
    %v440 = vld [vmem:[%s6 + $0x1a4] sm:$0xf]
    %v441 = vld [vmem:[%s6 + $0x1a8] sm:$0xf]
    %v442 = vld [vmem:[%s6 + $0x1ac] sm:$0xf]
    %v443 = vld [vmem:[%s6 + $0x1b0] sm:$0xf]
    %v444 = vld [vmem:[%s6 + $0x1b4] sm:$0xf]
    %v445 = vld [vmem:[%s6 + $0x1b8] sm:$0xf]
    %v446 = vld [vmem:[%s6 + $0x1bc] sm:$0xf]
    %v447 = vld [vmem:[%s6 + $0x1c0] sm:$0xf]
    %v448 = vld [vmem:[%s6 + $0x1c4] sm:$0xf]
    %v449 = vld [vmem:[%s6 + $0x1c8] sm:$0xf]
    %v450 = vld [vmem:[%s6 + $0x1cc] sm:$0xf]
    %v451 = vld [vmem:[%s6 + $0x1d0] sm:$0xf]
    %v452 = vld [vmem:[%s6 + $0x1d4] sm:$0xf]
    %v453 = vld [vmem:[%s6 + $0x1d8] sm:$0xf]
    %v454 = vld [vmem:[%s6 + $0x1dc] sm:$0xf]
    %v455 = vld [vmem:[%s6 + $0x1e0] sm:$0xf]
    %v456 = vld [vmem:[%s6 + $0x1e4] sm:$0xf]
    %v457 = vld [vmem:[%s6 + $0x1e8] sm:$0xf]
    %v458 = vld [vmem:[%s6 + $0x1ec] sm:$0xf]
    %v459 = vld [vmem:[%s6 + $0x1f0] sm:$0xf]
    %v460 = vld [vmem:[%s6 + $0x1f4] sm:$0xf]
    %v461 = vld [vmem:[%s6 + $0x1f8] sm:$0xf]
    %v462 = vld [vmem:[%s6 + $0x1fc] sm:$0xf]
    %v463 = vld [vmem:[%s6 + $0x200] sm:$0xf]
    %v464 = vld [vmem:[%s6 + $0x204] sm:$0xf]
    %v465 = vld [vmem:[%s6 + $0x208] sm:$0xf]
    %v466 = vld [vmem:[%s6 + $0x20c] sm:$0xf]
    %v467 = vld [vmem:[%s6 + $0x210] sm:$0xf]
    %v468 = vld [vmem:[%s6 + $0x214] sm:$0xf]
    %v469 = vld [vmem:[%s6 + $0x218] sm:$0xf]
    %v470 = vld [vmem:[%s6 + $0x21c] sm:$0xf]
    %v471 = vld [vmem:[%s6 + $0x220] sm:$0xf]
    %v472 = vld [vmem:[%s6 + $0x224] sm:$0xf]
    %v473 = vld [vmem:[%s6 + $0x228] sm:$0xf]
    %v474 = vld [vmem:[%s6 + $0x22c] sm:$0xf]
    %v475 = vld [vmem:[%s6 + $0x230] sm:$0xf]
    %v476 = vld [vmem:[%s6 + $0x234] sm:$0xf]
    %v477 = vld [vmem:[%s6 + $0x238] sm:$0xf]
    %v478 = vld [vmem:[%s6 + $0x23c] sm:$0xf]
    %v479 = vld [vmem:[%s6 + $0x240] sm:$0xf]
    %v480 = vld [vmem:[%s6 + $0x244] sm:$0xf]
    %v481 = vld [vmem:[%s6 + $0x248] sm:$0xf]
    %v482 = vld [vmem:[%s6 + $0x24c] sm:$0xf]
    %v483 = vld [vmem:[%s6 + $0x250] sm:$0xf]
    %v484 = vld [vmem:[%s6 + $0x254] sm:$0xf]
    %v485 = vld [vmem:[%s6 + $0x258] sm:$0xf]
    %v486 = vld [vmem:[%s6 + $0x25c] sm:$0xf]
    %v487 = vld [vmem:[%s6 + $0x260] sm:$0xf]
    %v488 = vld [vmem:[%s6 + $0x264] sm:$0xf]
    %v489 = vld [vmem:[%s6 + $0x268] sm:$0xf]
    %v490 = vld [vmem:[%s6 + $0x26c] sm:$0xf]
    %v491 = vld [vmem:[%s6 + $0x270] sm:$0xf]
    %v492 = vld [vmem:[%s6 + $0x274] sm:$0xf]
    %v493 = vld [vmem:[%s6 + $0x278] sm:$0xf]
    %v494 = vld [vmem:[%s6 + $0x27c] sm:$0xf]
    %v495 = vld [vmem:[%s6 + $0x280] sm:$0xf]
    %v496 = vld [vmem:[%s6 + $0x284] sm:$0xf]
    %v497 = vld [vmem:[%s6 + $0x288] sm:$0xf]
    %v498 = vld [vmem:[%s6 + $0x28c] sm:$0xf]
    %v499 = vld [vmem:[%s6 + $0x290] sm:$0xf]
    %v500 = vld [vmem:[%s6 + $0x294] sm:$0xf]
    %v501 = vld [vmem:[%s6 + $0x298] sm:$0xf]
    %v502 = vld [vmem:[%s6 + $0x29c] sm:$0xf]
    %v503 = vld [vmem:[%s6 + $0x2a0] sm:$0xf]
    %v504 = vld [vmem:[%s6 + $0x2a4] sm:$0xf]
    %v505 = vld [vmem:[%s6 + $0x2a8] sm:$0xf]
    %v506 = vld [vmem:[%s6 + $0x2ac] sm:$0xf]
    %v507 = vld [vmem:[%s6 + $0x2b0] sm:$0xf]
    %v508 = vld [vmem:[%s6 + $0x2b4] sm:$0xf]
    %v509 = vld [vmem:[%s6 + $0x2b8] sm:$0xf]
    %v510 = vld [vmem:[%s6 + $0x2bc] sm:$0xf]
    %v511 = vld [vmem:[%s6 + $0x2c0] sm:$0xf]
    %v512 = vld [vmem:[%s6 + $0x2c4] sm:$0xf]
    %v513 = vld [vmem:[%s6 + $0x2c8] sm:$0xf]
    %v514 = vld [vmem:[%s6 + $0x2cc] sm:$0xf]
    %v515 = vld [vmem:[%s6 + $0x2d0] sm:$0xf]
    %v516 = vld [vmem:[%s6 + $0x2d4] sm:$0xf]
    %v517 = vld [vmem:[%s6 + $0x2d8] sm:$0xf]
    %v518 = vld [vmem:[%s6 + $0x2dc] sm:$0xf]
    %v519 = vld [vmem:[%s6 + $0x2e0] sm:$0xf]
    %v520 = vld [vmem:[%s6 + $0x2e4] sm:$0xf]
    %v521 = vld [vmem:[%s6 + $0x2e8] sm:$0xf]
    %v522 = vld [vmem:[%s6 + $0x2ec] sm:$0xf]
    %v523 = vld [vmem:[%s6 + $0x2f0] sm:$0xf]
    %v524 = vld [vmem:[%s6 + $0x2f4] sm:$0xf]
    %v525 = vld [vmem:[%s6 + $0x2f8] sm:$0xf]
    %v526 = vld [vmem:[%s6 + $0x2fc] sm:$0xf]
    %v527 = vld [vmem:[%s6 + $0x300] sm:$0xf]
    %v528 = vld [vmem:[%s6 + $0x304] sm:$0xf]
    %v529 = vld [vmem:[%s6 + $0x308] sm:$0xf]
    %v530 = vld [vmem:[%s6 + $0x30c] sm:$0xf]
    %v531 = vld [vmem:[%s6 + $0x310] sm:$0xf]
    %v532 = vld [vmem:[%s6 + $0x314] sm:$0xf]
    %v533 = vld [vmem:[%s6 + $0x318] sm:$0xf]
    %v534 = vld [vmem:[%s6 + $0x31c] sm:$0xf]
    %v535 = vld [vmem:[%s6 + $0x320] sm:$0xf]
    %v536 = vld [vmem:[%s6 + $0x324] sm:$0xf]
    %v537 = vld [vmem:[%s6 + $0x328] sm:$0xf]
    %v538 = vld [vmem:[%s6 + $0x32c] sm:$0xf]
    %v539 = vld [vmem:[%s6 + $0x330] sm:$0xf]
    %v540 = vld [vmem:[%s6 + $0x334] sm:$0xf]
    %v541 = vld [vmem:[%s6 + $0x338] sm:$0xf]
    %v542 = vld [vmem:[%s6 + $0x33c] sm:$0xf]
    %v543 = vld [vmem:[%s6 + $0x340] sm:$0xf]
    %v544 = vld [vmem:[%s6 + $0x344] sm:$0xf]
    %v545 = vld [vmem:[%s6 + $0x348] sm:$0xf]
    %v546 = vld [vmem:[%s6 + $0x34c] sm:$0xf]
    %v547 = vld [vmem:[%s6 + $0x350] sm:$0xf]
    %v548 = vld [vmem:[%s6 + $0x354] sm:$0xf]
    %v549 = vld [vmem:[%s6 + $0x358] sm:$0xf]
    %v550 = vld [vmem:[%s6 + $0x35c] sm:$0xf]
    %v551 = vld [vmem:[%s6 + $0x360] sm:$0xf]
    %v552 = vld [vmem:[%s6 + $0x364] sm:$0xf]
    %v553 = vld [vmem:[%s6 + $0x368] sm:$0xf]
    %v554 = vld [vmem:[%s6 + $0x36c] sm:$0xf]
    %v555 = vld [vmem:[%s6 + $0x370] sm:$0xf]
    %v556 = vld [vmem:[%s6 + $0x374] sm:$0xf]
    %v557 = vld [vmem:[%s6 + $0x378] sm:$0xf]
    %v558 = vld [vmem:[%s6 + $0x37c] sm:$0xf]
    %v559 = vld [vmem:[%s6 + $0x380] sm:$0xf]
    %v560 = vld [vmem:[%s6 + $0x384] sm:$0xf]
    %v561 = vld [vmem:[%s6 + $0x388] sm:$0xf]
    %v562 = vld [vmem:[%s6 + $0x38c] sm:$0xf]
    %v563 = vld [vmem:[%s6 + $0x390] sm:$0xf]
    %v564 = vld [vmem:[%s6 + $0x394] sm:$0xf]
    %v565 = vld [vmem:[%s6 + $0x398] sm:$0xf]
    %v566 = vld [vmem:[%s6 + $0x39c] sm:$0xf]
    %v567 = vld [vmem:[%s6 + $0x3a0] sm:$0xf]
    %v568 = vld [vmem:[%s6 + $0x3a4] sm:$0xf]
    %v569 = vld [vmem:[%s6 + $0x3a8] sm:$0xf]
    %v570 = vld [vmem:[%s6 + $0x3ac] sm:$0xf]
    %v571 = vld [vmem:[%s6 + $0x3b0] sm:$0xf]
    %v572 = vld [vmem:[%s6 + $0x3b4] sm:$0xf]
    %v573 = vld [vmem:[%s6 + $0x3b8] sm:$0xf]
    %v574 = vld [vmem:[%s6 + $0x3bc] sm:$0xf]
    %v575 = vld [vmem:[%s6 + $0x3c0] sm:$0xf]
    %v576 = vld [vmem:[%s6 + $0x3c4] sm:$0xf]
    %v577 = vld [vmem:[%s6 + $0x3c8] sm:$0xf]
    %v578 = vld [vmem:[%s6 + $0x3cc] sm:$0xf]
    %v579 = vld [vmem:[%s6 + $0x3d0] sm:$0xf]
    %v580 = vld [vmem:[%s6 + $0x3d4] sm:$0xf]
    %v581 = vld [vmem:[%s6 + $0x3d8] sm:$0xf]
    %v582 = vld [vmem:[%s6 + $0x3dc] sm:$0xf]
    %v583 = vld [vmem:[%s6 + $0x3e0] sm:$0xf]
    %v584 = vld [vmem:[%s6 + $0x3e4] sm:$0xf]
    %v585 = vld [vmem:[%s6 + $0x3e8] sm:$0xf]
    %v586 = vld [vmem:[%s6 + $0x3ec] sm:$0xf]
    %v587 = vld [vmem:[%s6 + $0x3f0] sm:$0xf]
    %v588 = vld [vmem:[%s6 + $0x3f4] sm:$0xf]
    %v589 = vld [vmem:[%s6 + $0x3f8] sm:$0xf]
    %v590 = vld [vmem:[%s6 + $0x3fc] sm:$0xf]
    %v591 = vld [vmem:[%s6 + $0x400] sm:$0xf]
    %v592 = vld [vmem:[%s6 + $0x404] sm:$0xf]
    %v593 = vld [vmem:[%s6 + $0x408] sm:$0xf]
    %v594 = vld [vmem:[%s6 + $0x40c] sm:$0xf]
    %v595 = vld [vmem:[%s6 + $0x410] sm:$0xf]
    %v596 = vld [vmem:[%s6 + $0x414] sm:$0xf]
    %v597 = vld [vmem:[%s6 + $0x418] sm:$0xf]
    %v598 = vld [vmem:[%s6 + $0x41c] sm:$0xf]
    %v599 = vld [vmem:[%s6 + $0x420] sm:$0xf]
    %v600 = vld [vmem:[%s6 + $0x424] sm:$0xf]
    %v601 = vld [vmem:[%s6 + $0x428] sm:$0xf]
    %v602 = vld [vmem:[%s6 + $0x42c] sm:$0xf]
    %v603 = vld [vmem:[%s6 + $0x430] sm:$0xf]
    %v604 = vld [vmem:[%s6 + $0x434] sm:$0xf]
    %v605 = vld [vmem:[%s6 + $0x438] sm:$0xf]
    %v606 = vld [vmem:[%s6 + $0x43c] sm:$0xf]
    %v607 = vld [vmem:[%s6 + $0x440] sm:$0xf]
    %v608 = vld [vmem:[%s6 + $0x444] sm:$0x1]
    %v883 = vunpack.c.l.b16 %v335
    %v884 = vunpack.c.l.b16 %v336
    %v885 = vunpack.c.l.b16 %v337
    %v886 = vunpack.c.l.b16 %v338
    %v887 = vunpack.c.l.b16 %v339
    %v888 = vunpack.c.l.b16 %v340
    %v889 = vunpack.c.l.b16 %v341
    %v890 = vunpack.c.l.b16 %v342
    %v891 = vunpack.c.l.b16 %v343
    %v892 = vunpack.c.l.b16 %v344
    %v893 = vunpack.c.l.b16 %v345
    %v894 = vunpack.c.l.b16 %v346
    %v895 = vunpack.c.l.b16 %v347
    %v896 = vunpack.c.l.b16 %v348
    %v897 = vunpack.c.l.b16 %v349
    %v898 = vunpack.c.l.b16 %v350
    %v899 = vunpack.c.l.b16 %v351
    %v900 = vunpack.c.l.b16 %v352
    %v901 = vunpack.c.l.b16 %v353
    %v902 = vunpack.c.l.b16 %v354
    %v903 = vunpack.c.l.b16 %v355
    %v904 = vunpack.c.l.b16 %v356
    %v905 = vunpack.c.l.b16 %v357
    %v906 = vunpack.c.l.b16 %v358
    %v907 = vunpack.c.l.b16 %v359
    %v908 = vunpack.c.l.b16 %v360
    %v909 = vunpack.c.l.b16 %v361
    %v910 = vunpack.c.l.b16 %v362
    %v911 = vunpack.c.l.b16 %v363
    %v912 = vunpack.c.l.b16 %v364
    %v913 = vunpack.c.l.b16 %v365
    %v914 = vunpack.c.l.b16 %v366
    %v915 = vunpack.c.l.b16 %v367
    %v916 = vunpack.c.l.b16 %v368
    %v917 = vunpack.c.l.b16 %v369
    %v918 = vunpack.c.l.b16 %v370
    %v919 = vunpack.c.l.b16 %v371
    %v920 = vunpack.c.l.b16 %v372
    %v921 = vunpack.c.l.b16 %v373
    %v922 = vunpack.c.l.b16 %v374
    %v923 = vunpack.c.l.b16 %v375
    %v924 = vunpack.c.l.b16 %v376
    %v925 = vunpack.c.l.b16 %v377
    %v926 = vunpack.c.l.b16 %v378
    %v927 = vunpack.c.l.b16 %v379
    %v928 = vunpack.c.l.b16 %v380
    %v929 = vunpack.c.l.b16 %v381
    %v930 = vunpack.c.l.b16 %v382
    %v931 = vunpack.c.l.b16 %v383
    %v932 = vunpack.c.l.b16 %v384
    %v933 = vunpack.c.l.b16 %v385
    %v934 = vunpack.c.l.b16 %v386
    %v935 = vunpack.c.l.b16 %v387
    %v936 = vunpack.c.l.b16 %v388
    %v937 = vunpack.c.l.b16 %v389
    %v938 = vunpack.c.l.b16 %v390
    %v939 = vunpack.c.l.b16 %v391
    %v940 = vunpack.c.l.b16 %v392
    %v941 = vunpack.c.l.b16 %v393
    %v942 = vunpack.c.l.b16 %v394
    %v943 = vunpack.c.l.b16 %v395
    %v944 = vunpack.c.l.b16 %v396
    %v945 = vunpack.c.l.b16 %v397
    %v946 = vunpack.c.l.b16 %v398
    %v947 = vunpack.c.l.b16 %v399
    %v948 = vunpack.c.l.b16 %v400
    %v949 = vunpack.c.l.b16 %v401
    %v950 = vunpack.c.l.b16 %v402
    %v951 = vunpack.c.l.b16 %v403
    %v952 = vunpack.c.l.b16 %v404
    %v953 = vunpack.c.l.b16 %v405
    %v954 = vunpack.c.l.b16 %v406
    %v955 = vunpack.c.l.b16 %v407
    %v956 = vunpack.c.l.b16 %v408
    %v957 = vunpack.c.l.b16 %v409
    %v958 = vunpack.c.l.b16 %v410
    %v959 = vunpack.c.l.b16 %v411
    %v960 = vunpack.c.l.b16 %v412
    %v961 = vunpack.c.l.b16 %v413
    %v962 = vunpack.c.l.b16 %v414
    %v963 = vunpack.c.l.b16 %v415
    %v964 = vunpack.c.l.b16 %v416
    %v965 = vunpack.c.l.b16 %v417
    %v966 = vunpack.c.l.b16 %v418
    %v967 = vunpack.c.l.b16 %v419
    %v968 = vunpack.c.l.b16 %v420
    %v969 = vunpack.c.l.b16 %v421
    %v970 = vunpack.c.l.b16 %v422
    %v971 = vunpack.c.l.b16 %v423
    %v972 = vunpack.c.l.b16 %v424
    %v973 = vunpack.c.l.b16 %v425
    %v974 = vunpack.c.l.b16 %v426
    %v975 = vunpack.c.l.b16 %v427
    %v976 = vunpack.c.l.b16 %v428
    %v977 = vunpack.c.l.b16 %v429
    %v978 = vunpack.c.l.b16 %v430
    %v979 = vunpack.c.l.b16 %v431
    %v980 = vunpack.c.l.b16 %v432
    %v981 = vunpack.c.l.b16 %v433
    %v982 = vunpack.c.l.b16 %v434
    %v983 = vunpack.c.l.b16 %v435
    %v984 = vunpack.c.l.b16 %v436
    %v985 = vunpack.c.l.b16 %v437
    %v986 = vunpack.c.l.b16 %v438
    %v987 = vunpack.c.l.b16 %v439
    %v988 = vunpack.c.l.b16 %v440
    %v989 = vunpack.c.l.b16 %v441
    %v990 = vunpack.c.l.b16 %v442
    %v991 = vunpack.c.l.b16 %v443
    %v992 = vunpack.c.l.b16 %v444
    %v993 = vunpack.c.l.b16 %v445
    %v994 = vunpack.c.l.b16 %v446
    %v995 = vunpack.c.l.b16 %v447
    %v996 = vunpack.c.l.b16 %v448
    %v997 = vunpack.c.l.b16 %v449
    %v998 = vunpack.c.l.b16 %v450
    %v999 = vunpack.c.l.b16 %v451
    %v1000 = vunpack.c.l.b16 %v452
    %v1001 = vunpack.c.l.b16 %v453
    %v1002 = vunpack.c.l.b16 %v454
    %v1003 = vunpack.c.l.b16 %v455
    %v1004 = vunpack.c.l.b16 %v456
    %v1005 = vunpack.c.l.b16 %v457
    %v1006 = vunpack.c.l.b16 %v458
    %v1007 = vunpack.c.l.b16 %v459
    %v1008 = vunpack.c.l.b16 %v460
    %v1009 = vunpack.c.l.b16 %v461
    %v1010 = vunpack.c.l.b16 %v462
    %v1011 = vunpack.c.l.b16 %v463
    %v1012 = vunpack.c.l.b16 %v464
    %v1013 = vunpack.c.l.b16 %v465
    %v1014 = vunpack.c.l.b16 %v466
    %v1015 = vunpack.c.l.b16 %v467
    %v1016 = vunpack.c.l.b16 %v468
    %v1017 = vunpack.c.l.b16 %v469
    %v1018 = vunpack.c.l.b16 %v470
    %v1019 = vunpack.c.l.b16 %v471
    %v1020 = vunpack.c.l.b16 %v472
    %v1021 = vunpack.c.l.b16 %v473
    %v1022 = vunpack.c.l.b16 %v474
    %v1023 = vunpack.c.l.b16 %v475
    %v1024 = vunpack.c.l.b16 %v476
    %v1025 = vunpack.c.l.b16 %v477
    %v1026 = vunpack.c.l.b16 %v478
    %v1027 = vunpack.c.l.b16 %v479
    %v1028 = vunpack.c.l.b16 %v480
    %v1029 = vunpack.c.l.b16 %v481
    %v1030 = vunpack.c.l.b16 %v482
    %v1031 = vunpack.c.l.b16 %v483
    %v1032 = vunpack.c.l.b16 %v484
    %v1033 = vunpack.c.l.b16 %v485
    %v1034 = vunpack.c.l.b16 %v486
    %v1035 = vunpack.c.l.b16 %v487
    %v1036 = vunpack.c.l.b16 %v488
    %v1037 = vunpack.c.l.b16 %v489
    %v1038 = vunpack.c.l.b16 %v490
    %v1039 = vunpack.c.l.b16 %v491
    %v1040 = vunpack.c.l.b16 %v492
    %v1041 = vunpack.c.l.b16 %v493
    %v1042 = vunpack.c.l.b16 %v494
    %v1043 = vunpack.c.l.b16 %v495
    %v1044 = vunpack.c.l.b16 %v496
    %v1045 = vunpack.c.l.b16 %v497
    %v1046 = vunpack.c.l.b16 %v498
    %v1047 = vunpack.c.l.b16 %v499
    %v1048 = vunpack.c.l.b16 %v500
    %v1049 = vunpack.c.l.b16 %v501
    %v1050 = vunpack.c.l.b16 %v502
    %v1051 = vunpack.c.l.b16 %v503
    %v1052 = vunpack.c.l.b16 %v504
    %v1053 = vunpack.c.l.b16 %v505
    %v1054 = vunpack.c.l.b16 %v506
    %v1055 = vunpack.c.l.b16 %v507
    %v1056 = vunpack.c.l.b16 %v508
    %v1057 = vunpack.c.l.b16 %v509
    %v1058 = vunpack.c.l.b16 %v510
    %v1059 = vunpack.c.l.b16 %v511
    %v1060 = vunpack.c.l.b16 %v512
    %v1061 = vunpack.c.l.b16 %v513
    %v1062 = vunpack.c.l.b16 %v514
    %v1063 = vunpack.c.l.b16 %v515
    %v1064 = vunpack.c.l.b16 %v516
    %v1065 = vunpack.c.l.b16 %v517
    %v1066 = vunpack.c.l.b16 %v518
    %v1067 = vunpack.c.l.b16 %v519
    %v1068 = vunpack.c.l.b16 %v520
    %v1069 = vunpack.c.l.b16 %v521
    %v1070 = vunpack.c.l.b16 %v522
    %v1071 = vunpack.c.l.b16 %v523
    %v1072 = vunpack.c.l.b16 %v524
    %v1073 = vunpack.c.l.b16 %v525
    %v1074 = vunpack.c.l.b16 %v526
    %v1075 = vunpack.c.l.b16 %v527
    %v1076 = vunpack.c.l.b16 %v528
    %v1077 = vunpack.c.l.b16 %v529
    %v1078 = vunpack.c.l.b16 %v530
    %v1079 = vunpack.c.l.b16 %v531
    %v1080 = vunpack.c.l.b16 %v532
    %v1081 = vunpack.c.l.b16 %v533
    %v1082 = vunpack.c.l.b16 %v534
    %v1083 = vunpack.c.l.b16 %v535
    %v1084 = vunpack.c.l.b16 %v536
    %v1085 = vunpack.c.l.b16 %v537
    %v1086 = vunpack.c.l.b16 %v538
    %v1087 = vunpack.c.l.b16 %v539
    %v1088 = vunpack.c.l.b16 %v540
    %v1089 = vunpack.c.l.b16 %v541
    %v1090 = vunpack.c.l.b16 %v542
    %v1091 = vunpack.c.l.b16 %v543
    %v1092 = vunpack.c.l.b16 %v544
    %v1093 = vunpack.c.l.b16 %v545
    %v1094 = vunpack.c.l.b16 %v546
    %v1095 = vunpack.c.l.b16 %v547
    %v1096 = vunpack.c.l.b16 %v548
    %v1097 = vunpack.c.l.b16 %v549
    %v1098 = vunpack.c.l.b16 %v550
    %v1099 = vunpack.c.l.b16 %v551
    %v1100 = vunpack.c.l.b16 %v552
    %v1101 = vunpack.c.l.b16 %v553
    %v1102 = vunpack.c.l.b16 %v554
    %v1103 = vunpack.c.l.b16 %v555
    %v1104 = vunpack.c.l.b16 %v556
    %v1105 = vunpack.c.l.b16 %v557
    %v1106 = vunpack.c.l.b16 %v558
    %v1107 = vunpack.c.l.b16 %v559
    %v1108 = vunpack.c.l.b16 %v560
    %v1109 = vunpack.c.l.b16 %v561
    %v1110 = vunpack.c.l.b16 %v562
    %v1111 = vunpack.c.l.b16 %v563
    %v1112 = vunpack.c.l.b16 %v564
    %v1113 = vunpack.c.l.b16 %v565
    %v1114 = vunpack.c.l.b16 %v566
    %v1115 = vunpack.c.l.b16 %v567
    %v1116 = vunpack.c.l.b16 %v568
    %v1117 = vunpack.c.l.b16 %v569
    %v1118 = vunpack.c.l.b16 %v570
    %v1119 = vunpack.c.l.b16 %v571
    %v1120 = vunpack.c.l.b16 %v572
    %v1121 = vunpack.c.l.b16 %v573
    %v1122 = vunpack.c.l.b16 %v574
    %v1123 = vunpack.c.l.b16 %v575
    %v1124 = vunpack.c.l.b16 %v576
    %v1125 = vunpack.c.l.b16 %v577
    %v1126 = vunpack.c.l.b16 %v578
    %v1127 = vunpack.c.l.b16 %v579
    %v1128 = vunpack.c.l.b16 %v580
    %v1129 = vunpack.c.l.b16 %v581
    %v1130 = vunpack.c.l.b16 %v582
    %v1131 = vunpack.c.l.b16 %v583
    %v1132 = vunpack.c.l.b16 %v584
    %v1133 = vunpack.c.l.b16 %v585
    %v1134 = vunpack.c.l.b16 %v586
    %v1135 = vunpack.c.l.b16 %v587
    %v1136 = vunpack.c.l.b16 %v588
    %v1137 = vunpack.c.l.b16 %v589
    %v1138 = vunpack.c.l.b16 %v590
    %v1139 = vunpack.c.l.b16 %v591
    %v1140 = vunpack.c.l.b16 %v592
    %v1141 = vunpack.c.l.b16 %v593
    %v1142 = vunpack.c.l.b16 %v594
    %v1143 = vunpack.c.l.b16 %v595
    %v1144 = vunpack.c.l.b16 %v596
    %v1145 = vunpack.c.l.b16 %v597
    %v1146 = vunpack.c.l.b16 %v598
    %v1147 = vunpack.c.l.b16 %v599
    %v1148 = vunpack.c.l.b16 %v600
    %v1149 = vunpack.c.l.b16 %v601
    %v1150 = vunpack.c.l.b16 %v602
    %v1151 = vunpack.c.l.b16 %v603
    %v1152 = vunpack.c.l.b16 %v604
    %v1153 = vunpack.c.l.b16 %v605
    %v1154 = vunpack.c.l.b16 %v606
    %v1155 = vunpack.c.l.b16 %v607
    %v1156 = vunpack.c.l.b16 %v608
    %v1157 = vpack.c.b16 %v884, %v883
    %v1158 = vpack.c.b16 %v886, %v885
    %v1159 = vpack.c.b16 %v888, %v887
    %v1160 = vpack.c.b16 %v890, %v889
    %v1161 = vpack.c.b16 %v892, %v891
    %v1162 = vpack.c.b16 %v894, %v893
    %v1163 = vpack.c.b16 %v896, %v895
    %v1164 = vpack.c.b16 %v898, %v897
    %v1165 = vpack.c.b16 %v900, %v899
    %v1166 = vpack.c.b16 %v902, %v901
    %v1167 = vpack.c.b16 %v904, %v903
    %v1168 = vpack.c.b16 %v906, %v905
    %v1169 = vpack.c.b16 %v908, %v907
    %v1170 = vpack.c.b16 %v910, %v909
    %v1171 = vpack.c.b16 %v912, %v911
    %v1172 = vpack.c.b16 %v914, %v913
    %v1173 = vpack.c.b16 %v916, %v915
    %v1174 = vpack.c.b16 %v918, %v917
    %v1175 = vpack.c.b16 %v920, %v919
    %v1176 = vpack.c.b16 %v922, %v921
    %v1177 = vpack.c.b16 %v924, %v923
    %v1178 = vpack.c.b16 %v926, %v925
    %v1179 = vpack.c.b16 %v928, %v927
    %v1180 = vpack.c.b16 %v930, %v929
    %v1181 = vpack.c.b16 %v932, %v931
    %v1182 = vpack.c.b16 %v934, %v933
    %v1183 = vpack.c.b16 %v936, %v935
    %v1184 = vpack.c.b16 %v938, %v937
    %v1185 = vpack.c.b16 %v940, %v939
    %v1186 = vpack.c.b16 %v942, %v941
    %v1187 = vpack.c.b16 %v944, %v943
    %v1188 = vpack.c.b16 %v946, %v945
    %v1189 = vpack.c.b16 %v948, %v947
    %v1190 = vpack.c.b16 %v950, %v949
    %v1191 = vpack.c.b16 %v952, %v951
    %v1192 = vpack.c.b16 %v954, %v953
    %v1193 = vpack.c.b16 %v956, %v955
    %v1194 = vpack.c.b16 %v958, %v957
    %v1195 = vpack.c.b16 %v960, %v959
    %v1196 = vpack.c.b16 %v962, %v961
    %v1197 = vpack.c.b16 %v964, %v963
    %v1198 = vpack.c.b16 %v966, %v965
    %v1199 = vpack.c.b16 %v968, %v967
    %v1200 = vpack.c.b16 %v970, %v969
    %v1201 = vpack.c.b16 %v972, %v971
    %v1202 = vpack.c.b16 %v974, %v973
    %v1203 = vpack.c.b16 %v976, %v975
    %v1204 = vpack.c.b16 %v978, %v977
    %v1205 = vpack.c.b16 %v980, %v979
    %v1206 = vpack.c.b16 %v982, %v981
    %v1207 = vpack.c.b16 %v984, %v983
    %v1208 = vpack.c.b16 %v986, %v985
    %v1209 = vpack.c.b16 %v988, %v987
    %v1210 = vpack.c.b16 %v990, %v989
    %v1211 = vpack.c.b16 %v992, %v991
    %v1212 = vpack.c.b16 %v994, %v993
    %v1213 = vpack.c.b16 %v996, %v995
    %v1214 = vpack.c.b16 %v998, %v997
    %v1215 = vpack.c.b16 %v1000, %v999
    %v1216 = vpack.c.b16 %v1002, %v1001
    %v1217 = vpack.c.b16 %v1004, %v1003
    %v1218 = vpack.c.b16 %v1006, %v1005
    %v1219 = vpack.c.b16 %v1008, %v1007
    %v1220 = vpack.c.b16 %v1010, %v1009
    %v1221 = vpack.c.b16 %v1012, %v1011
    %v1222 = vpack.c.b16 %v1014, %v1013
    %v1223 = vpack.c.b16 %v1016, %v1015
    %v1224 = vpack.c.b16 %v1018, %v1017
    %v1225 = vpack.c.b16 %v1020, %v1019
    %v1226 = vpack.c.b16 %v1022, %v1021
    %v1227 = vpack.c.b16 %v1024, %v1023
    %v1228 = vpack.c.b16 %v1026, %v1025
    %v1229 = vpack.c.b16 %v1028, %v1027
    %v1230 = vpack.c.b16 %v1030, %v1029
    %v1231 = vpack.c.b16 %v1032, %v1031
    %v1232 = vpack.c.b16 %v1034, %v1033
    %v1233 = vpack.c.b16 %v1036, %v1035
    %v1234 = vpack.c.b16 %v1038, %v1037
    %v1235 = vpack.c.b16 %v1040, %v1039
    %v1236 = vpack.c.b16 %v1042, %v1041
    %v1237 = vpack.c.b16 %v1044, %v1043
    %v1238 = vpack.c.b16 %v1046, %v1045
    %v1239 = vpack.c.b16 %v1048, %v1047
    %v1240 = vpack.c.b16 %v1050, %v1049
    %v1241 = vpack.c.b16 %v1052, %v1051
    %v1242 = vpack.c.b16 %v1054, %v1053
    %v1243 = vpack.c.b16 %v1056, %v1055
    %v1244 = vpack.c.b16 %v1058, %v1057
    %v1245 = vpack.c.b16 %v1060, %v1059
    %v1246 = vpack.c.b16 %v1062, %v1061
    %v1247 = vpack.c.b16 %v1064, %v1063
    %v1248 = vpack.c.b16 %v1066, %v1065
    %v1249 = vpack.c.b16 %v1068, %v1067
    %v1250 = vpack.c.b16 %v1070, %v1069
    %v1251 = vpack.c.b16 %v1072, %v1071
    %v1252 = vpack.c.b16 %v1074, %v1073
    %v1253 = vpack.c.b16 %v1076, %v1075
    %v1254 = vpack.c.b16 %v1078, %v1077
    %v1255 = vpack.c.b16 %v1080, %v1079
    %v1256 = vpack.c.b16 %v1082, %v1081
    %v1257 = vpack.c.b16 %v1084, %v1083
    %v1258 = vpack.c.b16 %v1086, %v1085
    %v1259 = vpack.c.b16 %v1088, %v1087
    %v1260 = vpack.c.b16 %v1090, %v1089
    %v1261 = vpack.c.b16 %v1092, %v1091
    %v1262 = vpack.c.b16 %v1094, %v1093
    %v1263 = vpack.c.b16 %v1096, %v1095
    %v1264 = vpack.c.b16 %v1098, %v1097
    %v1265 = vpack.c.b16 %v1100, %v1099
    %v1266 = vpack.c.b16 %v1102, %v1101
    %v1267 = vpack.c.b16 %v1104, %v1103
    %v1268 = vpack.c.b16 %v1106, %v1105
    %v1269 = vpack.c.b16 %v1108, %v1107
    %v1270 = vpack.c.b16 %v1110, %v1109
    %v1271 = vpack.c.b16 %v1112, %v1111
    %v1272 = vpack.c.b16 %v1114, %v1113
    %v1273 = vpack.c.b16 %v1116, %v1115
    %v1274 = vpack.c.b16 %v1118, %v1117
    %v1275 = vpack.c.b16 %v1120, %v1119
    %v1276 = vpack.c.b16 %v1122, %v1121
    %v1277 = vpack.c.b16 %v1124, %v1123
    %v1278 = vpack.c.b16 %v1126, %v1125
    %v1279 = vpack.c.b16 %v1128, %v1127
    %v1280 = vpack.c.b16 %v1130, %v1129
    %v1281 = vpack.c.b16 %v1132, %v1131
    %v1282 = vpack.c.b16 %v1134, %v1133
    %v1283 = vpack.c.b16 %v1136, %v1135
    %v1284 = vpack.c.b16 %v1138, %v1137
    %v1285 = vpack.c.b16 %v1140, %v1139
    %v1286 = vpack.c.b16 %v1142, %v1141
    %v1287 = vpack.c.b16 %v1144, %v1143
    %v1288 = vpack.c.b16 %v1146, %v1145
    %v1289 = vpack.c.b16 %v1148, %v1147
    %v1290 = vpack.c.b16 %v1150, %v1149
    %v1291 = vpack.c.b16 %v1152, %v1151
    %v1292 = vpack.c.b16 %v1154, %v1153
    %v1293 = vpack.c.b16 %v1156, %v1155
    %vm1430 = vcmask 80896
    %v1432 = vsel %vm1430, %v316, 0
    %v1435 = vsel %vm1430, %v334, 0
    %v1438 = vsel %vm88, %v1293, 0
    %1440 = vmatprep.subr.bf16.mxu0 0
    %1441 = vmatpush1.bf16.msra.mxu0 %v1164
    %1442 = vmatprep.subr.bf16.mxu0 0
    %1443 = vmatpush1.bf16.msra.mxu0 %v1163
    %1444 = vmatprep.subr.bf16.mxu0 0
    %1445 = vmatpush1.bf16.msra.mxu0 %v1162
    %1446 = vmatprep.subr.bf16.mxu0 0
    %1447 = vmatpush1.bf16.msra.mxu0 %v1161
    %1448 = vmatprep.subr.bf16.mxu0 0
    %1449 = vmatpush1.bf16.msra.mxu0 %v1160
    %1450 = vmatprep.subr.bf16.mxu0 0
    %1451 = vmatpush1.bf16.msra.mxu0 %v1159
    %1452 = vmatprep.subr.bf16.mxu0 0
    %1453 = vmatpush1.bf16.msra.mxu0 %v1158
    %1454 = vmatprep.subr.bf16.mxu0 0
    %1455 = vmatpush1.bf16.msra.mxu0 %v1157
    %1456 = vmatprep.subr.bf16.mxu0 0
    %1457 = vmatpush2.bf16.msra.mxu0 %v1172
    %1458 = vmatprep.subr.bf16.mxu0 0
    %1459 = vmatpush2.bf16.msra.mxu0 %v1171
    %1460 = vmatprep.subr.bf16.mxu0 0
    %1461 = vmatpush2.bf16.msra.mxu0 %v1170
    %1462 = vmatprep.subr.bf16.mxu0 0
    %1463 = vmatpush2.bf16.msra.mxu0 %v1169
    %1464 = vmatprep.subr.bf16.mxu0 0
    %1465 = vmatpush2.bf16.msra.mxu0 %v1168
    %1466 = vmatprep.subr.bf16.mxu0 0
    %1467 = vmatpush2.bf16.msra.mxu0 %v1167
    %1468 = vmatprep.subr.bf16.mxu0 0
    %1469 = vmatpush2.bf16.msra.mxu0 %v1166
    %1470 = vmatprep.subr.bf16.mxu0 0
    %1471 = vmatpush2.bf16.msra.mxu0 %v1165
    %1472 = vmatprep.mubr.bf16.mxu0 %v300
    %1473 = vmatmul.mubr.bf16.gmra.mxu0 %v299
    %v1474 = vpop.f32.mrf.mxu0
    %v1475 = vadd.f32 0.0, %v1474
    %v1476 = vpop.f32.mrf.mxu0
    %v1477 = vpop.f32.mrf.mxu0
    %v1478 = vadd.f32 0.0, %v1477
    %v1479 = vpop.f32.mrf.mxu0
    %1480 = vmatprep.mubr.bf16.mxu0 %v318
    %1481 = vmatmul.mubr.bf16.gmra.mxu0 %v317
    %v1482 = vpop.f32.mrf.mxu0
    %v1483 = vadd.f32 0.0, %v1482
    %v1484 = vpop.f32.mrf.mxu0
    %v1485 = vpop.f32.mrf.mxu0
    %v1486 = vadd.f32 0.0, %v1485
    %v1487 = vpop.f32.mrf.mxu0
    %1488 = vdwg.mxu0
    %1489 = vmatprep.subr.bf16.mxu0 0
    %1490 = vmatpush1.bf16.msra.mxu0 %v1180
    %1491 = vmatprep.subr.bf16.mxu0 0
    %1492 = vmatpush1.bf16.msra.mxu0 %v1179
    %1493 = vmatprep.subr.bf16.mxu0 0
    %1494 = vmatpush1.bf16.msra.mxu0 %v1178
    %1495 = vmatprep.subr.bf16.mxu0 0
    %1496 = vmatpush1.bf16.msra.mxu0 %v1177
    %1497 = vmatprep.subr.bf16.mxu0 0
    %1498 = vmatpush1.bf16.msra.mxu0 %v1176
    %1499 = vmatprep.subr.bf16.mxu0 0
    %1500 = vmatpush1.bf16.msra.mxu0 %v1175
    %1501 = vmatprep.subr.bf16.mxu0 0
    %1502 = vmatpush1.bf16.msra.mxu0 %v1174
    %1503 = vmatprep.subr.bf16.mxu0 0
    %1504 = vmatpush1.bf16.msra.mxu0 %v1173
    %1505 = vmatprep.subr.bf16.mxu0 0
    %1506 = vmatpush2.bf16.msra.mxu0 %v1188
    %1507 = vmatprep.subr.bf16.mxu0 0
    %1508 = vmatpush2.bf16.msra.mxu0 %v1187
    %1509 = vmatprep.subr.bf16.mxu0 0
    %1510 = vmatpush2.bf16.msra.mxu0 %v1186
    %1511 = vmatprep.subr.bf16.mxu0 0
    %1512 = vmatpush2.bf16.msra.mxu0 %v1185
    %1513 = vmatprep.subr.bf16.mxu0 0
    %1514 = vmatpush2.bf16.msra.mxu0 %v1184
    %1515 = vmatprep.subr.bf16.mxu0 0
    %1516 = vmatpush2.bf16.msra.mxu0 %v1183
    %1517 = vmatprep.subr.bf16.mxu0 0
    %1518 = vmatpush2.bf16.msra.mxu0 %v1182
    %1519 = vmatprep.subr.bf16.mxu0 0
    %1520 = vmatpush2.bf16.msra.mxu0 %v1181
    %1521 = vmatprep.mubr.bf16.mxu0 %v302
    %1522 = vmatmul.mubr.bf16.gmra.mxu0 %v301
    %v1523 = vpop.f32.mrf.mxu0
    %v1524 = vadd.f32 %v1475, %v1523
    %v1525 = vpop.f32.mrf.mxu0
    %v1526 = vpop.f32.mrf.mxu0
    %v1527 = vadd.f32 %v1478, %v1526
    %v1528 = vpop.f32.mrf.mxu0
    %1529 = vmatprep.mubr.bf16.mxu0 %v320
    %1530 = vmatmul.mubr.bf16.gmra.mxu0 %v319
    %v1531 = vpop.f32.mrf.mxu0
    %v1532 = vadd.f32 %v1483, %v1531
    %v1533 = vpop.f32.mrf.mxu0
    %v1534 = vpop.f32.mrf.mxu0
    %v1535 = vadd.f32 %v1486, %v1534
    %v1536 = vpop.f32.mrf.mxu0
    %1537 = vdwg.mxu0
    %1538 = vmatprep.subr.bf16.mxu0 0
    %1539 = vmatpush1.bf16.msra.mxu0 %v1196
    %1540 = vmatprep.subr.bf16.mxu0 0
    %1541 = vmatpush1.bf16.msra.mxu0 %v1195
    %1542 = vmatprep.subr.bf16.mxu0 0
    %1543 = vmatpush1.bf16.msra.mxu0 %v1194
    %1544 = vmatprep.subr.bf16.mxu0 0
    %1545 = vmatpush1.bf16.msra.mxu0 %v1193
    %1546 = vmatprep.subr.bf16.mxu0 0
    %1547 = vmatpush1.bf16.msra.mxu0 %v1192
    %1548 = vmatprep.subr.bf16.mxu0 0
    %1549 = vmatpush1.bf16.msra.mxu0 %v1191
    %1550 = vmatprep.subr.bf16.mxu0 0
    %1551 = vmatpush1.bf16.msra.mxu0 %v1190
    %1552 = vmatprep.subr.bf16.mxu0 0
    %1553 = vmatpush1.bf16.msra.mxu0 %v1189
    %1554 = vmatprep.subr.bf16.mxu0 0
    %1555 = vmatpush2.bf16.msra.mxu0 %v1204
    %1556 = vmatprep.subr.bf16.mxu0 0
    %1557 = vmatpush2.bf16.msra.mxu0 %v1203
    %1558 = vmatprep.subr.bf16.mxu0 0
    %1559 = vmatpush2.bf16.msra.mxu0 %v1202
    %1560 = vmatprep.subr.bf16.mxu0 0
    %1561 = vmatpush2.bf16.msra.mxu0 %v1201
    %1562 = vmatprep.subr.bf16.mxu0 0
    %1563 = vmatpush2.bf16.msra.mxu0 %v1200
    %1564 = vmatprep.subr.bf16.mxu0 0
    %1565 = vmatpush2.bf16.msra.mxu0 %v1199
    %1566 = vmatprep.subr.bf16.mxu0 0
    %1567 = vmatpush2.bf16.msra.mxu0 %v1198
    %1568 = vmatprep.subr.bf16.mxu0 0
    %1569 = vmatpush2.bf16.msra.mxu0 %v1197
    %1570 = vmatprep.mubr.bf16.mxu0 %v304
    %1571 = vmatmul.mubr.bf16.gmra.mxu0 %v303
    %v1572 = vpop.f32.mrf.mxu0
    %v1573 = vadd.f32 %v1524, %v1572
    %v1574 = vpop.f32.mrf.mxu0
    %v1575 = vpop.f32.mrf.mxu0
    %v1576 = vadd.f32 %v1527, %v1575
    %v1577 = vpop.f32.mrf.mxu0
    %1578 = vmatprep.mubr.bf16.mxu0 %v322
    %1579 = vmatmul.mubr.bf16.gmra.mxu0 %v321
    %v1580 = vpop.f32.mrf.mxu0
    %v1581 = vadd.f32 %v1532, %v1580
    %v1582 = vpop.f32.mrf.mxu0
    %v1583 = vpop.f32.mrf.mxu0
    %v1584 = vadd.f32 %v1535, %v1583
    %v1585 = vpop.f32.mrf.mxu0
    %1586 = vdwg.mxu0
    %1587 = vmatprep.subr.bf16.mxu0 0
    %1588 = vmatpush1.bf16.msra.mxu0 %v1212
    %1589 = vmatprep.subr.bf16.mxu0 0
    %1590 = vmatpush1.bf16.msra.mxu0 %v1211
    %1591 = vmatprep.subr.bf16.mxu0 0
    %1592 = vmatpush1.bf16.msra.mxu0 %v1210
    %1593 = vmatprep.subr.bf16.mxu0 0
    %1594 = vmatpush1.bf16.msra.mxu0 %v1209
    %1595 = vmatprep.subr.bf16.mxu0 0
    %1596 = vmatpush1.bf16.msra.mxu0 %v1208
    %1597 = vmatprep.subr.bf16.mxu0 0
    %1598 = vmatpush1.bf16.msra.mxu0 %v1207
    %1599 = vmatprep.subr.bf16.mxu0 0
    %1600 = vmatpush1.bf16.msra.mxu0 %v1206
    %1601 = vmatprep.subr.bf16.mxu0 0
    %1602 = vmatpush1.bf16.msra.mxu0 %v1205
    %1603 = vmatprep.subr.bf16.mxu0 0
    %1604 = vmatpush2.bf16.msra.mxu0 %v1220
    %1605 = vmatprep.subr.bf16.mxu0 0
    %1606 = vmatpush2.bf16.msra.mxu0 %v1219
    %1607 = vmatprep.subr.bf16.mxu0 0
    %1608 = vmatpush2.bf16.msra.mxu0 %v1218
    %1609 = vmatprep.subr.bf16.mxu0 0
    %1610 = vmatpush2.bf16.msra.mxu0 %v1217
    %1611 = vmatprep.subr.bf16.mxu0 0
    %1612 = vmatpush2.bf16.msra.mxu0 %v1216
    %1613 = vmatprep.subr.bf16.mxu0 0
    %1614 = vmatpush2.bf16.msra.mxu0 %v1215
    %1615 = vmatprep.subr.bf16.mxu0 0
    %1616 = vmatpush2.bf16.msra.mxu0 %v1214
    %1617 = vmatprep.subr.bf16.mxu0 0
    %1618 = vmatpush2.bf16.msra.mxu0 %v1213
    %1619 = vmatprep.mubr.bf16.mxu0 %v306
    %1620 = vmatmul.mubr.bf16.gmra.mxu0 %v305
    %v1621 = vpop.f32.mrf.mxu0
    %v1622 = vadd.f32 %v1573, %v1621
    %v1623 = vpop.f32.mrf.mxu0
    %v1624 = vpop.f32.mrf.mxu0
    %v1625 = vadd.f32 %v1576, %v1624
    %v1626 = vpop.f32.mrf.mxu0
    %1627 = vmatprep.mubr.bf16.mxu0 %v324
    %1628 = vmatmul.mubr.bf16.gmra.mxu0 %v323
    %v1629 = vpop.f32.mrf.mxu0
    %v1630 = vadd.f32 %v1581, %v1629
    %v1631 = vpop.f32.mrf.mxu0
    %v1632 = vpop.f32.mrf.mxu0
    %v1633 = vadd.f32 %v1584, %v1632
    %v1634 = vpop.f32.mrf.mxu0
    %1635 = vdwg.mxu0
    %1636 = vmatprep.subr.bf16.mxu0 0
    %1637 = vmatpush1.bf16.msra.mxu0 %v1228
    %1638 = vmatprep.subr.bf16.mxu0 0
    %1639 = vmatpush1.bf16.msra.mxu0 %v1227
    %1640 = vmatprep.subr.bf16.mxu0 0
    %1641 = vmatpush1.bf16.msra.mxu0 %v1226
    %1642 = vmatprep.subr.bf16.mxu0 0
    %1643 = vmatpush1.bf16.msra.mxu0 %v1225
    %1644 = vmatprep.subr.bf16.mxu0 0
    %1645 = vmatpush1.bf16.msra.mxu0 %v1224
    %1646 = vmatprep.subr.bf16.mxu0 0
    %1647 = vmatpush1.bf16.msra.mxu0 %v1223
    %1648 = vmatprep.subr.bf16.mxu0 0
    %1649 = vmatpush1.bf16.msra.mxu0 %v1222
    %1650 = vmatprep.subr.bf16.mxu0 0
    %1651 = vmatpush1.bf16.msra.mxu0 %v1221
    %1652 = vmatprep.subr.bf16.mxu0 0
    %1653 = vmatpush2.bf16.msra.mxu0 %v1236
    %1654 = vmatprep.subr.bf16.mxu0 0
    %1655 = vmatpush2.bf16.msra.mxu0 %v1235
    %1656 = vmatprep.subr.bf16.mxu0 0
    %1657 = vmatpush2.bf16.msra.mxu0 %v1234
    %1658 = vmatprep.subr.bf16.mxu0 0
    %1659 = vmatpush2.bf16.msra.mxu0 %v1233
    %1660 = vmatprep.subr.bf16.mxu0 0
    %1661 = vmatpush2.bf16.msra.mxu0 %v1232
    %1662 = vmatprep.subr.bf16.mxu0 0
    %1663 = vmatpush2.bf16.msra.mxu0 %v1231
    %1664 = vmatprep.subr.bf16.mxu0 0
    %1665 = vmatpush2.bf16.msra.mxu0 %v1230
    %1666 = vmatprep.subr.bf16.mxu0 0
    %1667 = vmatpush2.bf16.msra.mxu0 %v1229
    %1668 = vmatprep.mubr.bf16.mxu0 %v308
    %1669 = vmatmul.mubr.bf16.gmra.mxu0 %v307
    %v1670 = vpop.f32.mrf.mxu0
    %v1671 = vadd.f32 %v1622, %v1670
    %v1672 = vpop.f32.mrf.mxu0
    %v1673 = vpop.f32.mrf.mxu0
    %v1674 = vadd.f32 %v1625, %v1673
    %v1675 = vpop.f32.mrf.mxu0
    %1676 = vmatprep.mubr.bf16.mxu0 %v326
    %1677 = vmatmul.mubr.bf16.gmra.mxu0 %v325
    %v1678 = vpop.f32.mrf.mxu0
    %v1679 = vadd.f32 %v1630, %v1678
    %v1680 = vpop.f32.mrf.mxu0
    %v1681 = vpop.f32.mrf.mxu0
    %v1682 = vadd.f32 %v1633, %v1681
    %v1683 = vpop.f32.mrf.mxu0
    %1684 = vdwg.mxu0
    %1685 = vmatprep.subr.bf16.mxu0 0
    %1686 = vmatpush1.bf16.msra.mxu0 %v1244
    %1687 = vmatprep.subr.bf16.mxu0 0
    %1688 = vmatpush1.bf16.msra.mxu0 %v1243
    %1689 = vmatprep.subr.bf16.mxu0 0
    %1690 = vmatpush1.bf16.msra.mxu0 %v1242
    %1691 = vmatprep.subr.bf16.mxu0 0
    %1692 = vmatpush1.bf16.msra.mxu0 %v1241
    %1693 = vmatprep.subr.bf16.mxu0 0
    %1694 = vmatpush1.bf16.msra.mxu0 %v1240
    %1695 = vmatprep.subr.bf16.mxu0 0
    %1696 = vmatpush1.bf16.msra.mxu0 %v1239
    %1697 = vmatprep.subr.bf16.mxu0 0
    %1698 = vmatpush1.bf16.msra.mxu0 %v1238
    %1699 = vmatprep.subr.bf16.mxu0 0
    %1700 = vmatpush1.bf16.msra.mxu0 %v1237
    %1701 = vmatprep.subr.bf16.mxu0 0
    %1702 = vmatpush2.bf16.msra.mxu0 %v1252
    %1703 = vmatprep.subr.bf16.mxu0 0
    %1704 = vmatpush2.bf16.msra.mxu0 %v1251
    %1705 = vmatprep.subr.bf16.mxu0 0
    %1706 = vmatpush2.bf16.msra.mxu0 %v1250
    %1707 = vmatprep.subr.bf16.mxu0 0
    %1708 = vmatpush2.bf16.msra.mxu0 %v1249
    %1709 = vmatprep.subr.bf16.mxu0 0
    %1710 = vmatpush2.bf16.msra.mxu0 %v1248
    %1711 = vmatprep.subr.bf16.mxu0 0
    %1712 = vmatpush2.bf16.msra.mxu0 %v1247
    %1713 = vmatprep.subr.bf16.mxu0 0
    %1714 = vmatpush2.bf16.msra.mxu0 %v1246
    %1715 = vmatprep.subr.bf16.mxu0 0
    %1716 = vmatpush2.bf16.msra.mxu0 %v1245
    %1717 = vmatprep.mubr.bf16.mxu0 %v310
    %1718 = vmatmul.mubr.bf16.gmra.mxu0 %v309
    %v1719 = vpop.f32.mrf.mxu0
    %v1720 = vadd.f32 %v1671, %v1719
    %v1721 = vpop.f32.mrf.mxu0
    %v1722 = vpop.f32.mrf.mxu0
    %v1723 = vadd.f32 %v1674, %v1722
    %v1724 = vpop.f32.mrf.mxu0
    %1725 = vmatprep.mubr.bf16.mxu0 %v328
    %1726 = vmatmul.mubr.bf16.gmra.mxu0 %v327
    %v1727 = vpop.f32.mrf.mxu0
    %v1728 = vadd.f32 %v1679, %v1727
    %v1729 = vpop.f32.mrf.mxu0
    %v1730 = vpop.f32.mrf.mxu0
    %v1731 = vadd.f32 %v1682, %v1730
    %v1732 = vpop.f32.mrf.mxu0
    %1733 = vdwg.mxu0
    %1734 = vmatprep.subr.bf16.mxu0 0
    %1735 = vmatpush1.bf16.msra.mxu0 %v1260
    %1736 = vmatprep.subr.bf16.mxu0 0
    %1737 = vmatpush1.bf16.msra.mxu0 %v1259
    %1738 = vmatprep.subr.bf16.mxu0 0
    %1739 = vmatpush1.bf16.msra.mxu0 %v1258
    %1740 = vmatprep.subr.bf16.mxu0 0
    %1741 = vmatpush1.bf16.msra.mxu0 %v1257
    %1742 = vmatprep.subr.bf16.mxu0 0
    %1743 = vmatpush1.bf16.msra.mxu0 %v1256
    %1744 = vmatprep.subr.bf16.mxu0 0
    %1745 = vmatpush1.bf16.msra.mxu0 %v1255
    %1746 = vmatprep.subr.bf16.mxu0 0
    %1747 = vmatpush1.bf16.msra.mxu0 %v1254
    %1748 = vmatprep.subr.bf16.mxu0 0
    %1749 = vmatpush1.bf16.msra.mxu0 %v1253
    %1750 = vmatprep.subr.bf16.mxu0 0
    %1751 = vmatpush2.bf16.msra.mxu0 %v1268
    %1752 = vmatprep.subr.bf16.mxu0 0
    %1753 = vmatpush2.bf16.msra.mxu0 %v1267
    %1754 = vmatprep.subr.bf16.mxu0 0
    %1755 = vmatpush2.bf16.msra.mxu0 %v1266
    %1756 = vmatprep.subr.bf16.mxu0 0
    %1757 = vmatpush2.bf16.msra.mxu0 %v1265
    %1758 = vmatprep.subr.bf16.mxu0 0
    %1759 = vmatpush2.bf16.msra.mxu0 %v1264
    %1760 = vmatprep.subr.bf16.mxu0 0
    %1761 = vmatpush2.bf16.msra.mxu0 %v1263
    %1762 = vmatprep.subr.bf16.mxu0 0
    %1763 = vmatpush2.bf16.msra.mxu0 %v1262
    %1764 = vmatprep.subr.bf16.mxu0 0
    %1765 = vmatpush2.bf16.msra.mxu0 %v1261
    %1766 = vmatprep.mubr.bf16.mxu0 %v312
    %1767 = vmatmul.mubr.bf16.gmra.mxu0 %v311
    %v1768 = vpop.f32.mrf.mxu0
    %v1769 = vadd.f32 %v1720, %v1768
    %v1770 = vpop.f32.mrf.mxu0
    %v1771 = vpop.f32.mrf.mxu0
    %v1772 = vadd.f32 %v1723, %v1771
    %v1773 = vpop.f32.mrf.mxu0
    %1774 = vmatprep.mubr.bf16.mxu0 %v330
    %1775 = vmatmul.mubr.bf16.gmra.mxu0 %v329
    %v1776 = vpop.f32.mrf.mxu0
    %v1777 = vadd.f32 %v1728, %v1776
    %v1778 = vpop.f32.mrf.mxu0
    %v1779 = vpop.f32.mrf.mxu0
    %v1780 = vadd.f32 %v1731, %v1779
    %v1781 = vpop.f32.mrf.mxu0
    %1782 = vdwg.mxu0
    %1783 = vmatprep.subr.bf16.mxu0 0
    %1784 = vmatpush1.bf16.msra.mxu0 %v1276
    %1785 = vmatprep.subr.bf16.mxu0 0
    %1786 = vmatpush1.bf16.msra.mxu0 %v1275
    %1787 = vmatprep.subr.bf16.mxu0 0
    %1788 = vmatpush1.bf16.msra.mxu0 %v1274
    %1789 = vmatprep.subr.bf16.mxu0 0
    %1790 = vmatpush1.bf16.msra.mxu0 %v1273
    %1791 = vmatprep.subr.bf16.mxu0 0
    %1792 = vmatpush1.bf16.msra.mxu0 %v1272
    %1793 = vmatprep.subr.bf16.mxu0 0
    %1794 = vmatpush1.bf16.msra.mxu0 %v1271
    %1795 = vmatprep.subr.bf16.mxu0 0
    %1796 = vmatpush1.bf16.msra.mxu0 %v1270
    %1797 = vmatprep.subr.bf16.mxu0 0
    %1798 = vmatpush1.bf16.msra.mxu0 %v1269
    %1799 = vmatprep.subr.bf16.mxu0 0
    %1800 = vmatpush2.bf16.msra.mxu0 %v1284
    %1801 = vmatprep.subr.bf16.mxu0 0
    %1802 = vmatpush2.bf16.msra.mxu0 %v1283
    %1803 = vmatprep.subr.bf16.mxu0 0
    %1804 = vmatpush2.bf16.msra.mxu0 %v1282
    %1805 = vmatprep.subr.bf16.mxu0 0
    %1806 = vmatpush2.bf16.msra.mxu0 %v1281
    %1807 = vmatprep.subr.bf16.mxu0 0
    %1808 = vmatpush2.bf16.msra.mxu0 %v1280
    %1809 = vmatprep.subr.bf16.mxu0 0
    %1810 = vmatpush2.bf16.msra.mxu0 %v1279
    %1811 = vmatprep.subr.bf16.mxu0 0
    %1812 = vmatpush2.bf16.msra.mxu0 %v1278
    %1813 = vmatprep.subr.bf16.mxu0 0
    %1814 = vmatpush2.bf16.msra.mxu0 %v1277
    %1815 = vmatprep.mubr.bf16.mxu0 %v314
    %1816 = vmatmul.mubr.bf16.gmra.mxu0 %v313
    %v1817 = vpop.f32.mrf.mxu0
    %v1818 = vadd.f32 %v1769, %v1817
    %v1819 = vpop.f32.mrf.mxu0
    %v1820 = vpop.f32.mrf.mxu0
    %v1821 = vadd.f32 %v1772, %v1820
    %v1822 = vpop.f32.mrf.mxu0
    %1823 = vmatprep.mubr.bf16.mxu0 %v332
    %1824 = vmatmul.mubr.bf16.gmra.mxu0 %v331
    %v1825 = vpop.f32.mrf.mxu0
    %v1826 = vadd.f32 %v1777, %v1825
    %v1827 = vpop.f32.mrf.mxu0
    %v1828 = vpop.f32.mrf.mxu0
    %v1829 = vadd.f32 %v1780, %v1828
    %v1830 = vpop.f32.mrf.mxu0
    %1831 = vdwg.mxu0
    %1832 = vmatprep.subr.bf16.mxu0 0
    %1833 = vmatpush1.bf16.msra.mxu0 %v1292
    %1834 = vmatprep.subr.bf16.mxu0 0
    %1835 = vmatpush1.bf16.msra.mxu0 %v1291
    %1836 = vmatprep.subr.bf16.mxu0 0
    %1837 = vmatpush1.bf16.msra.mxu0 %v1290
    %1838 = vmatprep.subr.bf16.mxu0 0
    %1839 = vmatpush1.bf16.msra.mxu0 %v1289
    %1840 = vmatprep.subr.bf16.mxu0 0
    %1841 = vmatpush1.bf16.msra.mxu0 %v1288
    %1842 = vmatprep.subr.bf16.mxu0 0
    %1843 = vmatpush1.bf16.msra.mxu0 %v1287
    %1844 = vmatprep.subr.bf16.mxu0 0
    %1845 = vmatpush1.bf16.msra.mxu0 %v1286
    %1846 = vmatprep.subr.bf16.mxu0 0
    %1847 = vmatpush1.bf16.msra.mxu0 %v1285
    %1848 = vmatprep.subr.bf16.mxu0 0
    %1849 = vmatpush2.bf16.msra.mxu0 0
    %1850 = vmatprep.subr.bf16.mxu0 0
    %1851 = vmatpush2.bf16.msra.mxu0 0
    %1852 = vmatprep.subr.bf16.mxu0 0
    %1853 = vmatpush2.bf16.msra.mxu0 0
    %1854 = vmatprep.subr.bf16.mxu0 0
    %1855 = vmatpush2.bf16.msra.mxu0 0
    %1856 = vmatprep.subr.bf16.mxu0 0
    %1857 = vmatpush2.bf16.msra.mxu0 0
    %1858 = vmatprep.subr.bf16.mxu0 0
    %1859 = vmatpush2.bf16.msra.mxu0 0
    %1860 = vmatprep.subr.bf16.mxu0 0
    %1861 = vmatpush2.bf16.msra.mxu0 0
    %1862 = vmatprep.subr.bf16.mxu0 0
    %1863 = vmatpush2.bf16.msra.mxu0 %v1438
    %1864 = vmatprep.mubr.bf16.mxu0 %v1432
    %1865 = vmatmul.mubr.bf16.gmra.mxu0 %v315
    %v1866 = vpop.f32.mrf.mxu0
    %v1867 = vadd.f32 %v1818, %v1866
    %v1868 = vpop.f32.mrf.mxu0
    %v1869 = vpop.f32.mrf.mxu0
    %v1870 = vadd.f32 %v1821, %v1869
    %v1871 = vpop.f32.mrf.mxu0
    %1872 = vmatprep.mubr.bf16.mxu0 %v1435
    %1873 = vmatmul.mubr.bf16.gmra.mxu0 %v333
    %v1874 = vpop.f32.mrf.mxu0
    %v1875 = vadd.f32 %v1826, %v1874
    %v1876 = vpop.f32.mrf.mxu0
    %v1877 = vpop.f32.mrf.mxu0
    %v1878 = vadd.f32 %v1829, %v1877
    %v1879 = vpop.f32.mrf.mxu0
    %1880 = vdwg.mxu0
    %vm1881 = vcmp.eq.f32.partialorder %v1867, 0.0
    %vm1882 = vcmp.eq.f32.partialorder %v1870, 0.0
    %vm1883 = vcmp.eq.f32.partialorder %v1875, 0.0
    %vm1884 = vcmp.eq.f32.partialorder %v1878, 0.0
    %v1885 = vsel %vm1881, 1.0, %v1867
    %v1886 = vsel %vm1882, 1.0, %v1870
    %v1887 = vsel %vm1883, 1.0, %v1875
    %v1888 = vsel %vm1884, 1.0, %v1878
    %v1889 = vrcp.pop %v1885
    %v1890 = vrcp.pop %v1886
    %v1891 = vrcp.pop %v1887
    %v1892 = vrcp.pop %v1888
    %1894 = vset.pattern.permute.xlu0 64
    %1895 = vperm.xlu0 %1894, %v1889
    %v1896 = vpop.permute.xlu0 %1895
    %1899 = vset.pattern.permute.xlu0 64
    %1900 = vperm.xlu0 %1899, %v1890
    %v1901 = vpop.permute.xlu0 %1900
    %1904 = vset.pattern.permute.xlu0 64
    %1905 = vperm.xlu0 %1904, %v1891
    %v1906 = vpop.permute.xlu0 %1905
    %1909 = vset.pattern.permute.xlu0 64
    %1910 = vperm.xlu0 %1909, %v1892
    %v1911 = vpop.permute.xlu0 %1910
    %v1913 = vmul.f32 %v1867, %v1896
    %v1914 = vmul.f32 %v1870, %v1901
    %v1915 = vmul.f32 %v1875, %v1906
    %v1916 = vmul.f32 %v1878, %v1911
    %v1917 = vadd.f32 %v263, %v1913
    %v1918 = vadd.f32 %v268, %v1914
    %v1919 = vadd.f32 %v273, %v1915
    %v1920 = vadd.f32 %v278, %v1916
    %v1921 = vld [vmem:[%s3] sm:$0xff]
    %v1922 = vld [vmem:[%s3 + $0x8] sm:$0xff]
    %v1923 = vld [vmem:[%s3 + $0x10] sm:$0xff]
    %v1924 = vld [vmem:[%s3 + $0x18] sm:$0xff]
    %v1925 = vld [vmem:[%s3 + $0x20] sm:$0xff]
    %v1926 = vld [vmem:[%s3 + $0x28] sm:$0xff]
    %v1927 = vld [vmem:[%s3 + $0x30] sm:$0xff]
    %v1928 = vld [vmem:[%s3 + $0x38] sm:$0xff]
    %v1929 = vld [vmem:[%s3 + $0x40] sm:$0xff]
    %v1930 = vld [vmem:[%s3 + $0x48] sm:$0xff]
    %v1931 = vld [vmem:[%s3 + $0x50] sm:$0xff]
    %v1932 = vld [vmem:[%s3 + $0x58] sm:$0xff]
    %v1933 = vld [vmem:[%s3 + $0x60] sm:$0xff]
    %v1934 = vld [vmem:[%s3 + $0x68] sm:$0xff]
    %v1935 = vld [vmem:[%s3 + $0x70] sm:$0xff]
    %v1936 = vld [vmem:[%s3 + $0x78] sm:$0xff]
    %v1937 = vld [vmem:[%s3 + $0x80] sm:$0xff]
    %v1938 = vld [vmem:[%s3 + $0x88] sm:$0xff]
    %v1939 = vld [vmem:[%s3 + $0x90] sm:$0xff]
    %v1940 = vld [vmem:[%s3 + $0x98] sm:$0xff]
    %v1941 = vld [vmem:[%s3 + $0xa0] sm:$0xff]
    %v1942 = vld [vmem:[%s3 + $0xa8] sm:$0xff]
    %v1943 = vld [vmem:[%s3 + $0xb0] sm:$0xff]
    %v1944 = vld [vmem:[%s3 + $0xb8] sm:$0xff]
    %v1945 = vld [vmem:[%s3 + $0xc0] sm:$0xff]
    %v1946 = vld [vmem:[%s3 + $0xc8] sm:$0xff]
    %v1947 = vld [vmem:[%s3 + $0xd0] sm:$0xff]
    %v1948 = vld [vmem:[%s3 + $0xd8] sm:$0xff]
    %v1949 = vld [vmem:[%s3 + $0xe0] sm:$0xff]
    %v1950 = vld [vmem:[%s3 + $0xe8] sm:$0xff]
    %v1951 = vld [vmem:[%s3 + $0xf0] sm:$0xff]
    %v1952 = vld [vmem:[%s3 + $0xf8] sm:$0xff]
    %v1953 = vld [vmem:[%s3 + $0x100] sm:$0xff]
    %v1954 = vld [vmem:[%s3 + $0x108] sm:$0xff]
    %v1955 = vld [vmem:[%s3 + $0x110] sm:$0xff]
    %v1956 = vld [vmem:[%s3 + $0x118] sm:$0xff]
    %v1957 = vld [vmem:[%s3 + $0x120] sm:$0xff]
    %v1958 = vld [vmem:[%s3 + $0x128] sm:$0xff]
    %v1959 = vld [vmem:[%s3 + $0x130] sm:$0xff]
    %v1960 = vld [vmem:[%s3 + $0x138] sm:$0xff]
    %v1961 = vld [vmem:[%s3 + $0x140] sm:$0xff]
    %v1962 = vld [vmem:[%s3 + $0x148] sm:$0xff]
    %v1963 = vld [vmem:[%s3 + $0x150] sm:$0xff]
    %v1964 = vld [vmem:[%s3 + $0x158] sm:$0xff]
    %v1965 = vld [vmem:[%s3 + $0x160] sm:$0xff]
    %v1966 = vld [vmem:[%s3 + $0x168] sm:$0xff]
    %v1967 = vld [vmem:[%s3 + $0x170] sm:$0xff]
    %v1968 = vld [vmem:[%s3 + $0x178] sm:$0xff]
    %v1969 = vld [vmem:[%s3 + $0x180] sm:$0xff]
    %v1970 = vld [vmem:[%s3 + $0x188] sm:$0xff]
    %v1971 = vld [vmem:[%s3 + $0x190] sm:$0xff]
    %v1972 = vld [vmem:[%s3 + $0x198] sm:$0xff]
    %v1973 = vld [vmem:[%s3 + $0x1a0] sm:$0xff]
    %v1974 = vld [vmem:[%s3 + $0x1a8] sm:$0xff]
    %v1975 = vld [vmem:[%s3 + $0x1b0] sm:$0xff]
    %v1976 = vld [vmem:[%s3 + $0x1b8] sm:$0xff]
    %v1977 = vld [vmem:[%s3 + $0x1c0] sm:$0xff]
    %v1978 = vld [vmem:[%s3 + $0x1c8] sm:$0xff]
    %v1979 = vld [vmem:[%s3 + $0x1d0] sm:$0xff]
    %v1980 = vld [vmem:[%s3 + $0x1d8] sm:$0xff]
    %v1981 = vld [vmem:[%s3 + $0x1e0] sm:$0xff]
    %v1982 = vld [vmem:[%s3 + $0x1e8] sm:$0xff]
    %v1983 = vld [vmem:[%s3 + $0x1f0] sm:$0xff]
    %v1984 = vunpack.c.l.s8.bf16 %v1921
    %v1985 = vunpack.c.l.s8.bf16 %v1922
    %v1986 = vunpack.c.l.s8.bf16 %v1923
    %v1987 = vunpack.c.l.s8.bf16 %v1924
    %v1988 = vunpack.c.l.s8.bf16 %v1925
    %v1989 = vunpack.c.l.s8.bf16 %v1926
    %v1990 = vunpack.c.l.s8.bf16 %v1927
    %v1991 = vunpack.c.l.s8.bf16 %v1928
    %v1992 = vunpack.c.l.s8.bf16 %v1929
    %v1993 = vunpack.c.l.s8.bf16 %v1930
    %v1994 = vunpack.c.l.s8.bf16 %v1931
    %v1995 = vunpack.c.l.s8.bf16 %v1932
    %v1996 = vunpack.c.l.s8.bf16 %v1933
    %v1997 = vunpack.c.l.s8.bf16 %v1934
    %v1998 = vunpack.c.l.s8.bf16 %v1935
    %v1999 = vunpack.c.l.s8.bf16 %v1936
    %v2000 = vunpack.c.l.s8.bf16 %v1937
    %v2001 = vunpack.c.l.s8.bf16 %v1938
    %v2002 = vunpack.c.l.s8.bf16 %v1939
    %v2003 = vunpack.c.l.s8.bf16 %v1940
    %v2004 = vunpack.c.l.s8.bf16 %v1941
    %v2005 = vunpack.c.l.s8.bf16 %v1942
    %v2006 = vunpack.c.l.s8.bf16 %v1943
    %v2007 = vunpack.c.l.s8.bf16 %v1944
    %v2008 = vunpack.c.l.s8.bf16 %v1945
    %v2009 = vunpack.c.l.s8.bf16 %v1946
    %v2010 = vunpack.c.l.s8.bf16 %v1947
    %v2011 = vunpack.c.l.s8.bf16 %v1948
    %v2012 = vunpack.c.l.s8.bf16 %v1949
    %v2013 = vunpack.c.l.s8.bf16 %v1950
    %v2014 = vunpack.c.l.s8.bf16 %v1951
    %v2015 = vunpack.c.l.s8.bf16 %v1952
    %v2016 = vunpack.c.l.s8.bf16 %v1953
    %v2017 = vunpack.c.l.s8.bf16 %v1954
    %v2018 = vunpack.c.l.s8.bf16 %v1955
    %v2019 = vunpack.c.l.s8.bf16 %v1956
    %v2020 = vunpack.c.l.s8.bf16 %v1957
    %v2021 = vunpack.c.l.s8.bf16 %v1958
    %v2022 = vunpack.c.l.s8.bf16 %v1959
    %v2023 = vunpack.c.l.s8.bf16 %v1960
    %v2024 = vunpack.c.l.s8.bf16 %v1961
    %v2025 = vunpack.c.l.s8.bf16 %v1962
    %v2026 = vunpack.c.l.s8.bf16 %v1963
    %v2027 = vunpack.c.l.s8.bf16 %v1964
    %v2028 = vunpack.c.l.s8.bf16 %v1965
    %v2029 = vunpack.c.l.s8.bf16 %v1966
    %v2030 = vunpack.c.l.s8.bf16 %v1967
    %v2031 = vunpack.c.l.s8.bf16 %v1968
    %v2032 = vunpack.c.l.s8.bf16 %v1969
    %v2033 = vunpack.c.l.s8.bf16 %v1970
    %v2034 = vunpack.c.l.s8.bf16 %v1971
    %v2035 = vunpack.c.l.s8.bf16 %v1972
    %v2036 = vunpack.c.l.s8.bf16 %v1973
    %v2037 = vunpack.c.l.s8.bf16 %v1974
    %v2038 = vunpack.c.l.s8.bf16 %v1975
    %v2039 = vunpack.c.l.s8.bf16 %v1976
    %v2040 = vunpack.c.l.s8.bf16 %v1977
    %v2041 = vunpack.c.l.s8.bf16 %v1978
    %v2042 = vunpack.c.l.s8.bf16 %v1979
    %v2043 = vunpack.c.l.s8.bf16 %v1980
    %v2044 = vunpack.c.l.s8.bf16 %v1981
    %v2045 = vunpack.c.l.s8.bf16 %v1982
    %v2046 = vunpack.c.l.s8.bf16 %v1983
    %v2047 = vunpack.c.h.s8.bf16 %v1921
    %v2048 = vunpack.c.h.s8.bf16 %v1922
    %v2049 = vunpack.c.h.s8.bf16 %v1923
    %v2050 = vunpack.c.h.s8.bf16 %v1924
    %v2051 = vunpack.c.h.s8.bf16 %v1925
    %v2052 = vunpack.c.h.s8.bf16 %v1926
    %v2053 = vunpack.c.h.s8.bf16 %v1927
    %v2054 = vunpack.c.h.s8.bf16 %v1928
    %v2055 = vunpack.c.h.s8.bf16 %v1929
    %v2056 = vunpack.c.h.s8.bf16 %v1930
    %v2057 = vunpack.c.h.s8.bf16 %v1931
    %v2058 = vunpack.c.h.s8.bf16 %v1932
    %v2059 = vunpack.c.h.s8.bf16 %v1933
    %v2060 = vunpack.c.h.s8.bf16 %v1934
    %v2061 = vunpack.c.h.s8.bf16 %v1935
    %v2062 = vunpack.c.h.s8.bf16 %v1936
    %v2063 = vunpack.c.h.s8.bf16 %v1937
    %v2064 = vunpack.c.h.s8.bf16 %v1938
    %v2065 = vunpack.c.h.s8.bf16 %v1939
    %v2066 = vunpack.c.h.s8.bf16 %v1940
    %v2067 = vunpack.c.h.s8.bf16 %v1941
    %v2068 = vunpack.c.h.s8.bf16 %v1942
    %v2069 = vunpack.c.h.s8.bf16 %v1943
    %v2070 = vunpack.c.h.s8.bf16 %v1944
    %v2071 = vunpack.c.h.s8.bf16 %v1945
    %v2072 = vunpack.c.h.s8.bf16 %v1946
    %v2073 = vunpack.c.h.s8.bf16 %v1947
    %v2074 = vunpack.c.h.s8.bf16 %v1948
    %v2075 = vunpack.c.h.s8.bf16 %v1949
    %v2076 = vunpack.c.h.s8.bf16 %v1950
    %v2077 = vunpack.c.h.s8.bf16 %v1951
    %v2078 = vunpack.c.h.s8.bf16 %v1952
    %v2079 = vunpack.c.h.s8.bf16 %v1953
    %v2080 = vunpack.c.h.s8.bf16 %v1954
    %v2081 = vunpack.c.h.s8.bf16 %v1955
    %v2082 = vunpack.c.h.s8.bf16 %v1956
    %v2083 = vunpack.c.h.s8.bf16 %v1957
    %v2084 = vunpack.c.h.s8.bf16 %v1958
    %v2085 = vunpack.c.h.s8.bf16 %v1959
    %v2086 = vunpack.c.h.s8.bf16 %v1960
    %v2087 = vunpack.c.h.s8.bf16 %v1961
    %v2088 = vunpack.c.h.s8.bf16 %v1962
    %v2089 = vunpack.c.h.s8.bf16 %v1963
    %v2090 = vunpack.c.h.s8.bf16 %v1964
    %v2091 = vunpack.c.h.s8.bf16 %v1965
    %v2092 = vunpack.c.h.s8.bf16 %v1966
    %v2093 = vunpack.c.h.s8.bf16 %v1967
    %v2094 = vunpack.c.h.s8.bf16 %v1968
    %v2095 = vunpack.c.h.s8.bf16 %v1969
    %v2096 = vunpack.c.h.s8.bf16 %v1970
    %v2097 = vunpack.c.h.s8.bf16 %v1971
    %v2098 = vunpack.c.h.s8.bf16 %v1972
    %v2099 = vunpack.c.h.s8.bf16 %v1973
    %v2100 = vunpack.c.h.s8.bf16 %v1974
    %v2101 = vunpack.c.h.s8.bf16 %v1975
    %v2102 = vunpack.c.h.s8.bf16 %v1976
    %v2103 = vunpack.c.h.s8.bf16 %v1977
    %v2104 = vunpack.c.h.s8.bf16 %v1978
    %v2105 = vunpack.c.h.s8.bf16 %v1979
    %v2106 = vunpack.c.h.s8.bf16 %v1980
    %v2107 = vunpack.c.h.s8.bf16 %v1981
    %v2108 = vunpack.c.h.s8.bf16 %v1982
    %v2109 = vunpack.c.h.s8.bf16 %v1983
    %v2110 = vld [vmem:[%s7] sm:$0xf]
    %v2111 = vld [vmem:[%s7 + $0x4] sm:$0xf]
    %v2112 = vld [vmem:[%s7 + $0x8] sm:$0xf]
    %v2113 = vld [vmem:[%s7 + $0xc] sm:$0xf]
    %v2114 = vld [vmem:[%s7 + $0x10] sm:$0xf]
    %v2115 = vld [vmem:[%s7 + $0x14] sm:$0xf]
    %v2116 = vld [vmem:[%s7 + $0x18] sm:$0xf]
    %v2117 = vld [vmem:[%s7 + $0x1c] sm:$0xf]
    %v2118 = vld [vmem:[%s7 + $0x20] sm:$0xf]
    %v2119 = vld [vmem:[%s7 + $0x24] sm:$0xf]
    %v2120 = vld [vmem:[%s7 + $0x28] sm:$0xf]
    %v2121 = vld [vmem:[%s7 + $0x2c] sm:$0xf]
    %v2122 = vld [vmem:[%s7 + $0x30] sm:$0xf]
    %v2123 = vld [vmem:[%s7 + $0x34] sm:$0xf]
    %v2124 = vld [vmem:[%s7 + $0x38] sm:$0xf]
    %v2125 = vld [vmem:[%s7 + $0x3c] sm:$0xf]
    %v2126 = vld [vmem:[%s7 + $0x40] sm:$0xf]
    %v2127 = vld [vmem:[%s7 + $0x44] sm:$0xf]
    %v2128 = vld [vmem:[%s7 + $0x48] sm:$0xf]
    %v2129 = vld [vmem:[%s7 + $0x4c] sm:$0xf]
    %v2130 = vld [vmem:[%s7 + $0x50] sm:$0xf]
    %v2131 = vld [vmem:[%s7 + $0x54] sm:$0xf]
    %v2132 = vld [vmem:[%s7 + $0x58] sm:$0xf]
    %v2133 = vld [vmem:[%s7 + $0x5c] sm:$0xf]
    %v2134 = vld [vmem:[%s7 + $0x60] sm:$0xf]
    %v2135 = vld [vmem:[%s7 + $0x64] sm:$0xf]
    %v2136 = vld [vmem:[%s7 + $0x68] sm:$0xf]
    %v2137 = vld [vmem:[%s7 + $0x6c] sm:$0xf]
    %v2138 = vld [vmem:[%s7 + $0x70] sm:$0xf]
    %v2139 = vld [vmem:[%s7 + $0x74] sm:$0xf]
    %v2140 = vld [vmem:[%s7 + $0x78] sm:$0xf]
    %v2141 = vld [vmem:[%s7 + $0x7c] sm:$0xf]
    %v2142 = vld [vmem:[%s7 + $0x80] sm:$0xf]
    %v2143 = vld [vmem:[%s7 + $0x84] sm:$0xf]
    %v2144 = vld [vmem:[%s7 + $0x88] sm:$0xf]
    %v2145 = vld [vmem:[%s7 + $0x8c] sm:$0xf]
    %v2146 = vld [vmem:[%s7 + $0x90] sm:$0xf]
    %v2147 = vld [vmem:[%s7 + $0x94] sm:$0xf]
    %v2148 = vld [vmem:[%s7 + $0x98] sm:$0xf]
    %v2149 = vld [vmem:[%s7 + $0x9c] sm:$0xf]
    %v2150 = vld [vmem:[%s7 + $0xa0] sm:$0xf]
    %v2151 = vld [vmem:[%s7 + $0xa4] sm:$0xf]
    %v2152 = vld [vmem:[%s7 + $0xa8] sm:$0xf]
    %v2153 = vld [vmem:[%s7 + $0xac] sm:$0xf]
    %v2154 = vld [vmem:[%s7 + $0xb0] sm:$0xf]
    %v2155 = vld [vmem:[%s7 + $0xb4] sm:$0xf]
    %v2156 = vld [vmem:[%s7 + $0xb8] sm:$0xf]
    %v2157 = vld [vmem:[%s7 + $0xbc] sm:$0xf]
    %v2158 = vld [vmem:[%s7 + $0xc0] sm:$0xf]
    %v2159 = vld [vmem:[%s7 + $0xc4] sm:$0xf]
    %v2160 = vld [vmem:[%s7 + $0xc8] sm:$0xf]
    %v2161 = vld [vmem:[%s7 + $0xcc] sm:$0xf]
    %v2162 = vld [vmem:[%s7 + $0xd0] sm:$0xf]
    %v2163 = vld [vmem:[%s7 + $0xd4] sm:$0xf]
    %v2164 = vld [vmem:[%s7 + $0xd8] sm:$0xf]
    %v2165 = vld [vmem:[%s7 + $0xdc] sm:$0xf]
    %v2166 = vld [vmem:[%s7 + $0xe0] sm:$0xf]
    %v2167 = vld [vmem:[%s7 + $0xe4] sm:$0xf]
    %v2168 = vld [vmem:[%s7 + $0xe8] sm:$0xf]
    %v2169 = vld [vmem:[%s7 + $0xec] sm:$0xf]
    %v2170 = vld [vmem:[%s7 + $0xf0] sm:$0xf]
    %v2171 = vld [vmem:[%s7 + $0xf4] sm:$0xf]
    %v2172 = vld [vmem:[%s7 + $0xf8] sm:$0xf]
    %v2173 = vld [vmem:[%s7 + $0xfc] sm:$0xf]
    %v2174 = vld [vmem:[%s7 + $0x100] sm:$0xf]
    %v2175 = vld [vmem:[%s7 + $0x104] sm:$0xf]
    %v2176 = vld [vmem:[%s7 + $0x108] sm:$0xf]
    %v2177 = vld [vmem:[%s7 + $0x10c] sm:$0xf]
    %v2178 = vld [vmem:[%s7 + $0x110] sm:$0xf]
    %v2179 = vld [vmem:[%s7 + $0x114] sm:$0xf]
    %v2180 = vld [vmem:[%s7 + $0x118] sm:$0xf]
    %v2181 = vld [vmem:[%s7 + $0x11c] sm:$0xf]
    %v2182 = vld [vmem:[%s7 + $0x120] sm:$0xf]
    %v2183 = vld [vmem:[%s7 + $0x124] sm:$0xf]
    %v2184 = vld [vmem:[%s7 + $0x128] sm:$0xf]
    %v2185 = vld [vmem:[%s7 + $0x12c] sm:$0xf]
    %v2186 = vld [vmem:[%s7 + $0x130] sm:$0xf]
    %v2187 = vld [vmem:[%s7 + $0x134] sm:$0xf]
    %v2188 = vld [vmem:[%s7 + $0x138] sm:$0xf]
    %v2189 = vld [vmem:[%s7 + $0x13c] sm:$0xf]
    %v2190 = vld [vmem:[%s7 + $0x140] sm:$0xf]
    %v2191 = vld [vmem:[%s7 + $0x144] sm:$0xf]
    %v2192 = vld [vmem:[%s7 + $0x148] sm:$0xf]
    %v2193 = vld [vmem:[%s7 + $0x14c] sm:$0xf]
    %v2194 = vld [vmem:[%s7 + $0x150] sm:$0xf]
    %v2195 = vld [vmem:[%s7 + $0x154] sm:$0xf]
    %v2196 = vld [vmem:[%s7 + $0x158] sm:$0xf]
    %v2197 = vld [vmem:[%s7 + $0x15c] sm:$0xf]
    %v2198 = vld [vmem:[%s7 + $0x160] sm:$0xf]
    %v2199 = vld [vmem:[%s7 + $0x164] sm:$0xf]
    %v2200 = vld [vmem:[%s7 + $0x168] sm:$0xf]
    %v2201 = vld [vmem:[%s7 + $0x16c] sm:$0xf]
    %v2202 = vld [vmem:[%s7 + $0x170] sm:$0xf]
    %v2203 = vld [vmem:[%s7 + $0x174] sm:$0xf]
    %v2204 = vld [vmem:[%s7 + $0x178] sm:$0xf]
    %v2205 = vld [vmem:[%s7 + $0x17c] sm:$0xf]
    %v2206 = vld [vmem:[%s7 + $0x180] sm:$0xf]
    %v2207 = vld [vmem:[%s7 + $0x184] sm:$0xf]
    %v2208 = vld [vmem:[%s7 + $0x188] sm:$0xf]
    %v2209 = vld [vmem:[%s7 + $0x18c] sm:$0xf]
    %v2210 = vld [vmem:[%s7 + $0x190] sm:$0xf]
    %v2211 = vld [vmem:[%s7 + $0x194] sm:$0xf]
    %v2212 = vld [vmem:[%s7 + $0x198] sm:$0xf]
    %v2213 = vld [vmem:[%s7 + $0x19c] sm:$0xf]
    %v2214 = vld [vmem:[%s7 + $0x1a0] sm:$0xf]
    %v2215 = vld [vmem:[%s7 + $0x1a4] sm:$0xf]
    %v2216 = vld [vmem:[%s7 + $0x1a8] sm:$0xf]
    %v2217 = vld [vmem:[%s7 + $0x1ac] sm:$0xf]
    %v2218 = vld [vmem:[%s7 + $0x1b0] sm:$0xf]
    %v2219 = vld [vmem:[%s7 + $0x1b4] sm:$0xf]
    %v2220 = vld [vmem:[%s7 + $0x1b8] sm:$0xf]
    %v2221 = vld [vmem:[%s7 + $0x1bc] sm:$0xf]
    %v2222 = vld [vmem:[%s7 + $0x1c0] sm:$0xf]
    %v2223 = vld [vmem:[%s7 + $0x1c4] sm:$0xf]
    %v2224 = vld [vmem:[%s7 + $0x1c8] sm:$0xf]
    %v2225 = vld [vmem:[%s7 + $0x1cc] sm:$0xf]
    %v2226 = vld [vmem:[%s7 + $0x1d0] sm:$0xf]
    %v2227 = vld [vmem:[%s7 + $0x1d4] sm:$0xf]
    %v2228 = vld [vmem:[%s7 + $0x1d8] sm:$0xf]
    %v2229 = vld [vmem:[%s7 + $0x1dc] sm:$0xf]
    %v2230 = vld [vmem:[%s7 + $0x1e0] sm:$0xf]
    %v2231 = vld [vmem:[%s7 + $0x1e4] sm:$0xf]
    %v2232 = vld [vmem:[%s7 + $0x1e8] sm:$0xf]
    %v2233 = vld [vmem:[%s7 + $0x1ec] sm:$0xf]
    %v2234 = vld [vmem:[%s7 + $0x1f0] sm:$0xf]
    %v2235 = vld [vmem:[%s7 + $0x1f4] sm:$0xf]
    %v2236 = vld [vmem:[%s7 + $0x1f8] sm:$0xf]
    %v2237 = vld [vmem:[%s7 + $0x1fc] sm:$0xf]
    %v2238 = vld [vmem:[%s7 + $0x200] sm:$0xf]
    %v2239 = vld [vmem:[%s7 + $0x204] sm:$0xf]
    %v2240 = vld [vmem:[%s7 + $0x208] sm:$0xf]
    %v2241 = vld [vmem:[%s7 + $0x20c] sm:$0xf]
    %v2242 = vld [vmem:[%s7 + $0x210] sm:$0xf]
    %v2243 = vld [vmem:[%s7 + $0x214] sm:$0xf]
    %v2244 = vld [vmem:[%s7 + $0x218] sm:$0xf]
    %v2245 = vld [vmem:[%s7 + $0x21c] sm:$0xf]
    %v2246 = vld [vmem:[%s7 + $0x220] sm:$0xf]
    %v2247 = vld [vmem:[%s7 + $0x224] sm:$0xf]
    %v2248 = vld [vmem:[%s7 + $0x228] sm:$0xf]
    %v2249 = vld [vmem:[%s7 + $0x22c] sm:$0xf]
    %v2250 = vld [vmem:[%s7 + $0x230] sm:$0xf]
    %v2251 = vld [vmem:[%s7 + $0x234] sm:$0xf]
    %v2252 = vld [vmem:[%s7 + $0x238] sm:$0xf]
    %v2253 = vld [vmem:[%s7 + $0x23c] sm:$0xf]
    %v2254 = vld [vmem:[%s7 + $0x240] sm:$0xf]
    %v2255 = vld [vmem:[%s7 + $0x244] sm:$0xf]
    %v2256 = vld [vmem:[%s7 + $0x248] sm:$0xf]
    %v2257 = vld [vmem:[%s7 + $0x24c] sm:$0xf]
    %v2258 = vld [vmem:[%s7 + $0x250] sm:$0xf]
    %v2259 = vld [vmem:[%s7 + $0x254] sm:$0xf]
    %v2260 = vld [vmem:[%s7 + $0x258] sm:$0xf]
    %v2261 = vld [vmem:[%s7 + $0x25c] sm:$0xf]
    %v2262 = vld [vmem:[%s7 + $0x260] sm:$0xf]
    %v2263 = vld [vmem:[%s7 + $0x264] sm:$0xf]
    %v2264 = vld [vmem:[%s7 + $0x268] sm:$0xf]
    %v2265 = vld [vmem:[%s7 + $0x26c] sm:$0xf]
    %v2266 = vld [vmem:[%s7 + $0x270] sm:$0xf]
    %v2267 = vld [vmem:[%s7 + $0x274] sm:$0xf]
    %v2268 = vld [vmem:[%s7 + $0x278] sm:$0xf]
    %v2269 = vld [vmem:[%s7 + $0x27c] sm:$0xf]
    %v2270 = vld [vmem:[%s7 + $0x280] sm:$0xf]
    %v2271 = vld [vmem:[%s7 + $0x284] sm:$0xf]
    %v2272 = vld [vmem:[%s7 + $0x288] sm:$0xf]
    %v2273 = vld [vmem:[%s7 + $0x28c] sm:$0xf]
    %v2274 = vld [vmem:[%s7 + $0x290] sm:$0xf]
    %v2275 = vld [vmem:[%s7 + $0x294] sm:$0xf]
    %v2276 = vld [vmem:[%s7 + $0x298] sm:$0xf]
    %v2277 = vld [vmem:[%s7 + $0x29c] sm:$0xf]
    %v2278 = vld [vmem:[%s7 + $0x2a0] sm:$0xf]
    %v2279 = vld [vmem:[%s7 + $0x2a4] sm:$0xf]
    %v2280 = vld [vmem:[%s7 + $0x2a8] sm:$0xf]
    %v2281 = vld [vmem:[%s7 + $0x2ac] sm:$0xf]
    %v2282 = vld [vmem:[%s7 + $0x2b0] sm:$0xf]
    %v2283 = vld [vmem:[%s7 + $0x2b4] sm:$0xf]
    %v2284 = vld [vmem:[%s7 + $0x2b8] sm:$0xf]
    %v2285 = vld [vmem:[%s7 + $0x2bc] sm:$0xf]
    %v2286 = vld [vmem:[%s7 + $0x2c0] sm:$0xf]
    %v2287 = vld [vmem:[%s7 + $0x2c4] sm:$0xf]
    %v2288 = vld [vmem:[%s7 + $0x2c8] sm:$0xf]
    %v2289 = vld [vmem:[%s7 + $0x2cc] sm:$0xf]
    %v2290 = vld [vmem:[%s7 + $0x2d0] sm:$0xf]
    %v2291 = vld [vmem:[%s7 + $0x2d4] sm:$0xf]
    %v2292 = vld [vmem:[%s7 + $0x2d8] sm:$0xf]
    %v2293 = vld [vmem:[%s7 + $0x2dc] sm:$0xf]
    %v2294 = vld [vmem:[%s7 + $0x2e0] sm:$0xf]
    %v2295 = vld [vmem:[%s7 + $0x2e4] sm:$0xf]
    %v2296 = vld [vmem:[%s7 + $0x2e8] sm:$0xf]
    %v2297 = vld [vmem:[%s7 + $0x2ec] sm:$0xf]
    %v2298 = vld [vmem:[%s7 + $0x2f0] sm:$0xf]
    %v2299 = vld [vmem:[%s7 + $0x2f4] sm:$0xf]
    %v2300 = vld [vmem:[%s7 + $0x2f8] sm:$0xf]
    %v2301 = vld [vmem:[%s7 + $0x2fc] sm:$0xf]
    %v2302 = vld [vmem:[%s7 + $0x300] sm:$0xf]
    %v2303 = vld [vmem:[%s7 + $0x304] sm:$0xf]
    %v2304 = vld [vmem:[%s7 + $0x308] sm:$0xf]
    %v2305 = vld [vmem:[%s7 + $0x30c] sm:$0xf]
    %v2306 = vld [vmem:[%s7 + $0x310] sm:$0xf]
    %v2307 = vld [vmem:[%s7 + $0x314] sm:$0xf]
    %v2308 = vld [vmem:[%s7 + $0x318] sm:$0xf]
    %v2309 = vld [vmem:[%s7 + $0x31c] sm:$0xf]
    %v2310 = vld [vmem:[%s7 + $0x320] sm:$0xf]
    %v2311 = vld [vmem:[%s7 + $0x324] sm:$0xf]
    %v2312 = vld [vmem:[%s7 + $0x328] sm:$0xf]
    %v2313 = vld [vmem:[%s7 + $0x32c] sm:$0xf]
    %v2314 = vld [vmem:[%s7 + $0x330] sm:$0xf]
    %v2315 = vld [vmem:[%s7 + $0x334] sm:$0xf]
    %v2316 = vld [vmem:[%s7 + $0x338] sm:$0xf]
    %v2317 = vld [vmem:[%s7 + $0x33c] sm:$0xf]
    %v2318 = vld [vmem:[%s7 + $0x340] sm:$0xf]
    %v2319 = vld [vmem:[%s7 + $0x344] sm:$0xf]
    %v2320 = vld [vmem:[%s7 + $0x348] sm:$0xf]
    %v2321 = vld [vmem:[%s7 + $0x34c] sm:$0xf]
    %v2322 = vld [vmem:[%s7 + $0x350] sm:$0xf]
    %v2323 = vld [vmem:[%s7 + $0x354] sm:$0xf]
    %v2324 = vld [vmem:[%s7 + $0x358] sm:$0xf]
    %v2325 = vld [vmem:[%s7 + $0x35c] sm:$0xf]
    %v2326 = vld [vmem:[%s7 + $0x360] sm:$0xf]
    %v2327 = vld [vmem:[%s7 + $0x364] sm:$0xf]
    %v2328 = vld [vmem:[%s7 + $0x368] sm:$0xf]
    %v2329 = vld [vmem:[%s7 + $0x36c] sm:$0xf]
    %v2330 = vld [vmem:[%s7 + $0x370] sm:$0xf]
    %v2331 = vld [vmem:[%s7 + $0x374] sm:$0xf]
    %v2332 = vld [vmem:[%s7 + $0x378] sm:$0xf]
    %v2333 = vld [vmem:[%s7 + $0x37c] sm:$0xf]
    %v2334 = vld [vmem:[%s7 + $0x380] sm:$0xf]
    %v2335 = vld [vmem:[%s7 + $0x384] sm:$0xf]
    %v2336 = vld [vmem:[%s7 + $0x388] sm:$0xf]
    %v2337 = vld [vmem:[%s7 + $0x38c] sm:$0xf]
    %v2338 = vld [vmem:[%s7 + $0x390] sm:$0xf]
    %v2339 = vld [vmem:[%s7 + $0x394] sm:$0xf]
    %v2340 = vld [vmem:[%s7 + $0x398] sm:$0xf]
    %v2341 = vld [vmem:[%s7 + $0x39c] sm:$0xf]
    %v2342 = vld [vmem:[%s7 + $0x3a0] sm:$0xf]
    %v2343 = vld [vmem:[%s7 + $0x3a4] sm:$0xf]
    %v2344 = vld [vmem:[%s7 + $0x3a8] sm:$0xf]
    %v2345 = vld [vmem:[%s7 + $0x3ac] sm:$0xf]
    %v2346 = vld [vmem:[%s7 + $0x3b0] sm:$0xf]
    %v2347 = vld [vmem:[%s7 + $0x3b4] sm:$0xf]
    %v2348 = vld [vmem:[%s7 + $0x3b8] sm:$0xf]
    %v2349 = vld [vmem:[%s7 + $0x3bc] sm:$0xf]
    %v2350 = vld [vmem:[%s7 + $0x3c0] sm:$0xf]
    %v2351 = vld [vmem:[%s7 + $0x3c4] sm:$0xf]
    %v2352 = vld [vmem:[%s7 + $0x3c8] sm:$0xf]
    %v2353 = vld [vmem:[%s7 + $0x3cc] sm:$0xf]
    %v2354 = vld [vmem:[%s7 + $0x3d0] sm:$0xf]
    %v2355 = vld [vmem:[%s7 + $0x3d4] sm:$0xf]
    %v2356 = vld [vmem:[%s7 + $0x3d8] sm:$0xf]
    %v2357 = vld [vmem:[%s7 + $0x3dc] sm:$0xf]
    %v2358 = vld [vmem:[%s7 + $0x3e0] sm:$0xf]
    %v2359 = vld [vmem:[%s7 + $0x3e4] sm:$0xf]
    %v2360 = vld [vmem:[%s7 + $0x3e8] sm:$0xf]
    %v2361 = vld [vmem:[%s7 + $0x3ec] sm:$0xf]
    %v2362 = vld [vmem:[%s7 + $0x3f0] sm:$0xf]
    %v2363 = vld [vmem:[%s7 + $0x3f4] sm:$0xf]
    %v2364 = vld [vmem:[%s7 + $0x3f8] sm:$0xf]
    %v2365 = vld [vmem:[%s7 + $0x3fc] sm:$0xf]
    %v2366 = vld [vmem:[%s7 + $0x400] sm:$0xf]
    %v2367 = vld [vmem:[%s7 + $0x404] sm:$0xf]
    %v2368 = vld [vmem:[%s7 + $0x408] sm:$0xf]
    %v2369 = vld [vmem:[%s7 + $0x40c] sm:$0xf]
    %v2370 = vld [vmem:[%s7 + $0x410] sm:$0xf]
    %v2371 = vld [vmem:[%s7 + $0x414] sm:$0xf]
    %v2372 = vld [vmem:[%s7 + $0x418] sm:$0xf]
    %v2373 = vld [vmem:[%s7 + $0x41c] sm:$0xf]
    %v2374 = vld [vmem:[%s7 + $0x420] sm:$0xf]
    %v2375 = vld [vmem:[%s7 + $0x424] sm:$0xf]
    %v2376 = vld [vmem:[%s7 + $0x428] sm:$0xf]
    %v2377 = vld [vmem:[%s7 + $0x42c] sm:$0xf]
    %v2378 = vld [vmem:[%s7 + $0x430] sm:$0xf]
    %v2379 = vld [vmem:[%s7 + $0x434] sm:$0xf]
    %v2380 = vld [vmem:[%s7 + $0x438] sm:$0xf]
    %v2381 = vld [vmem:[%s7 + $0x43c] sm:$0xf]
    %v2382 = vld [vmem:[%s7 + $0x440] sm:$0xf]
    %v2383 = vld [vmem:[%s7 + $0x444] sm:$0xf]
    %v2384 = vld [vmem:[%s7 + $0x448] sm:$0xf]
    %v2385 = vld [vmem:[%s7 + $0x44c] sm:$0xf]
    %v2386 = vld [vmem:[%s7 + $0x450] sm:$0xf]
    %v2387 = vld [vmem:[%s7 + $0x454] sm:$0xf]
    %v2388 = vld [vmem:[%s7 + $0x458] sm:$0xf]
    %v2389 = vld [vmem:[%s7 + $0x45c] sm:$0xf]
    %v2390 = vld [vmem:[%s7 + $0x460] sm:$0xf]
    %v2391 = vld [vmem:[%s7 + $0x464] sm:$0xf]
    %v2392 = vld [vmem:[%s7 + $0x468] sm:$0xf]
    %v2393 = vld [vmem:[%s7 + $0x46c] sm:$0xf]
    %v2394 = vld [vmem:[%s7 + $0x470] sm:$0xf]
    %v2395 = vld [vmem:[%s7 + $0x474] sm:$0xf]
    %v2396 = vld [vmem:[%s7 + $0x478] sm:$0xf]
    %v2397 = vld [vmem:[%s7 + $0x47c] sm:$0xf]
    %v2398 = vld [vmem:[%s7 + $0x480] sm:$0xf]
    %v2399 = vld [vmem:[%s7 + $0x484] sm:$0xf]
    %v2400 = vld [vmem:[%s7 + $0x488] sm:$0xf]
    %v2401 = vld [vmem:[%s7 + $0x48c] sm:$0xf]
    %v2402 = vld [vmem:[%s7 + $0x490] sm:$0xf]
    %v2403 = vld [vmem:[%s7 + $0x494] sm:$0xf]
    %v2404 = vld [vmem:[%s7 + $0x498] sm:$0xf]
    %v2405 = vld [vmem:[%s7 + $0x49c] sm:$0xf]
    %v2406 = vld [vmem:[%s7 + $0x4a0] sm:$0xf]
    %v2407 = vld [vmem:[%s7 + $0x4a4] sm:$0xf]
    %v2408 = vld [vmem:[%s7 + $0x4a8] sm:$0xf]
    %v2409 = vld [vmem:[%s7 + $0x4ac] sm:$0xf]
    %v2410 = vld [vmem:[%s7 + $0x4b0] sm:$0xf]
    %v2411 = vld [vmem:[%s7 + $0x4b4] sm:$0xf]
    %v2412 = vld [vmem:[%s7 + $0x4b8] sm:$0xf]
    %v2413 = vld [vmem:[%s7 + $0x4bc] sm:$0xf]
    %v2414 = vld [vmem:[%s7 + $0x4c0] sm:$0xf]
    %v2415 = vld [vmem:[%s7 + $0x4c4] sm:$0xf]
    %v2416 = vld [vmem:[%s7 + $0x4c8] sm:$0xf]
    %v2417 = vld [vmem:[%s7 + $0x4cc] sm:$0xf]
    %v2418 = vld [vmem:[%s7 + $0x4d0] sm:$0xf]
    %v2419 = vld [vmem:[%s7 + $0x4d4] sm:$0xf]
    %v2420 = vld [vmem:[%s7 + $0x4d8] sm:$0xf]
    %v2421 = vld [vmem:[%s7 + $0x4dc] sm:$0xf]
    %v2422 = vld [vmem:[%s7 + $0x4e0] sm:$0xf]
    %v2423 = vld [vmem:[%s7 + $0x4e4] sm:$0xf]
    %v2424 = vld [vmem:[%s7 + $0x4e8] sm:$0xf]
    %v2425 = vld [vmem:[%s7 + $0x4ec] sm:$0xf]
    %v2426 = vld [vmem:[%s7 + $0x4f0] sm:$0xf]
    %v2427 = vld [vmem:[%s7 + $0x4f4] sm:$0xf]
    %v2428 = vld [vmem:[%s7 + $0x4f8] sm:$0xf]
    %v2429 = vld [vmem:[%s7 + $0x4fc] sm:$0xf]
    %v2430 = vld [vmem:[%s7 + $0x500] sm:$0xf]
    %v2431 = vld [vmem:[%s7 + $0x504] sm:$0xf]
    %v2432 = vld [vmem:[%s7 + $0x508] sm:$0xf]
    %v2433 = vld [vmem:[%s7 + $0x50c] sm:$0xf]
    %v2434 = vld [vmem:[%s7 + $0x510] sm:$0xf]
    %v2435 = vld [vmem:[%s7 + $0x514] sm:$0xf]
    %v2436 = vld [vmem:[%s7 + $0x518] sm:$0xf]
    %v2437 = vld [vmem:[%s7 + $0x51c] sm:$0xf]
    %v2438 = vld [vmem:[%s7 + $0x520] sm:$0xf]
    %v2439 = vld [vmem:[%s7 + $0x524] sm:$0xf]
    %v2440 = vld [vmem:[%s7 + $0x528] sm:$0xf]
    %v2441 = vld [vmem:[%s7 + $0x52c] sm:$0xf]
    %v2442 = vld [vmem:[%s7 + $0x530] sm:$0xf]
    %v2443 = vld [vmem:[%s7 + $0x534] sm:$0xf]
    %v2444 = vld [vmem:[%s7 + $0x538] sm:$0xf]
    %v2445 = vld [vmem:[%s7 + $0x53c] sm:$0xf]
    %v2446 = vld [vmem:[%s7 + $0x540] sm:$0xf]
    %v2447 = vld [vmem:[%s7 + $0x544] sm:$0xf]
    %v2448 = vld [vmem:[%s7 + $0x548] sm:$0xf]
    %v2449 = vld [vmem:[%s7 + $0x54c] sm:$0xf]
    %v2450 = vld [vmem:[%s7 + $0x550] sm:$0xf]
    %v2451 = vld [vmem:[%s7 + $0x554] sm:$0xf]
    %v2452 = vld [vmem:[%s7 + $0x558] sm:$0xf]
    %v2453 = vld [vmem:[%s7 + $0x55c] sm:$0xf]
    %v2454 = vld [vmem:[%s7 + $0x560] sm:$0xf]
    %v2455 = vld [vmem:[%s7 + $0x564] sm:$0xf]
    %v2456 = vld [vmem:[%s7 + $0x568] sm:$0xf]
    %v2457 = vld [vmem:[%s7 + $0x56c] sm:$0xf]
    %v2458 = vld [vmem:[%s7 + $0x570] sm:$0xf]
    %v2459 = vld [vmem:[%s7 + $0x574] sm:$0xf]
    %v2460 = vld [vmem:[%s7 + $0x578] sm:$0xf]
    %v2461 = vld [vmem:[%s7 + $0x57c] sm:$0xf]
    %v2462 = vld [vmem:[%s7 + $0x580] sm:$0xf]
    %v2463 = vld [vmem:[%s7 + $0x584] sm:$0xf]
    %v2464 = vld [vmem:[%s7 + $0x588] sm:$0xf]
    %v2465 = vld [vmem:[%s7 + $0x58c] sm:$0xf]
    %v2466 = vld [vmem:[%s7 + $0x590] sm:$0xf]
    %v2467 = vld [vmem:[%s7 + $0x594] sm:$0xf]
    %v2468 = vld [vmem:[%s7 + $0x598] sm:$0xf]
    %v2469 = vld [vmem:[%s7 + $0x59c] sm:$0xf]
    %v2470 = vld [vmem:[%s7 + $0x5a0] sm:$0xf]
    %v2471 = vld [vmem:[%s7 + $0x5a4] sm:$0xf]
    %v2472 = vld [vmem:[%s7 + $0x5a8] sm:$0xf]
    %v2473 = vld [vmem:[%s7 + $0x5ac] sm:$0xf]
    %v2474 = vld [vmem:[%s7 + $0x5b0] sm:$0xf]
    %v2475 = vld [vmem:[%s7 + $0x5b4] sm:$0xf]
    %v2476 = vld [vmem:[%s7 + $0x5b8] sm:$0xf]
    %v2477 = vld [vmem:[%s7 + $0x5bc] sm:$0xf]
    %v2478 = vld [vmem:[%s7 + $0x5c0] sm:$0xf]
    %v2479 = vld [vmem:[%s7 + $0x5c4] sm:$0xf]
    %v2480 = vld [vmem:[%s7 + $0x5c8] sm:$0xf]
    %v2481 = vld [vmem:[%s7 + $0x5cc] sm:$0xf]
    %v2482 = vld [vmem:[%s7 + $0x5d0] sm:$0xf]
    %v2483 = vld [vmem:[%s7 + $0x5d4] sm:$0xf]
    %v2484 = vld [vmem:[%s7 + $0x5d8] sm:$0xf]
    %v2485 = vld [vmem:[%s7 + $0x5dc] sm:$0xf]
    %v2486 = vld [vmem:[%s7 + $0x5e0] sm:$0xf]
    %v2487 = vld [vmem:[%s7 + $0x5e4] sm:$0xf]
    %v2488 = vld [vmem:[%s7 + $0x5e8] sm:$0xf]
    %v2489 = vld [vmem:[%s7 + $0x5ec] sm:$0xf]
    %v2490 = vld [vmem:[%s7 + $0x5f0] sm:$0xf]
    %v2491 = vld [vmem:[%s7 + $0x5f4] sm:$0xf]
    %v2492 = vld [vmem:[%s7 + $0x5f8] sm:$0xf]
    %v2493 = vld [vmem:[%s7 + $0x5fc] sm:$0xf]
    %v2494 = vld [vmem:[%s7 + $0x600] sm:$0xf]
    %v2495 = vld [vmem:[%s7 + $0x604] sm:$0xf]
    %v2496 = vld [vmem:[%s7 + $0x608] sm:$0xf]
    %v2497 = vld [vmem:[%s7 + $0x60c] sm:$0xf]
    %v2498 = vld [vmem:[%s7 + $0x610] sm:$0xf]
    %v2499 = vld [vmem:[%s7 + $0x614] sm:$0xf]
    %v2500 = vld [vmem:[%s7 + $0x618] sm:$0xf]
    %v2501 = vld [vmem:[%s7 + $0x61c] sm:$0xf]
    %v2502 = vld [vmem:[%s7 + $0x620] sm:$0xf]
    %v2503 = vld [vmem:[%s7 + $0x624] sm:$0xf]
    %v2504 = vld [vmem:[%s7 + $0x628] sm:$0xf]
    %v2505 = vld [vmem:[%s7 + $0x62c] sm:$0xf]
    %v2506 = vld [vmem:[%s7 + $0x630] sm:$0xf]
    %v2507 = vld [vmem:[%s7 + $0x634] sm:$0xf]
    %v2508 = vld [vmem:[%s7 + $0x638] sm:$0xf]
    %v2509 = vld [vmem:[%s7 + $0x63c] sm:$0xf]
    %v2510 = vld [vmem:[%s7 + $0x640] sm:$0xf]
    %v2511 = vld [vmem:[%s7 + $0x644] sm:$0xf]
    %v2512 = vld [vmem:[%s7 + $0x648] sm:$0xf]
    %v2513 = vld [vmem:[%s7 + $0x64c] sm:$0xf]
    %v2514 = vld [vmem:[%s7 + $0x650] sm:$0xf]
    %v2515 = vld [vmem:[%s7 + $0x654] sm:$0xf]
    %v2516 = vld [vmem:[%s7 + $0x658] sm:$0xf]
    %v2517 = vld [vmem:[%s7 + $0x65c] sm:$0xf]
    %v2518 = vld [vmem:[%s7 + $0x660] sm:$0xf]
    %v2519 = vld [vmem:[%s7 + $0x664] sm:$0xf]
    %v2520 = vld [vmem:[%s7 + $0x668] sm:$0xf]
    %v2521 = vld [vmem:[%s7 + $0x66c] sm:$0xf]
    %v2522 = vld [vmem:[%s7 + $0x670] sm:$0xf]
    %v2523 = vld [vmem:[%s7 + $0x674] sm:$0xf]
    %v2524 = vld [vmem:[%s7 + $0x678] sm:$0xf]
    %v2525 = vld [vmem:[%s7 + $0x67c] sm:$0xf]
    %v2526 = vld [vmem:[%s7 + $0x680] sm:$0xf]
    %v2527 = vld [vmem:[%s7 + $0x684] sm:$0xf]
    %v2528 = vld [vmem:[%s7 + $0x688] sm:$0xf]
    %v2529 = vld [vmem:[%s7 + $0x68c] sm:$0xf]
    %v2530 = vld [vmem:[%s7 + $0x690] sm:$0xf]
    %v2531 = vld [vmem:[%s7 + $0x694] sm:$0xf]
    %v2532 = vld [vmem:[%s7 + $0x698] sm:$0xf]
    %v2533 = vld [vmem:[%s7 + $0x69c] sm:$0xf]
    %v2534 = vld [vmem:[%s7 + $0x6a0] sm:$0xf]
    %v2535 = vld [vmem:[%s7 + $0x6a4] sm:$0xf]
    %v2536 = vld [vmem:[%s7 + $0x6a8] sm:$0xf]
    %v2537 = vld [vmem:[%s7 + $0x6ac] sm:$0xf]
    %v2538 = vld [vmem:[%s7 + $0x6b0] sm:$0xf]
    %v2539 = vld [vmem:[%s7 + $0x6b4] sm:$0xf]
    %v2540 = vld [vmem:[%s7 + $0x6b8] sm:$0xf]
    %v2541 = vld [vmem:[%s7 + $0x6bc] sm:$0xf]
    %v2542 = vld [vmem:[%s7 + $0x6c0] sm:$0xf]
    %v2543 = vld [vmem:[%s7 + $0x6c4] sm:$0xf]
    %v2544 = vld [vmem:[%s7 + $0x6c8] sm:$0xf]
    %v2545 = vld [vmem:[%s7 + $0x6cc] sm:$0xf]
    %v2546 = vld [vmem:[%s7 + $0x6d0] sm:$0xf]
    %v2547 = vld [vmem:[%s7 + $0x6d4] sm:$0xf]
    %v2548 = vld [vmem:[%s7 + $0x6d8] sm:$0xf]
    %v2549 = vld [vmem:[%s7 + $0x6dc] sm:$0xf]
    %v2550 = vld [vmem:[%s7 + $0x6e0] sm:$0xf]
    %v2551 = vld [vmem:[%s7 + $0x6e4] sm:$0xf]
    %v2552 = vld [vmem:[%s7 + $0x6e8] sm:$0xf]
    %v2553 = vld [vmem:[%s7 + $0x6ec] sm:$0xf]
    %v2554 = vld [vmem:[%s7 + $0x6f0] sm:$0xf]
    %v2555 = vld [vmem:[%s7 + $0x6f4] sm:$0xf]
    %v2556 = vld [vmem:[%s7 + $0x6f8] sm:$0xf]
    %v2557 = vld [vmem:[%s7 + $0x6fc] sm:$0xf]
    %v2558 = vld [vmem:[%s7 + $0x700] sm:$0xf]
    %v2559 = vld [vmem:[%s7 + $0x704] sm:$0xf]
    %v2560 = vld [vmem:[%s7 + $0x708] sm:$0xf]
    %v2561 = vld [vmem:[%s7 + $0x70c] sm:$0xf]
    %v2562 = vld [vmem:[%s7 + $0x710] sm:$0xf]
    %v2563 = vld [vmem:[%s7 + $0x714] sm:$0xf]
    %v2564 = vld [vmem:[%s7 + $0x718] sm:$0xf]
    %v2565 = vld [vmem:[%s7 + $0x71c] sm:$0xf]
    %v2566 = vld [vmem:[%s7 + $0x720] sm:$0xf]
    %v2567 = vld [vmem:[%s7 + $0x724] sm:$0xf]
    %v2568 = vld [vmem:[%s7 + $0x728] sm:$0xf]
    %v2569 = vld [vmem:[%s7 + $0x72c] sm:$0xf]
    %v2570 = vld [vmem:[%s7 + $0x730] sm:$0xf]
    %v2571 = vld [vmem:[%s7 + $0x734] sm:$0xf]
    %v2572 = vld [vmem:[%s7 + $0x738] sm:$0xf]
    %v2573 = vld [vmem:[%s7 + $0x73c] sm:$0xf]
    %v2574 = vld [vmem:[%s7 + $0x740] sm:$0xf]
    %v2575 = vld [vmem:[%s7 + $0x744] sm:$0xf]
    %v2576 = vld [vmem:[%s7 + $0x748] sm:$0xf]
    %v2577 = vld [vmem:[%s7 + $0x74c] sm:$0xf]
    %v2578 = vld [vmem:[%s7 + $0x750] sm:$0xf]
    %v2579 = vld [vmem:[%s7 + $0x754] sm:$0xf]
    %v2580 = vld [vmem:[%s7 + $0x758] sm:$0xf]
    %v2581 = vld [vmem:[%s7 + $0x75c] sm:$0xf]
    %v2582 = vld [vmem:[%s7 + $0x760] sm:$0xf]
    %v2583 = vld [vmem:[%s7 + $0x764] sm:$0xf]
    %v2584 = vld [vmem:[%s7 + $0x768] sm:$0xf]
    %v2585 = vld [vmem:[%s7 + $0x76c] sm:$0xf]
    %v2586 = vld [vmem:[%s7 + $0x770] sm:$0xf]
    %v2587 = vld [vmem:[%s7 + $0x774] sm:$0xf]
    %v2588 = vld [vmem:[%s7 + $0x778] sm:$0xf]
    %v2589 = vld [vmem:[%s7 + $0x77c] sm:$0xf]
    %v2590 = vld [vmem:[%s7 + $0x780] sm:$0xf]
    %v2591 = vld [vmem:[%s7 + $0x784] sm:$0xf]
    %v2592 = vld [vmem:[%s7 + $0x788] sm:$0xf]
    %v2593 = vld [vmem:[%s7 + $0x78c] sm:$0xf]
    %v2594 = vld [vmem:[%s7 + $0x790] sm:$0xf]
    %v2595 = vld [vmem:[%s7 + $0x794] sm:$0xf]
    %v2596 = vld [vmem:[%s7 + $0x798] sm:$0xf]
    %v2597 = vld [vmem:[%s7 + $0x79c] sm:$0xf]
    %v2598 = vld [vmem:[%s7 + $0x7a0] sm:$0xf]
    %v2599 = vld [vmem:[%s7 + $0x7a4] sm:$0xf]
    %v2600 = vld [vmem:[%s7 + $0x7a8] sm:$0xf]
    %v2601 = vld [vmem:[%s7 + $0x7ac] sm:$0xf]
    %v2602 = vld [vmem:[%s7 + $0x7b0] sm:$0xf]
    %v2603 = vld [vmem:[%s7 + $0x7b4] sm:$0xf]
    %v2604 = vld [vmem:[%s7 + $0x7b8] sm:$0xf]
    %v2605 = vld [vmem:[%s7 + $0x7bc] sm:$0xf]
    %v2606 = vld [vmem:[%s7 + $0x7c0] sm:$0xf]
    %v2607 = vld [vmem:[%s7 + $0x7c4] sm:$0xf]
    %v2608 = vld [vmem:[%s7 + $0x7c8] sm:$0xf]
    %v2609 = vld [vmem:[%s7 + $0x7cc] sm:$0xf]
    %v2610 = vld [vmem:[%s7 + $0x7d0] sm:$0xf]
    %v2611 = vld [vmem:[%s7 + $0x7d4] sm:$0xf]
    %v2612 = vld [vmem:[%s7 + $0x7d8] sm:$0xf]
    %v2613 = vld [vmem:[%s7 + $0x7dc] sm:$0xf]
    %v2614 = vld [vmem:[%s7 + $0x7e0] sm:$0xf]
    %v2615 = vld [vmem:[%s7 + $0x7e4] sm:$0xf]
    %v2616 = vld [vmem:[%s7 + $0x7e8] sm:$0xf]
    %v2617 = vld [vmem:[%s7 + $0x7ec] sm:$0xf]
    %v2618 = vld [vmem:[%s7 + $0x7f0] sm:$0xf]
    %v2619 = vld [vmem:[%s7 + $0x7f4] sm:$0xf]
    %v2620 = vld [vmem:[%s7 + $0x7f8] sm:$0xf]
    %v2621 = vld [vmem:[%s7 + $0x7fc] sm:$0xf]
    %v2622 = vld [vmem:[%s7 + $0x800] sm:$0xf]
    %v2623 = vld [vmem:[%s7 + $0x804] sm:$0xf]
    %v2624 = vld [vmem:[%s7 + $0x808] sm:$0xf]
    %v2625 = vld [vmem:[%s7 + $0x80c] sm:$0xf]
    %v2626 = vld [vmem:[%s7 + $0x810] sm:$0xf]
    %v2627 = vld [vmem:[%s7 + $0x814] sm:$0xf]
    %v2628 = vld [vmem:[%s7 + $0x818] sm:$0xf]
    %v2629 = vld [vmem:[%s7 + $0x81c] sm:$0xf]
    %v2630 = vld [vmem:[%s7 + $0x820] sm:$0xf]
    %v2631 = vld [vmem:[%s7 + $0x824] sm:$0xf]
    %v2632 = vld [vmem:[%s7 + $0x828] sm:$0xf]
    %v2633 = vld [vmem:[%s7 + $0x82c] sm:$0xf]
    %v2634 = vld [vmem:[%s7 + $0x830] sm:$0xf]
    %v2635 = vld [vmem:[%s7 + $0x834] sm:$0xf]
    %v2636 = vld [vmem:[%s7 + $0x838] sm:$0xf]
    %v2637 = vld [vmem:[%s7 + $0x83c] sm:$0xf]
    %v2638 = vld [vmem:[%s7 + $0x840] sm:$0xf]
    %v2639 = vld [vmem:[%s7 + $0x844] sm:$0xf]
    %v2640 = vld [vmem:[%s7 + $0x848] sm:$0xf]
    %v2641 = vld [vmem:[%s7 + $0x84c] sm:$0xf]
    %v2642 = vld [vmem:[%s7 + $0x850] sm:$0xf]
    %v2643 = vld [vmem:[%s7 + $0x854] sm:$0xf]
    %v2644 = vld [vmem:[%s7 + $0x858] sm:$0xf]
    %v2645 = vld [vmem:[%s7 + $0x85c] sm:$0xf]
    %v2646 = vld [vmem:[%s7 + $0x860] sm:$0xf]
    %v2647 = vld [vmem:[%s7 + $0x864] sm:$0xf]
    %v2648 = vld [vmem:[%s7 + $0x868] sm:$0xf]
    %v2649 = vld [vmem:[%s7 + $0x86c] sm:$0xf]
    %v2650 = vld [vmem:[%s7 + $0x870] sm:$0xf]
    %v2651 = vld [vmem:[%s7 + $0x874] sm:$0xf]
    %v2652 = vld [vmem:[%s7 + $0x878] sm:$0xf]
    %v2653 = vld [vmem:[%s7 + $0x87c] sm:$0xf]
    %v2654 = vld [vmem:[%s7 + $0x880] sm:$0xf]
    %v2655 = vld [vmem:[%s7 + $0x884] sm:$0xf]
    %v2656 = vld [vmem:[%s7 + $0x888] sm:$0xf]
    %v2657 = vld [vmem:[%s7 + $0x88c] sm:$0xf]
    %v2658 = vld [vmem:[%s7 + $0x890] sm:$0xf]
    %v2659 = vld [vmem:[%s7 + $0x894] sm:$0xf]
    %v2660 = vld [vmem:[%s7 + $0x898] sm:$0xf]
    %v2661 = vld [vmem:[%s7 + $0x89c] sm:$0xf]
    %v2662 = vld [vmem:[%s7 + $0x8a0] sm:$0xf]
    %v2663 = vld [vmem:[%s7 + $0x8a4] sm:$0xf]
    %v2664 = vld [vmem:[%s7 + $0x8a8] sm:$0xf]
    %v2665 = vld [vmem:[%s7 + $0x8ac] sm:$0xf]
    %v2666 = vld [vmem:[%s7 + $0x8b0] sm:$0xf]
    %v2667 = vld [vmem:[%s7 + $0x8b4] sm:$0xf]
    %v2668 = vld [vmem:[%s7 + $0x8b8] sm:$0xf]
    %v2669 = vld [vmem:[%s7 + $0x8bc] sm:$0xf]
    %v2670 = vld [vmem:[%s7 + $0x8c0] sm:$0xf]
    %v2671 = vld [vmem:[%s7 + $0x8c4] sm:$0xf]
    %v2672 = vld [vmem:[%s7 + $0x8c8] sm:$0xf]
    %v2673 = vld [vmem:[%s7 + $0x8cc] sm:$0xf]
    %v2674 = vld [vmem:[%s7 + $0x8d0] sm:$0xf]
    %v2675 = vld [vmem:[%s7 + $0x8d4] sm:$0xf]
    %v2676 = vld [vmem:[%s7 + $0x8d8] sm:$0xf]
    %v2677 = vld [vmem:[%s7 + $0x8dc] sm:$0xf]
    %v2678 = vld [vmem:[%s7 + $0x8e0] sm:$0xf]
    %v2679 = vld [vmem:[%s7 + $0x8e4] sm:$0xf]
    %v2680 = vld [vmem:[%s7 + $0x8e8] sm:$0xf]
    %v2681 = vld [vmem:[%s7 + $0x8ec] sm:$0xf]
    %v2682 = vld [vmem:[%s7 + $0x8f0] sm:$0xf]
    %v2683 = vld [vmem:[%s7 + $0x8f4] sm:$0xf]
    %v2684 = vld [vmem:[%s7 + $0x8f8] sm:$0xf]
    %v2685 = vld [vmem:[%s7 + $0x8fc] sm:$0xf]
    %v2686 = vld [vmem:[%s7 + $0x900] sm:$0xf]
    %v2687 = vld [vmem:[%s7 + $0x904] sm:$0xf]
    %v2688 = vld [vmem:[%s7 + $0x908] sm:$0xf]
    %v2689 = vld [vmem:[%s7 + $0x90c] sm:$0xf]
    %v2690 = vld [vmem:[%s7 + $0x910] sm:$0xf]
    %v2691 = vld [vmem:[%s7 + $0x914] sm:$0xf]
    %v2692 = vld [vmem:[%s7 + $0x918] sm:$0xf]
    %v2693 = vld [vmem:[%s7 + $0x91c] sm:$0xf]
    %v2694 = vld [vmem:[%s7 + $0x920] sm:$0xf]
    %v2695 = vld [vmem:[%s7 + $0x924] sm:$0xf]
    %v2696 = vld [vmem:[%s7 + $0x928] sm:$0xf]
    %v2697 = vld [vmem:[%s7 + $0x92c] sm:$0xf]
    %v2698 = vld [vmem:[%s7 + $0x930] sm:$0xf]
    %v2699 = vld [vmem:[%s7 + $0x934] sm:$0xf]
    %v2700 = vld [vmem:[%s7 + $0x938] sm:$0xf]
    %v2701 = vld [vmem:[%s7 + $0x93c] sm:$0xf]
    %v2702 = vld [vmem:[%s7 + $0x940] sm:$0xf]
    %v2703 = vld [vmem:[%s7 + $0x944] sm:$0xf]
    %v2704 = vld [vmem:[%s7 + $0x948] sm:$0xf]
    %v2705 = vld [vmem:[%s7 + $0x94c] sm:$0xf]
    %v2706 = vld [vmem:[%s7 + $0x950] sm:$0xf]
    %v2707 = vld [vmem:[%s7 + $0x954] sm:$0xf]
    %v2708 = vld [vmem:[%s7 + $0x958] sm:$0xf]
    %v2709 = vld [vmem:[%s7 + $0x95c] sm:$0xf]
    %v2710 = vld [vmem:[%s7 + $0x960] sm:$0xf]
    %v2711 = vld [vmem:[%s7 + $0x964] sm:$0xf]
    %v2712 = vld [vmem:[%s7 + $0x968] sm:$0xf]
    %v2713 = vld [vmem:[%s7 + $0x96c] sm:$0xf]
    %v2714 = vld [vmem:[%s7 + $0x970] sm:$0xf]
    %v2715 = vld [vmem:[%s7 + $0x974] sm:$0xf]
    %v2716 = vld [vmem:[%s7 + $0x978] sm:$0xf]
    %v2717 = vld [vmem:[%s7 + $0x97c] sm:$0xf]
    %v2718 = vld [vmem:[%s7 + $0x980] sm:$0xf]
    %v2719 = vld [vmem:[%s7 + $0x984] sm:$0xf]
    %v2720 = vld [vmem:[%s7 + $0x988] sm:$0xf]
    %v2721 = vld [vmem:[%s7 + $0x98c] sm:$0xf]
    %v2722 = vld [vmem:[%s7 + $0x990] sm:$0xf]
    %v2723 = vld [vmem:[%s7 + $0x994] sm:$0xf]
    %v2724 = vld [vmem:[%s7 + $0x998] sm:$0xf]
    %v2725 = vld [vmem:[%s7 + $0x99c] sm:$0xf]
    %v2726 = vld [vmem:[%s7 + $0x9a0] sm:$0xf]
    %v2727 = vld [vmem:[%s7 + $0x9a4] sm:$0xf]
    %v2728 = vld [vmem:[%s7 + $0x9a8] sm:$0xf]
    %v2729 = vld [vmem:[%s7 + $0x9ac] sm:$0xf]
    %v2730 = vld [vmem:[%s7 + $0x9b0] sm:$0xf]
    %v2731 = vld [vmem:[%s7 + $0x9b4] sm:$0xf]
    %v2732 = vld [vmem:[%s7 + $0x9b8] sm:$0xf]
    %v2733 = vld [vmem:[%s7 + $0x9bc] sm:$0xf]
    %v2734 = vld [vmem:[%s7 + $0x9c0] sm:$0xf]
    %v2735 = vld [vmem:[%s7 + $0x9c4] sm:$0xf]
    %v2736 = vld [vmem:[%s7 + $0x9c8] sm:$0xf]
    %v2737 = vld [vmem:[%s7 + $0x9cc] sm:$0xf]
    %v2738 = vld [vmem:[%s7 + $0x9d0] sm:$0xf]
    %v2739 = vld [vmem:[%s7 + $0x9d4] sm:$0xf]
    %v2740 = vld [vmem:[%s7 + $0x9d8] sm:$0xf]
    %v2741 = vld [vmem:[%s7 + $0x9dc] sm:$0xf]
    %v2742 = vld [vmem:[%s7 + $0x9e0] sm:$0xf]
    %v2743 = vld [vmem:[%s7 + $0x9e4] sm:$0xf]
    %v2744 = vld [vmem:[%s7 + $0x9e8] sm:$0xf]
    %v2745 = vld [vmem:[%s7 + $0x9ec] sm:$0xf]
    %v2746 = vld [vmem:[%s7 + $0x9f0] sm:$0xf]
    %v2747 = vld [vmem:[%s7 + $0x9f4] sm:$0xf]
    %v2748 = vld [vmem:[%s7 + $0x9f8] sm:$0xf]
    %v2749 = vld [vmem:[%s7 + $0x9fc] sm:$0xf]
    %v2750 = vld [vmem:[%s7 + $0xa00] sm:$0xf]
    %v2751 = vld [vmem:[%s7 + $0xa04] sm:$0xf]
    %v2752 = vld [vmem:[%s7 + $0xa08] sm:$0xf]
    %v2753 = vld [vmem:[%s7 + $0xa0c] sm:$0xf]
    %v2754 = vld [vmem:[%s7 + $0xa10] sm:$0xf]
    %v2755 = vld [vmem:[%s7 + $0xa14] sm:$0xf]
    %v2756 = vld [vmem:[%s7 + $0xa18] sm:$0xf]
    %v2757 = vld [vmem:[%s7 + $0xa1c] sm:$0xf]
    %v2758 = vld [vmem:[%s7 + $0xa20] sm:$0xf]
    %v2759 = vld [vmem:[%s7 + $0xa24] sm:$0xf]
    %v2760 = vld [vmem:[%s7 + $0xa28] sm:$0xf]
    %v2761 = vld [vmem:[%s7 + $0xa2c] sm:$0xf]
    %v2762 = vld [vmem:[%s7 + $0xa30] sm:$0xf]
    %v2763 = vld [vmem:[%s7 + $0xa34] sm:$0xf]
    %v2764 = vld [vmem:[%s7 + $0xa38] sm:$0xf]
    %v2765 = vld [vmem:[%s7 + $0xa3c] sm:$0xf]
    %v2766 = vld [vmem:[%s7 + $0xa40] sm:$0xf]
    %v2767 = vld [vmem:[%s7 + $0xa44] sm:$0xf]
    %v2768 = vld [vmem:[%s7 + $0xa48] sm:$0xf]
    %v2769 = vld [vmem:[%s7 + $0xa4c] sm:$0xf]
    %v2770 = vld [vmem:[%s7 + $0xa50] sm:$0xf]
    %v2771 = vld [vmem:[%s7 + $0xa54] sm:$0xf]
    %v2772 = vld [vmem:[%s7 + $0xa58] sm:$0xf]
    %v2773 = vld [vmem:[%s7 + $0xa5c] sm:$0xf]
    %v2774 = vld [vmem:[%s7 + $0xa60] sm:$0xf]
    %v2775 = vld [vmem:[%s7 + $0xa64] sm:$0xf]
    %v2776 = vld [vmem:[%s7 + $0xa68] sm:$0xf]
    %v2777 = vld [vmem:[%s7 + $0xa6c] sm:$0xf]
    %v2778 = vld [vmem:[%s7 + $0xa70] sm:$0xf]
    %v2779 = vld [vmem:[%s7 + $0xa74] sm:$0xf]
    %v2780 = vld [vmem:[%s7 + $0xa78] sm:$0xf]
    %v2781 = vld [vmem:[%s7 + $0xa7c] sm:$0xf]
    %v2782 = vld [vmem:[%s7 + $0xa80] sm:$0xf]
    %v2783 = vld [vmem:[%s7 + $0xa84] sm:$0xf]
    %v2784 = vld [vmem:[%s7 + $0xa88] sm:$0xf]
    %v2785 = vld [vmem:[%s7 + $0xa8c] sm:$0xf]
    %v2786 = vld [vmem:[%s7 + $0xa90] sm:$0xf]
    %v2787 = vld [vmem:[%s7 + $0xa94] sm:$0xf]
    %v2788 = vld [vmem:[%s7 + $0xa98] sm:$0xf]
    %v2789 = vld [vmem:[%s7 + $0xa9c] sm:$0xf]
    %v2790 = vld [vmem:[%s7 + $0xaa0] sm:$0xf]
    %v2791 = vld [vmem:[%s7 + $0xaa4] sm:$0xf]
    %v2792 = vld [vmem:[%s7 + $0xaa8] sm:$0xf]
    %v2793 = vld [vmem:[%s7 + $0xaac] sm:$0xf]
    %v2794 = vld [vmem:[%s7 + $0xab0] sm:$0xf]
    %v2795 = vld [vmem:[%s7 + $0xab4] sm:$0xf]
    %v2796 = vld [vmem:[%s7 + $0xab8] sm:$0xf]
    %v2797 = vld [vmem:[%s7 + $0xabc] sm:$0xf]
    %v2798 = vld [vmem:[%s7 + $0xac0] sm:$0xf]
    %v2799 = vld [vmem:[%s7 + $0xac4] sm:$0xf]
    %v2800 = vld [vmem:[%s7 + $0xac8] sm:$0xf]
    %v2801 = vld [vmem:[%s7 + $0xacc] sm:$0xf]
    %v2802 = vld [vmem:[%s7 + $0xad0] sm:$0xf]
    %v2803 = vld [vmem:[%s7 + $0xad4] sm:$0xf]
    %v2804 = vld [vmem:[%s7 + $0xad8] sm:$0xf]
    %v2805 = vld [vmem:[%s7 + $0xadc] sm:$0xf]
    %v2806 = vld [vmem:[%s7 + $0xae0] sm:$0xf]
    %v2807 = vld [vmem:[%s7 + $0xae4] sm:$0xf]
    %v2808 = vld [vmem:[%s7 + $0xae8] sm:$0xf]
    %v2809 = vld [vmem:[%s7 + $0xaec] sm:$0xf]
    %v2810 = vld [vmem:[%s7 + $0xaf0] sm:$0xf]
    %v2811 = vld [vmem:[%s7 + $0xaf4] sm:$0xf]
    %v2812 = vld [vmem:[%s7 + $0xaf8] sm:$0xf]
    %v2813 = vld [vmem:[%s7 + $0xafc] sm:$0xf]
    %v2814 = vld [vmem:[%s7 + $0xb00] sm:$0xf]
    %v2815 = vld [vmem:[%s7 + $0xb04] sm:$0xf]
    %v2816 = vld [vmem:[%s7 + $0xb08] sm:$0xf]
    %v2817 = vld [vmem:[%s7 + $0xb0c] sm:$0xf]
    %v2818 = vld [vmem:[%s7 + $0xb10] sm:$0xf]
    %v2819 = vld [vmem:[%s7 + $0xb14] sm:$0xf]
    %v2820 = vld [vmem:[%s7 + $0xb18] sm:$0xf]
    %v2821 = vld [vmem:[%s7 + $0xb1c] sm:$0xf]
    %v2822 = vld [vmem:[%s7 + $0xb20] sm:$0xf]
    %v2823 = vld [vmem:[%s7 + $0xb24] sm:$0xf]
    %v2824 = vld [vmem:[%s7 + $0xb28] sm:$0xf]
    %v2825 = vld [vmem:[%s7 + $0xb2c] sm:$0xf]
    %v2826 = vld [vmem:[%s7 + $0xb30] sm:$0xf]
    %v2827 = vld [vmem:[%s7 + $0xb34] sm:$0xf]
    %v2828 = vld [vmem:[%s7 + $0xb38] sm:$0xf]
    %v2829 = vld [vmem:[%s7 + $0xb3c] sm:$0xf]
    %v2830 = vld [vmem:[%s7 + $0xb40] sm:$0xf]
    %v2831 = vld [vmem:[%s7 + $0xb44] sm:$0xf]
    %v2832 = vld [vmem:[%s7 + $0xb48] sm:$0xf]
    %v2833 = vld [vmem:[%s7 + $0xb4c] sm:$0xf]
    %v2834 = vld [vmem:[%s7 + $0xb50] sm:$0xf]
    %v2835 = vld [vmem:[%s7 + $0xb54] sm:$0xf]
    %v2836 = vld [vmem:[%s7 + $0xb58] sm:$0xf]
    %v2837 = vld [vmem:[%s7 + $0xb5c] sm:$0xf]
    %v2838 = vld [vmem:[%s7 + $0xb60] sm:$0xf]
    %v2839 = vld [vmem:[%s7 + $0xb64] sm:$0xf]
    %v2840 = vld [vmem:[%s7 + $0xb68] sm:$0xf]
    %v2841 = vld [vmem:[%s7 + $0xb6c] sm:$0xf]
    %v2842 = vld [vmem:[%s7 + $0xb70] sm:$0xf]
    %v2843 = vld [vmem:[%s7 + $0xb74] sm:$0xf]
    %v2844 = vld [vmem:[%s7 + $0xb78] sm:$0xf]
    %v2845 = vld [vmem:[%s7 + $0xb7c] sm:$0xf]
    %v2846 = vld [vmem:[%s7 + $0xb80] sm:$0xf]
    %v2847 = vld [vmem:[%s7 + $0xb84] sm:$0xf]
    %v2848 = vld [vmem:[%s7 + $0xb88] sm:$0xf]
    %v2849 = vld [vmem:[%s7 + $0xb8c] sm:$0xf]
    %v2850 = vld [vmem:[%s7 + $0xb90] sm:$0xf]
    %v2851 = vld [vmem:[%s7 + $0xb94] sm:$0xf]
    %v2852 = vld [vmem:[%s7 + $0xb98] sm:$0xf]
    %v2853 = vld [vmem:[%s7 + $0xb9c] sm:$0xf]
    %v2854 = vld [vmem:[%s7 + $0xba0] sm:$0xf]
    %v2855 = vld [vmem:[%s7 + $0xba4] sm:$0xf]
    %v2856 = vld [vmem:[%s7 + $0xba8] sm:$0xf]
    %v2857 = vld [vmem:[%s7 + $0xbac] sm:$0xf]
    %v2858 = vld [vmem:[%s7 + $0xbb0] sm:$0xf]
    %v2859 = vld [vmem:[%s7 + $0xbb4] sm:$0xf]
    %v2860 = vld [vmem:[%s7 + $0xbb8] sm:$0xf]
    %v2861 = vld [vmem:[%s7 + $0xbbc] sm:$0xf]
    %v2862 = vld [vmem:[%s7 + $0xbc0] sm:$0xf]
    %v2863 = vld [vmem:[%s7 + $0xbc4] sm:$0xf]
    %v2864 = vld [vmem:[%s7 + $0xbc8] sm:$0xf]
    %v2865 = vld [vmem:[%s7 + $0xbcc] sm:$0xf]
    %v2866 = vld [vmem:[%s7 + $0xbd0] sm:$0xf]
    %v2867 = vld [vmem:[%s7 + $0xbd4] sm:$0xf]
    %v2868 = vld [vmem:[%s7 + $0xbd8] sm:$0xf]
    %v2869 = vld [vmem:[%s7 + $0xbdc] sm:$0xf]
    %v2870 = vld [vmem:[%s7 + $0xbe0] sm:$0xf]
    %v2871 = vld [vmem:[%s7 + $0xbe4] sm:$0xf]
    %v2872 = vld [vmem:[%s7 + $0xbe8] sm:$0xf]
    %v2873 = vld [vmem:[%s7 + $0xbec] sm:$0xf]
    %v2874 = vld [vmem:[%s7 + $0xbf0] sm:$0xf]
    %v2875 = vld [vmem:[%s7 + $0xbf4] sm:$0xf]
    %v2876 = vld [vmem:[%s7 + $0xbf8] sm:$0xf]
    %v2877 = vld [vmem:[%s7 + $0xbfc] sm:$0xf]
    %v2878 = vld [vmem:[%s7 + $0xc00] sm:$0xf]
    %v2879 = vld [vmem:[%s7 + $0xc04] sm:$0xf]
    %v2880 = vld [vmem:[%s7 + $0xc08] sm:$0xf]
    %v2881 = vld [vmem:[%s7 + $0xc0c] sm:$0xf]
    %v2882 = vld [vmem:[%s7 + $0xc10] sm:$0xf]
    %v2883 = vld [vmem:[%s7 + $0xc14] sm:$0xf]
    %v2884 = vld [vmem:[%s7 + $0xc18] sm:$0xf]
    %v2885 = vld [vmem:[%s7 + $0xc1c] sm:$0xf]
    %v2886 = vld [vmem:[%s7 + $0xc20] sm:$0xf]
    %v2887 = vld [vmem:[%s7 + $0xc24] sm:$0xf]
    %v2888 = vld [vmem:[%s7 + $0xc28] sm:$0xf]
    %v2889 = vld [vmem:[%s7 + $0xc2c] sm:$0xf]
    %v2890 = vld [vmem:[%s7 + $0xc30] sm:$0xf]
    %v2891 = vld [vmem:[%s7 + $0xc34] sm:$0xf]
    %v2892 = vld [vmem:[%s7 + $0xc38] sm:$0xf]
    %v2893 = vld [vmem:[%s7 + $0xc3c] sm:$0xf]
    %v2894 = vld [vmem:[%s7 + $0xc40] sm:$0xf]
    %v2895 = vld [vmem:[%s7 + $0xc44] sm:$0xf]
    %v2896 = vld [vmem:[%s7 + $0xc48] sm:$0xf]
    %v2897 = vld [vmem:[%s7 + $0xc4c] sm:$0xf]
    %v2898 = vld [vmem:[%s7 + $0xc50] sm:$0xf]
    %v2899 = vld [vmem:[%s7 + $0xc54] sm:$0xf]
    %v2900 = vld [vmem:[%s7 + $0xc58] sm:$0xf]
    %v2901 = vld [vmem:[%s7 + $0xc5c] sm:$0xf]
    %v2902 = vld [vmem:[%s7 + $0xc60] sm:$0xf]
    %v2903 = vld [vmem:[%s7 + $0xc64] sm:$0xf]
    %v2904 = vld [vmem:[%s7 + $0xc68] sm:$0xf]
    %v2905 = vld [vmem:[%s7 + $0xc6c] sm:$0xf]
    %v2906 = vld [vmem:[%s7 + $0xc70] sm:$0xf]
    %v2907 = vld [vmem:[%s7 + $0xc74] sm:$0xf]
    %v2908 = vld [vmem:[%s7 + $0xc78] sm:$0xf]
    %v2909 = vld [vmem:[%s7 + $0xc7c] sm:$0xf]
    %v2910 = vld [vmem:[%s7 + $0xc80] sm:$0xf]
    %v2911 = vld [vmem:[%s7 + $0xc84] sm:$0xf]
    %v2912 = vld [vmem:[%s7 + $0xc88] sm:$0xf]
    %v2913 = vld [vmem:[%s7 + $0xc8c] sm:$0xf]
    %v2914 = vld [vmem:[%s7 + $0xc90] sm:$0xf]
    %v2915 = vld [vmem:[%s7 + $0xc94] sm:$0xf]
    %v2916 = vld [vmem:[%s7 + $0xc98] sm:$0xf]
    %v2917 = vld [vmem:[%s7 + $0xc9c] sm:$0xf]
    %v2918 = vld [vmem:[%s7 + $0xca0] sm:$0xf]
    %v2919 = vld [vmem:[%s7 + $0xca4] sm:$0xf]
    %v2920 = vld [vmem:[%s7 + $0xca8] sm:$0xf]
    %v2921 = vld [vmem:[%s7 + $0xcac] sm:$0xf]
    %v2922 = vld [vmem:[%s7 + $0xcb0] sm:$0xf]
    %v2923 = vld [vmem:[%s7 + $0xcb4] sm:$0xf]
    %v2924 = vld [vmem:[%s7 + $0xcb8] sm:$0xf]
    %v2925 = vld [vmem:[%s7 + $0xcbc] sm:$0xf]
    %v2926 = vld [vmem:[%s7 + $0xcc0] sm:$0xf]
    %v2927 = vld [vmem:[%s7 + $0xcc4] sm:$0xf]
    %v2928 = vld [vmem:[%s7 + $0xcc8] sm:$0xf]
    %v2929 = vld [vmem:[%s7 + $0xccc] sm:$0xf]
    %v2930 = vld [vmem:[%s7 + $0xcd0] sm:$0xf]
    %v2931 = vld [vmem:[%s7 + $0xcd4] sm:$0xf]
    %v2932 = vld [vmem:[%s7 + $0xcd8] sm:$0xf]
    %v2933 = vld [vmem:[%s7 + $0xcdc] sm:$0xf]
    %v2934 = vld [vmem:[%s7 + $0xce0] sm:$0xf]
    %v2935 = vld [vmem:[%s7 + $0xce4] sm:$0xf]
    %v2936 = vld [vmem:[%s7 + $0xce8] sm:$0xf]
    %v2937 = vld [vmem:[%s7 + $0xcec] sm:$0xf]
    %v2938 = vld [vmem:[%s7 + $0xcf0] sm:$0xf]
    %v2939 = vld [vmem:[%s7 + $0xcf4] sm:$0xf]
    %v2940 = vld [vmem:[%s7 + $0xcf8] sm:$0xf]
    %v2941 = vld [vmem:[%s7 + $0xcfc] sm:$0xf]
    %v2942 = vld [vmem:[%s7 + $0xd00] sm:$0xf]
    %v2943 = vld [vmem:[%s7 + $0xd04] sm:$0xf]
    %v2944 = vld [vmem:[%s7 + $0xd08] sm:$0xf]
    %v2945 = vld [vmem:[%s7 + $0xd0c] sm:$0xf]
    %v2946 = vld [vmem:[%s7 + $0xd10] sm:$0xf]
    %v2947 = vld [vmem:[%s7 + $0xd14] sm:$0xf]
    %v2948 = vld [vmem:[%s7 + $0xd18] sm:$0xf]
    %v2949 = vld [vmem:[%s7 + $0xd1c] sm:$0xf]
    %v2950 = vld [vmem:[%s7 + $0xd20] sm:$0xf]
    %v2951 = vld [vmem:[%s7 + $0xd24] sm:$0xf]
    %v2952 = vld [vmem:[%s7 + $0xd28] sm:$0xf]
    %v2953 = vld [vmem:[%s7 + $0xd2c] sm:$0xf]
    %v2954 = vld [vmem:[%s7 + $0xd30] sm:$0xf]
    %v2955 = vld [vmem:[%s7 + $0xd34] sm:$0xf]
    %v2956 = vld [vmem:[%s7 + $0xd38] sm:$0xf]
    %v2957 = vld [vmem:[%s7 + $0xd3c] sm:$0xf]
    %v2958 = vld [vmem:[%s7 + $0xd40] sm:$0xf]
    %v2959 = vld [vmem:[%s7 + $0xd44] sm:$0xf]
    %v2960 = vld [vmem:[%s7 + $0xd48] sm:$0xf]
    %v2961 = vld [vmem:[%s7 + $0xd4c] sm:$0xf]
    %v2962 = vld [vmem:[%s7 + $0xd50] sm:$0xf]
    %v2963 = vld [vmem:[%s7 + $0xd54] sm:$0xf]
    %v2964 = vld [vmem:[%s7 + $0xd58] sm:$0xf]
    %v2965 = vld [vmem:[%s7 + $0xd5c] sm:$0xf]
    %v2966 = vld [vmem:[%s7 + $0xd60] sm:$0xf]
    %v2967 = vld [vmem:[%s7 + $0xd64] sm:$0xf]
    %v2968 = vld [vmem:[%s7 + $0xd68] sm:$0xf]
    %v2969 = vld [vmem:[%s7 + $0xd6c] sm:$0xf]
    %v2970 = vld [vmem:[%s7 + $0xd70] sm:$0xf]
    %v2971 = vld [vmem:[%s7 + $0xd74] sm:$0xf]
    %v2972 = vld [vmem:[%s7 + $0xd78] sm:$0xf]
    %v2973 = vld [vmem:[%s7 + $0xd7c] sm:$0xf]
    %v2974 = vld [vmem:[%s7 + $0xd80] sm:$0xf]
    %v2975 = vld [vmem:[%s7 + $0xd84] sm:$0xf]
    %v2976 = vld [vmem:[%s7 + $0xd88] sm:$0xf]
    %v2977 = vld [vmem:[%s7 + $0xd8c] sm:$0xf]
    %v2978 = vld [vmem:[%s7 + $0xd90] sm:$0xf]
    %v2979 = vld [vmem:[%s7 + $0xd94] sm:$0xf]
    %v2980 = vld [vmem:[%s7 + $0xd98] sm:$0xf]
    %v2981 = vld [vmem:[%s7 + $0xd9c] sm:$0xf]
    %v2982 = vld [vmem:[%s7 + $0xda0] sm:$0xf]
    %v2983 = vld [vmem:[%s7 + $0xda4] sm:$0xf]
    %v2984 = vld [vmem:[%s7 + $0xda8] sm:$0xf]
    %v2985 = vld [vmem:[%s7 + $0xdac] sm:$0xf]
    %v2986 = vld [vmem:[%s7 + $0xdb0] sm:$0xf]
    %v2987 = vld [vmem:[%s7 + $0xdb4] sm:$0xf]
    %v2988 = vld [vmem:[%s7 + $0xdb8] sm:$0xf]
    %v2989 = vld [vmem:[%s7 + $0xdbc] sm:$0xf]
    %v2990 = vld [vmem:[%s7 + $0xdc0] sm:$0xf]
    %v2991 = vld [vmem:[%s7 + $0xdc4] sm:$0xf]
    %v2992 = vld [vmem:[%s7 + $0xdc8] sm:$0xf]
    %v2993 = vld [vmem:[%s7 + $0xdcc] sm:$0xf]
    %v2994 = vld [vmem:[%s7 + $0xdd0] sm:$0xf]
    %v2995 = vld [vmem:[%s7 + $0xdd4] sm:$0xf]
    %v2996 = vld [vmem:[%s7 + $0xdd8] sm:$0xf]
    %v2997 = vld [vmem:[%s7 + $0xddc] sm:$0xf]
    %v2998 = vld [vmem:[%s7 + $0xde0] sm:$0xf]
    %v2999 = vld [vmem:[%s7 + $0xde4] sm:$0xf]
    %v3000 = vld [vmem:[%s7 + $0xde8] sm:$0xf]
    %v3001 = vld [vmem:[%s7 + $0xdec] sm:$0xf]
    %v3002 = vld [vmem:[%s7 + $0xdf0] sm:$0xf]
    %v3003 = vld [vmem:[%s7 + $0xdf4] sm:$0xf]
    %v3004 = vld [vmem:[%s7 + $0xdf8] sm:$0xf]
    %v3005 = vld [vmem:[%s7 + $0xdfc] sm:$0xf]
    %v3006 = vld [vmem:[%s7 + $0xe00] sm:$0xf]
    %v3007 = vld [vmem:[%s7 + $0xe04] sm:$0xf]
    %v3008 = vld [vmem:[%s7 + $0xe08] sm:$0xf]
    %v3009 = vld [vmem:[%s7 + $0xe0c] sm:$0xf]
    %v3010 = vld [vmem:[%s7 + $0xe10] sm:$0xf]
    %v3011 = vld [vmem:[%s7 + $0xe14] sm:$0xf]
    %v3012 = vld [vmem:[%s7 + $0xe18] sm:$0xf]
    %v3013 = vld [vmem:[%s7 + $0xe1c] sm:$0xf]
    %v3014 = vld [vmem:[%s7 + $0xe20] sm:$0xf]
    %v3015 = vld [vmem:[%s7 + $0xe24] sm:$0xf]
    %v3016 = vld [vmem:[%s7 + $0xe28] sm:$0xf]
    %v3017 = vld [vmem:[%s7 + $0xe2c] sm:$0xf]
    %v3018 = vld [vmem:[%s7 + $0xe30] sm:$0xf]
    %v3019 = vld [vmem:[%s7 + $0xe34] sm:$0xf]
    %v3020 = vld [vmem:[%s7 + $0xe38] sm:$0xf]
    %v3021 = vld [vmem:[%s7 + $0xe3c] sm:$0xf]
    %v3022 = vld [vmem:[%s7 + $0xe40] sm:$0xf]
    %v3023 = vld [vmem:[%s7 + $0xe44] sm:$0xf]
    %v3024 = vld [vmem:[%s7 + $0xe48] sm:$0xf]
    %v3025 = vld [vmem:[%s7 + $0xe4c] sm:$0xf]
    %v3026 = vld [vmem:[%s7 + $0xe50] sm:$0xf]
    %v3027 = vld [vmem:[%s7 + $0xe54] sm:$0xf]
    %v3028 = vld [vmem:[%s7 + $0xe58] sm:$0xf]
    %v3029 = vld [vmem:[%s7 + $0xe5c] sm:$0xf]
    %v3030 = vld [vmem:[%s7 + $0xe60] sm:$0xf]
    %v3031 = vld [vmem:[%s7 + $0xe64] sm:$0xf]
    %v3032 = vld [vmem:[%s7 + $0xe68] sm:$0xf]
    %v3033 = vld [vmem:[%s7 + $0xe6c] sm:$0xf]
    %v3034 = vld [vmem:[%s7 + $0xe70] sm:$0xf]
    %v3035 = vld [vmem:[%s7 + $0xe74] sm:$0xf]
    %v3036 = vld [vmem:[%s7 + $0xe78] sm:$0xf]
    %v3037 = vld [vmem:[%s7 + $0xe7c] sm:$0xf]
    %v3038 = vld [vmem:[%s7 + $0xe80] sm:$0xf]
    %v3039 = vld [vmem:[%s7 + $0xe84] sm:$0xf]
    %v3040 = vld [vmem:[%s7 + $0xe88] sm:$0xf]
    %v3041 = vld [vmem:[%s7 + $0xe8c] sm:$0xf]
    %v3042 = vld [vmem:[%s7 + $0xe90] sm:$0xf]
    %v3043 = vld [vmem:[%s7 + $0xe94] sm:$0xf]
    %v3044 = vld [vmem:[%s7 + $0xe98] sm:$0xf]
    %v3045 = vld [vmem:[%s7 + $0xe9c] sm:$0xf]
    %v3046 = vld [vmem:[%s7 + $0xea0] sm:$0xf]
    %v3047 = vld [vmem:[%s7 + $0xea4] sm:$0xf]
    %v3048 = vld [vmem:[%s7 + $0xea8] sm:$0xf]
    %v3049 = vld [vmem:[%s7 + $0xeac] sm:$0xf]
    %v3050 = vld [vmem:[%s7 + $0xeb0] sm:$0xf]
    %v3051 = vld [vmem:[%s7 + $0xeb4] sm:$0xf]
    %v3052 = vld [vmem:[%s7 + $0xeb8] sm:$0xf]
    %v3053 = vld [vmem:[%s7 + $0xebc] sm:$0xf]
    %v3054 = vld [vmem:[%s7 + $0xec0] sm:$0xf]
    %v3055 = vld [vmem:[%s7 + $0xec4] sm:$0xf]
    %v3056 = vld [vmem:[%s7 + $0xec8] sm:$0xf]
    %v3057 = vld [vmem:[%s7 + $0xecc] sm:$0xf]
    %v3058 = vld [vmem:[%s7 + $0xed0] sm:$0xf]
    %v3059 = vld [vmem:[%s7 + $0xed4] sm:$0xf]
    %v3060 = vld [vmem:[%s7 + $0xed8] sm:$0xf]
    %v3061 = vld [vmem:[%s7 + $0xedc] sm:$0xf]
    %v3062 = vld [vmem:[%s7 + $0xee0] sm:$0xf]
    %v3063 = vld [vmem:[%s7 + $0xee4] sm:$0xf]
    %v3064 = vld [vmem:[%s7 + $0xee8] sm:$0xf]
    %v3065 = vld [vmem:[%s7 + $0xeec] sm:$0xf]
    %v3066 = vld [vmem:[%s7 + $0xef0] sm:$0xf]
    %v3067 = vld [vmem:[%s7 + $0xef4] sm:$0xf]
    %v3068 = vld [vmem:[%s7 + $0xef8] sm:$0xf]
    %v3069 = vld [vmem:[%s7 + $0xefc] sm:$0xf]
    %v3070 = vld [vmem:[%s7 + $0xf00] sm:$0xf]
    %v3071 = vld [vmem:[%s7 + $0xf04] sm:$0xf]
    %v3072 = vld [vmem:[%s7 + $0xf08] sm:$0xf]
    %v3073 = vld [vmem:[%s7 + $0xf0c] sm:$0xf]
    %v3074 = vld [vmem:[%s7 + $0xf10] sm:$0xf]
    %v3075 = vld [vmem:[%s7 + $0xf14] sm:$0xf]
    %v3076 = vld [vmem:[%s7 + $0xf18] sm:$0xf]
    %v3077 = vld [vmem:[%s7 + $0xf1c] sm:$0xf]
    %v3078 = vld [vmem:[%s7 + $0xf20] sm:$0xf]
    %v3079 = vld [vmem:[%s7 + $0xf24] sm:$0xf]
    %v3080 = vld [vmem:[%s7 + $0xf28] sm:$0xf]
    %v3081 = vld [vmem:[%s7 + $0xf2c] sm:$0xf]
    %v3082 = vld [vmem:[%s7 + $0xf30] sm:$0xf]
    %v3083 = vld [vmem:[%s7 + $0xf34] sm:$0xf]
    %v3084 = vld [vmem:[%s7 + $0xf38] sm:$0xf]
    %v3085 = vld [vmem:[%s7 + $0xf3c] sm:$0xf]
    %v3086 = vld [vmem:[%s7 + $0xf40] sm:$0xf]
    %v3087 = vld [vmem:[%s7 + $0xf44] sm:$0xf]
    %v3088 = vld [vmem:[%s7 + $0xf48] sm:$0xf]
    %v3089 = vld [vmem:[%s7 + $0xf4c] sm:$0xf]
    %v3090 = vld [vmem:[%s7 + $0xf50] sm:$0xf]
    %v3091 = vld [vmem:[%s7 + $0xf54] sm:$0xf]
    %v3092 = vld [vmem:[%s7 + $0xf58] sm:$0xf]
    %v3093 = vld [vmem:[%s7 + $0xf5c] sm:$0xf]
    %v3094 = vld [vmem:[%s7 + $0xf60] sm:$0xf]
    %v3095 = vld [vmem:[%s7 + $0xf64] sm:$0xf]
    %v3096 = vld [vmem:[%s7 + $0xf68] sm:$0xf]
    %v3097 = vld [vmem:[%s7 + $0xf6c] sm:$0xf]
    %v3098 = vld [vmem:[%s7 + $0xf70] sm:$0xf]
    %v3099 = vld [vmem:[%s7 + $0xf74] sm:$0xf]
    %v3100 = vld [vmem:[%s7 + $0xf78] sm:$0xf]
    %v3101 = vld [vmem:[%s7 + $0xf7c] sm:$0xf]
    %v3102 = vld [vmem:[%s7 + $0xf80] sm:$0xf]
    %v3103 = vld [vmem:[%s7 + $0xf84] sm:$0xf]
    %v3104 = vld [vmem:[%s7 + $0xf88] sm:$0xf]
    %v3105 = vld [vmem:[%s7 + $0xf8c] sm:$0xf]
    %v3106 = vld [vmem:[%s7 + $0xf90] sm:$0xf]
    %v3107 = vld [vmem:[%s7 + $0xf94] sm:$0xf]
    %v3108 = vld [vmem:[%s7 + $0xf98] sm:$0xf]
    %v3109 = vld [vmem:[%s7 + $0xf9c] sm:$0xf]
    %v3110 = vld [vmem:[%s7 + $0xfa0] sm:$0xf]
    %v3111 = vld [vmem:[%s7 + $0xfa4] sm:$0xf]
    %v3112 = vld [vmem:[%s7 + $0xfa8] sm:$0xf]
    %v3113 = vld [vmem:[%s7 + $0xfac] sm:$0x7]
    %v4118 = vunpack.c.l.b16 %v2110
    %v4119 = vunpack.c.l.b16 %v2111
    %v4120 = vunpack.c.l.b16 %v2112
    %v4121 = vunpack.c.l.b16 %v2113
    %v4122 = vunpack.c.l.b16 %v2114
    %v4123 = vunpack.c.l.b16 %v2115
    %v4124 = vunpack.c.l.b16 %v2116
    %v4125 = vunpack.c.l.b16 %v2117
    %v4126 = vunpack.c.l.b16 %v2118
    %v4127 = vunpack.c.l.b16 %v2119
    %v4128 = vunpack.c.l.b16 %v2120
    %v4129 = vunpack.c.l.b16 %v2121
    %v4130 = vunpack.c.l.b16 %v2122
    %v4131 = vunpack.c.l.b16 %v2123
    %v4132 = vunpack.c.l.b16 %v2124
    %v4133 = vunpack.c.l.b16 %v2125
    %v4134 = vunpack.c.l.b16 %v2126
    %v4135 = vunpack.c.l.b16 %v2127
    %v4136 = vunpack.c.l.b16 %v2128
    %v4137 = vunpack.c.l.b16 %v2129
    %v4138 = vunpack.c.l.b16 %v2130
    %v4139 = vunpack.c.l.b16 %v2131
    %v4140 = vunpack.c.l.b16 %v2132
    %v4141 = vunpack.c.l.b16 %v2133
    %v4142 = vunpack.c.l.b16 %v2134
    %v4143 = vunpack.c.l.b16 %v2135
    %v4144 = vunpack.c.l.b16 %v2136
    %v4145 = vunpack.c.l.b16 %v2137
    %v4146 = vunpack.c.l.b16 %v2138
    %v4147 = vunpack.c.l.b16 %v2139
    %v4148 = vunpack.c.l.b16 %v2140
    %v4149 = vunpack.c.l.b16 %v2141
    %v4150 = vunpack.c.l.b16 %v2142
    %v4151 = vunpack.c.l.b16 %v2143
    %v4152 = vunpack.c.l.b16 %v2144
    %v4153 = vunpack.c.l.b16 %v2145
    %v4154 = vunpack.c.l.b16 %v2146
    %v4155 = vunpack.c.l.b16 %v2147
    %v4156 = vunpack.c.l.b16 %v2148
    %v4157 = vunpack.c.l.b16 %v2149
    %v4158 = vunpack.c.l.b16 %v2150
    %v4159 = vunpack.c.l.b16 %v2151
    %v4160 = vunpack.c.l.b16 %v2152
    %v4161 = vunpack.c.l.b16 %v2153
    %v4162 = vunpack.c.l.b16 %v2154
    %v4163 = vunpack.c.l.b16 %v2155
    %v4164 = vunpack.c.l.b16 %v2156
    %v4165 = vunpack.c.l.b16 %v2157
    %v4166 = vunpack.c.l.b16 %v2158
    %v4167 = vunpack.c.l.b16 %v2159
    %v4168 = vunpack.c.l.b16 %v2160
    %v4169 = vunpack.c.l.b16 %v2161
    %v4170 = vunpack.c.l.b16 %v2162
    %v4171 = vunpack.c.l.b16 %v2163
    %v4172 = vunpack.c.l.b16 %v2164
    %v4173 = vunpack.c.l.b16 %v2165
    %v4174 = vunpack.c.l.b16 %v2166
    %v4175 = vunpack.c.l.b16 %v2167
    %v4176 = vunpack.c.l.b16 %v2168
    %v4177 = vunpack.c.l.b16 %v2169
    %v4178 = vunpack.c.l.b16 %v2170
    %v4179 = vunpack.c.l.b16 %v2171
    %v4180 = vunpack.c.l.b16 %v2172
    %v4181 = vunpack.c.l.b16 %v2173
    %v4182 = vunpack.c.l.b16 %v2174
    %v4183 = vunpack.c.l.b16 %v2175
    %v4184 = vunpack.c.l.b16 %v2176
    %v4185 = vunpack.c.l.b16 %v2177
    %v4186 = vunpack.c.l.b16 %v2178
    %v4187 = vunpack.c.l.b16 %v2179
    %v4188 = vunpack.c.l.b16 %v2180
    %v4189 = vunpack.c.l.b16 %v2181
    %v4190 = vunpack.c.l.b16 %v2182
    %v4191 = vunpack.c.l.b16 %v2183
    %v4192 = vunpack.c.l.b16 %v2184
    %v4193 = vunpack.c.l.b16 %v2185
    %v4194 = vunpack.c.l.b16 %v2186
    %v4195 = vunpack.c.l.b16 %v2187
    %v4196 = vunpack.c.l.b16 %v2188
    %v4197 = vunpack.c.l.b16 %v2189
    %v4198 = vunpack.c.l.b16 %v2190
    %v4199 = vunpack.c.l.b16 %v2191
    %v4200 = vunpack.c.l.b16 %v2192
    %v4201 = vunpack.c.l.b16 %v2193
    %v4202 = vunpack.c.l.b16 %v2194
    %v4203 = vunpack.c.l.b16 %v2195
    %v4204 = vunpack.c.l.b16 %v2196
    %v4205 = vunpack.c.l.b16 %v2197
    %v4206 = vunpack.c.l.b16 %v2198
    %v4207 = vunpack.c.l.b16 %v2199
    %v4208 = vunpack.c.l.b16 %v2200
    %v4209 = vunpack.c.l.b16 %v2201
    %v4210 = vunpack.c.l.b16 %v2202
    %v4211 = vunpack.c.l.b16 %v2203
    %v4212 = vunpack.c.l.b16 %v2204
    %v4213 = vunpack.c.l.b16 %v2205
    %v4214 = vunpack.c.l.b16 %v2206
    %v4215 = vunpack.c.l.b16 %v2207
    %v4216 = vunpack.c.l.b16 %v2208
    %v4217 = vunpack.c.l.b16 %v2209
    %v4218 = vunpack.c.l.b16 %v2210
    %v4219 = vunpack.c.l.b16 %v2211
    %v4220 = vunpack.c.l.b16 %v2212
    %v4221 = vunpack.c.l.b16 %v2213
    %v4222 = vunpack.c.l.b16 %v2214
    %v4223 = vunpack.c.l.b16 %v2215
    %v4224 = vunpack.c.l.b16 %v2216
    %v4225 = vunpack.c.l.b16 %v2217
    %v4226 = vunpack.c.l.b16 %v2218
    %v4227 = vunpack.c.l.b16 %v2219
    %v4228 = vunpack.c.l.b16 %v2220
    %v4229 = vunpack.c.l.b16 %v2221
    %v4230 = vunpack.c.l.b16 %v2222
    %v4231 = vunpack.c.l.b16 %v2223
    %v4232 = vunpack.c.l.b16 %v2224
    %v4233 = vunpack.c.l.b16 %v2225
    %v4234 = vunpack.c.l.b16 %v2226
    %v4235 = vunpack.c.l.b16 %v2227
    %v4236 = vunpack.c.l.b16 %v2228
    %v4237 = vunpack.c.l.b16 %v2229
    %v4238 = vunpack.c.l.b16 %v2230
    %v4239 = vunpack.c.l.b16 %v2231
    %v4240 = vunpack.c.l.b16 %v2232
    %v4241 = vunpack.c.l.b16 %v2233
    %v4242 = vunpack.c.l.b16 %v2234
    %v4243 = vunpack.c.l.b16 %v2235
    %v4244 = vunpack.c.l.b16 %v2236
    %v4245 = vunpack.c.l.b16 %v2237
    %v4246 = vunpack.c.l.b16 %v2238
    %v4247 = vunpack.c.l.b16 %v2239
    %v4248 = vunpack.c.l.b16 %v2240
    %v4249 = vunpack.c.l.b16 %v2241
    %v4250 = vunpack.c.l.b16 %v2242
    %v4251 = vunpack.c.l.b16 %v2243
    %v4252 = vunpack.c.l.b16 %v2244
    %v4253 = vunpack.c.l.b16 %v2245
    %v4254 = vunpack.c.l.b16 %v2246
    %v4255 = vunpack.c.l.b16 %v2247
    %v4256 = vunpack.c.l.b16 %v2248
    %v4257 = vunpack.c.l.b16 %v2249
    %v4258 = vunpack.c.l.b16 %v2250
    %v4259 = vunpack.c.l.b16 %v2251
    %v4260 = vunpack.c.l.b16 %v2252
    %v4261 = vunpack.c.l.b16 %v2253
    %v4262 = vunpack.c.l.b16 %v2254
    %v4263 = vunpack.c.l.b16 %v2255
    %v4264 = vunpack.c.l.b16 %v2256
    %v4265 = vunpack.c.l.b16 %v2257
    %v4266 = vunpack.c.l.b16 %v2258
    %v4267 = vunpack.c.l.b16 %v2259
    %v4268 = vunpack.c.l.b16 %v2260
    %v4269 = vunpack.c.l.b16 %v2261
    %v4270 = vunpack.c.l.b16 %v2262
    %v4271 = vunpack.c.l.b16 %v2263
    %v4272 = vunpack.c.l.b16 %v2264
    %v4273 = vunpack.c.l.b16 %v2265
    %v4274 = vunpack.c.l.b16 %v2266
    %v4275 = vunpack.c.l.b16 %v2267
    %v4276 = vunpack.c.l.b16 %v2268
    %v4277 = vunpack.c.l.b16 %v2269
    %v4278 = vunpack.c.l.b16 %v2270
    %v4279 = vunpack.c.l.b16 %v2271
    %v4280 = vunpack.c.l.b16 %v2272
    %v4281 = vunpack.c.l.b16 %v2273
    %v4282 = vunpack.c.l.b16 %v2274
    %v4283 = vunpack.c.l.b16 %v2275
    %v4284 = vunpack.c.l.b16 %v2276
    %v4285 = vunpack.c.l.b16 %v2277
    %v4286 = vunpack.c.l.b16 %v2278
    %v4287 = vunpack.c.l.b16 %v2279
    %v4288 = vunpack.c.l.b16 %v2280
    %v4289 = vunpack.c.l.b16 %v2281
    %v4290 = vunpack.c.l.b16 %v2282
    %v4291 = vunpack.c.l.b16 %v2283
    %v4292 = vunpack.c.l.b16 %v2284
    %v4293 = vunpack.c.l.b16 %v2285
    %v4294 = vunpack.c.l.b16 %v2286
    %v4295 = vunpack.c.l.b16 %v2287
    %v4296 = vunpack.c.l.b16 %v2288
    %v4297 = vunpack.c.l.b16 %v2289
    %v4298 = vunpack.c.l.b16 %v2290
    %v4299 = vunpack.c.l.b16 %v2291
    %v4300 = vunpack.c.l.b16 %v2292
    %v4301 = vunpack.c.l.b16 %v2293
    %v4302 = vunpack.c.l.b16 %v2294
    %v4303 = vunpack.c.l.b16 %v2295
    %v4304 = vunpack.c.l.b16 %v2296
    %v4305 = vunpack.c.l.b16 %v2297
    %v4306 = vunpack.c.l.b16 %v2298
    %v4307 = vunpack.c.l.b16 %v2299
    %v4308 = vunpack.c.l.b16 %v2300
    %v4309 = vunpack.c.l.b16 %v2301
    %v4310 = vunpack.c.l.b16 %v2302
    %v4311 = vunpack.c.l.b16 %v2303
    %v4312 = vunpack.c.l.b16 %v2304
    %v4313 = vunpack.c.l.b16 %v2305
    %v4314 = vunpack.c.l.b16 %v2306
    %v4315 = vunpack.c.l.b16 %v2307
    %v4316 = vunpack.c.l.b16 %v2308
    %v4317 = vunpack.c.l.b16 %v2309
    %v4318 = vunpack.c.l.b16 %v2310
    %v4319 = vunpack.c.l.b16 %v2311
    %v4320 = vunpack.c.l.b16 %v2312
    %v4321 = vunpack.c.l.b16 %v2313
    %v4322 = vunpack.c.l.b16 %v2314
    %v4323 = vunpack.c.l.b16 %v2315
    %v4324 = vunpack.c.l.b16 %v2316
    %v4325 = vunpack.c.l.b16 %v2317
    %v4326 = vunpack.c.l.b16 %v2318
    %v4327 = vunpack.c.l.b16 %v2319
    %v4328 = vunpack.c.l.b16 %v2320
    %v4329 = vunpack.c.l.b16 %v2321
    %v4330 = vunpack.c.l.b16 %v2322
    %v4331 = vunpack.c.l.b16 %v2323
    %v4332 = vunpack.c.l.b16 %v2324
    %v4333 = vunpack.c.l.b16 %v2325
    %v4334 = vunpack.c.l.b16 %v2326
    %v4335 = vunpack.c.l.b16 %v2327
    %v4336 = vunpack.c.l.b16 %v2328
    %v4337 = vunpack.c.l.b16 %v2329
    %v4338 = vunpack.c.l.b16 %v2330
    %v4339 = vunpack.c.l.b16 %v2331
    %v4340 = vunpack.c.l.b16 %v2332
    %v4341 = vunpack.c.l.b16 %v2333
    %v4342 = vunpack.c.l.b16 %v2334
    %v4343 = vunpack.c.l.b16 %v2335
    %v4344 = vunpack.c.l.b16 %v2336
    %v4345 = vunpack.c.l.b16 %v2337
    %v4346 = vunpack.c.l.b16 %v2338
    %v4347 = vunpack.c.l.b16 %v2339
    %v4348 = vunpack.c.l.b16 %v2340
    %v4349 = vunpack.c.l.b16 %v2341
    %v4350 = vunpack.c.l.b16 %v2342
    %v4351 = vunpack.c.l.b16 %v2343
    %v4352 = vunpack.c.l.b16 %v2344
    %v4353 = vunpack.c.l.b16 %v2345
    %v4354 = vunpack.c.l.b16 %v2346
    %v4355 = vunpack.c.l.b16 %v2347
    %v4356 = vunpack.c.l.b16 %v2348
    %v4357 = vunpack.c.l.b16 %v2349
    %v4358 = vunpack.c.l.b16 %v2350
    %v4359 = vunpack.c.l.b16 %v2351
    %v4360 = vunpack.c.l.b16 %v2352
    %v4361 = vunpack.c.l.b16 %v2353
    %v4362 = vunpack.c.l.b16 %v2354
    %v4363 = vunpack.c.l.b16 %v2355
    %v4364 = vunpack.c.l.b16 %v2356
    %v4365 = vunpack.c.l.b16 %v2357
    %v4366 = vunpack.c.l.b16 %v2358
    %v4367 = vunpack.c.l.b16 %v2359
    %v4368 = vunpack.c.l.b16 %v2360
    %v4369 = vunpack.c.l.b16 %v2361
    %v4370 = vunpack.c.l.b16 %v2362
    %v4371 = vunpack.c.l.b16 %v2363
    %v4372 = vunpack.c.l.b16 %v2364
    %v4373 = vunpack.c.l.b16 %v2365
    %v4374 = vunpack.c.l.b16 %v2366
    %v4375 = vunpack.c.l.b16 %v2367
    %v4376 = vunpack.c.l.b16 %v2368
    %v4377 = vunpack.c.l.b16 %v2369
    %v4378 = vunpack.c.l.b16 %v2370
    %v4379 = vunpack.c.l.b16 %v2371
    %v4380 = vunpack.c.l.b16 %v2372
    %v4381 = vunpack.c.l.b16 %v2373
    %v4382 = vunpack.c.l.b16 %v2374
    %v4383 = vunpack.c.l.b16 %v2375
    %v4384 = vunpack.c.l.b16 %v2376
    %v4385 = vunpack.c.l.b16 %v2377
    %v4386 = vunpack.c.l.b16 %v2378
    %v4387 = vunpack.c.l.b16 %v2379
    %v4388 = vunpack.c.l.b16 %v2380
    %v4389 = vunpack.c.l.b16 %v2381
    %v4390 = vunpack.c.l.b16 %v2382
    %v4391 = vunpack.c.l.b16 %v2383
    %v4392 = vunpack.c.l.b16 %v2384
    %v4393 = vunpack.c.l.b16 %v2385
    %v4394 = vunpack.c.l.b16 %v2386
    %v4395 = vunpack.c.l.b16 %v2387
    %v4396 = vunpack.c.l.b16 %v2388
    %v4397 = vunpack.c.l.b16 %v2389
    %v4398 = vunpack.c.l.b16 %v2390
    %v4399 = vunpack.c.l.b16 %v2391
    %v4400 = vunpack.c.l.b16 %v2392
    %v4401 = vunpack.c.l.b16 %v2393
    %v4402 = vunpack.c.l.b16 %v2394
    %v4403 = vunpack.c.l.b16 %v2395
    %v4404 = vunpack.c.l.b16 %v2396
    %v4405 = vunpack.c.l.b16 %v2397
    %v4406 = vunpack.c.l.b16 %v2398
    %v4407 = vunpack.c.l.b16 %v2399
    %v4408 = vunpack.c.l.b16 %v2400
    %v4409 = vunpack.c.l.b16 %v2401
    %v4410 = vunpack.c.l.b16 %v2402
    %v4411 = vunpack.c.l.b16 %v2403
    %v4412 = vunpack.c.l.b16 %v2404
    %v4413 = vunpack.c.l.b16 %v2405
    %v4414 = vunpack.c.l.b16 %v2406
    %v4415 = vunpack.c.l.b16 %v2407
    %v4416 = vunpack.c.l.b16 %v2408
    %v4417 = vunpack.c.l.b16 %v2409
    %v4418 = vunpack.c.l.b16 %v2410
    %v4419 = vunpack.c.l.b16 %v2411
    %v4420 = vunpack.c.l.b16 %v2412
    %v4421 = vunpack.c.l.b16 %v2413
    %v4422 = vunpack.c.l.b16 %v2414
    %v4423 = vunpack.c.l.b16 %v2415
    %v4424 = vunpack.c.l.b16 %v2416
    %v4425 = vunpack.c.l.b16 %v2417
    %v4426 = vunpack.c.l.b16 %v2418
    %v4427 = vunpack.c.l.b16 %v2419
    %v4428 = vunpack.c.l.b16 %v2420
    %v4429 = vunpack.c.l.b16 %v2421
    %v4430 = vunpack.c.l.b16 %v2422
    %v4431 = vunpack.c.l.b16 %v2423
    %v4432 = vunpack.c.l.b16 %v2424
    %v4433 = vunpack.c.l.b16 %v2425
    %v4434 = vunpack.c.l.b16 %v2426
    %v4435 = vunpack.c.l.b16 %v2427
    %v4436 = vunpack.c.l.b16 %v2428
    %v4437 = vunpack.c.l.b16 %v2429
    %v4438 = vunpack.c.l.b16 %v2430
    %v4439 = vunpack.c.l.b16 %v2431
    %v4440 = vunpack.c.l.b16 %v2432
    %v4441 = vunpack.c.l.b16 %v2433
    %v4442 = vunpack.c.l.b16 %v2434
    %v4443 = vunpack.c.l.b16 %v2435
    %v4444 = vunpack.c.l.b16 %v2436
    %v4445 = vunpack.c.l.b16 %v2437
    %v4446 = vunpack.c.l.b16 %v2438
    %v4447 = vunpack.c.l.b16 %v2439
    %v4448 = vunpack.c.l.b16 %v2440
    %v4449 = vunpack.c.l.b16 %v2441
    %v4450 = vunpack.c.l.b16 %v2442
    %v4451 = vunpack.c.l.b16 %v2443
    %v4452 = vunpack.c.l.b16 %v2444
    %v4453 = vunpack.c.l.b16 %v2445
    %v4454 = vunpack.c.l.b16 %v2446
    %v4455 = vunpack.c.l.b16 %v2447
    %v4456 = vunpack.c.l.b16 %v2448
    %v4457 = vunpack.c.l.b16 %v2449
    %v4458 = vunpack.c.l.b16 %v2450
    %v4459 = vunpack.c.l.b16 %v2451
    %v4460 = vunpack.c.l.b16 %v2452
    %v4461 = vunpack.c.l.b16 %v2453
    %v4462 = vunpack.c.l.b16 %v2454
    %v4463 = vunpack.c.l.b16 %v2455
    %v4464 = vunpack.c.l.b16 %v2456
    %v4465 = vunpack.c.l.b16 %v2457
    %v4466 = vunpack.c.l.b16 %v2458
    %v4467 = vunpack.c.l.b16 %v2459
    %v4468 = vunpack.c.l.b16 %v2460
    %v4469 = vunpack.c.l.b16 %v2461
    %v4470 = vunpack.c.l.b16 %v2462
    %v4471 = vunpack.c.l.b16 %v2463
    %v4472 = vunpack.c.l.b16 %v2464
    %v4473 = vunpack.c.l.b16 %v2465
    %v4474 = vunpack.c.l.b16 %v2466
    %v4475 = vunpack.c.l.b16 %v2467
    %v4476 = vunpack.c.l.b16 %v2468
    %v4477 = vunpack.c.l.b16 %v2469
    %v4478 = vunpack.c.l.b16 %v2470
    %v4479 = vunpack.c.l.b16 %v2471
    %v4480 = vunpack.c.l.b16 %v2472
    %v4481 = vunpack.c.l.b16 %v2473
    %v4482 = vunpack.c.l.b16 %v2474
    %v4483 = vunpack.c.l.b16 %v2475
    %v4484 = vunpack.c.l.b16 %v2476
    %v4485 = vunpack.c.l.b16 %v2477
    %v4486 = vunpack.c.l.b16 %v2478
    %v4487 = vunpack.c.l.b16 %v2479
    %v4488 = vunpack.c.l.b16 %v2480
    %v4489 = vunpack.c.l.b16 %v2481
    %v4490 = vunpack.c.l.b16 %v2482
    %v4491 = vunpack.c.l.b16 %v2483
    %v4492 = vunpack.c.l.b16 %v2484
    %v4493 = vunpack.c.l.b16 %v2485
    %v4494 = vunpack.c.l.b16 %v2486
    %v4495 = vunpack.c.l.b16 %v2487
    %v4496 = vunpack.c.l.b16 %v2488
    %v4497 = vunpack.c.l.b16 %v2489
    %v4498 = vunpack.c.l.b16 %v2490
    %v4499 = vunpack.c.l.b16 %v2491
    %v4500 = vunpack.c.l.b16 %v2492
    %v4501 = vunpack.c.l.b16 %v2493
    %v4502 = vunpack.c.l.b16 %v2494
    %v4503 = vunpack.c.l.b16 %v2495
    %v4504 = vunpack.c.l.b16 %v2496
    %v4505 = vunpack.c.l.b16 %v2497
    %v4506 = vunpack.c.l.b16 %v2498
    %v4507 = vunpack.c.l.b16 %v2499
    %v4508 = vunpack.c.l.b16 %v2500
    %v4509 = vunpack.c.l.b16 %v2501
    %v4510 = vunpack.c.l.b16 %v2502
    %v4511 = vunpack.c.l.b16 %v2503
    %v4512 = vunpack.c.l.b16 %v2504
    %v4513 = vunpack.c.l.b16 %v2505
    %v4514 = vunpack.c.l.b16 %v2506
    %v4515 = vunpack.c.l.b16 %v2507
    %v4516 = vunpack.c.l.b16 %v2508
    %v4517 = vunpack.c.l.b16 %v2509
    %v4518 = vunpack.c.l.b16 %v2510
    %v4519 = vunpack.c.l.b16 %v2511
    %v4520 = vunpack.c.l.b16 %v2512
    %v4521 = vunpack.c.l.b16 %v2513
    %v4522 = vunpack.c.l.b16 %v2514
    %v4523 = vunpack.c.l.b16 %v2515
    %v4524 = vunpack.c.l.b16 %v2516
    %v4525 = vunpack.c.l.b16 %v2517
    %v4526 = vunpack.c.l.b16 %v2518
    %v4527 = vunpack.c.l.b16 %v2519
    %v4528 = vunpack.c.l.b16 %v2520
    %v4529 = vunpack.c.l.b16 %v2521
    %v4530 = vunpack.c.l.b16 %v2522
    %v4531 = vunpack.c.l.b16 %v2523
    %v4532 = vunpack.c.l.b16 %v2524
    %v4533 = vunpack.c.l.b16 %v2525
    %v4534 = vunpack.c.l.b16 %v2526
    %v4535 = vunpack.c.l.b16 %v2527
    %v4536 = vunpack.c.l.b16 %v2528
    %v4537 = vunpack.c.l.b16 %v2529
    %v4538 = vunpack.c.l.b16 %v2530
    %v4539 = vunpack.c.l.b16 %v2531
    %v4540 = vunpack.c.l.b16 %v2532
    %v4541 = vunpack.c.l.b16 %v2533
    %v4542 = vunpack.c.l.b16 %v2534
    %v4543 = vunpack.c.l.b16 %v2535
    %v4544 = vunpack.c.l.b16 %v2536
    %v4545 = vunpack.c.l.b16 %v2537
    %v4546 = vunpack.c.l.b16 %v2538
    %v4547 = vunpack.c.l.b16 %v2539
    %v4548 = vunpack.c.l.b16 %v2540
    %v4549 = vunpack.c.l.b16 %v2541
    %v4550 = vunpack.c.l.b16 %v2542
    %v4551 = vunpack.c.l.b16 %v2543
    %v4552 = vunpack.c.l.b16 %v2544
    %v4553 = vunpack.c.l.b16 %v2545
    %v4554 = vunpack.c.l.b16 %v2546
    %v4555 = vunpack.c.l.b16 %v2547
    %v4556 = vunpack.c.l.b16 %v2548
    %v4557 = vunpack.c.l.b16 %v2549
    %v4558 = vunpack.c.l.b16 %v2550
    %v4559 = vunpack.c.l.b16 %v2551
    %v4560 = vunpack.c.l.b16 %v2552
    %v4561 = vunpack.c.l.b16 %v2553
    %v4562 = vunpack.c.l.b16 %v2554
    %v4563 = vunpack.c.l.b16 %v2555
    %v4564 = vunpack.c.l.b16 %v2556
    %v4565 = vunpack.c.l.b16 %v2557
    %v4566 = vunpack.c.l.b16 %v2558
    %v4567 = vunpack.c.l.b16 %v2559
    %v4568 = vunpack.c.l.b16 %v2560
    %v4569 = vunpack.c.l.b16 %v2561
    %v4570 = vunpack.c.l.b16 %v2562
    %v4571 = vunpack.c.l.b16 %v2563
    %v4572 = vunpack.c.l.b16 %v2564
    %v4573 = vunpack.c.l.b16 %v2565
    %v4574 = vunpack.c.l.b16 %v2566
    %v4575 = vunpack.c.l.b16 %v2567
    %v4576 = vunpack.c.l.b16 %v2568
    %v4577 = vunpack.c.l.b16 %v2569
    %v4578 = vunpack.c.l.b16 %v2570
    %v4579 = vunpack.c.l.b16 %v2571
    %v4580 = vunpack.c.l.b16 %v2572
    %v4581 = vunpack.c.l.b16 %v2573
    %v4582 = vunpack.c.l.b16 %v2574
    %v4583 = vunpack.c.l.b16 %v2575
    %v4584 = vunpack.c.l.b16 %v2576
    %v4585 = vunpack.c.l.b16 %v2577
    %v4586 = vunpack.c.l.b16 %v2578
    %v4587 = vunpack.c.l.b16 %v2579
    %v4588 = vunpack.c.l.b16 %v2580
    %v4589 = vunpack.c.l.b16 %v2581
    %v4590 = vunpack.c.l.b16 %v2582
    %v4591 = vunpack.c.l.b16 %v2583
    %v4592 = vunpack.c.l.b16 %v2584
    %v4593 = vunpack.c.l.b16 %v2585
    %v4594 = vunpack.c.l.b16 %v2586
    %v4595 = vunpack.c.l.b16 %v2587
    %v4596 = vunpack.c.l.b16 %v2588
    %v4597 = vunpack.c.l.b16 %v2589
    %v4598 = vunpack.c.l.b16 %v2590
    %v4599 = vunpack.c.l.b16 %v2591
    %v4600 = vunpack.c.l.b16 %v2592
    %v4601 = vunpack.c.l.b16 %v2593
    %v4602 = vunpack.c.l.b16 %v2594
    %v4603 = vunpack.c.l.b16 %v2595
    %v4604 = vunpack.c.l.b16 %v2596
    %v4605 = vunpack.c.l.b16 %v2597
    %v4606 = vunpack.c.l.b16 %v2598
    %v4607 = vunpack.c.l.b16 %v2599
    %v4608 = vunpack.c.l.b16 %v2600
    %v4609 = vunpack.c.l.b16 %v2601
    %v4610 = vunpack.c.l.b16 %v2602
    %v4611 = vunpack.c.l.b16 %v2603
    %v4612 = vunpack.c.l.b16 %v2604
    %v4613 = vunpack.c.l.b16 %v2605
    %v4614 = vunpack.c.l.b16 %v2606
    %v4615 = vunpack.c.l.b16 %v2607
    %v4616 = vunpack.c.l.b16 %v2608
    %v4617 = vunpack.c.l.b16 %v2609
    %v4618 = vunpack.c.l.b16 %v2610
    %v4619 = vunpack.c.l.b16 %v2611
    %v4620 = vunpack.c.l.b16 %v2612
    %v4621 = vunpack.c.l.b16 %v2613
    %v4622 = vunpack.c.l.b16 %v2614
    %v4623 = vunpack.c.l.b16 %v2615
    %v4624 = vunpack.c.l.b16 %v2616
    %v4625 = vunpack.c.l.b16 %v2617
    %v4626 = vunpack.c.l.b16 %v2618
    %v4627 = vunpack.c.l.b16 %v2619
    %v4628 = vunpack.c.l.b16 %v2620
    %v4629 = vunpack.c.l.b16 %v2621
    %v4630 = vunpack.c.l.b16 %v2622
    %v4631 = vunpack.c.l.b16 %v2623
    %v4632 = vunpack.c.l.b16 %v2624
    %v4633 = vunpack.c.l.b16 %v2625
    %v4634 = vunpack.c.l.b16 %v2626
    %v4635 = vunpack.c.l.b16 %v2627
    %v4636 = vunpack.c.l.b16 %v2628
    %v4637 = vunpack.c.l.b16 %v2629
    %v4638 = vunpack.c.l.b16 %v2630
    %v4639 = vunpack.c.l.b16 %v2631
    %v4640 = vunpack.c.l.b16 %v2632
    %v4641 = vunpack.c.l.b16 %v2633
    %v4642 = vunpack.c.l.b16 %v2634
    %v4643 = vunpack.c.l.b16 %v2635
    %v4644 = vunpack.c.l.b16 %v2636
    %v4645 = vunpack.c.l.b16 %v2637
    %v4646 = vunpack.c.l.b16 %v2638
    %v4647 = vunpack.c.l.b16 %v2639
    %v4648 = vunpack.c.l.b16 %v2640
    %v4649 = vunpack.c.l.b16 %v2641
    %v4650 = vunpack.c.l.b16 %v2642
    %v4651 = vunpack.c.l.b16 %v2643
    %v4652 = vunpack.c.l.b16 %v2644
    %v4653 = vunpack.c.l.b16 %v2645
    %v4654 = vunpack.c.l.b16 %v2646
    %v4655 = vunpack.c.l.b16 %v2647
    %v4656 = vunpack.c.l.b16 %v2648
    %v4657 = vunpack.c.l.b16 %v2649
    %v4658 = vunpack.c.l.b16 %v2650
    %v4659 = vunpack.c.l.b16 %v2651
    %v4660 = vunpack.c.l.b16 %v2652
    %v4661 = vunpack.c.l.b16 %v2653
    %v4662 = vunpack.c.l.b16 %v2654
    %v4663 = vunpack.c.l.b16 %v2655
    %v4664 = vunpack.c.l.b16 %v2656
    %v4665 = vunpack.c.l.b16 %v2657
    %v4666 = vunpack.c.l.b16 %v2658
    %v4667 = vunpack.c.l.b16 %v2659
    %v4668 = vunpack.c.l.b16 %v2660
    %v4669 = vunpack.c.l.b16 %v2661
    %v4670 = vunpack.c.l.b16 %v2662
    %v4671 = vunpack.c.l.b16 %v2663
    %v4672 = vunpack.c.l.b16 %v2664
    %v4673 = vunpack.c.l.b16 %v2665
    %v4674 = vunpack.c.l.b16 %v2666
    %v4675 = vunpack.c.l.b16 %v2667
    %v4676 = vunpack.c.l.b16 %v2668
    %v4677 = vunpack.c.l.b16 %v2669
    %v4678 = vunpack.c.l.b16 %v2670
    %v4679 = vunpack.c.l.b16 %v2671
    %v4680 = vunpack.c.l.b16 %v2672
    %v4681 = vunpack.c.l.b16 %v2673
    %v4682 = vunpack.c.l.b16 %v2674
    %v4683 = vunpack.c.l.b16 %v2675
    %v4684 = vunpack.c.l.b16 %v2676
    %v4685 = vunpack.c.l.b16 %v2677
    %v4686 = vunpack.c.l.b16 %v2678
    %v4687 = vunpack.c.l.b16 %v2679
    %v4688 = vunpack.c.l.b16 %v2680
    %v4689 = vunpack.c.l.b16 %v2681
    %v4690 = vunpack.c.l.b16 %v2682
    %v4691 = vunpack.c.l.b16 %v2683
    %v4692 = vunpack.c.l.b16 %v2684
    %v4693 = vunpack.c.l.b16 %v2685
    %v4694 = vunpack.c.l.b16 %v2686
    %v4695 = vunpack.c.l.b16 %v2687
    %v4696 = vunpack.c.l.b16 %v2688
    %v4697 = vunpack.c.l.b16 %v2689
    %v4698 = vunpack.c.l.b16 %v2690
    %v4699 = vunpack.c.l.b16 %v2691
    %v4700 = vunpack.c.l.b16 %v2692
    %v4701 = vunpack.c.l.b16 %v2693
    %v4702 = vunpack.c.l.b16 %v2694
    %v4703 = vunpack.c.l.b16 %v2695
    %v4704 = vunpack.c.l.b16 %v2696
    %v4705 = vunpack.c.l.b16 %v2697
    %v4706 = vunpack.c.l.b16 %v2698
    %v4707 = vunpack.c.l.b16 %v2699
    %v4708 = vunpack.c.l.b16 %v2700
    %v4709 = vunpack.c.l.b16 %v2701
    %v4710 = vunpack.c.l.b16 %v2702
    %v4711 = vunpack.c.l.b16 %v2703
    %v4712 = vunpack.c.l.b16 %v2704
    %v4713 = vunpack.c.l.b16 %v2705
    %v4714 = vunpack.c.l.b16 %v2706
    %v4715 = vunpack.c.l.b16 %v2707
    %v4716 = vunpack.c.l.b16 %v2708
    %v4717 = vunpack.c.l.b16 %v2709
    %v4718 = vunpack.c.l.b16 %v2710
    %v4719 = vunpack.c.l.b16 %v2711
    %v4720 = vunpack.c.l.b16 %v2712
    %v4721 = vunpack.c.l.b16 %v2713
    %v4722 = vunpack.c.l.b16 %v2714
    %v4723 = vunpack.c.l.b16 %v2715
    %v4724 = vunpack.c.l.b16 %v2716
    %v4725 = vunpack.c.l.b16 %v2717
    %v4726 = vunpack.c.l.b16 %v2718
    %v4727 = vunpack.c.l.b16 %v2719
    %v4728 = vunpack.c.l.b16 %v2720
    %v4729 = vunpack.c.l.b16 %v2721
    %v4730 = vunpack.c.l.b16 %v2722
    %v4731 = vunpack.c.l.b16 %v2723
    %v4732 = vunpack.c.l.b16 %v2724
    %v4733 = vunpack.c.l.b16 %v2725
    %v4734 = vunpack.c.l.b16 %v2726
    %v4735 = vunpack.c.l.b16 %v2727
    %v4736 = vunpack.c.l.b16 %v2728
    %v4737 = vunpack.c.l.b16 %v2729
    %v4738 = vunpack.c.l.b16 %v2730
    %v4739 = vunpack.c.l.b16 %v2731
    %v4740 = vunpack.c.l.b16 %v2732
    %v4741 = vunpack.c.l.b16 %v2733
    %v4742 = vunpack.c.l.b16 %v2734
    %v4743 = vunpack.c.l.b16 %v2735
    %v4744 = vunpack.c.l.b16 %v2736
    %v4745 = vunpack.c.l.b16 %v2737
    %v4746 = vunpack.c.l.b16 %v2738
    %v4747 = vunpack.c.l.b16 %v2739
    %v4748 = vunpack.c.l.b16 %v2740
    %v4749 = vunpack.c.l.b16 %v2741
    %v4750 = vunpack.c.l.b16 %v2742
    %v4751 = vunpack.c.l.b16 %v2743
    %v4752 = vunpack.c.l.b16 %v2744
    %v4753 = vunpack.c.l.b16 %v2745
    %v4754 = vunpack.c.l.b16 %v2746
    %v4755 = vunpack.c.l.b16 %v2747
    %v4756 = vunpack.c.l.b16 %v2748
    %v4757 = vunpack.c.l.b16 %v2749
    %v4758 = vunpack.c.l.b16 %v2750
    %v4759 = vunpack.c.l.b16 %v2751
    %v4760 = vunpack.c.l.b16 %v2752
    %v4761 = vunpack.c.l.b16 %v2753
    %v4762 = vunpack.c.l.b16 %v2754
    %v4763 = vunpack.c.l.b16 %v2755
    %v4764 = vunpack.c.l.b16 %v2756
    %v4765 = vunpack.c.l.b16 %v2757
    %v4766 = vunpack.c.l.b16 %v2758
    %v4767 = vunpack.c.l.b16 %v2759
    %v4768 = vunpack.c.l.b16 %v2760
    %v4769 = vunpack.c.l.b16 %v2761
    %v4770 = vunpack.c.l.b16 %v2762
    %v4771 = vunpack.c.l.b16 %v2763
    %v4772 = vunpack.c.l.b16 %v2764
    %v4773 = vunpack.c.l.b16 %v2765
    %v4774 = vunpack.c.l.b16 %v2766
    %v4775 = vunpack.c.l.b16 %v2767
    %v4776 = vunpack.c.l.b16 %v2768
    %v4777 = vunpack.c.l.b16 %v2769
    %v4778 = vunpack.c.l.b16 %v2770
    %v4779 = vunpack.c.l.b16 %v2771
    %v4780 = vunpack.c.l.b16 %v2772
    %v4781 = vunpack.c.l.b16 %v2773
    %v4782 = vunpack.c.l.b16 %v2774
    %v4783 = vunpack.c.l.b16 %v2775
    %v4784 = vunpack.c.l.b16 %v2776
    %v4785 = vunpack.c.l.b16 %v2777
    %v4786 = vunpack.c.l.b16 %v2778
    %v4787 = vunpack.c.l.b16 %v2779
    %v4788 = vunpack.c.l.b16 %v2780
    %v4789 = vunpack.c.l.b16 %v2781
    %v4790 = vunpack.c.l.b16 %v2782
    %v4791 = vunpack.c.l.b16 %v2783
    %v4792 = vunpack.c.l.b16 %v2784
    %v4793 = vunpack.c.l.b16 %v2785
    %v4794 = vunpack.c.l.b16 %v2786
    %v4795 = vunpack.c.l.b16 %v2787
    %v4796 = vunpack.c.l.b16 %v2788
    %v4797 = vunpack.c.l.b16 %v2789
    %v4798 = vunpack.c.l.b16 %v2790
    %v4799 = vunpack.c.l.b16 %v2791
    %v4800 = vunpack.c.l.b16 %v2792
    %v4801 = vunpack.c.l.b16 %v2793
    %v4802 = vunpack.c.l.b16 %v2794
    %v4803 = vunpack.c.l.b16 %v2795
    %v4804 = vunpack.c.l.b16 %v2796
    %v4805 = vunpack.c.l.b16 %v2797
    %v4806 = vunpack.c.l.b16 %v2798
    %v4807 = vunpack.c.l.b16 %v2799
    %v4808 = vunpack.c.l.b16 %v2800
    %v4809 = vunpack.c.l.b16 %v2801
    %v4810 = vunpack.c.l.b16 %v2802
    %v4811 = vunpack.c.l.b16 %v2803
    %v4812 = vunpack.c.l.b16 %v2804
    %v4813 = vunpack.c.l.b16 %v2805
    %v4814 = vunpack.c.l.b16 %v2806
    %v4815 = vunpack.c.l.b16 %v2807
    %v4816 = vunpack.c.l.b16 %v2808
    %v4817 = vunpack.c.l.b16 %v2809
    %v4818 = vunpack.c.l.b16 %v2810
    %v4819 = vunpack.c.l.b16 %v2811
    %v4820 = vunpack.c.l.b16 %v2812
    %v4821 = vunpack.c.l.b16 %v2813
    %v4822 = vunpack.c.l.b16 %v2814
    %v4823 = vunpack.c.l.b16 %v2815
    %v4824 = vunpack.c.l.b16 %v2816
    %v4825 = vunpack.c.l.b16 %v2817
    %v4826 = vunpack.c.l.b16 %v2818
    %v4827 = vunpack.c.l.b16 %v2819
    %v4828 = vunpack.c.l.b16 %v2820
    %v4829 = vunpack.c.l.b16 %v2821
    %v4830 = vunpack.c.l.b16 %v2822
    %v4831 = vunpack.c.l.b16 %v2823
    %v4832 = vunpack.c.l.b16 %v2824
    %v4833 = vunpack.c.l.b16 %v2825
    %v4834 = vunpack.c.l.b16 %v2826
    %v4835 = vunpack.c.l.b16 %v2827
    %v4836 = vunpack.c.l.b16 %v2828
    %v4837 = vunpack.c.l.b16 %v2829
    %v4838 = vunpack.c.l.b16 %v2830
    %v4839 = vunpack.c.l.b16 %v2831
    %v4840 = vunpack.c.l.b16 %v2832
    %v4841 = vunpack.c.l.b16 %v2833
    %v4842 = vunpack.c.l.b16 %v2834
    %v4843 = vunpack.c.l.b16 %v2835
    %v4844 = vunpack.c.l.b16 %v2836
    %v4845 = vunpack.c.l.b16 %v2837
    %v4846 = vunpack.c.l.b16 %v2838
    %v4847 = vunpack.c.l.b16 %v2839
    %v4848 = vunpack.c.l.b16 %v2840
    %v4849 = vunpack.c.l.b16 %v2841
    %v4850 = vunpack.c.l.b16 %v2842
    %v4851 = vunpack.c.l.b16 %v2843
    %v4852 = vunpack.c.l.b16 %v2844
    %v4853 = vunpack.c.l.b16 %v2845
    %v4854 = vunpack.c.l.b16 %v2846
    %v4855 = vunpack.c.l.b16 %v2847
    %v4856 = vunpack.c.l.b16 %v2848
    %v4857 = vunpack.c.l.b16 %v2849
    %v4858 = vunpack.c.l.b16 %v2850
    %v4859 = vunpack.c.l.b16 %v2851
    %v4860 = vunpack.c.l.b16 %v2852
    %v4861 = vunpack.c.l.b16 %v2853
    %v4862 = vunpack.c.l.b16 %v2854
    %v4863 = vunpack.c.l.b16 %v2855
    %v4864 = vunpack.c.l.b16 %v2856
    %v4865 = vunpack.c.l.b16 %v2857
    %v4866 = vunpack.c.l.b16 %v2858
    %v4867 = vunpack.c.l.b16 %v2859
    %v4868 = vunpack.c.l.b16 %v2860
    %v4869 = vunpack.c.l.b16 %v2861
    %v4870 = vunpack.c.l.b16 %v2862
    %v4871 = vunpack.c.l.b16 %v2863
    %v4872 = vunpack.c.l.b16 %v2864
    %v4873 = vunpack.c.l.b16 %v2865
    %v4874 = vunpack.c.l.b16 %v2866
    %v4875 = vunpack.c.l.b16 %v2867
    %v4876 = vunpack.c.l.b16 %v2868
    %v4877 = vunpack.c.l.b16 %v2869
    %v4878 = vunpack.c.l.b16 %v2870
    %v4879 = vunpack.c.l.b16 %v2871
    %v4880 = vunpack.c.l.b16 %v2872
    %v4881 = vunpack.c.l.b16 %v2873
    %v4882 = vunpack.c.l.b16 %v2874
    %v4883 = vunpack.c.l.b16 %v2875
    %v4884 = vunpack.c.l.b16 %v2876
    %v4885 = vunpack.c.l.b16 %v2877
    %v4886 = vunpack.c.l.b16 %v2878
    %v4887 = vunpack.c.l.b16 %v2879
    %v4888 = vunpack.c.l.b16 %v2880
    %v4889 = vunpack.c.l.b16 %v2881
    %v4890 = vunpack.c.l.b16 %v2882
    %v4891 = vunpack.c.l.b16 %v2883
    %v4892 = vunpack.c.l.b16 %v2884
    %v4893 = vunpack.c.l.b16 %v2885
    %v4894 = vunpack.c.l.b16 %v2886
    %v4895 = vunpack.c.l.b16 %v2887
    %v4896 = vunpack.c.l.b16 %v2888
    %v4897 = vunpack.c.l.b16 %v2889
    %v4898 = vunpack.c.l.b16 %v2890
    %v4899 = vunpack.c.l.b16 %v2891
    %v4900 = vunpack.c.l.b16 %v2892
    %v4901 = vunpack.c.l.b16 %v2893
    %v4902 = vunpack.c.l.b16 %v2894
    %v4903 = vunpack.c.l.b16 %v2895
    %v4904 = vunpack.c.l.b16 %v2896
    %v4905 = vunpack.c.l.b16 %v2897
    %v4906 = vunpack.c.l.b16 %v2898
    %v4907 = vunpack.c.l.b16 %v2899
    %v4908 = vunpack.c.l.b16 %v2900
    %v4909 = vunpack.c.l.b16 %v2901
    %v4910 = vunpack.c.l.b16 %v2902
    %v4911 = vunpack.c.l.b16 %v2903
    %v4912 = vunpack.c.l.b16 %v2904
    %v4913 = vunpack.c.l.b16 %v2905
    %v4914 = vunpack.c.l.b16 %v2906
    %v4915 = vunpack.c.l.b16 %v2907
    %v4916 = vunpack.c.l.b16 %v2908
    %v4917 = vunpack.c.l.b16 %v2909
    %v4918 = vunpack.c.l.b16 %v2910
    %v4919 = vunpack.c.l.b16 %v2911
    %v4920 = vunpack.c.l.b16 %v2912
    %v4921 = vunpack.c.l.b16 %v2913
    %v4922 = vunpack.c.l.b16 %v2914
    %v4923 = vunpack.c.l.b16 %v2915
    %v4924 = vunpack.c.l.b16 %v2916
    %v4925 = vunpack.c.l.b16 %v2917
    %v4926 = vunpack.c.l.b16 %v2918
    %v4927 = vunpack.c.l.b16 %v2919
    %v4928 = vunpack.c.l.b16 %v2920
    %v4929 = vunpack.c.l.b16 %v2921
    %v4930 = vunpack.c.l.b16 %v2922
    %v4931 = vunpack.c.l.b16 %v2923
    %v4932 = vunpack.c.l.b16 %v2924
    %v4933 = vunpack.c.l.b16 %v2925
    %v4934 = vunpack.c.l.b16 %v2926
    %v4935 = vunpack.c.l.b16 %v2927
    %v4936 = vunpack.c.l.b16 %v2928
    %v4937 = vunpack.c.l.b16 %v2929
    %v4938 = vunpack.c.l.b16 %v2930
    %v4939 = vunpack.c.l.b16 %v2931
    %v4940 = vunpack.c.l.b16 %v2932
    %v4941 = vunpack.c.l.b16 %v2933
    %v4942 = vunpack.c.l.b16 %v2934
    %v4943 = vunpack.c.l.b16 %v2935
    %v4944 = vunpack.c.l.b16 %v2936
    %v4945 = vunpack.c.l.b16 %v2937
    %v4946 = vunpack.c.l.b16 %v2938
    %v4947 = vunpack.c.l.b16 %v2939
    %v4948 = vunpack.c.l.b16 %v2940
    %v4949 = vunpack.c.l.b16 %v2941
    %v4950 = vunpack.c.l.b16 %v2942
    %v4951 = vunpack.c.l.b16 %v2943
    %v4952 = vunpack.c.l.b16 %v2944
    %v4953 = vunpack.c.l.b16 %v2945
    %v4954 = vunpack.c.l.b16 %v2946
    %v4955 = vunpack.c.l.b16 %v2947
    %v4956 = vunpack.c.l.b16 %v2948
    %v4957 = vunpack.c.l.b16 %v2949
    %v4958 = vunpack.c.l.b16 %v2950
    %v4959 = vunpack.c.l.b16 %v2951
    %v4960 = vunpack.c.l.b16 %v2952
    %v4961 = vunpack.c.l.b16 %v2953
    %v4962 = vunpack.c.l.b16 %v2954
    %v4963 = vunpack.c.l.b16 %v2955
    %v4964 = vunpack.c.l.b16 %v2956
    %v4965 = vunpack.c.l.b16 %v2957
    %v4966 = vunpack.c.l.b16 %v2958
    %v4967 = vunpack.c.l.b16 %v2959
    %v4968 = vunpack.c.l.b16 %v2960
    %v4969 = vunpack.c.l.b16 %v2961
    %v4970 = vunpack.c.l.b16 %v2962
    %v4971 = vunpack.c.l.b16 %v2963
    %v4972 = vunpack.c.l.b16 %v2964
    %v4973 = vunpack.c.l.b16 %v2965
    %v4974 = vunpack.c.l.b16 %v2966
    %v4975 = vunpack.c.l.b16 %v2967
    %v4976 = vunpack.c.l.b16 %v2968
    %v4977 = vunpack.c.l.b16 %v2969
    %v4978 = vunpack.c.l.b16 %v2970
    %v4979 = vunpack.c.l.b16 %v2971
    %v4980 = vunpack.c.l.b16 %v2972
    %v4981 = vunpack.c.l.b16 %v2973
    %v4982 = vunpack.c.l.b16 %v2974
    %v4983 = vunpack.c.l.b16 %v2975
    %v4984 = vunpack.c.l.b16 %v2976
    %v4985 = vunpack.c.l.b16 %v2977
    %v4986 = vunpack.c.l.b16 %v2978
    %v4987 = vunpack.c.l.b16 %v2979
    %v4988 = vunpack.c.l.b16 %v2980
    %v4989 = vunpack.c.l.b16 %v2981
    %v4990 = vunpack.c.l.b16 %v2982
    %v4991 = vunpack.c.l.b16 %v2983
    %v4992 = vunpack.c.l.b16 %v2984
    %v4993 = vunpack.c.l.b16 %v2985
    %v4994 = vunpack.c.l.b16 %v2986
    %v4995 = vunpack.c.l.b16 %v2987
    %v4996 = vunpack.c.l.b16 %v2988
    %v4997 = vunpack.c.l.b16 %v2989
    %v4998 = vunpack.c.l.b16 %v2990
    %v4999 = vunpack.c.l.b16 %v2991
    %v5000 = vunpack.c.l.b16 %v2992
    %v5001 = vunpack.c.l.b16 %v2993
    %v5002 = vunpack.c.l.b16 %v2994
    %v5003 = vunpack.c.l.b16 %v2995
    %v5004 = vunpack.c.l.b16 %v2996
    %v5005 = vunpack.c.l.b16 %v2997
    %v5006 = vunpack.c.l.b16 %v2998
    %v5007 = vunpack.c.l.b16 %v2999
    %v5008 = vunpack.c.l.b16 %v3000
    %v5009 = vunpack.c.l.b16 %v3001
    %v5010 = vunpack.c.l.b16 %v3002
    %v5011 = vunpack.c.l.b16 %v3003
    %v5012 = vunpack.c.l.b16 %v3004
    %v5013 = vunpack.c.l.b16 %v3005
    %v5014 = vunpack.c.l.b16 %v3006
    %v5015 = vunpack.c.l.b16 %v3007
    %v5016 = vunpack.c.l.b16 %v3008
    %v5017 = vunpack.c.l.b16 %v3009
    %v5018 = vunpack.c.l.b16 %v3010
    %v5019 = vunpack.c.l.b16 %v3011
    %v5020 = vunpack.c.l.b16 %v3012
    %v5021 = vunpack.c.l.b16 %v3013
    %v5022 = vunpack.c.l.b16 %v3014
    %v5023 = vunpack.c.l.b16 %v3015
    %v5024 = vunpack.c.l.b16 %v3016
    %v5025 = vunpack.c.l.b16 %v3017
    %v5026 = vunpack.c.l.b16 %v3018
    %v5027 = vunpack.c.l.b16 %v3019
    %v5028 = vunpack.c.l.b16 %v3020
    %v5029 = vunpack.c.l.b16 %v3021
    %v5030 = vunpack.c.l.b16 %v3022
    %v5031 = vunpack.c.l.b16 %v3023
    %v5032 = vunpack.c.l.b16 %v3024
    %v5033 = vunpack.c.l.b16 %v3025
    %v5034 = vunpack.c.l.b16 %v3026
    %v5035 = vunpack.c.l.b16 %v3027
    %v5036 = vunpack.c.l.b16 %v3028
    %v5037 = vunpack.c.l.b16 %v3029
    %v5038 = vunpack.c.l.b16 %v3030
    %v5039 = vunpack.c.l.b16 %v3031
    %v5040 = vunpack.c.l.b16 %v3032
    %v5041 = vunpack.c.l.b16 %v3033
    %v5042 = vunpack.c.l.b16 %v3034
    %v5043 = vunpack.c.l.b16 %v3035
    %v5044 = vunpack.c.l.b16 %v3036
    %v5045 = vunpack.c.l.b16 %v3037
    %v5046 = vunpack.c.l.b16 %v3038
    %v5047 = vunpack.c.l.b16 %v3039
    %v5048 = vunpack.c.l.b16 %v3040
    %v5049 = vunpack.c.l.b16 %v3041
    %v5050 = vunpack.c.l.b16 %v3042
    %v5051 = vunpack.c.l.b16 %v3043
    %v5052 = vunpack.c.l.b16 %v3044
    %v5053 = vunpack.c.l.b16 %v3045
    %v5054 = vunpack.c.l.b16 %v3046
    %v5055 = vunpack.c.l.b16 %v3047
    %v5056 = vunpack.c.l.b16 %v3048
    %v5057 = vunpack.c.l.b16 %v3049
    %v5058 = vunpack.c.l.b16 %v3050
    %v5059 = vunpack.c.l.b16 %v3051
    %v5060 = vunpack.c.l.b16 %v3052
    %v5061 = vunpack.c.l.b16 %v3053
    %v5062 = vunpack.c.l.b16 %v3054
    %v5063 = vunpack.c.l.b16 %v3055
    %v5064 = vunpack.c.l.b16 %v3056
    %v5065 = vunpack.c.l.b16 %v3057
    %v5066 = vunpack.c.l.b16 %v3058
    %v5067 = vunpack.c.l.b16 %v3059
    %v5068 = vunpack.c.l.b16 %v3060
    %v5069 = vunpack.c.l.b16 %v3061
    %v5070 = vunpack.c.l.b16 %v3062
    %v5071 = vunpack.c.l.b16 %v3063
    %v5072 = vunpack.c.l.b16 %v3064
    %v5073 = vunpack.c.l.b16 %v3065
    %v5074 = vunpack.c.l.b16 %v3066
    %v5075 = vunpack.c.l.b16 %v3067
    %v5076 = vunpack.c.l.b16 %v3068
    %v5077 = vunpack.c.l.b16 %v3069
    %v5078 = vunpack.c.l.b16 %v3070
    %v5079 = vunpack.c.l.b16 %v3071
    %v5080 = vunpack.c.l.b16 %v3072
    %v5081 = vunpack.c.l.b16 %v3073
    %v5082 = vunpack.c.l.b16 %v3074
    %v5083 = vunpack.c.l.b16 %v3075
    %v5084 = vunpack.c.l.b16 %v3076
    %v5085 = vunpack.c.l.b16 %v3077
    %v5086 = vunpack.c.l.b16 %v3078
    %v5087 = vunpack.c.l.b16 %v3079
    %v5088 = vunpack.c.l.b16 %v3080
    %v5089 = vunpack.c.l.b16 %v3081
    %v5090 = vunpack.c.l.b16 %v3082
    %v5091 = vunpack.c.l.b16 %v3083
    %v5092 = vunpack.c.l.b16 %v3084
    %v5093 = vunpack.c.l.b16 %v3085
    %v5094 = vunpack.c.l.b16 %v3086
    %v5095 = vunpack.c.l.b16 %v3087
    %v5096 = vunpack.c.l.b16 %v3088
    %v5097 = vunpack.c.l.b16 %v3089
    %v5098 = vunpack.c.l.b16 %v3090
    %v5099 = vunpack.c.l.b16 %v3091
    %v5100 = vunpack.c.l.b16 %v3092
    %v5101 = vunpack.c.l.b16 %v3093
    %v5102 = vunpack.c.l.b16 %v3094
    %v5103 = vunpack.c.l.b16 %v3095
    %v5104 = vunpack.c.l.b16 %v3096
    %v5105 = vunpack.c.l.b16 %v3097
    %v5106 = vunpack.c.l.b16 %v3098
    %v5107 = vunpack.c.l.b16 %v3099
    %v5108 = vunpack.c.l.b16 %v3100
    %v5109 = vunpack.c.l.b16 %v3101
    %v5110 = vunpack.c.l.b16 %v3102
    %v5111 = vunpack.c.l.b16 %v3103
    %v5112 = vunpack.c.l.b16 %v3104
    %v5113 = vunpack.c.l.b16 %v3105
    %v5114 = vunpack.c.l.b16 %v3106
    %v5115 = vunpack.c.l.b16 %v3107
    %v5116 = vunpack.c.l.b16 %v3108
    %v5117 = vunpack.c.l.b16 %v3109
    %v5118 = vunpack.c.l.b16 %v3110
    %v5119 = vunpack.c.l.b16 %v3111
    %v5120 = vunpack.c.l.b16 %v3112
    %v5121 = vunpack.c.l.b16 %v3113
    %v5122 = vpack.c.b16 %v4119, %v4118
    %v5123 = vpack.c.b16 %v4121, %v4120
    %v5124 = vpack.c.b16 %v4123, %v4122
    %v5125 = vpack.c.b16 %v4125, %v4124
    %v5126 = vpack.c.b16 %v4127, %v4126
    %v5127 = vpack.c.b16 %v4129, %v4128
    %v5128 = vpack.c.b16 %v4131, %v4130
    %v5129 = vpack.c.b16 %v4133, %v4132
    %v5130 = vpack.c.b16 %v4135, %v4134
    %v5131 = vpack.c.b16 %v4137, %v4136
    %v5132 = vpack.c.b16 %v4139, %v4138
    %v5133 = vpack.c.b16 %v4141, %v4140
    %v5134 = vpack.c.b16 %v4143, %v4142
    %v5135 = vpack.c.b16 %v4145, %v4144
    %v5136 = vpack.c.b16 %v4147, %v4146
    %v5137 = vpack.c.b16 %v4149, %v4148
    %v5138 = vpack.c.b16 %v4151, %v4150
    %v5139 = vpack.c.b16 %v4153, %v4152
    %v5140 = vpack.c.b16 %v4155, %v4154
    %v5141 = vpack.c.b16 %v4157, %v4156
    %v5142 = vpack.c.b16 %v4159, %v4158
    %v5143 = vpack.c.b16 %v4161, %v4160
    %v5144 = vpack.c.b16 %v4163, %v4162
    %v5145 = vpack.c.b16 %v4165, %v4164
    %v5146 = vpack.c.b16 %v4167, %v4166
    %v5147 = vpack.c.b16 %v4169, %v4168
    %v5148 = vpack.c.b16 %v4171, %v4170
    %v5149 = vpack.c.b16 %v4173, %v4172
    %v5150 = vpack.c.b16 %v4175, %v4174
    %v5151 = vpack.c.b16 %v4177, %v4176
    %v5152 = vpack.c.b16 %v4179, %v4178
    %v5153 = vpack.c.b16 %v4181, %v4180
    %v5154 = vpack.c.b16 %v4183, %v4182
    %v5155 = vpack.c.b16 %v4185, %v4184
    %v5156 = vpack.c.b16 %v4187, %v4186
    %v5157 = vpack.c.b16 %v4189, %v4188
    %v5158 = vpack.c.b16 %v4191, %v4190
    %v5159 = vpack.c.b16 %v4193, %v4192
    %v5160 = vpack.c.b16 %v4195, %v4194
    %v5161 = vpack.c.b16 %v4197, %v4196
    %v5162 = vpack.c.b16 %v4199, %v4198
    %v5163 = vpack.c.b16 %v4201, %v4200
    %v5164 = vpack.c.b16 %v4203, %v4202
    %v5165 = vpack.c.b16 %v4205, %v4204
    %v5166 = vpack.c.b16 %v4207, %v4206
    %v5167 = vpack.c.b16 %v4209, %v4208
    %v5168 = vpack.c.b16 %v4211, %v4210
    %v5169 = vpack.c.b16 %v4213, %v4212
    %v5170 = vpack.c.b16 %v4215, %v4214
    %v5171 = vpack.c.b16 %v4217, %v4216
    %v5172 = vpack.c.b16 %v4219, %v4218
    %v5173 = vpack.c.b16 %v4221, %v4220
    %v5174 = vpack.c.b16 %v4223, %v4222
    %v5175 = vpack.c.b16 %v4225, %v4224
    %v5176 = vpack.c.b16 %v4227, %v4226
    %v5177 = vpack.c.b16 %v4229, %v4228
    %v5178 = vpack.c.b16 %v4231, %v4230
    %v5179 = vpack.c.b16 %v4233, %v4232
    %v5180 = vpack.c.b16 %v4235, %v4234
    %v5181 = vpack.c.b16 %v4237, %v4236
    %v5182 = vpack.c.b16 %v4239, %v4238
    %v5183 = vpack.c.b16 %v4241, %v4240
    %v5184 = vpack.c.b16 %v4243, %v4242
    %v5185 = vpack.c.b16 %v4245, %v4244
    %v5186 = vpack.c.b16 %v4247, %v4246
    %v5187 = vpack.c.b16 %v4249, %v4248
    %v5188 = vpack.c.b16 %v4251, %v4250
    %v5189 = vpack.c.b16 %v4253, %v4252
    %v5190 = vpack.c.b16 %v4255, %v4254
    %v5191 = vpack.c.b16 %v4257, %v4256
    %v5192 = vpack.c.b16 %v4259, %v4258
    %v5193 = vpack.c.b16 %v4261, %v4260
    %v5194 = vpack.c.b16 %v4263, %v4262
    %v5195 = vpack.c.b16 %v4265, %v4264
    %v5196 = vpack.c.b16 %v4267, %v4266
    %v5197 = vpack.c.b16 %v4269, %v4268
    %v5198 = vpack.c.b16 %v4271, %v4270
    %v5199 = vpack.c.b16 %v4273, %v4272
    %v5200 = vpack.c.b16 %v4275, %v4274
    %v5201 = vpack.c.b16 %v4277, %v4276
    %v5202 = vpack.c.b16 %v4279, %v4278
    %v5203 = vpack.c.b16 %v4281, %v4280
    %v5204 = vpack.c.b16 %v4283, %v4282
    %v5205 = vpack.c.b16 %v4285, %v4284
    %v5206 = vpack.c.b16 %v4287, %v4286
    %v5207 = vpack.c.b16 %v4289, %v4288
    %v5208 = vpack.c.b16 %v4291, %v4290
    %v5209 = vpack.c.b16 %v4293, %v4292
    %v5210 = vpack.c.b16 %v4295, %v4294
    %v5211 = vpack.c.b16 %v4297, %v4296
    %v5212 = vpack.c.b16 %v4299, %v4298
    %v5213 = vpack.c.b16 %v4301, %v4300
    %v5214 = vpack.c.b16 %v4303, %v4302
    %v5215 = vpack.c.b16 %v4305, %v4304
    %v5216 = vpack.c.b16 %v4307, %v4306
    %v5217 = vpack.c.b16 %v4309, %v4308
    %v5218 = vpack.c.b16 %v4311, %v4310
    %v5219 = vpack.c.b16 %v4313, %v4312
    %v5220 = vpack.c.b16 %v4315, %v4314
    %v5221 = vpack.c.b16 %v4317, %v4316
    %v5222 = vpack.c.b16 %v4319, %v4318
    %v5223 = vpack.c.b16 %v4321, %v4320
    %v5224 = vpack.c.b16 %v4323, %v4322
    %v5225 = vpack.c.b16 %v4325, %v4324
    %v5226 = vpack.c.b16 %v4327, %v4326
    %v5227 = vpack.c.b16 %v4329, %v4328
    %v5228 = vpack.c.b16 %v4331, %v4330
    %v5229 = vpack.c.b16 %v4333, %v4332
    %v5230 = vpack.c.b16 %v4335, %v4334
    %v5231 = vpack.c.b16 %v4337, %v4336
    %v5232 = vpack.c.b16 %v4339, %v4338
    %v5233 = vpack.c.b16 %v4341, %v4340
    %v5234 = vpack.c.b16 %v4343, %v4342
    %v5235 = vpack.c.b16 %v4345, %v4344
    %v5236 = vpack.c.b16 %v4347, %v4346
    %v5237 = vpack.c.b16 %v4349, %v4348
    %v5238 = vpack.c.b16 %v4351, %v4350
    %v5239 = vpack.c.b16 %v4353, %v4352
    %v5240 = vpack.c.b16 %v4355, %v4354
    %v5241 = vpack.c.b16 %v4357, %v4356
    %v5242 = vpack.c.b16 %v4359, %v4358
    %v5243 = vpack.c.b16 %v4361, %v4360
    %v5244 = vpack.c.b16 %v4363, %v4362
    %v5245 = vpack.c.b16 %v4365, %v4364
    %v5246 = vpack.c.b16 %v4367, %v4366
    %v5247 = vpack.c.b16 %v4369, %v4368
    %v5248 = vpack.c.b16 %v4371, %v4370
    %v5249 = vpack.c.b16 %v4373, %v4372
    %v5250 = vpack.c.b16 %v4375, %v4374
    %v5251 = vpack.c.b16 %v4377, %v4376
    %v5252 = vpack.c.b16 %v4379, %v4378
    %v5253 = vpack.c.b16 %v4381, %v4380
    %v5254 = vpack.c.b16 %v4383, %v4382
    %v5255 = vpack.c.b16 %v4385, %v4384
    %v5256 = vpack.c.b16 %v4387, %v4386
    %v5257 = vpack.c.b16 %v4389, %v4388
    %v5258 = vpack.c.b16 %v4391, %v4390
    %v5259 = vpack.c.b16 %v4393, %v4392
    %v5260 = vpack.c.b16 %v4395, %v4394
    %v5261 = vpack.c.b16 %v4397, %v4396
    %v5262 = vpack.c.b16 %v4399, %v4398
    %v5263 = vpack.c.b16 %v4401, %v4400
    %v5264 = vpack.c.b16 %v4403, %v4402
    %v5265 = vpack.c.b16 %v4405, %v4404
    %v5266 = vpack.c.b16 %v4407, %v4406
    %v5267 = vpack.c.b16 %v4409, %v4408
    %v5268 = vpack.c.b16 %v4411, %v4410
    %v5269 = vpack.c.b16 %v4413, %v4412
    %v5270 = vpack.c.b16 %v4415, %v4414
    %v5271 = vpack.c.b16 %v4417, %v4416
    %v5272 = vpack.c.b16 %v4419, %v4418
    %v5273 = vpack.c.b16 %v4421, %v4420
    %v5274 = vpack.c.b16 %v4423, %v4422
    %v5275 = vpack.c.b16 %v4425, %v4424
    %v5276 = vpack.c.b16 %v4427, %v4426
    %v5277 = vpack.c.b16 %v4429, %v4428
    %v5278 = vpack.c.b16 %v4431, %v4430
    %v5279 = vpack.c.b16 %v4433, %v4432
    %v5280 = vpack.c.b16 %v4435, %v4434
    %v5281 = vpack.c.b16 %v4437, %v4436
    %v5282 = vpack.c.b16 %v4439, %v4438
    %v5283 = vpack.c.b16 %v4441, %v4440
    %v5284 = vpack.c.b16 %v4443, %v4442
    %v5285 = vpack.c.b16 %v4445, %v4444
    %v5286 = vpack.c.b16 %v4447, %v4446
    %v5287 = vpack.c.b16 %v4449, %v4448
    %v5288 = vpack.c.b16 %v4451, %v4450
    %v5289 = vpack.c.b16 %v4453, %v4452
    %v5290 = vpack.c.b16 %v4455, %v4454
    %v5291 = vpack.c.b16 %v4457, %v4456
    %v5292 = vpack.c.b16 %v4459, %v4458
    %v5293 = vpack.c.b16 %v4461, %v4460
    %v5294 = vpack.c.b16 %v4463, %v4462
    %v5295 = vpack.c.b16 %v4465, %v4464
    %v5296 = vpack.c.b16 %v4467, %v4466
    %v5297 = vpack.c.b16 %v4469, %v4468
    %v5298 = vpack.c.b16 %v4471, %v4470
    %v5299 = vpack.c.b16 %v4473, %v4472
    %v5300 = vpack.c.b16 %v4475, %v4474
    %v5301 = vpack.c.b16 %v4477, %v4476
    %v5302 = vpack.c.b16 %v4479, %v4478
    %v5303 = vpack.c.b16 %v4481, %v4480
    %v5304 = vpack.c.b16 %v4483, %v4482
    %v5305 = vpack.c.b16 %v4485, %v4484
    %v5306 = vpack.c.b16 %v4487, %v4486
    %v5307 = vpack.c.b16 %v4489, %v4488
    %v5308 = vpack.c.b16 %v4491, %v4490
    %v5309 = vpack.c.b16 %v4493, %v4492
    %v5310 = vpack.c.b16 %v4495, %v4494
    %v5311 = vpack.c.b16 %v4497, %v4496
    %v5312 = vpack.c.b16 %v4499, %v4498
    %v5313 = vpack.c.b16 %v4501, %v4500
    %v5314 = vpack.c.b16 %v4503, %v4502
    %v5315 = vpack.c.b16 %v4505, %v4504
    %v5316 = vpack.c.b16 %v4507, %v4506
    %v5317 = vpack.c.b16 %v4509, %v4508
    %v5318 = vpack.c.b16 %v4511, %v4510
    %v5319 = vpack.c.b16 %v4513, %v4512
    %v5320 = vpack.c.b16 %v4515, %v4514
    %v5321 = vpack.c.b16 %v4517, %v4516
    %v5322 = vpack.c.b16 %v4519, %v4518
    %v5323 = vpack.c.b16 %v4521, %v4520
    %v5324 = vpack.c.b16 %v4523, %v4522
    %v5325 = vpack.c.b16 %v4525, %v4524
    %v5326 = vpack.c.b16 %v4527, %v4526
    %v5327 = vpack.c.b16 %v4529, %v4528
    %v5328 = vpack.c.b16 %v4531, %v4530
    %v5329 = vpack.c.b16 %v4533, %v4532
    %v5330 = vpack.c.b16 %v4535, %v4534
    %v5331 = vpack.c.b16 %v4537, %v4536
    %v5332 = vpack.c.b16 %v4539, %v4538
    %v5333 = vpack.c.b16 %v4541, %v4540
    %v5334 = vpack.c.b16 %v4543, %v4542
    %v5335 = vpack.c.b16 %v4545, %v4544
    %v5336 = vpack.c.b16 %v4547, %v4546
    %v5337 = vpack.c.b16 %v4549, %v4548
    %v5338 = vpack.c.b16 %v4551, %v4550
    %v5339 = vpack.c.b16 %v4553, %v4552
    %v5340 = vpack.c.b16 %v4555, %v4554
    %v5341 = vpack.c.b16 %v4557, %v4556
    %v5342 = vpack.c.b16 %v4559, %v4558
    %v5343 = vpack.c.b16 %v4561, %v4560
    %v5344 = vpack.c.b16 %v4563, %v4562
    %v5345 = vpack.c.b16 %v4565, %v4564
    %v5346 = vpack.c.b16 %v4567, %v4566
    %v5347 = vpack.c.b16 %v4569, %v4568
    %v5348 = vpack.c.b16 %v4571, %v4570
    %v5349 = vpack.c.b16 %v4573, %v4572
    %v5350 = vpack.c.b16 %v4575, %v4574
    %v5351 = vpack.c.b16 %v4577, %v4576
    %v5352 = vpack.c.b16 %v4579, %v4578
    %v5353 = vpack.c.b16 %v4581, %v4580
    %v5354 = vpack.c.b16 %v4583, %v4582
    %v5355 = vpack.c.b16 %v4585, %v4584
    %v5356 = vpack.c.b16 %v4587, %v4586
    %v5357 = vpack.c.b16 %v4589, %v4588
    %v5358 = vpack.c.b16 %v4591, %v4590
    %v5359 = vpack.c.b16 %v4593, %v4592
    %v5360 = vpack.c.b16 %v4595, %v4594
    %v5361 = vpack.c.b16 %v4597, %v4596
    %v5362 = vpack.c.b16 %v4599, %v4598
    %v5363 = vpack.c.b16 %v4601, %v4600
    %v5364 = vpack.c.b16 %v4603, %v4602
    %v5365 = vpack.c.b16 %v4605, %v4604
    %v5366 = vpack.c.b16 %v4607, %v4606
    %v5367 = vpack.c.b16 %v4609, %v4608
    %v5368 = vpack.c.b16 %v4611, %v4610
    %v5369 = vpack.c.b16 %v4613, %v4612
    %v5370 = vpack.c.b16 %v4615, %v4614
    %v5371 = vpack.c.b16 %v4617, %v4616
    %v5372 = vpack.c.b16 %v4619, %v4618
    %v5373 = vpack.c.b16 %v4621, %v4620
    %v5374 = vpack.c.b16 %v4623, %v4622
    %v5375 = vpack.c.b16 %v4625, %v4624
    %v5376 = vpack.c.b16 %v4627, %v4626
    %v5377 = vpack.c.b16 %v4629, %v4628
    %v5378 = vpack.c.b16 %v4631, %v4630
    %v5379 = vpack.c.b16 %v4633, %v4632
    %v5380 = vpack.c.b16 %v4635, %v4634
    %v5381 = vpack.c.b16 %v4637, %v4636
    %v5382 = vpack.c.b16 %v4639, %v4638
    %v5383 = vpack.c.b16 %v4641, %v4640
    %v5384 = vpack.c.b16 %v4643, %v4642
    %v5385 = vpack.c.b16 %v4645, %v4644
    %v5386 = vpack.c.b16 %v4647, %v4646
    %v5387 = vpack.c.b16 %v4649, %v4648
    %v5388 = vpack.c.b16 %v4651, %v4650
    %v5389 = vpack.c.b16 %v4653, %v4652
    %v5390 = vpack.c.b16 %v4655, %v4654
    %v5391 = vpack.c.b16 %v4657, %v4656
    %v5392 = vpack.c.b16 %v4659, %v4658
    %v5393 = vpack.c.b16 %v4661, %v4660
    %v5394 = vpack.c.b16 %v4663, %v4662
    %v5395 = vpack.c.b16 %v4665, %v4664
    %v5396 = vpack.c.b16 %v4667, %v4666
    %v5397 = vpack.c.b16 %v4669, %v4668
    %v5398 = vpack.c.b16 %v4671, %v4670
    %v5399 = vpack.c.b16 %v4673, %v4672
    %v5400 = vpack.c.b16 %v4675, %v4674
    %v5401 = vpack.c.b16 %v4677, %v4676
    %v5402 = vpack.c.b16 %v4679, %v4678
    %v5403 = vpack.c.b16 %v4681, %v4680
    %v5404 = vpack.c.b16 %v4683, %v4682
    %v5405 = vpack.c.b16 %v4685, %v4684
    %v5406 = vpack.c.b16 %v4687, %v4686
    %v5407 = vpack.c.b16 %v4689, %v4688
    %v5408 = vpack.c.b16 %v4691, %v4690
    %v5409 = vpack.c.b16 %v4693, %v4692
    %v5410 = vpack.c.b16 %v4695, %v4694
    %v5411 = vpack.c.b16 %v4697, %v4696
    %v5412 = vpack.c.b16 %v4699, %v4698
    %v5413 = vpack.c.b16 %v4701, %v4700
    %v5414 = vpack.c.b16 %v4703, %v4702
    %v5415 = vpack.c.b16 %v4705, %v4704
    %v5416 = vpack.c.b16 %v4707, %v4706
    %v5417 = vpack.c.b16 %v4709, %v4708
    %v5418 = vpack.c.b16 %v4711, %v4710
    %v5419 = vpack.c.b16 %v4713, %v4712
    %v5420 = vpack.c.b16 %v4715, %v4714
    %v5421 = vpack.c.b16 %v4717, %v4716
    %v5422 = vpack.c.b16 %v4719, %v4718
    %v5423 = vpack.c.b16 %v4721, %v4720
    %v5424 = vpack.c.b16 %v4723, %v4722
    %v5425 = vpack.c.b16 %v4725, %v4724
    %v5426 = vpack.c.b16 %v4727, %v4726
    %v5427 = vpack.c.b16 %v4729, %v4728
    %v5428 = vpack.c.b16 %v4731, %v4730
    %v5429 = vpack.c.b16 %v4733, %v4732
    %v5430 = vpack.c.b16 %v4735, %v4734
    %v5431 = vpack.c.b16 %v4737, %v4736
    %v5432 = vpack.c.b16 %v4739, %v4738
    %v5433 = vpack.c.b16 %v4741, %v4740
    %v5434 = vpack.c.b16 %v4743, %v4742
    %v5435 = vpack.c.b16 %v4745, %v4744
    %v5436 = vpack.c.b16 %v4747, %v4746
    %v5437 = vpack.c.b16 %v4749, %v4748
    %v5438 = vpack.c.b16 %v4751, %v4750
    %v5439 = vpack.c.b16 %v4753, %v4752
    %v5440 = vpack.c.b16 %v4755, %v4754
    %v5441 = vpack.c.b16 %v4757, %v4756
    %v5442 = vpack.c.b16 %v4759, %v4758
    %v5443 = vpack.c.b16 %v4761, %v4760
    %v5444 = vpack.c.b16 %v4763, %v4762
    %v5445 = vpack.c.b16 %v4765, %v4764
    %v5446 = vpack.c.b16 %v4767, %v4766
    %v5447 = vpack.c.b16 %v4769, %v4768
    %v5448 = vpack.c.b16 %v4771, %v4770
    %v5449 = vpack.c.b16 %v4773, %v4772
    %v5450 = vpack.c.b16 %v4775, %v4774
    %v5451 = vpack.c.b16 %v4777, %v4776
    %v5452 = vpack.c.b16 %v4779, %v4778
    %v5453 = vpack.c.b16 %v4781, %v4780
    %v5454 = vpack.c.b16 %v4783, %v4782
    %v5455 = vpack.c.b16 %v4785, %v4784
    %v5456 = vpack.c.b16 %v4787, %v4786
    %v5457 = vpack.c.b16 %v4789, %v4788
    %v5458 = vpack.c.b16 %v4791, %v4790
    %v5459 = vpack.c.b16 %v4793, %v4792
    %v5460 = vpack.c.b16 %v4795, %v4794
    %v5461 = vpack.c.b16 %v4797, %v4796
    %v5462 = vpack.c.b16 %v4799, %v4798
    %v5463 = vpack.c.b16 %v4801, %v4800
    %v5464 = vpack.c.b16 %v4803, %v4802
    %v5465 = vpack.c.b16 %v4805, %v4804
    %v5466 = vpack.c.b16 %v4807, %v4806
    %v5467 = vpack.c.b16 %v4809, %v4808
    %v5468 = vpack.c.b16 %v4811, %v4810
    %v5469 = vpack.c.b16 %v4813, %v4812
    %v5470 = vpack.c.b16 %v4815, %v4814
    %v5471 = vpack.c.b16 %v4817, %v4816
    %v5472 = vpack.c.b16 %v4819, %v4818
    %v5473 = vpack.c.b16 %v4821, %v4820
    %v5474 = vpack.c.b16 %v4823, %v4822
    %v5475 = vpack.c.b16 %v4825, %v4824
    %v5476 = vpack.c.b16 %v4827, %v4826
    %v5477 = vpack.c.b16 %v4829, %v4828
    %v5478 = vpack.c.b16 %v4831, %v4830
    %v5479 = vpack.c.b16 %v4833, %v4832
    %v5480 = vpack.c.b16 %v4835, %v4834
    %v5481 = vpack.c.b16 %v4837, %v4836
    %v5482 = vpack.c.b16 %v4839, %v4838
    %v5483 = vpack.c.b16 %v4841, %v4840
    %v5484 = vpack.c.b16 %v4843, %v4842
    %v5485 = vpack.c.b16 %v4845, %v4844
    %v5486 = vpack.c.b16 %v4847, %v4846
    %v5487 = vpack.c.b16 %v4849, %v4848
    %v5488 = vpack.c.b16 %v4851, %v4850
    %v5489 = vpack.c.b16 %v4853, %v4852
    %v5490 = vpack.c.b16 %v4855, %v4854
    %v5491 = vpack.c.b16 %v4857, %v4856
    %v5492 = vpack.c.b16 %v4859, %v4858
    %v5493 = vpack.c.b16 %v4861, %v4860
    %v5494 = vpack.c.b16 %v4863, %v4862
    %v5495 = vpack.c.b16 %v4865, %v4864
    %v5496 = vpack.c.b16 %v4867, %v4866
    %v5497 = vpack.c.b16 %v4869, %v4868
    %v5498 = vpack.c.b16 %v4871, %v4870
    %v5499 = vpack.c.b16 %v4873, %v4872
    %v5500 = vpack.c.b16 %v4875, %v4874
    %v5501 = vpack.c.b16 %v4877, %v4876
    %v5502 = vpack.c.b16 %v4879, %v4878
    %v5503 = vpack.c.b16 %v4881, %v4880
    %v5504 = vpack.c.b16 %v4883, %v4882
    %v5505 = vpack.c.b16 %v4885, %v4884
    %v5506 = vpack.c.b16 %v4887, %v4886
    %v5507 = vpack.c.b16 %v4889, %v4888
    %v5508 = vpack.c.b16 %v4891, %v4890
    %v5509 = vpack.c.b16 %v4893, %v4892
    %v5510 = vpack.c.b16 %v4895, %v4894
    %v5511 = vpack.c.b16 %v4897, %v4896
    %v5512 = vpack.c.b16 %v4899, %v4898
    %v5513 = vpack.c.b16 %v4901, %v4900
    %v5514 = vpack.c.b16 %v4903, %v4902
    %v5515 = vpack.c.b16 %v4905, %v4904
    %v5516 = vpack.c.b16 %v4907, %v4906
    %v5517 = vpack.c.b16 %v4909, %v4908
    %v5518 = vpack.c.b16 %v4911, %v4910
    %v5519 = vpack.c.b16 %v4913, %v4912
    %v5520 = vpack.c.b16 %v4915, %v4914
    %v5521 = vpack.c.b16 %v4917, %v4916
    %v5522 = vpack.c.b16 %v4919, %v4918
    %v5523 = vpack.c.b16 %v4921, %v4920
    %v5524 = vpack.c.b16 %v4923, %v4922
    %v5525 = vpack.c.b16 %v4925, %v4924
    %v5526 = vpack.c.b16 %v4927, %v4926
    %v5527 = vpack.c.b16 %v4929, %v4928
    %v5528 = vpack.c.b16 %v4931, %v4930
    %v5529 = vpack.c.b16 %v4933, %v4932
    %v5530 = vpack.c.b16 %v4935, %v4934
    %v5531 = vpack.c.b16 %v4937, %v4936
    %v5532 = vpack.c.b16 %v4939, %v4938
    %v5533 = vpack.c.b16 %v4941, %v4940
    %v5534 = vpack.c.b16 %v4943, %v4942
    %v5535 = vpack.c.b16 %v4945, %v4944
    %v5536 = vpack.c.b16 %v4947, %v4946
    %v5537 = vpack.c.b16 %v4949, %v4948
    %v5538 = vpack.c.b16 %v4951, %v4950
    %v5539 = vpack.c.b16 %v4953, %v4952
    %v5540 = vpack.c.b16 %v4955, %v4954
    %v5541 = vpack.c.b16 %v4957, %v4956
    %v5542 = vpack.c.b16 %v4959, %v4958
    %v5543 = vpack.c.b16 %v4961, %v4960
    %v5544 = vpack.c.b16 %v4963, %v4962
    %v5545 = vpack.c.b16 %v4965, %v4964
    %v5546 = vpack.c.b16 %v4967, %v4966
    %v5547 = vpack.c.b16 %v4969, %v4968
    %v5548 = vpack.c.b16 %v4971, %v4970
    %v5549 = vpack.c.b16 %v4973, %v4972
    %v5550 = vpack.c.b16 %v4975, %v4974
    %v5551 = vpack.c.b16 %v4977, %v4976
    %v5552 = vpack.c.b16 %v4979, %v4978
    %v5553 = vpack.c.b16 %v4981, %v4980
    %v5554 = vpack.c.b16 %v4983, %v4982
    %v5555 = vpack.c.b16 %v4985, %v4984
    %v5556 = vpack.c.b16 %v4987, %v4986
    %v5557 = vpack.c.b16 %v4989, %v4988
    %v5558 = vpack.c.b16 %v4991, %v4990
    %v5559 = vpack.c.b16 %v4993, %v4992
    %v5560 = vpack.c.b16 %v4995, %v4994
    %v5561 = vpack.c.b16 %v4997, %v4996
    %v5562 = vpack.c.b16 %v4999, %v4998
    %v5563 = vpack.c.b16 %v5001, %v5000
    %v5564 = vpack.c.b16 %v5003, %v5002
    %v5565 = vpack.c.b16 %v5005, %v5004
    %v5566 = vpack.c.b16 %v5007, %v5006
    %v5567 = vpack.c.b16 %v5009, %v5008
    %v5568 = vpack.c.b16 %v5011, %v5010
    %v5569 = vpack.c.b16 %v5013, %v5012
    %v5570 = vpack.c.b16 %v5015, %v5014
    %v5571 = vpack.c.b16 %v5017, %v5016
    %v5572 = vpack.c.b16 %v5019, %v5018
    %v5573 = vpack.c.b16 %v5021, %v5020
    %v5574 = vpack.c.b16 %v5023, %v5022
    %v5575 = vpack.c.b16 %v5025, %v5024
    %v5576 = vpack.c.b16 %v5027, %v5026
    %v5577 = vpack.c.b16 %v5029, %v5028
    %v5578 = vpack.c.b16 %v5031, %v5030
    %v5579 = vpack.c.b16 %v5033, %v5032
    %v5580 = vpack.c.b16 %v5035, %v5034
    %v5581 = vpack.c.b16 %v5037, %v5036
    %v5582 = vpack.c.b16 %v5039, %v5038
    %v5583 = vpack.c.b16 %v5041, %v5040
    %v5584 = vpack.c.b16 %v5043, %v5042
    %v5585 = vpack.c.b16 %v5045, %v5044
    %v5586 = vpack.c.b16 %v5047, %v5046
    %v5587 = vpack.c.b16 %v5049, %v5048
    %v5588 = vpack.c.b16 %v5051, %v5050
    %v5589 = vpack.c.b16 %v5053, %v5052
    %v5590 = vpack.c.b16 %v5055, %v5054
    %v5591 = vpack.c.b16 %v5057, %v5056
    %v5592 = vpack.c.b16 %v5059, %v5058
    %v5593 = vpack.c.b16 %v5061, %v5060
    %v5594 = vpack.c.b16 %v5063, %v5062
    %v5595 = vpack.c.b16 %v5065, %v5064
    %v5596 = vpack.c.b16 %v5067, %v5066
    %v5597 = vpack.c.b16 %v5069, %v5068
    %v5598 = vpack.c.b16 %v5071, %v5070
    %v5599 = vpack.c.b16 %v5073, %v5072
    %v5600 = vpack.c.b16 %v5075, %v5074
    %v5601 = vpack.c.b16 %v5077, %v5076
    %v5602 = vpack.c.b16 %v5079, %v5078
    %v5603 = vpack.c.b16 %v5081, %v5080
    %v5604 = vpack.c.b16 %v5083, %v5082
    %v5605 = vpack.c.b16 %v5085, %v5084
    %v5606 = vpack.c.b16 %v5087, %v5086
    %v5607 = vpack.c.b16 %v5089, %v5088
    %v5608 = vpack.c.b16 %v5091, %v5090
    %v5609 = vpack.c.b16 %v5093, %v5092
    %v5610 = vpack.c.b16 %v5095, %v5094
    %v5611 = vpack.c.b16 %v5097, %v5096
    %v5612 = vpack.c.b16 %v5099, %v5098
    %v5613 = vpack.c.b16 %v5101, %v5100
    %v5614 = vpack.c.b16 %v5103, %v5102
    %v5615 = vpack.c.b16 %v5105, %v5104
    %v5616 = vpack.c.b16 %v5107, %v5106
    %v5617 = vpack.c.b16 %v5109, %v5108
    %v5618 = vpack.c.b16 %v5111, %v5110
    %v5619 = vpack.c.b16 %v5113, %v5112
    %v5620 = vpack.c.b16 %v5115, %v5114
    %v5621 = vpack.c.b16 %v5117, %v5116
    %v5622 = vpack.c.b16 %v5119, %v5118
    %v5623 = vpack.c.b16 %v5121, %v5120
    %vm6125 = vcmask 769024
    %v6127 = vsel %vm6125, %v2046, 0
    %v6130 = vsel %vm6125, %v2109, 0
    %vm6132 = vcmask 1046528
    %v6134 = vsel %vm6132, %v5623, 0
    %6136 = vmatprep.subr.bf16.mxu0 0
    %6137 = vmatpush1.bf16.msra.mxu0 %v5129
    %6138 = vmatprep.subr.bf16.mxu0 0
    %6139 = vmatpush1.bf16.msra.mxu0 %v5128
    %6140 = vmatprep.subr.bf16.mxu0 0
    %6141 = vmatpush1.bf16.msra.mxu0 %v5127
    %6142 = vmatprep.subr.bf16.mxu0 0
    %6143 = vmatpush1.bf16.msra.mxu0 %v5126
    %6144 = vmatprep.subr.bf16.mxu0 0
    %6145 = vmatpush1.bf16.msra.mxu0 %v5125
    %6146 = vmatprep.subr.bf16.mxu0 0
    %6147 = vmatpush1.bf16.msra.mxu0 %v5124
    %6148 = vmatprep.subr.bf16.mxu0 0
    %6149 = vmatpush1.bf16.msra.mxu0 %v5123
    %6150 = vmatprep.subr.bf16.mxu0 0
    %6151 = vmatpush1.bf16.msra.mxu0 %v5122
    %6152 = vmatprep.subr.bf16.mxu0 0
    %6153 = vmatpush2.bf16.msra.mxu0 %v5137
    %6154 = vmatprep.subr.bf16.mxu0 0
    %6155 = vmatpush2.bf16.msra.mxu0 %v5136
    %6156 = vmatprep.subr.bf16.mxu0 0
    %6157 = vmatpush2.bf16.msra.mxu0 %v5135
    %6158 = vmatprep.subr.bf16.mxu0 0
    %6159 = vmatpush2.bf16.msra.mxu0 %v5134
    %6160 = vmatprep.subr.bf16.mxu0 0
    %6161 = vmatpush2.bf16.msra.mxu0 %v5133
    %6162 = vmatprep.subr.bf16.mxu0 0
    %6163 = vmatpush2.bf16.msra.mxu0 %v5132
    %6164 = vmatprep.subr.bf16.mxu0 0
    %6165 = vmatpush2.bf16.msra.mxu0 %v5131
    %6166 = vmatprep.subr.bf16.mxu0 0
    %6167 = vmatpush2.bf16.msra.mxu0 %v5130
    %6168 = vmatprep.mubr.bf16.mxu0 %v1985
    %6169 = vmatmul.mubr.bf16.gmra.mxu0 %v1984
    %v6170 = vpop.f32.mrf.mxu0
    %v6171 = vadd.f32 0.0, %v6170
    %v6172 = vpop.f32.mrf.mxu0
    %v6173 = vpop.f32.mrf.mxu0
    %v6174 = vadd.f32 0.0, %v6173
    %v6175 = vpop.f32.mrf.mxu0
    %6176 = vmatprep.mubr.bf16.mxu0 %v2048
    %6177 = vmatmul.mubr.bf16.gmra.mxu0 %v2047
    %v6178 = vpop.f32.mrf.mxu0
    %v6179 = vadd.f32 0.0, %v6178
    %v6180 = vpop.f32.mrf.mxu0
    %v6181 = vpop.f32.mrf.mxu0
    %v6182 = vadd.f32 0.0, %v6181
    %v6183 = vpop.f32.mrf.mxu0
    %6184 = vdwg.mxu0
    %6185 = vmatprep.subr.bf16.mxu0 0
    %6186 = vmatpush1.bf16.msra.mxu0 %v5145
    %6187 = vmatprep.subr.bf16.mxu0 0
    %6188 = vmatpush1.bf16.msra.mxu0 %v5144
    %6189 = vmatprep.subr.bf16.mxu0 0
    %6190 = vmatpush1.bf16.msra.mxu0 %v5143
    %6191 = vmatprep.subr.bf16.mxu0 0
    %6192 = vmatpush1.bf16.msra.mxu0 %v5142
    %6193 = vmatprep.subr.bf16.mxu0 0
    %6194 = vmatpush1.bf16.msra.mxu0 %v5141
    %6195 = vmatprep.subr.bf16.mxu0 0
    %6196 = vmatpush1.bf16.msra.mxu0 %v5140
    %6197 = vmatprep.subr.bf16.mxu0 0
    %6198 = vmatpush1.bf16.msra.mxu0 %v5139
    %6199 = vmatprep.subr.bf16.mxu0 0
    %6200 = vmatpush1.bf16.msra.mxu0 %v5138
    %6201 = vmatprep.subr.bf16.mxu0 0
    %6202 = vmatpush2.bf16.msra.mxu0 %v5153
    %6203 = vmatprep.subr.bf16.mxu0 0
    %6204 = vmatpush2.bf16.msra.mxu0 %v5152
    %6205 = vmatprep.subr.bf16.mxu0 0
    %6206 = vmatpush2.bf16.msra.mxu0 %v5151
    %6207 = vmatprep.subr.bf16.mxu0 0
    %6208 = vmatpush2.bf16.msra.mxu0 %v5150
    %6209 = vmatprep.subr.bf16.mxu0 0
    %6210 = vmatpush2.bf16.msra.mxu0 %v5149
    %6211 = vmatprep.subr.bf16.mxu0 0
    %6212 = vmatpush2.bf16.msra.mxu0 %v5148
    %6213 = vmatprep.subr.bf16.mxu0 0
    %6214 = vmatpush2.bf16.msra.mxu0 %v5147
    %6215 = vmatprep.subr.bf16.mxu0 0
    %6216 = vmatpush2.bf16.msra.mxu0 %v5146
    %6217 = vmatprep.mubr.bf16.mxu0 %v1987
    %6218 = vmatmul.mubr.bf16.gmra.mxu0 %v1986
    %v6219 = vpop.f32.mrf.mxu0
    %v6220 = vadd.f32 %v6171, %v6219
    %v6221 = vpop.f32.mrf.mxu0
    %v6222 = vpop.f32.mrf.mxu0
    %v6223 = vadd.f32 %v6174, %v6222
    %v6224 = vpop.f32.mrf.mxu0
    %6225 = vmatprep.mubr.bf16.mxu0 %v2050
    %6226 = vmatmul.mubr.bf16.gmra.mxu0 %v2049
    %v6227 = vpop.f32.mrf.mxu0
    %v6228 = vadd.f32 %v6179, %v6227
    %v6229 = vpop.f32.mrf.mxu0
    %v6230 = vpop.f32.mrf.mxu0
    %v6231 = vadd.f32 %v6182, %v6230
    %v6232 = vpop.f32.mrf.mxu0
    %6233 = vdwg.mxu0
    %6234 = vmatprep.subr.bf16.mxu0 0
    %6235 = vmatpush1.bf16.msra.mxu0 %v5161
    %6236 = vmatprep.subr.bf16.mxu0 0
    %6237 = vmatpush1.bf16.msra.mxu0 %v5160
    %6238 = vmatprep.subr.bf16.mxu0 0
    %6239 = vmatpush1.bf16.msra.mxu0 %v5159
    %6240 = vmatprep.subr.bf16.mxu0 0
    %6241 = vmatpush1.bf16.msra.mxu0 %v5158
    %6242 = vmatprep.subr.bf16.mxu0 0
    %6243 = vmatpush1.bf16.msra.mxu0 %v5157
    %6244 = vmatprep.subr.bf16.mxu0 0
    %6245 = vmatpush1.bf16.msra.mxu0 %v5156
    %6246 = vmatprep.subr.bf16.mxu0 0
    %6247 = vmatpush1.bf16.msra.mxu0 %v5155
    %6248 = vmatprep.subr.bf16.mxu0 0
    %6249 = vmatpush1.bf16.msra.mxu0 %v5154
    %6250 = vmatprep.subr.bf16.mxu0 0
    %6251 = vmatpush2.bf16.msra.mxu0 %v5169
    %6252 = vmatprep.subr.bf16.mxu0 0
    %6253 = vmatpush2.bf16.msra.mxu0 %v5168
    %6254 = vmatprep.subr.bf16.mxu0 0
    %6255 = vmatpush2.bf16.msra.mxu0 %v5167
    %6256 = vmatprep.subr.bf16.mxu0 0
    %6257 = vmatpush2.bf16.msra.mxu0 %v5166
    %6258 = vmatprep.subr.bf16.mxu0 0
    %6259 = vmatpush2.bf16.msra.mxu0 %v5165
    %6260 = vmatprep.subr.bf16.mxu0 0
    %6261 = vmatpush2.bf16.msra.mxu0 %v5164
    %6262 = vmatprep.subr.bf16.mxu0 0
    %6263 = vmatpush2.bf16.msra.mxu0 %v5163
    %6264 = vmatprep.subr.bf16.mxu0 0
    %6265 = vmatpush2.bf16.msra.mxu0 %v5162
    %6266 = vmatprep.mubr.bf16.mxu0 %v1989
    %6267 = vmatmul.mubr.bf16.gmra.mxu0 %v1988
    %v6268 = vpop.f32.mrf.mxu0
    %v6269 = vadd.f32 %v6220, %v6268
    %v6270 = vpop.f32.mrf.mxu0
    %v6271 = vpop.f32.mrf.mxu0
    %v6272 = vadd.f32 %v6223, %v6271
    %v6273 = vpop.f32.mrf.mxu0
    %6274 = vmatprep.mubr.bf16.mxu0 %v2052
    %6275 = vmatmul.mubr.bf16.gmra.mxu0 %v2051
    %v6276 = vpop.f32.mrf.mxu0
    %v6277 = vadd.f32 %v6228, %v6276
    %v6278 = vpop.f32.mrf.mxu0
    %v6279 = vpop.f32.mrf.mxu0
    %v6280 = vadd.f32 %v6231, %v6279
    %v6281 = vpop.f32.mrf.mxu0
    %6282 = vdwg.mxu0
    %6283 = vmatprep.subr.bf16.mxu0 0
    %6284 = vmatpush1.bf16.msra.mxu0 %v5177
    %6285 = vmatprep.subr.bf16.mxu0 0
    %6286 = vmatpush1.bf16.msra.mxu0 %v5176
    %6287 = vmatprep.subr.bf16.mxu0 0
    %6288 = vmatpush1.bf16.msra.mxu0 %v5175
    %6289 = vmatprep.subr.bf16.mxu0 0
    %6290 = vmatpush1.bf16.msra.mxu0 %v5174
    %6291 = vmatprep.subr.bf16.mxu0 0
    %6292 = vmatpush1.bf16.msra.mxu0 %v5173
    %6293 = vmatprep.subr.bf16.mxu0 0
    %6294 = vmatpush1.bf16.msra.mxu0 %v5172
    %6295 = vmatprep.subr.bf16.mxu0 0
    %6296 = vmatpush1.bf16.msra.mxu0 %v5171
    %6297 = vmatprep.subr.bf16.mxu0 0
    %6298 = vmatpush1.bf16.msra.mxu0 %v5170
    %6299 = vmatprep.subr.bf16.mxu0 0
    %6300 = vmatpush2.bf16.msra.mxu0 %v5185
    %6301 = vmatprep.subr.bf16.mxu0 0
    %6302 = vmatpush2.bf16.msra.mxu0 %v5184
    %6303 = vmatprep.subr.bf16.mxu0 0
    %6304 = vmatpush2.bf16.msra.mxu0 %v5183
    %6305 = vmatprep.subr.bf16.mxu0 0
    %6306 = vmatpush2.bf16.msra.mxu0 %v5182
    %6307 = vmatprep.subr.bf16.mxu0 0
    %6308 = vmatpush2.bf16.msra.mxu0 %v5181
    %6309 = vmatprep.subr.bf16.mxu0 0
    %6310 = vmatpush2.bf16.msra.mxu0 %v5180
    %6311 = vmatprep.subr.bf16.mxu0 0
    %6312 = vmatpush2.bf16.msra.mxu0 %v5179
    %6313 = vmatprep.subr.bf16.mxu0 0
    %6314 = vmatpush2.bf16.msra.mxu0 %v5178
    %6315 = vmatprep.mubr.bf16.mxu0 %v1991
    %6316 = vmatmul.mubr.bf16.gmra.mxu0 %v1990
    %v6317 = vpop.f32.mrf.mxu0
    %v6318 = vadd.f32 %v6269, %v6317
    %v6319 = vpop.f32.mrf.mxu0
    %v6320 = vpop.f32.mrf.mxu0
    %v6321 = vadd.f32 %v6272, %v6320
    %v6322 = vpop.f32.mrf.mxu0
    %6323 = vmatprep.mubr.bf16.mxu0 %v2054
    %6324 = vmatmul.mubr.bf16.gmra.mxu0 %v2053
    %v6325 = vpop.f32.mrf.mxu0
    %v6326 = vadd.f32 %v6277, %v6325
    %v6327 = vpop.f32.mrf.mxu0
    %v6328 = vpop.f32.mrf.mxu0
    %v6329 = vadd.f32 %v6280, %v6328
    %v6330 = vpop.f32.mrf.mxu0
    %6331 = vdwg.mxu0
    %6332 = vmatprep.subr.bf16.mxu0 0
    %6333 = vmatpush1.bf16.msra.mxu0 %v5193
    %6334 = vmatprep.subr.bf16.mxu0 0
    %6335 = vmatpush1.bf16.msra.mxu0 %v5192
    %6336 = vmatprep.subr.bf16.mxu0 0
    %6337 = vmatpush1.bf16.msra.mxu0 %v5191
    %6338 = vmatprep.subr.bf16.mxu0 0
    %6339 = vmatpush1.bf16.msra.mxu0 %v5190
    %6340 = vmatprep.subr.bf16.mxu0 0
    %6341 = vmatpush1.bf16.msra.mxu0 %v5189
    %6342 = vmatprep.subr.bf16.mxu0 0
    %6343 = vmatpush1.bf16.msra.mxu0 %v5188
    %6344 = vmatprep.subr.bf16.mxu0 0
    %6345 = vmatpush1.bf16.msra.mxu0 %v5187
    %6346 = vmatprep.subr.bf16.mxu0 0
    %6347 = vmatpush1.bf16.msra.mxu0 %v5186
    %6348 = vmatprep.subr.bf16.mxu0 0
    %6349 = vmatpush2.bf16.msra.mxu0 %v5201
    %6350 = vmatprep.subr.bf16.mxu0 0
    %6351 = vmatpush2.bf16.msra.mxu0 %v5200
    %6352 = vmatprep.subr.bf16.mxu0 0
    %6353 = vmatpush2.bf16.msra.mxu0 %v5199
    %6354 = vmatprep.subr.bf16.mxu0 0
    %6355 = vmatpush2.bf16.msra.mxu0 %v5198
    %6356 = vmatprep.subr.bf16.mxu0 0
    %6357 = vmatpush2.bf16.msra.mxu0 %v5197
    %6358 = vmatprep.subr.bf16.mxu0 0
    %6359 = vmatpush2.bf16.msra.mxu0 %v5196
    %6360 = vmatprep.subr.bf16.mxu0 0
    %6361 = vmatpush2.bf16.msra.mxu0 %v5195
    %6362 = vmatprep.subr.bf16.mxu0 0
    %6363 = vmatpush2.bf16.msra.mxu0 %v5194
    %6364 = vmatprep.mubr.bf16.mxu0 %v1993
    %6365 = vmatmul.mubr.bf16.gmra.mxu0 %v1992
    %v6366 = vpop.f32.mrf.mxu0
    %v6367 = vadd.f32 %v6318, %v6366
    %v6368 = vpop.f32.mrf.mxu0
    %v6369 = vpop.f32.mrf.mxu0
    %v6370 = vadd.f32 %v6321, %v6369
    %v6371 = vpop.f32.mrf.mxu0
    %6372 = vmatprep.mubr.bf16.mxu0 %v2056
    %6373 = vmatmul.mubr.bf16.gmra.mxu0 %v2055
    %v6374 = vpop.f32.mrf.mxu0
    %v6375 = vadd.f32 %v6326, %v6374
    %v6376 = vpop.f32.mrf.mxu0
    %v6377 = vpop.f32.mrf.mxu0
    %v6378 = vadd.f32 %v6329, %v6377
    %v6379 = vpop.f32.mrf.mxu0
    %6380 = vdwg.mxu0
    %6381 = vmatprep.subr.bf16.mxu0 0
    %6382 = vmatpush1.bf16.msra.mxu0 %v5209
    %6383 = vmatprep.subr.bf16.mxu0 0
    %6384 = vmatpush1.bf16.msra.mxu0 %v5208
    %6385 = vmatprep.subr.bf16.mxu0 0
    %6386 = vmatpush1.bf16.msra.mxu0 %v5207
    %6387 = vmatprep.subr.bf16.mxu0 0
    %6388 = vmatpush1.bf16.msra.mxu0 %v5206
    %6389 = vmatprep.subr.bf16.mxu0 0
    %6390 = vmatpush1.bf16.msra.mxu0 %v5205
    %6391 = vmatprep.subr.bf16.mxu0 0
    %6392 = vmatpush1.bf16.msra.mxu0 %v5204
    %6393 = vmatprep.subr.bf16.mxu0 0
    %6394 = vmatpush1.bf16.msra.mxu0 %v5203
    %6395 = vmatprep.subr.bf16.mxu0 0
    %6396 = vmatpush1.bf16.msra.mxu0 %v5202
    %6397 = vmatprep.subr.bf16.mxu0 0
    %6398 = vmatpush2.bf16.msra.mxu0 %v5217
    %6399 = vmatprep.subr.bf16.mxu0 0
    %6400 = vmatpush2.bf16.msra.mxu0 %v5216
    %6401 = vmatprep.subr.bf16.mxu0 0
    %6402 = vmatpush2.bf16.msra.mxu0 %v5215
    %6403 = vmatprep.subr.bf16.mxu0 0
    %6404 = vmatpush2.bf16.msra.mxu0 %v5214
    %6405 = vmatprep.subr.bf16.mxu0 0
    %6406 = vmatpush2.bf16.msra.mxu0 %v5213
    %6407 = vmatprep.subr.bf16.mxu0 0
    %6408 = vmatpush2.bf16.msra.mxu0 %v5212
    %6409 = vmatprep.subr.bf16.mxu0 0
    %6410 = vmatpush2.bf16.msra.mxu0 %v5211
    %6411 = vmatprep.subr.bf16.mxu0 0
    %6412 = vmatpush2.bf16.msra.mxu0 %v5210
    %6413 = vmatprep.mubr.bf16.mxu0 %v1995
    %6414 = vmatmul.mubr.bf16.gmra.mxu0 %v1994
    %v6415 = vpop.f32.mrf.mxu0
    %v6416 = vadd.f32 %v6367, %v6415
    %v6417 = vpop.f32.mrf.mxu0
    %v6418 = vpop.f32.mrf.mxu0
    %v6419 = vadd.f32 %v6370, %v6418
    %v6420 = vpop.f32.mrf.mxu0
    %6421 = vmatprep.mubr.bf16.mxu0 %v2058
    %6422 = vmatmul.mubr.bf16.gmra.mxu0 %v2057
    %v6423 = vpop.f32.mrf.mxu0
    %v6424 = vadd.f32 %v6375, %v6423
    %v6425 = vpop.f32.mrf.mxu0
    %v6426 = vpop.f32.mrf.mxu0
    %v6427 = vadd.f32 %v6378, %v6426
    %v6428 = vpop.f32.mrf.mxu0
    %6429 = vdwg.mxu0
    %6430 = vmatprep.subr.bf16.mxu0 0
    %6431 = vmatpush1.bf16.msra.mxu0 %v5225
    %6432 = vmatprep.subr.bf16.mxu0 0
    %6433 = vmatpush1.bf16.msra.mxu0 %v5224
    %6434 = vmatprep.subr.bf16.mxu0 0
    %6435 = vmatpush1.bf16.msra.mxu0 %v5223
    %6436 = vmatprep.subr.bf16.mxu0 0
    %6437 = vmatpush1.bf16.msra.mxu0 %v5222
    %6438 = vmatprep.subr.bf16.mxu0 0
    %6439 = vmatpush1.bf16.msra.mxu0 %v5221
    %6440 = vmatprep.subr.bf16.mxu0 0
    %6441 = vmatpush1.bf16.msra.mxu0 %v5220
    %6442 = vmatprep.subr.bf16.mxu0 0
    %6443 = vmatpush1.bf16.msra.mxu0 %v5219
    %6444 = vmatprep.subr.bf16.mxu0 0
    %6445 = vmatpush1.bf16.msra.mxu0 %v5218
    %6446 = vmatprep.subr.bf16.mxu0 0
    %6447 = vmatpush2.bf16.msra.mxu0 %v5233
    %6448 = vmatprep.subr.bf16.mxu0 0
    %6449 = vmatpush2.bf16.msra.mxu0 %v5232
    %6450 = vmatprep.subr.bf16.mxu0 0
    %6451 = vmatpush2.bf16.msra.mxu0 %v5231
    %6452 = vmatprep.subr.bf16.mxu0 0
    %6453 = vmatpush2.bf16.msra.mxu0 %v5230
    %6454 = vmatprep.subr.bf16.mxu0 0
    %6455 = vmatpush2.bf16.msra.mxu0 %v5229
    %6456 = vmatprep.subr.bf16.mxu0 0
    %6457 = vmatpush2.bf16.msra.mxu0 %v5228
    %6458 = vmatprep.subr.bf16.mxu0 0
    %6459 = vmatpush2.bf16.msra.mxu0 %v5227
    %6460 = vmatprep.subr.bf16.mxu0 0
    %6461 = vmatpush2.bf16.msra.mxu0 %v5226
    %6462 = vmatprep.mubr.bf16.mxu0 %v1997
    %6463 = vmatmul.mubr.bf16.gmra.mxu0 %v1996
    %v6464 = vpop.f32.mrf.mxu0
    %v6465 = vadd.f32 %v6416, %v6464
    %v6466 = vpop.f32.mrf.mxu0
    %v6467 = vpop.f32.mrf.mxu0
    %v6468 = vadd.f32 %v6419, %v6467
    %v6469 = vpop.f32.mrf.mxu0
    %6470 = vmatprep.mubr.bf16.mxu0 %v2060
    %6471 = vmatmul.mubr.bf16.gmra.mxu0 %v2059
    %v6472 = vpop.f32.mrf.mxu0
    %v6473 = vadd.f32 %v6424, %v6472
    %v6474 = vpop.f32.mrf.mxu0
    %v6475 = vpop.f32.mrf.mxu0
    %v6476 = vadd.f32 %v6427, %v6475
    %v6477 = vpop.f32.mrf.mxu0
    %6478 = vdwg.mxu0
    %6479 = vmatprep.subr.bf16.mxu0 0
    %6480 = vmatpush1.bf16.msra.mxu0 %v5241
    %6481 = vmatprep.subr.bf16.mxu0 0
    %6482 = vmatpush1.bf16.msra.mxu0 %v5240
    %6483 = vmatprep.subr.bf16.mxu0 0
    %6484 = vmatpush1.bf16.msra.mxu0 %v5239
    %6485 = vmatprep.subr.bf16.mxu0 0
    %6486 = vmatpush1.bf16.msra.mxu0 %v5238
    %6487 = vmatprep.subr.bf16.mxu0 0
    %6488 = vmatpush1.bf16.msra.mxu0 %v5237
    %6489 = vmatprep.subr.bf16.mxu0 0
    %6490 = vmatpush1.bf16.msra.mxu0 %v5236
    %6491 = vmatprep.subr.bf16.mxu0 0
    %6492 = vmatpush1.bf16.msra.mxu0 %v5235
    %6493 = vmatprep.subr.bf16.mxu0 0
    %6494 = vmatpush1.bf16.msra.mxu0 %v5234
    %6495 = vmatprep.subr.bf16.mxu0 0
    %6496 = vmatpush2.bf16.msra.mxu0 %v5249
    %6497 = vmatprep.subr.bf16.mxu0 0
    %6498 = vmatpush2.bf16.msra.mxu0 %v5248
    %6499 = vmatprep.subr.bf16.mxu0 0
    %6500 = vmatpush2.bf16.msra.mxu0 %v5247
    %6501 = vmatprep.subr.bf16.mxu0 0
    %6502 = vmatpush2.bf16.msra.mxu0 %v5246
    %6503 = vmatprep.subr.bf16.mxu0 0
    %6504 = vmatpush2.bf16.msra.mxu0 %v5245
    %6505 = vmatprep.subr.bf16.mxu0 0
    %6506 = vmatpush2.bf16.msra.mxu0 %v5244
    %6507 = vmatprep.subr.bf16.mxu0 0
    %6508 = vmatpush2.bf16.msra.mxu0 %v5243
    %6509 = vmatprep.subr.bf16.mxu0 0
    %6510 = vmatpush2.bf16.msra.mxu0 %v5242
    %6511 = vmatprep.mubr.bf16.mxu0 %v1999
    %6512 = vmatmul.mubr.bf16.gmra.mxu0 %v1998
    %v6513 = vpop.f32.mrf.mxu0
    %v6514 = vadd.f32 %v6465, %v6513
    %v6515 = vpop.f32.mrf.mxu0
    %v6516 = vpop.f32.mrf.mxu0
    %v6517 = vadd.f32 %v6468, %v6516
    %v6518 = vpop.f32.mrf.mxu0
    %6519 = vmatprep.mubr.bf16.mxu0 %v2062
    %6520 = vmatmul.mubr.bf16.gmra.mxu0 %v2061
    %v6521 = vpop.f32.mrf.mxu0
    %v6522 = vadd.f32 %v6473, %v6521
    %v6523 = vpop.f32.mrf.mxu0
    %v6524 = vpop.f32.mrf.mxu0
    %v6525 = vadd.f32 %v6476, %v6524
    %v6526 = vpop.f32.mrf.mxu0
    %6527 = vdwg.mxu0
    %6528 = vmatprep.subr.bf16.mxu0 0
    %6529 = vmatpush1.bf16.msra.mxu0 %v5257
    %6530 = vmatprep.subr.bf16.mxu0 0
    %6531 = vmatpush1.bf16.msra.mxu0 %v5256
    %6532 = vmatprep.subr.bf16.mxu0 0
    %6533 = vmatpush1.bf16.msra.mxu0 %v5255
    %6534 = vmatprep.subr.bf16.mxu0 0
    %6535 = vmatpush1.bf16.msra.mxu0 %v5254
    %6536 = vmatprep.subr.bf16.mxu0 0
    %6537 = vmatpush1.bf16.msra.mxu0 %v5253
    %6538 = vmatprep.subr.bf16.mxu0 0
    %6539 = vmatpush1.bf16.msra.mxu0 %v5252
    %6540 = vmatprep.subr.bf16.mxu0 0
    %6541 = vmatpush1.bf16.msra.mxu0 %v5251
    %6542 = vmatprep.subr.bf16.mxu0 0
    %6543 = vmatpush1.bf16.msra.mxu0 %v5250
    %6544 = vmatprep.subr.bf16.mxu0 0
    %6545 = vmatpush2.bf16.msra.mxu0 %v5265
    %6546 = vmatprep.subr.bf16.mxu0 0
    %6547 = vmatpush2.bf16.msra.mxu0 %v5264
    %6548 = vmatprep.subr.bf16.mxu0 0
    %6549 = vmatpush2.bf16.msra.mxu0 %v5263
    %6550 = vmatprep.subr.bf16.mxu0 0
    %6551 = vmatpush2.bf16.msra.mxu0 %v5262
    %6552 = vmatprep.subr.bf16.mxu0 0
    %6553 = vmatpush2.bf16.msra.mxu0 %v5261
    %6554 = vmatprep.subr.bf16.mxu0 0
    %6555 = vmatpush2.bf16.msra.mxu0 %v5260
    %6556 = vmatprep.subr.bf16.mxu0 0
    %6557 = vmatpush2.bf16.msra.mxu0 %v5259
    %6558 = vmatprep.subr.bf16.mxu0 0
    %6559 = vmatpush2.bf16.msra.mxu0 %v5258
    %6560 = vmatprep.mubr.bf16.mxu0 %v2001
    %6561 = vmatmul.mubr.bf16.gmra.mxu0 %v2000
    %v6562 = vpop.f32.mrf.mxu0
    %v6563 = vadd.f32 %v6514, %v6562
    %v6564 = vpop.f32.mrf.mxu0
    %v6565 = vpop.f32.mrf.mxu0
    %v6566 = vadd.f32 %v6517, %v6565
    %v6567 = vpop.f32.mrf.mxu0
    %6568 = vmatprep.mubr.bf16.mxu0 %v2064
    %6569 = vmatmul.mubr.bf16.gmra.mxu0 %v2063
    %v6570 = vpop.f32.mrf.mxu0
    %v6571 = vadd.f32 %v6522, %v6570
    %v6572 = vpop.f32.mrf.mxu0
    %v6573 = vpop.f32.mrf.mxu0
    %v6574 = vadd.f32 %v6525, %v6573
    %v6575 = vpop.f32.mrf.mxu0
    %6576 = vdwg.mxu0
    %6577 = vmatprep.subr.bf16.mxu0 0
    %6578 = vmatpush1.bf16.msra.mxu0 %v5273
    %6579 = vmatprep.subr.bf16.mxu0 0
    %6580 = vmatpush1.bf16.msra.mxu0 %v5272
    %6581 = vmatprep.subr.bf16.mxu0 0
    %6582 = vmatpush1.bf16.msra.mxu0 %v5271
    %6583 = vmatprep.subr.bf16.mxu0 0
    %6584 = vmatpush1.bf16.msra.mxu0 %v5270
    %6585 = vmatprep.subr.bf16.mxu0 0
    %6586 = vmatpush1.bf16.msra.mxu0 %v5269
    %6587 = vmatprep.subr.bf16.mxu0 0
    %6588 = vmatpush1.bf16.msra.mxu0 %v5268
    %6589 = vmatprep.subr.bf16.mxu0 0
    %6590 = vmatpush1.bf16.msra.mxu0 %v5267
    %6591 = vmatprep.subr.bf16.mxu0 0
    %6592 = vmatpush1.bf16.msra.mxu0 %v5266
    %6593 = vmatprep.subr.bf16.mxu0 0
    %6594 = vmatpush2.bf16.msra.mxu0 %v5281
    %6595 = vmatprep.subr.bf16.mxu0 0
    %6596 = vmatpush2.bf16.msra.mxu0 %v5280
    %6597 = vmatprep.subr.bf16.mxu0 0
    %6598 = vmatpush2.bf16.msra.mxu0 %v5279
    %6599 = vmatprep.subr.bf16.mxu0 0
    %6600 = vmatpush2.bf16.msra.mxu0 %v5278
    %6601 = vmatprep.subr.bf16.mxu0 0
    %6602 = vmatpush2.bf16.msra.mxu0 %v5277
    %6603 = vmatprep.subr.bf16.mxu0 0
    %6604 = vmatpush2.bf16.msra.mxu0 %v5276
    %6605 = vmatprep.subr.bf16.mxu0 0
    %6606 = vmatpush2.bf16.msra.mxu0 %v5275
    %6607 = vmatprep.subr.bf16.mxu0 0
    %6608 = vmatpush2.bf16.msra.mxu0 %v5274
    %6609 = vmatprep.mubr.bf16.mxu0 %v2003
    %6610 = vmatmul.mubr.bf16.gmra.mxu0 %v2002
    %v6611 = vpop.f32.mrf.mxu0
    %v6612 = vadd.f32 %v6563, %v6611
    %v6613 = vpop.f32.mrf.mxu0
    %v6614 = vpop.f32.mrf.mxu0
    %v6615 = vadd.f32 %v6566, %v6614
    %v6616 = vpop.f32.mrf.mxu0
    %6617 = vmatprep.mubr.bf16.mxu0 %v2066
    %6618 = vmatmul.mubr.bf16.gmra.mxu0 %v2065
    %v6619 = vpop.f32.mrf.mxu0
    %v6620 = vadd.f32 %v6571, %v6619
    %v6621 = vpop.f32.mrf.mxu0
    %v6622 = vpop.f32.mrf.mxu0
    %v6623 = vadd.f32 %v6574, %v6622
    %v6624 = vpop.f32.mrf.mxu0
    %6625 = vdwg.mxu0
    %6626 = vmatprep.subr.bf16.mxu0 0
    %6627 = vmatpush1.bf16.msra.mxu0 %v5289
    %6628 = vmatprep.subr.bf16.mxu0 0
    %6629 = vmatpush1.bf16.msra.mxu0 %v5288
    %6630 = vmatprep.subr.bf16.mxu0 0
    %6631 = vmatpush1.bf16.msra.mxu0 %v5287
    %6632 = vmatprep.subr.bf16.mxu0 0
    %6633 = vmatpush1.bf16.msra.mxu0 %v5286
    %6634 = vmatprep.subr.bf16.mxu0 0
    %6635 = vmatpush1.bf16.msra.mxu0 %v5285
    %6636 = vmatprep.subr.bf16.mxu0 0
    %6637 = vmatpush1.bf16.msra.mxu0 %v5284
    %6638 = vmatprep.subr.bf16.mxu0 0
    %6639 = vmatpush1.bf16.msra.mxu0 %v5283
    %6640 = vmatprep.subr.bf16.mxu0 0
    %6641 = vmatpush1.bf16.msra.mxu0 %v5282
    %6642 = vmatprep.subr.bf16.mxu0 0
    %6643 = vmatpush2.bf16.msra.mxu0 %v5297
    %6644 = vmatprep.subr.bf16.mxu0 0
    %6645 = vmatpush2.bf16.msra.mxu0 %v5296
    %6646 = vmatprep.subr.bf16.mxu0 0
    %6647 = vmatpush2.bf16.msra.mxu0 %v5295
    %6648 = vmatprep.subr.bf16.mxu0 0
    %6649 = vmatpush2.bf16.msra.mxu0 %v5294
    %6650 = vmatprep.subr.bf16.mxu0 0
    %6651 = vmatpush2.bf16.msra.mxu0 %v5293
    %6652 = vmatprep.subr.bf16.mxu0 0
    %6653 = vmatpush2.bf16.msra.mxu0 %v5292
    %6654 = vmatprep.subr.bf16.mxu0 0
    %6655 = vmatpush2.bf16.msra.mxu0 %v5291
    %6656 = vmatprep.subr.bf16.mxu0 0
    %6657 = vmatpush2.bf16.msra.mxu0 %v5290
    %6658 = vmatprep.mubr.bf16.mxu0 %v2005
    %6659 = vmatmul.mubr.bf16.gmra.mxu0 %v2004
    %v6660 = vpop.f32.mrf.mxu0
    %v6661 = vadd.f32 %v6612, %v6660
    %v6662 = vpop.f32.mrf.mxu0
    %v6663 = vpop.f32.mrf.mxu0
    %v6664 = vadd.f32 %v6615, %v6663
    %v6665 = vpop.f32.mrf.mxu0
    %6666 = vmatprep.mubr.bf16.mxu0 %v2068
    %6667 = vmatmul.mubr.bf16.gmra.mxu0 %v2067
    %v6668 = vpop.f32.mrf.mxu0
    %v6669 = vadd.f32 %v6620, %v6668
    %v6670 = vpop.f32.mrf.mxu0
    %v6671 = vpop.f32.mrf.mxu0
    %v6672 = vadd.f32 %v6623, %v6671
    %v6673 = vpop.f32.mrf.mxu0
    %6674 = vdwg.mxu0
    %6675 = vmatprep.subr.bf16.mxu0 0
    %6676 = vmatpush1.bf16.msra.mxu0 %v5305
    %6677 = vmatprep.subr.bf16.mxu0 0
    %6678 = vmatpush1.bf16.msra.mxu0 %v5304
    %6679 = vmatprep.subr.bf16.mxu0 0
    %6680 = vmatpush1.bf16.msra.mxu0 %v5303
    %6681 = vmatprep.subr.bf16.mxu0 0
    %6682 = vmatpush1.bf16.msra.mxu0 %v5302
    %6683 = vmatprep.subr.bf16.mxu0 0
    %6684 = vmatpush1.bf16.msra.mxu0 %v5301
    %6685 = vmatprep.subr.bf16.mxu0 0
    %6686 = vmatpush1.bf16.msra.mxu0 %v5300
    %6687 = vmatprep.subr.bf16.mxu0 0
    %6688 = vmatpush1.bf16.msra.mxu0 %v5299
    %6689 = vmatprep.subr.bf16.mxu0 0
    %6690 = vmatpush1.bf16.msra.mxu0 %v5298
    %6691 = vmatprep.subr.bf16.mxu0 0
    %6692 = vmatpush2.bf16.msra.mxu0 %v5313
    %6693 = vmatprep.subr.bf16.mxu0 0
    %6694 = vmatpush2.bf16.msra.mxu0 %v5312
    %6695 = vmatprep.subr.bf16.mxu0 0
    %6696 = vmatpush2.bf16.msra.mxu0 %v5311
    %6697 = vmatprep.subr.bf16.mxu0 0
    %6698 = vmatpush2.bf16.msra.mxu0 %v5310
    %6699 = vmatprep.subr.bf16.mxu0 0
    %6700 = vmatpush2.bf16.msra.mxu0 %v5309
    %6701 = vmatprep.subr.bf16.mxu0 0
    %6702 = vmatpush2.bf16.msra.mxu0 %v5308
    %6703 = vmatprep.subr.bf16.mxu0 0
    %6704 = vmatpush2.bf16.msra.mxu0 %v5307
    %6705 = vmatprep.subr.bf16.mxu0 0
    %6706 = vmatpush2.bf16.msra.mxu0 %v5306
    %6707 = vmatprep.mubr.bf16.mxu0 %v2007
    %6708 = vmatmul.mubr.bf16.gmra.mxu0 %v2006
    %v6709 = vpop.f32.mrf.mxu0
    %v6710 = vadd.f32 %v6661, %v6709
    %v6711 = vpop.f32.mrf.mxu0
    %v6712 = vpop.f32.mrf.mxu0
    %v6713 = vadd.f32 %v6664, %v6712
    %v6714 = vpop.f32.mrf.mxu0
    %6715 = vmatprep.mubr.bf16.mxu0 %v2070
    %6716 = vmatmul.mubr.bf16.gmra.mxu0 %v2069
    %v6717 = vpop.f32.mrf.mxu0
    %v6718 = vadd.f32 %v6669, %v6717
    %v6719 = vpop.f32.mrf.mxu0
    %v6720 = vpop.f32.mrf.mxu0
    %v6721 = vadd.f32 %v6672, %v6720
    %v6722 = vpop.f32.mrf.mxu0
    %6723 = vdwg.mxu0
    %6724 = vmatprep.subr.bf16.mxu0 0
    %6725 = vmatpush1.bf16.msra.mxu0 %v5321
    %6726 = vmatprep.subr.bf16.mxu0 0
    %6727 = vmatpush1.bf16.msra.mxu0 %v5320
    %6728 = vmatprep.subr.bf16.mxu0 0
    %6729 = vmatpush1.bf16.msra.mxu0 %v5319
    %6730 = vmatprep.subr.bf16.mxu0 0
    %6731 = vmatpush1.bf16.msra.mxu0 %v5318
    %6732 = vmatprep.subr.bf16.mxu0 0
    %6733 = vmatpush1.bf16.msra.mxu0 %v5317
    %6734 = vmatprep.subr.bf16.mxu0 0
    %6735 = vmatpush1.bf16.msra.mxu0 %v5316
    %6736 = vmatprep.subr.bf16.mxu0 0
    %6737 = vmatpush1.bf16.msra.mxu0 %v5315
    %6738 = vmatprep.subr.bf16.mxu0 0
    %6739 = vmatpush1.bf16.msra.mxu0 %v5314
    %6740 = vmatprep.subr.bf16.mxu0 0
    %6741 = vmatpush2.bf16.msra.mxu0 %v5329
    %6742 = vmatprep.subr.bf16.mxu0 0
    %6743 = vmatpush2.bf16.msra.mxu0 %v5328
    %6744 = vmatprep.subr.bf16.mxu0 0
    %6745 = vmatpush2.bf16.msra.mxu0 %v5327
    %6746 = vmatprep.subr.bf16.mxu0 0
    %6747 = vmatpush2.bf16.msra.mxu0 %v5326
    %6748 = vmatprep.subr.bf16.mxu0 0
    %6749 = vmatpush2.bf16.msra.mxu0 %v5325
    %6750 = vmatprep.subr.bf16.mxu0 0
    %6751 = vmatpush2.bf16.msra.mxu0 %v5324
    %6752 = vmatprep.subr.bf16.mxu0 0
    %6753 = vmatpush2.bf16.msra.mxu0 %v5323
    %6754 = vmatprep.subr.bf16.mxu0 0
    %6755 = vmatpush2.bf16.msra.mxu0 %v5322
    %6756 = vmatprep.mubr.bf16.mxu0 %v2009
    %6757 = vmatmul.mubr.bf16.gmra.mxu0 %v2008
    %v6758 = vpop.f32.mrf.mxu0
    %v6759 = vadd.f32 %v6710, %v6758
    %v6760 = vpop.f32.mrf.mxu0
    %v6761 = vpop.f32.mrf.mxu0
    %v6762 = vadd.f32 %v6713, %v6761
    %v6763 = vpop.f32.mrf.mxu0
    %6764 = vmatprep.mubr.bf16.mxu0 %v2072
    %6765 = vmatmul.mubr.bf16.gmra.mxu0 %v2071
    %v6766 = vpop.f32.mrf.mxu0
    %v6767 = vadd.f32 %v6718, %v6766
    %v6768 = vpop.f32.mrf.mxu0
    %v6769 = vpop.f32.mrf.mxu0
    %v6770 = vadd.f32 %v6721, %v6769
    %v6771 = vpop.f32.mrf.mxu0
    %6772 = vdwg.mxu0
    %6773 = vmatprep.subr.bf16.mxu0 0
    %6774 = vmatpush1.bf16.msra.mxu0 %v5337
    %6775 = vmatprep.subr.bf16.mxu0 0
    %6776 = vmatpush1.bf16.msra.mxu0 %v5336
    %6777 = vmatprep.subr.bf16.mxu0 0
    %6778 = vmatpush1.bf16.msra.mxu0 %v5335
    %6779 = vmatprep.subr.bf16.mxu0 0
    %6780 = vmatpush1.bf16.msra.mxu0 %v5334
    %6781 = vmatprep.subr.bf16.mxu0 0
    %6782 = vmatpush1.bf16.msra.mxu0 %v5333
    %6783 = vmatprep.subr.bf16.mxu0 0
    %6784 = vmatpush1.bf16.msra.mxu0 %v5332
    %6785 = vmatprep.subr.bf16.mxu0 0
    %6786 = vmatpush1.bf16.msra.mxu0 %v5331
    %6787 = vmatprep.subr.bf16.mxu0 0
    %6788 = vmatpush1.bf16.msra.mxu0 %v5330
    %6789 = vmatprep.subr.bf16.mxu0 0
    %6790 = vmatpush2.bf16.msra.mxu0 %v5345
    %6791 = vmatprep.subr.bf16.mxu0 0
    %6792 = vmatpush2.bf16.msra.mxu0 %v5344
    %6793 = vmatprep.subr.bf16.mxu0 0
    %6794 = vmatpush2.bf16.msra.mxu0 %v5343
    %6795 = vmatprep.subr.bf16.mxu0 0
    %6796 = vmatpush2.bf16.msra.mxu0 %v5342
    %6797 = vmatprep.subr.bf16.mxu0 0
    %6798 = vmatpush2.bf16.msra.mxu0 %v5341
    %6799 = vmatprep.subr.bf16.mxu0 0
    %6800 = vmatpush2.bf16.msra.mxu0 %v5340
    %6801 = vmatprep.subr.bf16.mxu0 0
    %6802 = vmatpush2.bf16.msra.mxu0 %v5339
    %6803 = vmatprep.subr.bf16.mxu0 0
    %6804 = vmatpush2.bf16.msra.mxu0 %v5338
    %6805 = vmatprep.mubr.bf16.mxu0 %v2011
    %6806 = vmatmul.mubr.bf16.gmra.mxu0 %v2010
    %v6807 = vpop.f32.mrf.mxu0
    %v6808 = vadd.f32 %v6759, %v6807
    %v6809 = vpop.f32.mrf.mxu0
    %v6810 = vpop.f32.mrf.mxu0
    %v6811 = vadd.f32 %v6762, %v6810
    %v6812 = vpop.f32.mrf.mxu0
    %6813 = vmatprep.mubr.bf16.mxu0 %v2074
    %6814 = vmatmul.mubr.bf16.gmra.mxu0 %v2073
    %v6815 = vpop.f32.mrf.mxu0
    %v6816 = vadd.f32 %v6767, %v6815
    %v6817 = vpop.f32.mrf.mxu0
    %v6818 = vpop.f32.mrf.mxu0
    %v6819 = vadd.f32 %v6770, %v6818
    %v6820 = vpop.f32.mrf.mxu0
    %6821 = vdwg.mxu0
    %6822 = vmatprep.subr.bf16.mxu0 0
    %6823 = vmatpush1.bf16.msra.mxu0 %v5353
    %6824 = vmatprep.subr.bf16.mxu0 0
    %6825 = vmatpush1.bf16.msra.mxu0 %v5352
    %6826 = vmatprep.subr.bf16.mxu0 0
    %6827 = vmatpush1.bf16.msra.mxu0 %v5351
    %6828 = vmatprep.subr.bf16.mxu0 0
    %6829 = vmatpush1.bf16.msra.mxu0 %v5350
    %6830 = vmatprep.subr.bf16.mxu0 0
    %6831 = vmatpush1.bf16.msra.mxu0 %v5349
    %6832 = vmatprep.subr.bf16.mxu0 0
    %6833 = vmatpush1.bf16.msra.mxu0 %v5348
    %6834 = vmatprep.subr.bf16.mxu0 0
    %6835 = vmatpush1.bf16.msra.mxu0 %v5347
    %6836 = vmatprep.subr.bf16.mxu0 0
    %6837 = vmatpush1.bf16.msra.mxu0 %v5346
    %6838 = vmatprep.subr.bf16.mxu0 0
    %6839 = vmatpush2.bf16.msra.mxu0 %v5361
    %6840 = vmatprep.subr.bf16.mxu0 0
    %6841 = vmatpush2.bf16.msra.mxu0 %v5360
    %6842 = vmatprep.subr.bf16.mxu0 0
    %6843 = vmatpush2.bf16.msra.mxu0 %v5359
    %6844 = vmatprep.subr.bf16.mxu0 0
    %6845 = vmatpush2.bf16.msra.mxu0 %v5358
    %6846 = vmatprep.subr.bf16.mxu0 0
    %6847 = vmatpush2.bf16.msra.mxu0 %v5357
    %6848 = vmatprep.subr.bf16.mxu0 0
    %6849 = vmatpush2.bf16.msra.mxu0 %v5356
    %6850 = vmatprep.subr.bf16.mxu0 0
    %6851 = vmatpush2.bf16.msra.mxu0 %v5355
    %6852 = vmatprep.subr.bf16.mxu0 0
    %6853 = vmatpush2.bf16.msra.mxu0 %v5354
    %6854 = vmatprep.mubr.bf16.mxu0 %v2013
    %6855 = vmatmul.mubr.bf16.gmra.mxu0 %v2012
    %v6856 = vpop.f32.mrf.mxu0
    %v6857 = vadd.f32 %v6808, %v6856
    %v6858 = vpop.f32.mrf.mxu0
    %v6859 = vpop.f32.mrf.mxu0
    %v6860 = vadd.f32 %v6811, %v6859
    %v6861 = vpop.f32.mrf.mxu0
    %6862 = vmatprep.mubr.bf16.mxu0 %v2076
    %6863 = vmatmul.mubr.bf16.gmra.mxu0 %v2075
    %v6864 = vpop.f32.mrf.mxu0
    %v6865 = vadd.f32 %v6816, %v6864
    %v6866 = vpop.f32.mrf.mxu0
    %v6867 = vpop.f32.mrf.mxu0
    %v6868 = vadd.f32 %v6819, %v6867
    %v6869 = vpop.f32.mrf.mxu0
    %6870 = vdwg.mxu0
    %6871 = vmatprep.subr.bf16.mxu0 0
    %6872 = vmatpush1.bf16.msra.mxu0 %v5369
    %6873 = vmatprep.subr.bf16.mxu0 0
    %6874 = vmatpush1.bf16.msra.mxu0 %v5368
    %6875 = vmatprep.subr.bf16.mxu0 0
    %6876 = vmatpush1.bf16.msra.mxu0 %v5367
    %6877 = vmatprep.subr.bf16.mxu0 0
    %6878 = vmatpush1.bf16.msra.mxu0 %v5366
    %6879 = vmatprep.subr.bf16.mxu0 0
    %6880 = vmatpush1.bf16.msra.mxu0 %v5365
    %6881 = vmatprep.subr.bf16.mxu0 0
    %6882 = vmatpush1.bf16.msra.mxu0 %v5364
    %6883 = vmatprep.subr.bf16.mxu0 0
    %6884 = vmatpush1.bf16.msra.mxu0 %v5363
    %6885 = vmatprep.subr.bf16.mxu0 0
    %6886 = vmatpush1.bf16.msra.mxu0 %v5362
    %6887 = vmatprep.subr.bf16.mxu0 0
    %6888 = vmatpush2.bf16.msra.mxu0 %v5377
    %6889 = vmatprep.subr.bf16.mxu0 0
    %6890 = vmatpush2.bf16.msra.mxu0 %v5376
    %6891 = vmatprep.subr.bf16.mxu0 0
    %6892 = vmatpush2.bf16.msra.mxu0 %v5375
    %6893 = vmatprep.subr.bf16.mxu0 0
    %6894 = vmatpush2.bf16.msra.mxu0 %v5374
    %6895 = vmatprep.subr.bf16.mxu0 0
    %6896 = vmatpush2.bf16.msra.mxu0 %v5373
    %6897 = vmatprep.subr.bf16.mxu0 0
    %6898 = vmatpush2.bf16.msra.mxu0 %v5372
    %6899 = vmatprep.subr.bf16.mxu0 0
    %6900 = vmatpush2.bf16.msra.mxu0 %v5371
    %6901 = vmatprep.subr.bf16.mxu0 0
    %6902 = vmatpush2.bf16.msra.mxu0 %v5370
    %6903 = vmatprep.mubr.bf16.mxu0 %v2015
    %6904 = vmatmul.mubr.bf16.gmra.mxu0 %v2014
    %v6905 = vpop.f32.mrf.mxu0
    %v6906 = vadd.f32 %v6857, %v6905
    %v6907 = vpop.f32.mrf.mxu0
    %v6908 = vpop.f32.mrf.mxu0
    %v6909 = vadd.f32 %v6860, %v6908
    %v6910 = vpop.f32.mrf.mxu0
    %6911 = vmatprep.mubr.bf16.mxu0 %v2078
    %6912 = vmatmul.mubr.bf16.gmra.mxu0 %v2077
    %v6913 = vpop.f32.mrf.mxu0
    %v6914 = vadd.f32 %v6865, %v6913
    %v6915 = vpop.f32.mrf.mxu0
    %v6916 = vpop.f32.mrf.mxu0
    %v6917 = vadd.f32 %v6868, %v6916
    %v6918 = vpop.f32.mrf.mxu0
    %6919 = vdwg.mxu0
    %6920 = vmatprep.subr.bf16.mxu0 0
    %6921 = vmatpush1.bf16.msra.mxu0 %v5385
    %6922 = vmatprep.subr.bf16.mxu0 0
    %6923 = vmatpush1.bf16.msra.mxu0 %v5384
    %6924 = vmatprep.subr.bf16.mxu0 0
    %6925 = vmatpush1.bf16.msra.mxu0 %v5383
    %6926 = vmatprep.subr.bf16.mxu0 0
    %6927 = vmatpush1.bf16.msra.mxu0 %v5382
    %6928 = vmatprep.subr.bf16.mxu0 0
    %6929 = vmatpush1.bf16.msra.mxu0 %v5381
    %6930 = vmatprep.subr.bf16.mxu0 0
    %6931 = vmatpush1.bf16.msra.mxu0 %v5380
    %6932 = vmatprep.subr.bf16.mxu0 0
    %6933 = vmatpush1.bf16.msra.mxu0 %v5379
    %6934 = vmatprep.subr.bf16.mxu0 0
    %6935 = vmatpush1.bf16.msra.mxu0 %v5378
    %6936 = vmatprep.subr.bf16.mxu0 0
    %6937 = vmatpush2.bf16.msra.mxu0 %v5393
    %6938 = vmatprep.subr.bf16.mxu0 0
    %6939 = vmatpush2.bf16.msra.mxu0 %v5392
    %6940 = vmatprep.subr.bf16.mxu0 0
    %6941 = vmatpush2.bf16.msra.mxu0 %v5391
    %6942 = vmatprep.subr.bf16.mxu0 0
    %6943 = vmatpush2.bf16.msra.mxu0 %v5390
    %6944 = vmatprep.subr.bf16.mxu0 0
    %6945 = vmatpush2.bf16.msra.mxu0 %v5389
    %6946 = vmatprep.subr.bf16.mxu0 0
    %6947 = vmatpush2.bf16.msra.mxu0 %v5388
    %6948 = vmatprep.subr.bf16.mxu0 0
    %6949 = vmatpush2.bf16.msra.mxu0 %v5387
    %6950 = vmatprep.subr.bf16.mxu0 0
    %6951 = vmatpush2.bf16.msra.mxu0 %v5386
    %6952 = vmatprep.mubr.bf16.mxu0 %v2017
    %6953 = vmatmul.mubr.bf16.gmra.mxu0 %v2016
    %v6954 = vpop.f32.mrf.mxu0
    %v6955 = vadd.f32 %v6906, %v6954
    %v6956 = vpop.f32.mrf.mxu0
    %v6957 = vpop.f32.mrf.mxu0
    %v6958 = vadd.f32 %v6909, %v6957
    %v6959 = vpop.f32.mrf.mxu0
    %6960 = vmatprep.mubr.bf16.mxu0 %v2080
    %6961 = vmatmul.mubr.bf16.gmra.mxu0 %v2079
    %v6962 = vpop.f32.mrf.mxu0
    %v6963 = vadd.f32 %v6914, %v6962
    %v6964 = vpop.f32.mrf.mxu0
    %v6965 = vpop.f32.mrf.mxu0
    %v6966 = vadd.f32 %v6917, %v6965
    %v6967 = vpop.f32.mrf.mxu0
    %6968 = vdwg.mxu0
    %6969 = vmatprep.subr.bf16.mxu0 0
    %6970 = vmatpush1.bf16.msra.mxu0 %v5401
    %6971 = vmatprep.subr.bf16.mxu0 0
    %6972 = vmatpush1.bf16.msra.mxu0 %v5400
    %6973 = vmatprep.subr.bf16.mxu0 0
    %6974 = vmatpush1.bf16.msra.mxu0 %v5399
    %6975 = vmatprep.subr.bf16.mxu0 0
    %6976 = vmatpush1.bf16.msra.mxu0 %v5398
    %6977 = vmatprep.subr.bf16.mxu0 0
    %6978 = vmatpush1.bf16.msra.mxu0 %v5397
    %6979 = vmatprep.subr.bf16.mxu0 0
    %6980 = vmatpush1.bf16.msra.mxu0 %v5396
    %6981 = vmatprep.subr.bf16.mxu0 0
    %6982 = vmatpush1.bf16.msra.mxu0 %v5395
    %6983 = vmatprep.subr.bf16.mxu0 0
    %6984 = vmatpush1.bf16.msra.mxu0 %v5394
    %6985 = vmatprep.subr.bf16.mxu0 0
    %6986 = vmatpush2.bf16.msra.mxu0 %v5409
    %6987 = vmatprep.subr.bf16.mxu0 0
    %6988 = vmatpush2.bf16.msra.mxu0 %v5408
    %6989 = vmatprep.subr.bf16.mxu0 0
    %6990 = vmatpush2.bf16.msra.mxu0 %v5407
    %6991 = vmatprep.subr.bf16.mxu0 0
    %6992 = vmatpush2.bf16.msra.mxu0 %v5406
    %6993 = vmatprep.subr.bf16.mxu0 0
    %6994 = vmatpush2.bf16.msra.mxu0 %v5405
    %6995 = vmatprep.subr.bf16.mxu0 0
    %6996 = vmatpush2.bf16.msra.mxu0 %v5404
    %6997 = vmatprep.subr.bf16.mxu0 0
    %6998 = vmatpush2.bf16.msra.mxu0 %v5403
    %6999 = vmatprep.subr.bf16.mxu0 0
    %7000 = vmatpush2.bf16.msra.mxu0 %v5402
    %7001 = vmatprep.mubr.bf16.mxu0 %v2019
    %7002 = vmatmul.mubr.bf16.gmra.mxu0 %v2018
    %v7003 = vpop.f32.mrf.mxu0
    %v7004 = vadd.f32 %v6955, %v7003
    %v7005 = vpop.f32.mrf.mxu0
    %v7006 = vpop.f32.mrf.mxu0
    %v7007 = vadd.f32 %v6958, %v7006
    %v7008 = vpop.f32.mrf.mxu0
    %7009 = vmatprep.mubr.bf16.mxu0 %v2082
    %7010 = vmatmul.mubr.bf16.gmra.mxu0 %v2081
    %v7011 = vpop.f32.mrf.mxu0
    %v7012 = vadd.f32 %v6963, %v7011
    %v7013 = vpop.f32.mrf.mxu0
    %v7014 = vpop.f32.mrf.mxu0
    %v7015 = vadd.f32 %v6966, %v7014
    %v7016 = vpop.f32.mrf.mxu0
    %7017 = vdwg.mxu0
    %7018 = vmatprep.subr.bf16.mxu0 0
    %7019 = vmatpush1.bf16.msra.mxu0 %v5417
    %7020 = vmatprep.subr.bf16.mxu0 0
    %7021 = vmatpush1.bf16.msra.mxu0 %v5416
    %7022 = vmatprep.subr.bf16.mxu0 0
    %7023 = vmatpush1.bf16.msra.mxu0 %v5415
    %7024 = vmatprep.subr.bf16.mxu0 0
    %7025 = vmatpush1.bf16.msra.mxu0 %v5414
    %7026 = vmatprep.subr.bf16.mxu0 0
    %7027 = vmatpush1.bf16.msra.mxu0 %v5413
    %7028 = vmatprep.subr.bf16.mxu0 0
    %7029 = vmatpush1.bf16.msra.mxu0 %v5412
    %7030 = vmatprep.subr.bf16.mxu0 0
    %7031 = vmatpush1.bf16.msra.mxu0 %v5411
    %7032 = vmatprep.subr.bf16.mxu0 0
    %7033 = vmatpush1.bf16.msra.mxu0 %v5410
    %7034 = vmatprep.subr.bf16.mxu0 0
    %7035 = vmatpush2.bf16.msra.mxu0 %v5425
    %7036 = vmatprep.subr.bf16.mxu0 0
    %7037 = vmatpush2.bf16.msra.mxu0 %v5424
    %7038 = vmatprep.subr.bf16.mxu0 0
    %7039 = vmatpush2.bf16.msra.mxu0 %v5423
    %7040 = vmatprep.subr.bf16.mxu0 0
    %7041 = vmatpush2.bf16.msra.mxu0 %v5422
    %7042 = vmatprep.subr.bf16.mxu0 0
    %7043 = vmatpush2.bf16.msra.mxu0 %v5421
    %7044 = vmatprep.subr.bf16.mxu0 0
    %7045 = vmatpush2.bf16.msra.mxu0 %v5420
    %7046 = vmatprep.subr.bf16.mxu0 0
    %7047 = vmatpush2.bf16.msra.mxu0 %v5419
    %7048 = vmatprep.subr.bf16.mxu0 0
    %7049 = vmatpush2.bf16.msra.mxu0 %v5418
    %7050 = vmatprep.mubr.bf16.mxu0 %v2021
    %7051 = vmatmul.mubr.bf16.gmra.mxu0 %v2020
    %v7052 = vpop.f32.mrf.mxu0
    %v7053 = vadd.f32 %v7004, %v7052
    %v7054 = vpop.f32.mrf.mxu0
    %v7055 = vpop.f32.mrf.mxu0
    %v7056 = vadd.f32 %v7007, %v7055
    %v7057 = vpop.f32.mrf.mxu0
    %7058 = vmatprep.mubr.bf16.mxu0 %v2084
    %7059 = vmatmul.mubr.bf16.gmra.mxu0 %v2083
    %v7060 = vpop.f32.mrf.mxu0
    %v7061 = vadd.f32 %v7012, %v7060
    %v7062 = vpop.f32.mrf.mxu0
    %v7063 = vpop.f32.mrf.mxu0
    %v7064 = vadd.f32 %v7015, %v7063
    %v7065 = vpop.f32.mrf.mxu0
    %7066 = vdwg.mxu0
    %7067 = vmatprep.subr.bf16.mxu0 0
    %7068 = vmatpush1.bf16.msra.mxu0 %v5433
    %7069 = vmatprep.subr.bf16.mxu0 0
    %7070 = vmatpush1.bf16.msra.mxu0 %v5432
    %7071 = vmatprep.subr.bf16.mxu0 0
    %7072 = vmatpush1.bf16.msra.mxu0 %v5431
    %7073 = vmatprep.subr.bf16.mxu0 0
    %7074 = vmatpush1.bf16.msra.mxu0 %v5430
    %7075 = vmatprep.subr.bf16.mxu0 0
    %7076 = vmatpush1.bf16.msra.mxu0 %v5429
    %7077 = vmatprep.subr.bf16.mxu0 0
    %7078 = vmatpush1.bf16.msra.mxu0 %v5428
    %7079 = vmatprep.subr.bf16.mxu0 0
    %7080 = vmatpush1.bf16.msra.mxu0 %v5427
    %7081 = vmatprep.subr.bf16.mxu0 0
    %7082 = vmatpush1.bf16.msra.mxu0 %v5426
    %7083 = vmatprep.subr.bf16.mxu0 0
    %7084 = vmatpush2.bf16.msra.mxu0 %v5441
    %7085 = vmatprep.subr.bf16.mxu0 0
    %7086 = vmatpush2.bf16.msra.mxu0 %v5440
    %7087 = vmatprep.subr.bf16.mxu0 0
    %7088 = vmatpush2.bf16.msra.mxu0 %v5439
    %7089 = vmatprep.subr.bf16.mxu0 0
    %7090 = vmatpush2.bf16.msra.mxu0 %v5438
    %7091 = vmatprep.subr.bf16.mxu0 0
    %7092 = vmatpush2.bf16.msra.mxu0 %v5437
    %7093 = vmatprep.subr.bf16.mxu0 0
    %7094 = vmatpush2.bf16.msra.mxu0 %v5436
    %7095 = vmatprep.subr.bf16.mxu0 0
    %7096 = vmatpush2.bf16.msra.mxu0 %v5435
    %7097 = vmatprep.subr.bf16.mxu0 0
    %7098 = vmatpush2.bf16.msra.mxu0 %v5434
    %7099 = vmatprep.mubr.bf16.mxu0 %v2023
    %7100 = vmatmul.mubr.bf16.gmra.mxu0 %v2022
    %v7101 = vpop.f32.mrf.mxu0
    %v7102 = vadd.f32 %v7053, %v7101
    %v7103 = vpop.f32.mrf.mxu0
    %v7104 = vpop.f32.mrf.mxu0
    %v7105 = vadd.f32 %v7056, %v7104
    %v7106 = vpop.f32.mrf.mxu0
    %7107 = vmatprep.mubr.bf16.mxu0 %v2086
    %7108 = vmatmul.mubr.bf16.gmra.mxu0 %v2085
    %v7109 = vpop.f32.mrf.mxu0
    %v7110 = vadd.f32 %v7061, %v7109
    %v7111 = vpop.f32.mrf.mxu0
    %v7112 = vpop.f32.mrf.mxu0
    %v7113 = vadd.f32 %v7064, %v7112
    %v7114 = vpop.f32.mrf.mxu0
    %7115 = vdwg.mxu0
    %7116 = vmatprep.subr.bf16.mxu0 0
    %7117 = vmatpush1.bf16.msra.mxu0 %v5449
    %7118 = vmatprep.subr.bf16.mxu0 0
    %7119 = vmatpush1.bf16.msra.mxu0 %v5448
    %7120 = vmatprep.subr.bf16.mxu0 0
    %7121 = vmatpush1.bf16.msra.mxu0 %v5447
    %7122 = vmatprep.subr.bf16.mxu0 0
    %7123 = vmatpush1.bf16.msra.mxu0 %v5446
    %7124 = vmatprep.subr.bf16.mxu0 0
    %7125 = vmatpush1.bf16.msra.mxu0 %v5445
    %7126 = vmatprep.subr.bf16.mxu0 0
    %7127 = vmatpush1.bf16.msra.mxu0 %v5444
    %7128 = vmatprep.subr.bf16.mxu0 0
    %7129 = vmatpush1.bf16.msra.mxu0 %v5443
    %7130 = vmatprep.subr.bf16.mxu0 0
    %7131 = vmatpush1.bf16.msra.mxu0 %v5442
    %7132 = vmatprep.subr.bf16.mxu0 0
    %7133 = vmatpush2.bf16.msra.mxu0 %v5457
    %7134 = vmatprep.subr.bf16.mxu0 0
    %7135 = vmatpush2.bf16.msra.mxu0 %v5456
    %7136 = vmatprep.subr.bf16.mxu0 0
    %7137 = vmatpush2.bf16.msra.mxu0 %v5455
    %7138 = vmatprep.subr.bf16.mxu0 0
    %7139 = vmatpush2.bf16.msra.mxu0 %v5454
    %7140 = vmatprep.subr.bf16.mxu0 0
    %7141 = vmatpush2.bf16.msra.mxu0 %v5453
    %7142 = vmatprep.subr.bf16.mxu0 0
    %7143 = vmatpush2.bf16.msra.mxu0 %v5452
    %7144 = vmatprep.subr.bf16.mxu0 0
    %7145 = vmatpush2.bf16.msra.mxu0 %v5451
    %7146 = vmatprep.subr.bf16.mxu0 0
    %7147 = vmatpush2.bf16.msra.mxu0 %v5450
    %7148 = vmatprep.mubr.bf16.mxu0 %v2025
    %7149 = vmatmul.mubr.bf16.gmra.mxu0 %v2024
    %v7150 = vpop.f32.mrf.mxu0
    %v7151 = vadd.f32 %v7102, %v7150
    %v7152 = vpop.f32.mrf.mxu0
    %v7153 = vpop.f32.mrf.mxu0
    %v7154 = vadd.f32 %v7105, %v7153
    %v7155 = vpop.f32.mrf.mxu0
    %7156 = vmatprep.mubr.bf16.mxu0 %v2088
    %7157 = vmatmul.mubr.bf16.gmra.mxu0 %v2087
    %v7158 = vpop.f32.mrf.mxu0
    %v7159 = vadd.f32 %v7110, %v7158
    %v7160 = vpop.f32.mrf.mxu0
    %v7161 = vpop.f32.mrf.mxu0
    %v7162 = vadd.f32 %v7113, %v7161
    %v7163 = vpop.f32.mrf.mxu0
    %7164 = vdwg.mxu0
    %7165 = vmatprep.subr.bf16.mxu0 0
    %7166 = vmatpush1.bf16.msra.mxu0 %v5465
    %7167 = vmatprep.subr.bf16.mxu0 0
    %7168 = vmatpush1.bf16.msra.mxu0 %v5464
    %7169 = vmatprep.subr.bf16.mxu0 0
    %7170 = vmatpush1.bf16.msra.mxu0 %v5463
    %7171 = vmatprep.subr.bf16.mxu0 0
    %7172 = vmatpush1.bf16.msra.mxu0 %v5462
    %7173 = vmatprep.subr.bf16.mxu0 0
    %7174 = vmatpush1.bf16.msra.mxu0 %v5461
    %7175 = vmatprep.subr.bf16.mxu0 0
    %7176 = vmatpush1.bf16.msra.mxu0 %v5460
    %7177 = vmatprep.subr.bf16.mxu0 0
    %7178 = vmatpush1.bf16.msra.mxu0 %v5459
    %7179 = vmatprep.subr.bf16.mxu0 0
    %7180 = vmatpush1.bf16.msra.mxu0 %v5458
    %7181 = vmatprep.subr.bf16.mxu0 0
    %7182 = vmatpush2.bf16.msra.mxu0 %v5473
    %7183 = vmatprep.subr.bf16.mxu0 0
    %7184 = vmatpush2.bf16.msra.mxu0 %v5472
    %7185 = vmatprep.subr.bf16.mxu0 0
    %7186 = vmatpush2.bf16.msra.mxu0 %v5471
    %7187 = vmatprep.subr.bf16.mxu0 0
    %7188 = vmatpush2.bf16.msra.mxu0 %v5470
    %7189 = vmatprep.subr.bf16.mxu0 0
    %7190 = vmatpush2.bf16.msra.mxu0 %v5469
    %7191 = vmatprep.subr.bf16.mxu0 0
    %7192 = vmatpush2.bf16.msra.mxu0 %v5468
    %7193 = vmatprep.subr.bf16.mxu0 0
    %7194 = vmatpush2.bf16.msra.mxu0 %v5467
    %7195 = vmatprep.subr.bf16.mxu0 0
    %7196 = vmatpush2.bf16.msra.mxu0 %v5466
    %7197 = vmatprep.mubr.bf16.mxu0 %v2027
    %7198 = vmatmul.mubr.bf16.gmra.mxu0 %v2026
    %v7199 = vpop.f32.mrf.mxu0
    %v7200 = vadd.f32 %v7151, %v7199
    %v7201 = vpop.f32.mrf.mxu0
    %v7202 = vpop.f32.mrf.mxu0
    %v7203 = vadd.f32 %v7154, %v7202
    %v7204 = vpop.f32.mrf.mxu0
    %7205 = vmatprep.mubr.bf16.mxu0 %v2090
    %7206 = vmatmul.mubr.bf16.gmra.mxu0 %v2089
    %v7207 = vpop.f32.mrf.mxu0
    %v7208 = vadd.f32 %v7159, %v7207
    %v7209 = vpop.f32.mrf.mxu0
    %v7210 = vpop.f32.mrf.mxu0
    %v7211 = vadd.f32 %v7162, %v7210
    %v7212 = vpop.f32.mrf.mxu0
    %7213 = vdwg.mxu0
    %7214 = vmatprep.subr.bf16.mxu0 0
    %7215 = vmatpush1.bf16.msra.mxu0 %v5481
    %7216 = vmatprep.subr.bf16.mxu0 0
    %7217 = vmatpush1.bf16.msra.mxu0 %v5480
    %7218 = vmatprep.subr.bf16.mxu0 0
    %7219 = vmatpush1.bf16.msra.mxu0 %v5479
    %7220 = vmatprep.subr.bf16.mxu0 0
    %7221 = vmatpush1.bf16.msra.mxu0 %v5478
    %7222 = vmatprep.subr.bf16.mxu0 0
    %7223 = vmatpush1.bf16.msra.mxu0 %v5477
    %7224 = vmatprep.subr.bf16.mxu0 0
    %7225 = vmatpush1.bf16.msra.mxu0 %v5476
    %7226 = vmatprep.subr.bf16.mxu0 0
    %7227 = vmatpush1.bf16.msra.mxu0 %v5475
    %7228 = vmatprep.subr.bf16.mxu0 0
    %7229 = vmatpush1.bf16.msra.mxu0 %v5474
    %7230 = vmatprep.subr.bf16.mxu0 0
    %7231 = vmatpush2.bf16.msra.mxu0 %v5489
    %7232 = vmatprep.subr.bf16.mxu0 0
    %7233 = vmatpush2.bf16.msra.mxu0 %v5488
    %7234 = vmatprep.subr.bf16.mxu0 0
    %7235 = vmatpush2.bf16.msra.mxu0 %v5487
    %7236 = vmatprep.subr.bf16.mxu0 0
    %7237 = vmatpush2.bf16.msra.mxu0 %v5486
    %7238 = vmatprep.subr.bf16.mxu0 0
    %7239 = vmatpush2.bf16.msra.mxu0 %v5485
    %7240 = vmatprep.subr.bf16.mxu0 0
    %7241 = vmatpush2.bf16.msra.mxu0 %v5484
    %7242 = vmatprep.subr.bf16.mxu0 0
    %7243 = vmatpush2.bf16.msra.mxu0 %v5483
    %7244 = vmatprep.subr.bf16.mxu0 0
    %7245 = vmatpush2.bf16.msra.mxu0 %v5482
    %7246 = vmatprep.mubr.bf16.mxu0 %v2029
    %7247 = vmatmul.mubr.bf16.gmra.mxu0 %v2028
    %v7248 = vpop.f32.mrf.mxu0
    %v7249 = vadd.f32 %v7200, %v7248
    %v7250 = vpop.f32.mrf.mxu0
    %v7251 = vpop.f32.mrf.mxu0
    %v7252 = vadd.f32 %v7203, %v7251
    %v7253 = vpop.f32.mrf.mxu0
    %7254 = vmatprep.mubr.bf16.mxu0 %v2092
    %7255 = vmatmul.mubr.bf16.gmra.mxu0 %v2091
    %v7256 = vpop.f32.mrf.mxu0
    %v7257 = vadd.f32 %v7208, %v7256
    %v7258 = vpop.f32.mrf.mxu0
    %v7259 = vpop.f32.mrf.mxu0
    %v7260 = vadd.f32 %v7211, %v7259
    %v7261 = vpop.f32.mrf.mxu0
    %7262 = vdwg.mxu0
    %7263 = vmatprep.subr.bf16.mxu0 0
    %7264 = vmatpush1.bf16.msra.mxu0 %v5497
    %7265 = vmatprep.subr.bf16.mxu0 0
    %7266 = vmatpush1.bf16.msra.mxu0 %v5496
    %7267 = vmatprep.subr.bf16.mxu0 0
    %7268 = vmatpush1.bf16.msra.mxu0 %v5495
    %7269 = vmatprep.subr.bf16.mxu0 0
    %7270 = vmatpush1.bf16.msra.mxu0 %v5494
    %7271 = vmatprep.subr.bf16.mxu0 0
    %7272 = vmatpush1.bf16.msra.mxu0 %v5493
    %7273 = vmatprep.subr.bf16.mxu0 0
    %7274 = vmatpush1.bf16.msra.mxu0 %v5492
    %7275 = vmatprep.subr.bf16.mxu0 0
    %7276 = vmatpush1.bf16.msra.mxu0 %v5491
    %7277 = vmatprep.subr.bf16.mxu0 0
    %7278 = vmatpush1.bf16.msra.mxu0 %v5490
    %7279 = vmatprep.subr.bf16.mxu0 0
    %7280 = vmatpush2.bf16.msra.mxu0 %v5505
    %7281 = vmatprep.subr.bf16.mxu0 0
    %7282 = vmatpush2.bf16.msra.mxu0 %v5504
    %7283 = vmatprep.subr.bf16.mxu0 0
    %7284 = vmatpush2.bf16.msra.mxu0 %v5503
    %7285 = vmatprep.subr.bf16.mxu0 0
    %7286 = vmatpush2.bf16.msra.mxu0 %v5502
    %7287 = vmatprep.subr.bf16.mxu0 0
    %7288 = vmatpush2.bf16.msra.mxu0 %v5501
    %7289 = vmatprep.subr.bf16.mxu0 0
    %7290 = vmatpush2.bf16.msra.mxu0 %v5500
    %7291 = vmatprep.subr.bf16.mxu0 0
    %7292 = vmatpush2.bf16.msra.mxu0 %v5499
    %7293 = vmatprep.subr.bf16.mxu0 0
    %7294 = vmatpush2.bf16.msra.mxu0 %v5498
    %7295 = vmatprep.mubr.bf16.mxu0 %v2031
    %7296 = vmatmul.mubr.bf16.gmra.mxu0 %v2030
    %v7297 = vpop.f32.mrf.mxu0
    %v7298 = vadd.f32 %v7249, %v7297
    %v7299 = vpop.f32.mrf.mxu0
    %v7300 = vpop.f32.mrf.mxu0
    %v7301 = vadd.f32 %v7252, %v7300
    %v7302 = vpop.f32.mrf.mxu0
    %7303 = vmatprep.mubr.bf16.mxu0 %v2094
    %7304 = vmatmul.mubr.bf16.gmra.mxu0 %v2093
    %v7305 = vpop.f32.mrf.mxu0
    %v7306 = vadd.f32 %v7257, %v7305
    %v7307 = vpop.f32.mrf.mxu0
    %v7308 = vpop.f32.mrf.mxu0
    %v7309 = vadd.f32 %v7260, %v7308
    %v7310 = vpop.f32.mrf.mxu0
    %7311 = vdwg.mxu0
    %7312 = vmatprep.subr.bf16.mxu0 0
    %7313 = vmatpush1.bf16.msra.mxu0 %v5513
    %7314 = vmatprep.subr.bf16.mxu0 0
    %7315 = vmatpush1.bf16.msra.mxu0 %v5512
    %7316 = vmatprep.subr.bf16.mxu0 0
    %7317 = vmatpush1.bf16.msra.mxu0 %v5511
    %7318 = vmatprep.subr.bf16.mxu0 0
    %7319 = vmatpush1.bf16.msra.mxu0 %v5510
    %7320 = vmatprep.subr.bf16.mxu0 0
    %7321 = vmatpush1.bf16.msra.mxu0 %v5509
    %7322 = vmatprep.subr.bf16.mxu0 0
    %7323 = vmatpush1.bf16.msra.mxu0 %v5508
    %7324 = vmatprep.subr.bf16.mxu0 0
    %7325 = vmatpush1.bf16.msra.mxu0 %v5507
    %7326 = vmatprep.subr.bf16.mxu0 0
    %7327 = vmatpush1.bf16.msra.mxu0 %v5506
    %7328 = vmatprep.subr.bf16.mxu0 0
    %7329 = vmatpush2.bf16.msra.mxu0 %v5521
    %7330 = vmatprep.subr.bf16.mxu0 0
    %7331 = vmatpush2.bf16.msra.mxu0 %v5520
    %7332 = vmatprep.subr.bf16.mxu0 0
    %7333 = vmatpush2.bf16.msra.mxu0 %v5519
    %7334 = vmatprep.subr.bf16.mxu0 0
    %7335 = vmatpush2.bf16.msra.mxu0 %v5518
    %7336 = vmatprep.subr.bf16.mxu0 0
    %7337 = vmatpush2.bf16.msra.mxu0 %v5517
    %7338 = vmatprep.subr.bf16.mxu0 0
    %7339 = vmatpush2.bf16.msra.mxu0 %v5516
    %7340 = vmatprep.subr.bf16.mxu0 0
    %7341 = vmatpush2.bf16.msra.mxu0 %v5515
    %7342 = vmatprep.subr.bf16.mxu0 0
    %7343 = vmatpush2.bf16.msra.mxu0 %v5514
    %7344 = vmatprep.mubr.bf16.mxu0 %v2033
    %7345 = vmatmul.mubr.bf16.gmra.mxu0 %v2032
    %v7346 = vpop.f32.mrf.mxu0
    %v7347 = vadd.f32 %v7298, %v7346
    %v7348 = vpop.f32.mrf.mxu0
    %v7349 = vpop.f32.mrf.mxu0
    %v7350 = vadd.f32 %v7301, %v7349
    %v7351 = vpop.f32.mrf.mxu0
    %7352 = vmatprep.mubr.bf16.mxu0 %v2096
    %7353 = vmatmul.mubr.bf16.gmra.mxu0 %v2095
    %v7354 = vpop.f32.mrf.mxu0
    %v7355 = vadd.f32 %v7306, %v7354
    %v7356 = vpop.f32.mrf.mxu0
    %v7357 = vpop.f32.mrf.mxu0
    %v7358 = vadd.f32 %v7309, %v7357
    %v7359 = vpop.f32.mrf.mxu0
    %7360 = vdwg.mxu0
    %7361 = vmatprep.subr.bf16.mxu0 0
    %7362 = vmatpush1.bf16.msra.mxu0 %v5529
    %7363 = vmatprep.subr.bf16.mxu0 0
    %7364 = vmatpush1.bf16.msra.mxu0 %v5528
    %7365 = vmatprep.subr.bf16.mxu0 0
    %7366 = vmatpush1.bf16.msra.mxu0 %v5527
    %7367 = vmatprep.subr.bf16.mxu0 0
    %7368 = vmatpush1.bf16.msra.mxu0 %v5526
    %7369 = vmatprep.subr.bf16.mxu0 0
    %7370 = vmatpush1.bf16.msra.mxu0 %v5525
    %7371 = vmatprep.subr.bf16.mxu0 0
    %7372 = vmatpush1.bf16.msra.mxu0 %v5524
    %7373 = vmatprep.subr.bf16.mxu0 0
    %7374 = vmatpush1.bf16.msra.mxu0 %v5523
    %7375 = vmatprep.subr.bf16.mxu0 0
    %7376 = vmatpush1.bf16.msra.mxu0 %v5522
    %7377 = vmatprep.subr.bf16.mxu0 0
    %7378 = vmatpush2.bf16.msra.mxu0 %v5537
    %7379 = vmatprep.subr.bf16.mxu0 0
    %7380 = vmatpush2.bf16.msra.mxu0 %v5536
    %7381 = vmatprep.subr.bf16.mxu0 0
    %7382 = vmatpush2.bf16.msra.mxu0 %v5535
    %7383 = vmatprep.subr.bf16.mxu0 0
    %7384 = vmatpush2.bf16.msra.mxu0 %v5534
    %7385 = vmatprep.subr.bf16.mxu0 0
    %7386 = vmatpush2.bf16.msra.mxu0 %v5533
    %7387 = vmatprep.subr.bf16.mxu0 0
    %7388 = vmatpush2.bf16.msra.mxu0 %v5532
    %7389 = vmatprep.subr.bf16.mxu0 0
    %7390 = vmatpush2.bf16.msra.mxu0 %v5531
    %7391 = vmatprep.subr.bf16.mxu0 0
    %7392 = vmatpush2.bf16.msra.mxu0 %v5530
    %7393 = vmatprep.mubr.bf16.mxu0 %v2035
    %7394 = vmatmul.mubr.bf16.gmra.mxu0 %v2034
    %v7395 = vpop.f32.mrf.mxu0
    %v7396 = vadd.f32 %v7347, %v7395
    %v7397 = vpop.f32.mrf.mxu0
    %v7398 = vpop.f32.mrf.mxu0
    %v7399 = vadd.f32 %v7350, %v7398
    %v7400 = vpop.f32.mrf.mxu0
    %7401 = vmatprep.mubr.bf16.mxu0 %v2098
    %7402 = vmatmul.mubr.bf16.gmra.mxu0 %v2097
    %v7403 = vpop.f32.mrf.mxu0
    %v7404 = vadd.f32 %v7355, %v7403
    %v7405 = vpop.f32.mrf.mxu0
    %v7406 = vpop.f32.mrf.mxu0
    %v7407 = vadd.f32 %v7358, %v7406
    %v7408 = vpop.f32.mrf.mxu0
    %7409 = vdwg.mxu0
    %7410 = vmatprep.subr.bf16.mxu0 0
    %7411 = vmatpush1.bf16.msra.mxu0 %v5545
    %7412 = vmatprep.subr.bf16.mxu0 0
    %7413 = vmatpush1.bf16.msra.mxu0 %v5544
    %7414 = vmatprep.subr.bf16.mxu0 0
    %7415 = vmatpush1.bf16.msra.mxu0 %v5543
    %7416 = vmatprep.subr.bf16.mxu0 0
    %7417 = vmatpush1.bf16.msra.mxu0 %v5542
    %7418 = vmatprep.subr.bf16.mxu0 0
    %7419 = vmatpush1.bf16.msra.mxu0 %v5541
    %7420 = vmatprep.subr.bf16.mxu0 0
    %7421 = vmatpush1.bf16.msra.mxu0 %v5540
    %7422 = vmatprep.subr.bf16.mxu0 0
    %7423 = vmatpush1.bf16.msra.mxu0 %v5539
    %7424 = vmatprep.subr.bf16.mxu0 0
    %7425 = vmatpush1.bf16.msra.mxu0 %v5538
    %7426 = vmatprep.subr.bf16.mxu0 0
    %7427 = vmatpush2.bf16.msra.mxu0 %v5553
    %7428 = vmatprep.subr.bf16.mxu0 0
    %7429 = vmatpush2.bf16.msra.mxu0 %v5552
    %7430 = vmatprep.subr.bf16.mxu0 0
    %7431 = vmatpush2.bf16.msra.mxu0 %v5551
    %7432 = vmatprep.subr.bf16.mxu0 0
    %7433 = vmatpush2.bf16.msra.mxu0 %v5550
    %7434 = vmatprep.subr.bf16.mxu0 0
    %7435 = vmatpush2.bf16.msra.mxu0 %v5549
    %7436 = vmatprep.subr.bf16.mxu0 0
    %7437 = vmatpush2.bf16.msra.mxu0 %v5548
    %7438 = vmatprep.subr.bf16.mxu0 0
    %7439 = vmatpush2.bf16.msra.mxu0 %v5547
    %7440 = vmatprep.subr.bf16.mxu0 0
    %7441 = vmatpush2.bf16.msra.mxu0 %v5546
    %7442 = vmatprep.mubr.bf16.mxu0 %v2037
    %7443 = vmatmul.mubr.bf16.gmra.mxu0 %v2036
    %v7444 = vpop.f32.mrf.mxu0
    %v7445 = vadd.f32 %v7396, %v7444
    %v7446 = vpop.f32.mrf.mxu0
    %v7447 = vpop.f32.mrf.mxu0
    %v7448 = vadd.f32 %v7399, %v7447
    %v7449 = vpop.f32.mrf.mxu0
    %7450 = vmatprep.mubr.bf16.mxu0 %v2100
    %7451 = vmatmul.mubr.bf16.gmra.mxu0 %v2099
    %v7452 = vpop.f32.mrf.mxu0
    %v7453 = vadd.f32 %v7404, %v7452
    %v7454 = vpop.f32.mrf.mxu0
    %v7455 = vpop.f32.mrf.mxu0
    %v7456 = vadd.f32 %v7407, %v7455
    %v7457 = vpop.f32.mrf.mxu0
    %7458 = vdwg.mxu0
    %7459 = vmatprep.subr.bf16.mxu0 0
    %7460 = vmatpush1.bf16.msra.mxu0 %v5561
    %7461 = vmatprep.subr.bf16.mxu0 0
    %7462 = vmatpush1.bf16.msra.mxu0 %v5560
    %7463 = vmatprep.subr.bf16.mxu0 0
    %7464 = vmatpush1.bf16.msra.mxu0 %v5559
    %7465 = vmatprep.subr.bf16.mxu0 0
    %7466 = vmatpush1.bf16.msra.mxu0 %v5558
    %7467 = vmatprep.subr.bf16.mxu0 0
    %7468 = vmatpush1.bf16.msra.mxu0 %v5557
    %7469 = vmatprep.subr.bf16.mxu0 0
    %7470 = vmatpush1.bf16.msra.mxu0 %v5556
    %7471 = vmatprep.subr.bf16.mxu0 0
    %7472 = vmatpush1.bf16.msra.mxu0 %v5555
    %7473 = vmatprep.subr.bf16.mxu0 0
    %7474 = vmatpush1.bf16.msra.mxu0 %v5554
    %7475 = vmatprep.subr.bf16.mxu0 0
    %7476 = vmatpush2.bf16.msra.mxu0 %v5569
    %7477 = vmatprep.subr.bf16.mxu0 0
    %7478 = vmatpush2.bf16.msra.mxu0 %v5568
    %7479 = vmatprep.subr.bf16.mxu0 0
    %7480 = vmatpush2.bf16.msra.mxu0 %v5567
    %7481 = vmatprep.subr.bf16.mxu0 0
    %7482 = vmatpush2.bf16.msra.mxu0 %v5566
    %7483 = vmatprep.subr.bf16.mxu0 0
    %7484 = vmatpush2.bf16.msra.mxu0 %v5565
    %7485 = vmatprep.subr.bf16.mxu0 0
    %7486 = vmatpush2.bf16.msra.mxu0 %v5564
    %7487 = vmatprep.subr.bf16.mxu0 0
    %7488 = vmatpush2.bf16.msra.mxu0 %v5563
    %7489 = vmatprep.subr.bf16.mxu0 0
    %7490 = vmatpush2.bf16.msra.mxu0 %v5562
    %7491 = vmatprep.mubr.bf16.mxu0 %v2039
    %7492 = vmatmul.mubr.bf16.gmra.mxu0 %v2038
    %v7493 = vpop.f32.mrf.mxu0
    %v7494 = vadd.f32 %v7445, %v7493
    %v7495 = vpop.f32.mrf.mxu0
    %v7496 = vpop.f32.mrf.mxu0
    %v7497 = vadd.f32 %v7448, %v7496
    %v7498 = vpop.f32.mrf.mxu0
    %7499 = vmatprep.mubr.bf16.mxu0 %v2102
    %7500 = vmatmul.mubr.bf16.gmra.mxu0 %v2101
    %v7501 = vpop.f32.mrf.mxu0
    %v7502 = vadd.f32 %v7453, %v7501
    %v7503 = vpop.f32.mrf.mxu0
    %v7504 = vpop.f32.mrf.mxu0
    %v7505 = vadd.f32 %v7456, %v7504
    %v7506 = vpop.f32.mrf.mxu0
    %7507 = vdwg.mxu0
    %7508 = vmatprep.subr.bf16.mxu0 0
    %7509 = vmatpush1.bf16.msra.mxu0 %v5577
    %7510 = vmatprep.subr.bf16.mxu0 0
    %7511 = vmatpush1.bf16.msra.mxu0 %v5576
    %7512 = vmatprep.subr.bf16.mxu0 0
    %7513 = vmatpush1.bf16.msra.mxu0 %v5575
    %7514 = vmatprep.subr.bf16.mxu0 0
    %7515 = vmatpush1.bf16.msra.mxu0 %v5574
    %7516 = vmatprep.subr.bf16.mxu0 0
    %7517 = vmatpush1.bf16.msra.mxu0 %v5573
    %7518 = vmatprep.subr.bf16.mxu0 0
    %7519 = vmatpush1.bf16.msra.mxu0 %v5572
    %7520 = vmatprep.subr.bf16.mxu0 0
    %7521 = vmatpush1.bf16.msra.mxu0 %v5571
    %7522 = vmatprep.subr.bf16.mxu0 0
    %7523 = vmatpush1.bf16.msra.mxu0 %v5570
    %7524 = vmatprep.subr.bf16.mxu0 0
    %7525 = vmatpush2.bf16.msra.mxu0 %v5585
    %7526 = vmatprep.subr.bf16.mxu0 0
    %7527 = vmatpush2.bf16.msra.mxu0 %v5584
    %7528 = vmatprep.subr.bf16.mxu0 0
    %7529 = vmatpush2.bf16.msra.mxu0 %v5583
    %7530 = vmatprep.subr.bf16.mxu0 0
    %7531 = vmatpush2.bf16.msra.mxu0 %v5582
    %7532 = vmatprep.subr.bf16.mxu0 0
    %7533 = vmatpush2.bf16.msra.mxu0 %v5581
    %7534 = vmatprep.subr.bf16.mxu0 0
    %7535 = vmatpush2.bf16.msra.mxu0 %v5580
    %7536 = vmatprep.subr.bf16.mxu0 0
    %7537 = vmatpush2.bf16.msra.mxu0 %v5579
    %7538 = vmatprep.subr.bf16.mxu0 0
    %7539 = vmatpush2.bf16.msra.mxu0 %v5578
    %7540 = vmatprep.mubr.bf16.mxu0 %v2041
    %7541 = vmatmul.mubr.bf16.gmra.mxu0 %v2040
    %v7542 = vpop.f32.mrf.mxu0
    %v7543 = vadd.f32 %v7494, %v7542
    %v7544 = vpop.f32.mrf.mxu0
    %v7545 = vpop.f32.mrf.mxu0
    %v7546 = vadd.f32 %v7497, %v7545
    %v7547 = vpop.f32.mrf.mxu0
    %7548 = vmatprep.mubr.bf16.mxu0 %v2104
    %7549 = vmatmul.mubr.bf16.gmra.mxu0 %v2103
    %v7550 = vpop.f32.mrf.mxu0
    %v7551 = vadd.f32 %v7502, %v7550
    %v7552 = vpop.f32.mrf.mxu0
    %v7553 = vpop.f32.mrf.mxu0
    %v7554 = vadd.f32 %v7505, %v7553
    %v7555 = vpop.f32.mrf.mxu0
    %7556 = vdwg.mxu0
    %7557 = vmatprep.subr.bf16.mxu0 0
    %7558 = vmatpush1.bf16.msra.mxu0 %v5593
    %7559 = vmatprep.subr.bf16.mxu0 0
    %7560 = vmatpush1.bf16.msra.mxu0 %v5592
    %7561 = vmatprep.subr.bf16.mxu0 0
    %7562 = vmatpush1.bf16.msra.mxu0 %v5591
    %7563 = vmatprep.subr.bf16.mxu0 0
    %7564 = vmatpush1.bf16.msra.mxu0 %v5590
    %7565 = vmatprep.subr.bf16.mxu0 0
    %7566 = vmatpush1.bf16.msra.mxu0 %v5589
    %7567 = vmatprep.subr.bf16.mxu0 0
    %7568 = vmatpush1.bf16.msra.mxu0 %v5588
    %7569 = vmatprep.subr.bf16.mxu0 0
    %7570 = vmatpush1.bf16.msra.mxu0 %v5587
    %7571 = vmatprep.subr.bf16.mxu0 0
    %7572 = vmatpush1.bf16.msra.mxu0 %v5586
    %7573 = vmatprep.subr.bf16.mxu0 0
    %7574 = vmatpush2.bf16.msra.mxu0 %v5601
    %7575 = vmatprep.subr.bf16.mxu0 0
    %7576 = vmatpush2.bf16.msra.mxu0 %v5600
    %7577 = vmatprep.subr.bf16.mxu0 0
    %7578 = vmatpush2.bf16.msra.mxu0 %v5599
    %7579 = vmatprep.subr.bf16.mxu0 0
    %7580 = vmatpush2.bf16.msra.mxu0 %v5598
    %7581 = vmatprep.subr.bf16.mxu0 0
    %7582 = vmatpush2.bf16.msra.mxu0 %v5597
    %7583 = vmatprep.subr.bf16.mxu0 0
    %7584 = vmatpush2.bf16.msra.mxu0 %v5596
    %7585 = vmatprep.subr.bf16.mxu0 0
    %7586 = vmatpush2.bf16.msra.mxu0 %v5595
    %7587 = vmatprep.subr.bf16.mxu0 0
    %7588 = vmatpush2.bf16.msra.mxu0 %v5594
    %7589 = vmatprep.mubr.bf16.mxu0 %v2043
    %7590 = vmatmul.mubr.bf16.gmra.mxu0 %v2042
    %v7591 = vpop.f32.mrf.mxu0
    %v7592 = vadd.f32 %v7543, %v7591
    %v7593 = vpop.f32.mrf.mxu0
    %v7594 = vpop.f32.mrf.mxu0
    %v7595 = vadd.f32 %v7546, %v7594
    %v7596 = vpop.f32.mrf.mxu0
    %7597 = vmatprep.mubr.bf16.mxu0 %v2106
    %7598 = vmatmul.mubr.bf16.gmra.mxu0 %v2105
    %v7599 = vpop.f32.mrf.mxu0
    %v7600 = vadd.f32 %v7551, %v7599
    %v7601 = vpop.f32.mrf.mxu0
    %v7602 = vpop.f32.mrf.mxu0
    %v7603 = vadd.f32 %v7554, %v7602
    %v7604 = vpop.f32.mrf.mxu0
    %7605 = vdwg.mxu0
    %7606 = vmatprep.subr.bf16.mxu0 0
    %7607 = vmatpush1.bf16.msra.mxu0 %v5609
    %7608 = vmatprep.subr.bf16.mxu0 0
    %7609 = vmatpush1.bf16.msra.mxu0 %v5608
    %7610 = vmatprep.subr.bf16.mxu0 0
    %7611 = vmatpush1.bf16.msra.mxu0 %v5607
    %7612 = vmatprep.subr.bf16.mxu0 0
    %7613 = vmatpush1.bf16.msra.mxu0 %v5606
    %7614 = vmatprep.subr.bf16.mxu0 0
    %7615 = vmatpush1.bf16.msra.mxu0 %v5605
    %7616 = vmatprep.subr.bf16.mxu0 0
    %7617 = vmatpush1.bf16.msra.mxu0 %v5604
    %7618 = vmatprep.subr.bf16.mxu0 0
    %7619 = vmatpush1.bf16.msra.mxu0 %v5603
    %7620 = vmatprep.subr.bf16.mxu0 0
    %7621 = vmatpush1.bf16.msra.mxu0 %v5602
    %7622 = vmatprep.subr.bf16.mxu0 0
    %7623 = vmatpush2.bf16.msra.mxu0 %v5617
    %7624 = vmatprep.subr.bf16.mxu0 0
    %7625 = vmatpush2.bf16.msra.mxu0 %v5616
    %7626 = vmatprep.subr.bf16.mxu0 0
    %7627 = vmatpush2.bf16.msra.mxu0 %v5615
    %7628 = vmatprep.subr.bf16.mxu0 0
    %7629 = vmatpush2.bf16.msra.mxu0 %v5614
    %7630 = vmatprep.subr.bf16.mxu0 0
    %7631 = vmatpush2.bf16.msra.mxu0 %v5613
    %7632 = vmatprep.subr.bf16.mxu0 0
    %7633 = vmatpush2.bf16.msra.mxu0 %v5612
    %7634 = vmatprep.subr.bf16.mxu0 0
    %7635 = vmatpush2.bf16.msra.mxu0 %v5611
    %7636 = vmatprep.subr.bf16.mxu0 0
    %7637 = vmatpush2.bf16.msra.mxu0 %v5610
    %7638 = vmatprep.mubr.bf16.mxu0 %v2045
    %7639 = vmatmul.mubr.bf16.gmra.mxu0 %v2044
    %v7640 = vpop.f32.mrf.mxu0
    %v7641 = vadd.f32 %v7592, %v7640
    %v7642 = vpop.f32.mrf.mxu0
    %v7643 = vpop.f32.mrf.mxu0
    %v7644 = vadd.f32 %v7595, %v7643
    %v7645 = vpop.f32.mrf.mxu0
    %7646 = vmatprep.mubr.bf16.mxu0 %v2108
    %7647 = vmatmul.mubr.bf16.gmra.mxu0 %v2107
    %v7648 = vpop.f32.mrf.mxu0
    %v7649 = vadd.f32 %v7600, %v7648
    %v7650 = vpop.f32.mrf.mxu0
    %v7651 = vpop.f32.mrf.mxu0
    %v7652 = vadd.f32 %v7603, %v7651
    %v7653 = vpop.f32.mrf.mxu0
    %7654 = vdwg.mxu0
    %7655 = vmatprep.subr.bf16.mxu0 0
    %7656 = vmatpush1.bf16.msra.mxu0 0
    %7657 = vmatprep.subr.bf16.mxu0 0
    %7658 = vmatpush1.bf16.msra.mxu0 0
    %7659 = vmatprep.subr.bf16.mxu0 0
    %7660 = vmatpush1.bf16.msra.mxu0 %v6134
    %7661 = vmatprep.subr.bf16.mxu0 0
    %7662 = vmatpush1.bf16.msra.mxu0 %v5622
    %7663 = vmatprep.subr.bf16.mxu0 0
    %7664 = vmatpush1.bf16.msra.mxu0 %v5621
    %7665 = vmatprep.subr.bf16.mxu0 0
    %7666 = vmatpush1.bf16.msra.mxu0 %v5620
    %7667 = vmatprep.subr.bf16.mxu0 0
    %7668 = vmatpush1.bf16.msra.mxu0 %v5619
    %7669 = vmatprep.subr.bf16.mxu0 0
    %7670 = vmatpush1.bf16.msra.mxu0 %v5618
    %7671 = vmatprep.subr.bf16.mxu0 0
    %7672 = vmatpush2.bf16.msra.mxu0 0
    %7673 = vmatprep.subr.bf16.mxu0 0
    %7674 = vmatpush2.bf16.msra.mxu0 0
    %7675 = vmatprep.subr.bf16.mxu0 0
    %7676 = vmatpush2.bf16.msra.mxu0 0
    %7677 = vmatprep.subr.bf16.mxu0 0
    %7678 = vmatpush2.bf16.msra.mxu0 0
    %7679 = vmatprep.subr.bf16.mxu0 0
    %7680 = vmatpush2.bf16.msra.mxu0 0
    %7681 = vmatprep.subr.bf16.mxu0 0
    %7682 = vmatpush2.bf16.msra.mxu0 0
    %7683 = vmatprep.subr.bf16.mxu0 0
    %7684 = vmatpush2.bf16.msra.mxu0 0
    %7685 = vmatprep.subr.bf16.mxu0 0
    %7686 = vmatpush2.bf16.msra.mxu0 0
    %7687 = vmatprep.mubr.bf16.mxu0 0
    %7688 = vmatmul.mubr.bf16.gmra.mxu0 %v6127
    %v7689 = vpop.f32.mrf.mxu0
    %v7690 = vadd.f32 %v7641, %v7689
    %v7691 = vpop.f32.mrf.mxu0
    %v7692 = vpop.f32.mrf.mxu0
    %v7693 = vadd.f32 %v7644, %v7692
    %v7694 = vpop.f32.mrf.mxu0
    %7695 = vmatprep.mubr.bf16.mxu0 0
    %7696 = vmatmul.mubr.bf16.gmra.mxu0 %v6130
    %v7697 = vpop.f32.mrf.mxu0
    %v7698 = vadd.f32 %v7649, %v7697
    %v7699 = vpop.f32.mrf.mxu0
    %v7700 = vpop.f32.mrf.mxu0
    %v7701 = vadd.f32 %v7652, %v7700
    %v7702 = vpop.f32.mrf.mxu0
    %7703 = vdwg.mxu0
    %vm7704 = vcmp.eq.f32.partialorder %v7690, 0.0
    %vm7705 = vcmp.eq.f32.partialorder %v7693, 0.0
    %vm7706 = vcmp.eq.f32.partialorder %v7698, 0.0
    %vm7707 = vcmp.eq.f32.partialorder %v7701, 0.0
    %v7708 = vsel %vm7704, 1.0, %v7690
    %v7709 = vsel %vm7705, 1.0, %v7693
    %v7710 = vsel %vm7706, 1.0, %v7698
    %v7711 = vsel %vm7707, 1.0, %v7701
    %v7712 = vrcp.pop %v7708
    %v7713 = vrcp.pop %v7709
    %v7714 = vrcp.pop %v7710
    %v7715 = vrcp.pop %v7711
    %7717 = vset.pattern.permute.xlu0 64
    %7718 = vperm.xlu0 %7717, %v7712
    %v7719 = vpop.permute.xlu0 %7718
    %7722 = vset.pattern.permute.xlu0 64
    %7723 = vperm.xlu0 %7722, %v7713
    %v7724 = vpop.permute.xlu0 %7723
    %7727 = vset.pattern.permute.xlu0 64
    %7728 = vperm.xlu0 %7727, %v7714
    %v7729 = vpop.permute.xlu0 %7728
    %7732 = vset.pattern.permute.xlu0 64
    %7733 = vperm.xlu0 %7732, %v7715
    %v7734 = vpop.permute.xlu0 %7733
    %v7736 = vmul.f32 %v7690, %v7719
    %v7737 = vmul.f32 %v7693, %v7724
    %v7738 = vmul.f32 %v7698, %v7729
    %v7739 = vmul.f32 %v7701, %v7734
    %v7740 = vadd.f32 %v1917, %v7736
    %v7741 = vadd.f32 %v1918, %v7737
    %v7742 = vadd.f32 %v1919, %v7738
    %v7743 = vadd.f32 %v1920, %v7739
    %vm7744 = vcmask 523264
    %7745 = vst.msk [vmem:[#allocation2] sm:$0xff] %vm7744, %v7740
    %7746 = vst.msk [vmem:[#allocation2 + $0x8] sm:$0xff] %vm7744, %v7741
    %7747 = vst.msk [vmem:[#allocation2 + $0x10] sm:$0xff] %vm7744, %v7742
    %7748 = vst.msk [vmem:[#allocation2 + $0x18] sm:$0xff] %vm7744, %v7743
    // Predicated region
    $region34: #{tpu_custom_call.1} parent=1 // pred_check
      _
    $region35: #{tpu_custom_call.1} parent=1 // pred_check_branch
      %7750 = sbr.rel (0) target = $region37
    $region36: #{tpu_custom_call.1} parent=1 // pred_region
      %s7752 = ssub.s32 512, 512
      %7753 = vsyncadd [#allocation3], %s7752
      %s7754 = sshll.u32 [#allocation2], 4
      %s7755 = int_to_ptr.vmem [resolvable:$true] %s7754
      %7760 = dma.vmem_to_hbm [thread:$0]  %s7755, 512, %s8, [#allocation3], 128, 128, 8
    $region37: #{tpu_custom_call.1} parent=1 // pred_fallthru
      _
    // Predicated region
    $region38: #{tpu_custom_call.1} parent=1 // pred_check
      _
    $region39: #{tpu_custom_call.1} parent=1 // pred_check_branch
      %7762 = sbr.rel (0) target = $region41
    $region40: #{tpu_custom_call.1} parent=1 // pred_region
      %7763 = dma.done [#allocation3], 512
    $region41: #{tpu_custom_call.1} parent=1 // pred_fallthru
      _
    %7764 = vsyncpa [#allocation3], 1

</llo_original>
